<compile_context>
chip_gen: v7x
topology: tpu7x:2x2x1
jax: 0.10.0
libtpu: 0.0.40
codegen_flags: <defaults>
</compile_context>

<pallas_src>
import math

import jax
import jax.numpy as jnp
from jax.experimental import pallas as pl
from jax.experimental.pallas import tpu as pltpu

D_MODEL = 128
N_QUERY = 32
N_HEAD = 8
HEAD_DIM = D_MODEL // N_HEAD
FEAT_DIM = 256
LN_EPS = 1e-5
BN_EPS = 1e-5
ATTN_SCALE = 1.0 / math.sqrt(HEAD_DIM)
HQ = N_HEAD * N_QUERY                  # 256 rows of head-stacked query / mask

# ---------------- packed-slab row offsets (encoder, bf16 slab) ----------------
WA_PF = 0                              # point_features_head weight (256,128)
WA_CAK = WA_PF + FEAT_DIM              # cross-attn Wk
WA_CAV = WA_CAK + D_MODEL
WA_CAO = WA_CAV + D_MODEL
WA_SAO = WA_CAO + D_MODEL              # self-attn Wo
WA_FW1 = WA_SAO + D_MODEL
WA_FW2 = WA_FW1 + D_MODEL
WA_QSCA = WA_FW2 + D_MODEL             # precomputed masked/scaled cross-attn Q (256)
WA_MASK = WA_QSCA + HQ                 # bf16 head mask (256)
WA_ROWS = WA_MASK + HQ                 # 1536
# wenc_b : bf16 (128, 384) = [sa_Wq | sa_Wk | sa_Wv]  (fused self-attn QKV)

# ---------------- packed-slab row offsets (encoder, f32 slab) -----------------
VE_Q0 = 0                              # query embedding (32)
VE_CORRQ = VE_Q0 + N_QUERY             # query_pos@sa_Wq + sa_bq (32)
VE_CORRK = VE_CORRQ + N_QUERY          # query_pos@sa_Wk + sa_bk (32)
VE_MASK = VE_CORRK + N_QUERY           # f32 head mask (256)
_VE_BIAS0 = VE_MASK + HQ               # 352
(VE_BPF, VE_CA_BK, VE_CA_BV, VE_CA_BO, VE_CA_LNG, VE_CA_LNB,
 VE_SA_BV, VE_SA_BO, VE_SA_LNG, VE_SA_LNB,
 VE_FB1, VE_FB2, VE_FLNG, VE_FLNB) = range(_VE_BIAS0, _VE_BIAS0 + 14)
VE_ROWS = 368                          # 366 used rows, padded to a sublane multiple

# ---------------- packed-slab row offsets (head MLP) --------------------------
WH_W0 = 0                              # layer0 (4096,128)
WH_L1 = WH_W0 + N_QUERY * D_MODEL
WH_L2 = WH_L1 + D_MODEL
WH_HD = WH_L2 + D_MODEL                # [wm | ws | 0-pad] (128,128)
WH_ROWS = WH_HD + D_MODEL              # 4480


# ================================ encoder =====================================

def run_encoder(feats2d, ppos2d, B_pad, N, pk, Bt):
    """point_features_head + CrossAttention + SelfAttention + FFN.

    feats2d : (B_pad*N, 256) bf16, ppos2d : (B_pad*N, 128) bf16.  Batch is folded
    into the matmul M dimension; Bt batch elements are processed per grid step.
    """
    assert N % 8 == 0, "number of points must be a multiple of 8 (sublane tile)"
    assert B_pad % Bt == 0
    grid = (B_pad // Bt,)

    def kernel(feats_ref, ppos_ref, wa_ref, wb_ref, ve_ref, out_ref, attn_scr):
        def vrow(i):                               # (1,128) f32 bias / LN row
            return ve_ref[i:i + 1, :]

        def w128(off):                             # (128,128) bf16 weight block
            return wa_ref[off:off + D_MODEL, :]

        def mm(x, w):                              # bf16 MXU matmul, f32 accum
            return jnp.dot(x.astype(jnp.bfloat16), w,
                           preferred_element_type=jnp.float32)

        def layer_norm(x, g, b):
            mu = jnp.mean(x, axis=-1, keepdims=True)
            var = jnp.mean((x - mu) ** 2, axis=-1, keepdims=True)
            return (x - mu) * jax.lax.rsqrt(var + LN_EPS) * g + b

        def add_shared(x2d, shared):
            # Add a batch-shared (32,128) block to every 32-row slice of x2d
            # without materializing Bt stacked copies of `shared`.
            if Bt == 1:
                return x2d + shared
            return (x2d.reshape(Bt, N_QUERY, D_MODEL) + shared[None, :, :]
                    ).reshape(Bt * N_QUERY, D_MODEL)

        def attn_from_qs(qs, k, v):
            # qs: (256,128) bf16, already head-masked & pre-scaled (8 heads of
            # width 16 stacked along sublanes).  k, v: (T,128) f32.
            s = jax.lax.dot_general(qs, k.astype(jnp.bfloat16),
                                    (((1,), (1,)), ((), ())),
                                    preferred_element_type=jnp.float32)  # (256,T)
            s = s - jnp.max(s, axis=-1, keepdims=True)
            e = jnp.exp(s)
            p = e * pl.reciprocal(jnp.sum(e, axis=-1, keepdims=True), approx=False)
            pv = jnp.dot(p.astype(jnp.bfloat16), v.astype(jnp.bfloat16),
                         preferred_element_type=jnp.float32)             # (256,128)
            # Head fold: zero foreign-lane segments, sum the 8 head slabs.
            pv = pv * ve_ref[VE_MASK:VE_MASK + HQ, :]
            return pv.reshape(N_HEAD, N_QUERY, D_MODEL).sum(axis=0)      # (32,128)

        query = ve_ref[VE_Q0:VE_Q0 + N_QUERY, :]

        # point_features_head : Linear(256 -> 128); batch folded -> M = Bt*N.
        pf = mm(feats_ref[...], wa_ref[WA_PF:WA_PF + FEAT_DIM, :]) + vrow(VE_BPF)

        # ---- CrossAttentionLayer.forward_post (dropout = 0) ----
        # The batch-shared masked/scaled Q (qs_ca) is precomputed at pack time
        # and read straight from the resident bf16 slab.
        k_ca = mm(pf + ppos_ref[...].astype(jnp.float32), w128(WA_CAK)) + vrow(VE_CA_BK)
        v_ca = mm(pf, w128(WA_CAV)) + vrow(VE_CA_BV)
        for b in range(Bt):
            r = b * N_QUERY
            attn_scr[r:r + N_QUERY, :] = attn_from_qs(
                wa_ref[WA_QSCA:WA_QSCA + HQ, :],
                k_ca[b * N:(b + 1) * N, :], v_ca[b * N:(b + 1) * N, :])
        ca = mm(attn_scr[...], w128(WA_CAO)) + vrow(VE_CA_BO)
        tgt = layer_norm(add_shared(ca, query), vrow(VE_CA_LNG), vrow(VE_CA_LNB))

        # ---- SelfAttentionLayer.forward_post ----
        # Fused QKV on tgt; batch-shared query_pos corrections (precomputed) are
        # added to the per-batch 32-row slices right where they are consumed.
        qkv = mm(tgt, wb_ref[...])                                       # (Bt*32,384)
        corr_q = ve_ref[VE_CORRQ:VE_CORRQ + N_QUERY, :]
        corr_k = ve_ref[VE_CORRK:VE_CORRK + N_QUERY, :]
        b_v = vrow(VE_SA_BV)
        for b in range(Bt):
            r = b * N_QUERY
            q_b = (qkv[r:r + N_QUERY, 0:D_MODEL] + corr_q) * ATTN_SCALE
            k_b = qkv[r:r + N_QUERY, D_MODEL:2 * D_MODEL] + corr_k
            v_b = qkv[r:r + N_QUERY, 2 * D_MODEL:3 * D_MODEL] + b_v
            qhb = q_b.astype(jnp.bfloat16)                               # (32,128)
            qs = (jnp.concatenate([qhb] * N_HEAD, axis=0)
                  * wa_ref[WA_MASK:WA_MASK + HQ, :])                     # bf16 mask
            attn_scr[r:r + N_QUERY, :] = attn_from_qs(qs, k_b, v_b)
        sa = mm(attn_scr[...], w128(WA_SAO)) + vrow(VE_SA_BO)
        tgt = layer_norm(tgt + sa, vrow(VE_SA_LNG), vrow(VE_SA_LNB))

        # ---- FFNLayer.forward_post ----
        h = jnp.maximum(mm(tgt, w128(WA_FW1)) + vrow(VE_FB1), 0.0)
        t2 = mm(h, w128(WA_FW2)) + vrow(VE_FB2)
        tgt = layer_norm(tgt + t2, vrow(VE_FLNG), vrow(VE_FLNB))

        out_ref[...] = tgt.astype(out_ref.dtype)

    return pl.pallas_call(
        kernel,
        out_shape=jax.ShapeDtypeStruct((B_pad * N_QUERY, D_MODEL), jnp.bfloat16),
        grid=grid,
        in_specs=[
            pl.BlockSpec((Bt * N, FEAT_DIM), lambda i: (i, 0)),
            pl.BlockSpec((Bt * N, D_MODEL), lambda i: (i, 0)),
            pl.BlockSpec((WA_ROWS, D_MODEL), lambda i: (0, 0)),
            pl.BlockSpec((D_MODEL, 3 * D_MODEL), lambda i: (0, 0)),
            pl.BlockSpec((VE_ROWS, D_MODEL), lambda i: (0, 0)),
        ],
        out_specs=pl.BlockSpec((Bt * N_QUERY, D_MODEL), lambda i: (i, 0)),
        scratch_shapes=[pltpu.VMEM((Bt * N_QUERY, D_MODEL), jnp.float32)],
        compiler_params=pltpu.CompilerParams(
            dimension_semantics=("parallel",)),   # batch chunks -> both TCs on v7x
    )(feats2d, ppos2d, pk["wenc_a"], pk["wenc_b"], pk["venc"])


def _choose_bt(B, max_batch_tile):
    """Batch tile: >=2 grid steps whenever B>=2 (v7x megacore), capped tile size.

    On v6e (single TC) raise max_batch_tile (e.g. 16-32) for large B to amortize
    per-grid-step overhead; the per-step working set stays well under VMEM.
    """
    if B <= 1:
        return 1
    return max(1, min(max_batch_tile, (B + 1) // 2))


# ================================ head MLP ====================================

def head_kernel(xflat_ref, wh_ref, vh_ref, heads_ref, x_ref, out0_ref):
    def mm(x, w):
        return jnp.dot(x.astype(jnp.bfloat16), w, preferred_element_type=jnp.float32)

    def bn_relu(h, g, be):
        # TODO(synk): BatchNorm1d with batch statistics (training-mode default of a
        # fresh module); eval-mode running stats would need extra state.
        mu = jnp.mean(h, axis=0, keepdims=True)
        var = jnp.mean((h - mu) ** 2, axis=0, keepdims=True)
        return jnp.maximum((h - mu) * jax.lax.rsqrt(var + BN_EPS) * g + be, 0.0)

    out0 = mm(xflat_ref[...], wh_ref[WH_W0:WH_W0 + N_QUERY * D_MODEL, :]) + vh_ref[0:1, :]
    h1 = mm(out0, wh_ref[WH_L1:WH_L1 + D_MODEL, :]) + vh_ref[1:2, :]
    x1 = bn_relu(h1, vh_ref[2:3, :], vh_ref[3:4, :])
    h2 = mm(x1, wh_ref[WH_L2:WH_L2 + D_MODEL, :]) + vh_ref[4:5, :]
    x2 = bn_relu(h2, vh_ref[5:6, :], vh_ref[6:7, :])
    # layer3_moving / layer3_scale merged into one lane-dense (B,128) store;
    # the wrapper slices [:, 0:5] and [:, 5:8].
    heads_ref[...] = mm(x2, wh_ref[WH_HD:WH_HD + D_MODEL, :]) + vh_ref[7:8, :]
    x_ref[...] = x1
    out0_ref[...] = out0


def run_head(xflat, pk):
    B = xflat.shape[0]
    vmem = pltpu.MemorySpace.VMEM
    return pl.pallas_call(
        head_kernel,
        out_shape=(jax.ShapeDtypeStruct((B, D_MODEL), jnp.float32),   # [moving|scale|pad]
                   jax.ShapeDtypeStruct((B, D_MODEL), jnp.float32),   # x   (layer1 out)
                   jax.ShapeDtypeStruct((B, D_MODEL), jnp.float32)),  # out0 (layer0 out)
        in_specs=[pl.BlockSpec(memory_space=vmem)] * 3,
        out_specs=(pl.BlockSpec(memory_space=vmem),) * 3,
    )(xflat, pk["whead"], pk["vhead"])


# ============================== plain-JAX glue ================================

def sine_pos_embed(xyz, mins, maxs, d_pos=D_MODEL, temperature=10000.0):
    # TODO(synk): PositionEmbeddingCoordsSine source not provided; this follows the
    # standard 3DETR/Mask3D 'sine' variant with normalize=True (scale = 2*pi).
    B, N, ncoord = xyz.shape
    xyz_n = (xyz - mins[:, None, :]) / (maxs - mins)[:, None, :]
    scale = 2.0 * math.pi
    ndim = d_pos // ncoord
    if ndim % 2 != 0:
        ndim -= 1
    rems = d_pos - ndim * ncoord
    embeds = []
    for d in range(ncoord):
        cdim = ndim
        if rems > 0:
            cdim += 2
            rems -= 2
        i = jnp.arange(cdim)
        dim_t = temperature ** (2.0 * (i // 2).astype(jnp.float32) / cdim)
        raw = xyz_n[:, :, d] * scale
        pos = raw[:, :, None] / dim_t                                   # (B, N, cdim)
        pos = jnp.stack([jnp.sin(pos[:, :, 0::2]), jnp.cos(pos[:, :, 1::2])], axis=3)
        embeds.append(pos.reshape(B, N, cdim))
    return jnp.concatenate(embeds, axis=2)                              # (B, N, d_pos)


def ppo_actor_forward(params, sampled_env_xyz, R, sampled_env_feats, curpos, history,
                      non_parametric_queries=False, max_batch_tile=8):
    # R and history are unused in the reference forward pass.
    del R, history
    # TODO(synk): non_parametric_queries=True path (proj_query_pos) not implemented;
    # the reference default (False, learned query_pos embedding) is implemented.
    B, N, _ = sampled_env_feats.shape
    xyz = sampled_env_xyz - curpos
    mins = jnp.min(xyz, axis=1)
    maxs = jnp.max(xyz, axis=1)
    maxs = jnp.where(maxs == mins, maxs + 0.1, maxs)
    point_pos = sine_pos_embed(xyz.astype(jnp.float32), mins, maxs)      # (B,N,128)

    feats2d = sampled_env_feats.astype(jnp.bfloat16).reshape(B * N, FEAT_DIM)
    ppos2d = point_pos.astype(jnp.bfloat16).reshape(B * N, D_MODEL)      # bf16 stream

    # Batch tiling: pad B to a multiple of Bt so awkward batch sizes never fall
    # back to Bt=1; padded rows are zero and get sliced off after the encoder.
    Bt = _choose_bt(B, max_batch_tile)
    B_pad = -(-B // Bt) * Bt
    if B_pad != B:
        pad_rows = (B_pad - B) * N
        feats2d = jnp.concatenate(
            [feats2d, jnp.zeros((pad_rows, FEAT_DIM), feats2d.dtype)], axis=0)
        ppos2d = jnp.concatenate(
            [ppos2d, jnp.zeros((pad_rows, D_MODEL), ppos2d.dtype)], axis=0)

    enc = run_encoder(feats2d, ppos2d, B_pad, N, params, Bt)             # (B_pad*32,128)

    # .view(B, -1): free XLA reshape (+ pad slice) between the two pallas_calls.
    xflat = enc.reshape(B_pad, N_QUERY * D_MODEL)[:B]
    heads, x, out0 = run_head(xflat, params)
    return heads[:, 0:5], heads[:, 5:8], x, out0


# ============================ parameter handling ==============================

def init_params(key):
    keys = iter(jax.random.split(key, 24))

    def xavier(shape):
        fan_in, fan_out = shape[-2], shape[-1]
        lim = math.sqrt(6.0 / (fan_in + fan_out))
        return jax.random.uniform(next(keys), shape, jnp.float32, -lim, lim)

    z = lambda *s: jnp.zeros(s, jnp.float32)
    o = lambda *s: jnp.ones(s, jnp.float32)

    # NOTE: all Linear / attention projections are stored (in, out); torch stores
    # (out, in) (and MHA packs q/k/v as one (3D, D) in_proj_weight), so a
    # transpose + split is required when importing torch checkpoints.
    return {
        "query": xavier((N_QUERY, D_MODEL)),
        "query_pos": xavier((N_QUERY, D_MODEL)),
        # point_features_head: Linear(256, 128)
        "wpf": xavier((FEAT_DIM, D_MODEL)), "bpf": z(1, D_MODEL),
        # cross attention
        "ca_wq": xavier((D_MODEL, D_MODEL)), "ca_wk": xavier((D_MODEL, D_MODEL)),
        "ca_wv": xavier((D_MODEL, D_MODEL)), "ca_wo": xavier((D_MODEL, D_MODEL)),
        "ca_bq": z(1, D_MODEL), "ca_bk": z(1, D_MODEL), "ca_bv": z(1, D_MODEL),
        "ca_bo": z(1, D_MODEL), "ca_g": o(1, D_MODEL), "ca_be": z(1, D_MODEL),
        # self attention
        "sa_wq": xavier((D_MODEL, D_MODEL)), "sa_wk": xavier((D_MODEL, D_MODEL)),
        "sa_wv": xavier((D_MODEL, D_MODEL)), "sa_wo": xavier((D_MODEL, D_MODEL)),
        "sa_bq": z(1, D_MODEL), "sa_bk": z(1, D_MODEL), "sa_bv": z(1, D_MODEL),
        "sa_bo": z(1, D_MODEL), "sa_g": o(1, D_MODEL), "sa_be": z(1, D_MODEL),
        # FFN (d_model=128, dim_feedforward=128)
        "f_w1": xavier((D_MODEL, D_MODEL)), "f_b1": z(1, D_MODEL),
        "f_w2": xavier((D_MODEL, D_MODEL)), "f_b2": z(1, D_MODEL),
        "f_g": o(1, D_MODEL), "f_be": z(1, D_MODEL),
        # layer0 / layer1 / layer2 / heads
        "w0": xavier((N_QUERY * D_MODEL, D_MODEL)), "b0": z(1, D_MODEL),
        "l1_w": xavier((D_MODEL, D_MODEL)), "l1_b": z(1, D_MODEL),
        "l1_g": o(1, D_MODEL), "l1_be": z(1, D_MODEL),
        "l2_w": xavier((D_MODEL, D_MODEL)), "l2_b": z(1, D_MODEL),
        "l2_g": o(1, D_MODEL), "l2_be": z(1, D_MODEL),
        "wm": xavier((D_MODEL, 5)), "bm": z(1, 5),
        "ws": xavier((D_MODEL, 3)), "bs": z(1, 3),
    }


def pack_params(p):
    """Pack parameters into a few contiguous resident slabs (one DMA each).

    Batch-invariant attention prep (masked/scaled cross-attn Q, self-attn
    query_pos corrections, head mask) is folded into the slabs here so the
    kernel never recomputes it.
    """
    head_mask = (
        jnp.arange(HQ)[:, None] // N_QUERY == jnp.arange(D_MODEL)[None, :] // HEAD_DIM
    ).astype(jnp.float32)                                               # (256,128)
    q_ca = (p["query"] + p["query_pos"]) @ p["ca_wq"] + p["ca_bq"]      # (32,128)
    qs_ca = jnp.concatenate([q_ca * ATTN_SCALE] * N_HEAD, axis=0) * head_mask
    corr_q = p["query_pos"] @ p["sa_wq"] + p["sa_bq"]
    corr_k = p["query_pos"] @ p["sa_wk"] + p["sa_bk"]

    wenc_a = jnp.concatenate(
        [p["wpf"], p["ca_wk"], p["ca_wv"], p["ca_wo"],
         p["sa_wo"], p["f_w1"], p["f_w2"], qs_ca, head_mask],
        axis=0).astype(jnp.bfloat16)
    assert wenc_a.shape == (WA_ROWS, D_MODEL)
    wenc_b = jnp.concatenate([p["sa_wq"], p["sa_wk"], p["sa_wv"]],
                             axis=1).astype(jnp.bfloat16)               # (128,384)
    venc = jnp.concatenate(
        [p["query"], corr_q, corr_k, head_mask,
         p["bpf"], p["ca_bk"], p["ca_bv"], p["ca_bo"], p["ca_g"], p["ca_be"],
         p["sa_bv"], p["sa_bo"], p["sa_g"], p["sa_be"],
         p["f_b1"], p["f_b2"], p["f_g"], p["f_be"]], axis=0).astype(jnp.float32)
    venc = jnp.concatenate(
        [venc, jnp.zeros((VE_ROWS - venc.shape[0], D_MODEL), jnp.float32)], axis=0)
    assert venc.shape == (VE_ROWS, D_MODEL)

    w_heads = jnp.zeros((D_MODEL, D_MODEL), jnp.float32)
    w_heads = w_heads.at[:, 0:5].set(p["wm"]).at[:, 5:8].set(p["ws"])
    b_heads = jnp.zeros((1, D_MODEL), jnp.float32)
    b_heads = b_heads.at[:, 0:5].set(p["bm"]).at[:, 5:8].set(p["bs"])
    whead = jnp.concatenate([p["w0"], p["l1_w"], p["l2_w"], w_heads],
                            axis=0).astype(jnp.bfloat16)
    assert whead.shape == (WH_ROWS, D_MODEL)
    vhead = jnp.concatenate([p["b0"], p["l1_b"], p["l1_g"], p["l1_be"],
                             p["l2_b"], p["l2_g"], p["l2_be"], b_heads],
                            axis=0).astype(jnp.float32)                 # (8,128)
    return {"wenc_a": wenc_a, "wenc_b": wenc_b, "venc": venc,
            "whead": whead, "vhead": vhead}


# =================================== main =====================================

if __name__ == "__main__":
    key = jax.random.PRNGKey(0)
    pkey, dkey = jax.random.split(key)
    params = pack_params(init_params(pkey))

    fwd = jax.jit(ppo_actor_forward)

    N = 64
    # B=2 -> Bt=1, grid=(2,) (megacore path); B=5 -> Bt=3, padded to 6 (exercises
    # batch padding and the multi-batch-per-step in-kernel paths).
    for B in (2, 5):
        k1, k2, k3 = jax.random.split(jax.random.fold_in(dkey, B), 3)
        sampled_env_xyz = jax.random.normal(k1, (B, N, 3), jnp.float32)
        sampled_env_feats = jax.random.normal(k2, (B, N, FEAT_DIM), jnp.float32)
        curpos = jax.random.normal(k3, (B, 1, 3), jnp.float32)
        R = jnp.tile(jnp.eye(3, dtype=jnp.float32)[None], (B, 1, 1))     # unused
        history = jnp.zeros((B, 8), jnp.float32)                         # unused

        outs = fwd(params, sampled_env_xyz, R, sampled_env_feats, curpos, history)
        jax.block_until_ready(outs)
        moving, scale_out, x, out0 = outs
        assert moving.shape == (B, 5) and scale_out.shape == (B, 3)
        assert x.shape == (B, D_MODEL) and out0.shape == (B, D_MODEL)
        assert all(bool(jnp.all(jnp.isfinite(o))) for o in outs)
    print("KERNEL_OK")
</pallas_src>

<mosaic_0001>
module attributes {stable_mosaic.version = 11 : i64} {
  func.func @kernel(%arg0: i32, %arg1: memref<64x256xbf16, #tpu.memory_space<vmem>>, %arg2: memref<64x128xbf16, #tpu.memory_space<vmem>>, %arg3: memref<1536x128xbf16, #tpu.memory_space<vmem>>, %arg4: memref<128x384xbf16, #tpu.memory_space<vmem>>, %arg5: memref<368x128xf32, #tpu.memory_space<vmem>>, %arg6: memref<32x128xbf16, #tpu.memory_space<vmem>>, %arg7: memref<32x128xf32, #tpu.memory_space<vmem>>) attributes {dimension_semantics = [#tpu.dimension_semantics<parallel>], iteration_bounds = array<i64: 2>, scalar_prefetch = 0 : i64, scratch_operands = 1 : i64, tpu.core_type = #tpu.core_type<tc>, window_params = [{transform_indices = @transform_0, window_bounds = array<i64: 64, 256>}, {transform_indices = @transform_1, window_bounds = array<i64: 64, 128>}, {pipeline_mode = #tpu.pipeline_mode<synchronous>, transform_indices = @transform_2, window_bounds = array<i64: 1536, 128>}, {pipeline_mode = #tpu.pipeline_mode<synchronous>, transform_indices = @transform_3, window_bounds = array<i64: 128, 384>}, {pipeline_mode = #tpu.pipeline_mode<synchronous>, transform_indices = @transform_4, window_bounds = array<i64: 368, 128>}, {transform_indices = @transform_5, window_bounds = array<i64: 32, 128>}]} {
    %c0 = arith.constant 0 : index
    %c0_0 = arith.constant 0 : index
    %0 = vector.load %arg5[%c0, %c0_0] : memref<368x128xf32, #tpu.memory_space<vmem>>, vector<32x128xf32>
    %c0_1 = arith.constant 0 : index
    %c0_2 = arith.constant 0 : index
    %1 = vector.load %arg1[%c0_1, %c0_2] : memref<64x256xbf16, #tpu.memory_space<vmem>>, vector<64x256xbf16>
    %c0_3 = arith.constant 0 : index
    %c0_4 = arith.constant 0 : index
    %2 = vector.load %arg3[%c0_3, %c0_4] : memref<1536x128xbf16, #tpu.memory_space<vmem>>, vector<256x128xbf16>
    %cst = arith.constant dense<0.000000e+00> : vector<64x128xf32>
    %3 = tpu.matmul %1, %2, %cst {dimension_numbers = #tpu.dot_dimension_numbers<[1], [0], [0], [1], [0, 0, 1, 1], [], []>} : vector<64x256xbf16>, vector<256x128xbf16>, vector<64x128xf32> -> vector<64x128xf32>
    %c352 = arith.constant 352 : index
    %c0_5 = arith.constant 0 : index
    %4 = vector.load %arg5[%c352, %c0_5] : memref<368x128xf32, #tpu.memory_space<vmem>>, vector<1x128xf32>
    %5 = vector.broadcast %4 : vector<1x128xf32> to vector<64x128xf32>
    %6 = arith.addf %3, %5 : vector<64x128xf32>
    %c0_6 = arith.constant 0 : index
    %c0_7 = arith.constant 0 : index
    %7 = vector.load %arg2[%c0_6, %c0_7] : memref<64x128xbf16, #tpu.memory_space<vmem>>, vector<64x128xbf16>
    %8 = arith.extf %7 : vector<64x128xbf16> to vector<64x128xf32>
    %9 = arith.addf %6, %8 : vector<64x128xf32>
    %c256 = arith.constant 256 : index
    %c0_8 = arith.constant 0 : index
    %10 = vector.load %arg3[%c256, %c0_8] : memref<1536x128xbf16, #tpu.memory_space<vmem>>, vector<128x128xbf16>
    %11 = arith.truncf %9 : vector<64x128xf32> to vector<64x128xbf16>
    %cst_9 = arith.constant dense<0.000000e+00> : vector<64x128xf32>
    %12 = tpu.matmul %11, %10, %cst_9 {dimension_numbers = #tpu.dot_dimension_numbers<[1], [0], [0], [1], [0, 0, 1, 1], [], []>} : vector<64x128xbf16>, vector<128x128xbf16>, vector<64x128xf32> -> vector<64x128xf32>
    %c353 = arith.constant 353 : index
    %c0_10 = arith.constant 0 : index
    %13 = vector.load %arg5[%c353, %c0_10] : memref<368x128xf32, #tpu.memory_space<vmem>>, vector<1x128xf32>
    %14 = vector.broadcast %13 : vector<1x128xf32> to vector<64x128xf32>
    %15 = arith.addf %12, %14 : vector<64x128xf32>
    %c384 = arith.constant 384 : index
    %c0_11 = arith.constant 0 : index
    %16 = vector.load %arg3[%c384, %c0_11] : memref<1536x128xbf16, #tpu.memory_space<vmem>>, vector<128x128xbf16>
    %17 = arith.truncf %6 : vector<64x128xf32> to vector<64x128xbf16>
    %cst_12 = arith.constant dense<0.000000e+00> : vector<64x128xf32>
    %18 = tpu.matmul %17, %16, %cst_12 {dimension_numbers = #tpu.dot_dimension_numbers<[1], [0], [0], [1], [0, 0, 1, 1], [], []>} : vector<64x128xbf16>, vector<128x128xbf16>, vector<64x128xf32> -> vector<64x128xf32>
    %c354 = arith.constant 354 : index
    %c0_13 = arith.constant 0 : index
    %19 = vector.load %arg5[%c354, %c0_13] : memref<368x128xf32, #tpu.memory_space<vmem>>, vector<1x128xf32>
    %20 = vector.broadcast %19 : vector<1x128xf32> to vector<64x128xf32>
    %21 = arith.addf %18, %20 : vector<64x128xf32>
    %c1024 = arith.constant 1024 : index
    %c0_14 = arith.constant 0 : index
    %22 = vector.load %arg3[%c1024, %c0_14] : memref<1536x128xbf16, #tpu.memory_space<vmem>>, vector<256x128xbf16>
    %23 = arith.truncf %15 : vector<64x128xf32> to vector<64x128xbf16>
    %cst_15 = arith.constant dense<0.000000e+00> : vector<256x64xf32>
    %24 = tpu.matmul %22, %23, %cst_15 {dimension_numbers = #tpu.dot_dimension_numbers<[1], [1], [0], [0], [0, 0, 1, 0], [], []>} : vector<256x128xbf16>, vector<64x128xbf16>, vector<256x64xf32> -> vector<256x64xf32>
    %cst_16 = arith.constant dense<0xFF800000> : vector<256xf32>
    %25 = vector.multi_reduction <maximumf>, %24, %cst_16 [1] : vector<256x64xf32> to vector<256xf32>
    %26 = vector.shape_cast %25 : vector<256xf32> to vector<256x1xf32>
    %27 = vector.broadcast %26 : vector<256x1xf32> to vector<256x64xf32>
    %28 = arith.subf %24, %27 : vector<256x64xf32>
    %29 = math.exp %28 : vector<256x64xf32>
    %cst_17 = arith.constant dense<0.000000e+00> : vector<256xf32>
    %30 = vector.multi_reduction <add>, %29, %cst_17 [1] : vector<256x64xf32> to vector<256xf32>
    %31 = vector.shape_cast %30 : vector<256xf32> to vector<256x1xf32>
    %32 = tpu.reciprocal %31 : vector<256x1xf32> -> vector<256x1xf32>
    %33 = vector.broadcast %32 : vector<256x1xf32> to vector<256x64xf32>
    %34 = arith.mulf %29, %33 : vector<256x64xf32>
    %35 = arith.truncf %34 : vector<256x64xf32> to vector<256x64xbf16>
    %36 = arith.truncf %21 : vector<64x128xf32> to vector<64x128xbf16>
    %cst_18 = arith.constant dense<0.000000e+00> : vector<256x128xf32>
    %37 = tpu.matmul %35, %36, %cst_18 {dimension_numbers = #tpu.dot_dimension_numbers<[1], [0], [0], [1], [0, 0, 1, 1], [], []>} : vector<256x64xbf16>, vector<64x128xbf16>, vector<256x128xf32> -> vector<256x128xf32>
    %c96 = arith.constant 96 : index
    %c0_19 = arith.constant 0 : index
    %38 = vector.load %arg5[%c96, %c0_19] : memref<368x128xf32, #tpu.memory_space<vmem>>, vector<256x128xf32>
    %39 = arith.mulf %37, %38 : vector<256x128xf32>
    %40 = vector.shape_cast %39 : vector<256x128xf32> to vector<8x32x128xf32>
    %cst_20 = arith.constant dense<0.000000e+00> : vector<32x128xf32>
    %41 = vector.multi_reduction <add>, %40, %cst_20 [0] : vector<8x32x128xf32> to vector<32x128xf32>
    %c0_21 = arith.constant 0 : index
    %c0_22 = arith.constant 0 : index
    %42 = vector.load %arg7[%c0_21, %c0_22] : memref<32x128xf32, #tpu.memory_space<vmem>>, vector<32x128xf32>
    tpu.vector_store %arg7[%c0_21, %c0_22], %41 {strides = array<i32>} : memref<32x128xf32, #tpu.memory_space<vmem>>, vector<32x128xf32>,
    %c0_23 = arith.constant 0 : index
    %c0_24 = arith.constant 0 : index
    %43 = vector.load %arg7[%c0_23, %c0_24] : memref<32x128xf32, #tpu.memory_space<vmem>>, vector<32x128xf32>
    %c512 = arith.constant 512 : index
    %c0_25 = arith.constant 0 : index
    %44 = vector.load %arg3[%c512, %c0_25] : memref<1536x128xbf16, #tpu.memory_space<vmem>>, vector<128x128xbf16>
    %45 = arith.truncf %43 : vector<32x128xf32> to vector<32x128xbf16>
    %cst_26 = arith.constant dense<0.000000e+00> : vector<32x128xf32>
    %46 = tpu.matmul %45, %44, %cst_26 {dimension_numbers = #tpu.dot_dimension_numbers<[1], [0], [0], [1], [0, 0, 1, 1], [], []>} : vector<32x128xbf16>, vector<128x128xbf16>, vector<32x128xf32> -> vector<32x128xf32>
    %c355 = arith.constant 355 : index
    %c0_27 = arith.constant 0 : index
    %47 = vector.load %arg5[%c355, %c0_27] : memref<368x128xf32, #tpu.memory_space<vmem>>, vector<1x128xf32>
    %48 = vector.broadcast %47 : vector<1x128xf32> to vector<32x128xf32>
    %49 = arith.addf %46, %48 : vector<32x128xf32>
    %50 = arith.addf %49, %0 : vector<32x128xf32>
    %c356 = arith.constant 356 : index
    %c0_28 = arith.constant 0 : index
    %51 = vector.load %arg5[%c356, %c0_28] : memref<368x128xf32, #tpu.memory_space<vmem>>, vector<1x128xf32>
    %c357 = arith.constant 357 : index
    %c0_29 = arith.constant 0 : index
    %52 = vector.load %arg5[%c357, %c0_29] : memref<368x128xf32, #tpu.memory_space<vmem>>, vector<1x128xf32>
    %cst_30 = arith.constant dense<0.000000e+00> : vector<32xf32>
    %53 = vector.multi_reduction <add>, %50, %cst_30 [1] : vector<32x128xf32> to vector<32xf32>
    %54 = vector.shape_cast %53 : vector<32xf32> to vector<32x1xf32>
    %cst_31 = arith.constant 1.280000e+02 : f32
    %55 = vector.broadcast %cst_31 : f32 to vector<32x1xf32>
    %56 = arith.divf %54, %55 : vector<32x1xf32>
    %57 = vector.broadcast %56 : vector<32x1xf32> to vector<32x128xf32>
    %58 = arith.subf %50, %57 : vector<32x128xf32>
    %59 = arith.mulf %58, %58 : vector<32x128xf32>
    %cst_32 = arith.constant dense<0.000000e+00> : vector<32xf32>
    %60 = vector.multi_reduction <add>, %59, %cst_32 [1] : vector<32x128xf32> to vector<32xf32>
    %61 = vector.shape_cast %60 : vector<32xf32> to vector<32x1xf32>
    %cst_33 = arith.constant 1.280000e+02 : f32
    %62 = vector.broadcast %cst_33 : f32 to vector<32x1xf32>
    %63 = arith.divf %61, %62 : vector<32x1xf32>
    %64 = vector.broadcast %56 : vector<32x1xf32> to vector<32x128xf32>
    %65 = arith.subf %50, %64 : vector<32x128xf32>
    %cst_34 = arith.constant 9.99999974E-6 : f32
    %66 = vector.broadcast %cst_34 : f32 to vector<32x1xf32>
    %67 = arith.addf %63, %66 : vector<32x1xf32>
    %68 = math.rsqrt %67 : vector<32x1xf32>
    %69 = vector.broadcast %68 : vector<32x1xf32> to vector<32x128xf32>
    %70 = arith.mulf %65, %69 : vector<32x128xf32>
    %71 = vector.broadcast %51 : vector<1x128xf32> to vector<32x128xf32>
    %72 = arith.mulf %70, %71 : vector<32x128xf32>
    %73 = vector.broadcast %52 : vector<1x128xf32> to vector<32x128xf32>
    %74 = arith.addf %72, %73 : vector<32x128xf32>
    %c0_35 = arith.constant 0 : index
    %c0_36 = arith.constant 0 : index
    %75 = vector.load %arg4[%c0_35, %c0_36] : memref<128x384xbf16, #tpu.memory_space<vmem>>, vector<128x384xbf16>
    %76 = arith.truncf %74 : vector<32x128xf32> to vector<32x128xbf16>
    %cst_37 = arith.constant dense<0.000000e+00> : vector<32x384xf32>
    %77 = tpu.matmul %76, %75, %cst_37 {dimension_numbers = #tpu.dot_dimension_numbers<[1], [0], [0], [1], [0, 0, 1, 1], [], []>} : vector<32x128xbf16>, vector<128x384xbf16>, vector<32x384xf32> -> vector<32x384xf32>
    %c32 = arith.constant 32 : index
    %c0_38 = arith.constant 0 : index
    %78 = vector.load %arg5[%c32, %c0_38] : memref<368x128xf32, #tpu.memory_space<vmem>>, vector<32x128xf32>
    %c64 = arith.constant 64 : index
    %c0_39 = arith.constant 0 : index
    %79 = vector.load %arg5[%c64, %c0_39] : memref<368x128xf32, #tpu.memory_space<vmem>>, vector<32x128xf32>
    %c358 = arith.constant 358 : index
    %c0_40 = arith.constant 0 : index
    %80 = vector.load %arg5[%c358, %c0_40] : memref<368x128xf32, #tpu.memory_space<vmem>>, vector<1x128xf32>
    %81 = vector.extract_strided_slice %77 {offsets = [0, 0], sizes = [32, 128], strides = [1, 1]} : vector<32x384xf32> to vector<32x128xf32>
    %82 = arith.addf %81, %78 : vector<32x128xf32>
    %cst_41 = arith.constant 2.500000e-01 : f32
    %83 = vector.broadcast %cst_41 : f32 to vector<32x128xf32>
    %84 = arith.mulf %82, %83 : vector<32x128xf32>
    %85 = vector.extract_strided_slice %77 {offsets = [0, 128], sizes = [32, 128], strides = [1, 1]} : vector<32x384xf32> to vector<32x128xf32>
    %86 = arith.addf %85, %79 : vector<32x128xf32>
    %87 = vector.extract_strided_slice %77 {offsets = [0, 256], sizes = [32, 128], strides = [1, 1]} : vector<32x384xf32> to vector<32x128xf32>
    %88 = vector.broadcast %80 : vector<1x128xf32> to vector<32x128xf32>
    %89 = arith.addf %87, %88 : vector<32x128xf32>
    %90 = arith.truncf %84 : vector<32x128xf32> to vector<32x128xbf16>
    %91 = tpu.concatenate %90, %90, %90, %90, %90, %90, %90, %90 in 0 : vector<32x128xbf16>, vector<32x128xbf16>, vector<32x128xbf16>, vector<32x128xbf16>, vector<32x128xbf16>, vector<32x128xbf16>, vector<32x128xbf16>, vector<32x128xbf16> -> vector<256x128xbf16>
    %c1280 = arith.constant 1280 : index
    %c0_42 = arith.constant 0 : index
    %92 = vector.load %arg3[%c1280, %c0_42] : memref<1536x128xbf16, #tpu.memory_space<vmem>>, vector<256x128xbf16>
    %93 = arith.mulf %91, %92 : vector<256x128xbf16>
    %94 = arith.truncf %86 : vector<32x128xf32> to vector<32x128xbf16>
    %cst_43 = arith.constant dense<0.000000e+00> : vector<256x32xf32>
    %95 = tpu.matmul %93, %94, %cst_43 {dimension_numbers = #tpu.dot_dimension_numbers<[1], [1], [0], [0], [0, 0, 1, 0], [], []>} : vector<256x128xbf16>, vector<32x128xbf16>, vector<256x32xf32> -> vector<256x32xf32>
    %cst_44 = arith.constant dense<0xFF800000> : vector<256xf32>
    %96 = vector.multi_reduction <maximumf>, %95, %cst_44 [1] : vector<256x32xf32> to vector<256xf32>
    %97 = vector.shape_cast %96 : vector<256xf32> to vector<256x1xf32>
    %98 = vector.broadcast %97 : vector<256x1xf32> to vector<256x32xf32>
    %99 = arith.subf %95, %98 : vector<256x32xf32>
    %100 = math.exp %99 : vector<256x32xf32>
    %cst_45 = arith.constant dense<0.000000e+00> : vector<256xf32>
    %101 = vector.multi_reduction <add>, %100, %cst_45 [1] : vector<256x32xf32> to vector<256xf32>
    %102 = vector.shape_cast %101 : vector<256xf32> to vector<256x1xf32>
    %103 = tpu.reciprocal %102 : vector<256x1xf32> -> vector<256x1xf32>
    %104 = vector.broadcast %103 : vector<256x1xf32> to vector<256x32xf32>
    %105 = arith.mulf %100, %104 : vector<256x32xf32>
    %106 = arith.truncf %105 : vector<256x32xf32> to vector<256x32xbf16>
    %107 = arith.truncf %89 : vector<32x128xf32> to vector<32x128xbf16>
    %cst_46 = arith.constant dense<0.000000e+00> : vector<256x128xf32>
    %108 = tpu.matmul %106, %107, %cst_46 {dimension_numbers = #tpu.dot_dimension_numbers<[1], [0], [0], [1], [0, 0, 1, 1], [], []>} : vector<256x32xbf16>, vector<32x128xbf16>, vector<256x128xf32> -> vector<256x128xf32>
    %c96_47 = arith.constant 96 : index
    %c0_48 = arith.constant 0 : index
    %109 = vector.load %arg5[%c96_47, %c0_48] : memref<368x128xf32, #tpu.memory_space<vmem>>, vector<256x128xf32>
    %110 = arith.mulf %108, %109 : vector<256x128xf32>
    %111 = vector.shape_cast %110 : vector<256x128xf32> to vector<8x32x128xf32>
    %cst_49 = arith.constant dense<0.000000e+00> : vector<32x128xf32>
    %112 = vector.multi_reduction <add>, %111, %cst_49 [0] : vector<8x32x128xf32> to vector<32x128xf32>
    %c0_50 = arith.constant 0 : index
    %c0_51 = arith.constant 0 : index
    %113 = vector.load %arg7[%c0_50, %c0_51] : memref<32x128xf32, #tpu.memory_space<vmem>>, vector<32x128xf32>
    tpu.vector_store %arg7[%c0_50, %c0_51], %112 {strides = array<i32>} : memref<32x128xf32, #tpu.memory_space<vmem>>, vector<32x128xf32>,
    %c0_52 = arith.constant 0 : index
    %c0_53 = arith.constant 0 : index
    %114 = vector.load %arg7[%c0_52, %c0_53] : memref<32x128xf32, #tpu.memory_space<vmem>>, vector<32x128xf32>
    %c640 = arith.constant 640 : index
    %c0_54 = arith.constant 0 : index
    %115 = vector.load %arg3[%c640, %c0_54] : memref<1536x128xbf16, #tpu.memory_space<vmem>>, vector<128x128xbf16>
    %116 = arith.truncf %114 : vector<32x128xf32> to vector<32x128xbf16>
    %cst_55 = arith.constant dense<0.000000e+00> : vector<32x128xf32>
    %117 = tpu.matmul %116, %115, %cst_55 {dimension_numbers = #tpu.dot_dimension_numbers<[1], [0], [0], [1], [0, 0, 1, 1], [], []>} : vector<32x128xbf16>, vector<128x128xbf16>, vector<32x128xf32> -> vector<32x128xf32>
    %c359 = arith.constant 359 : index
    %c0_56 = arith.constant 0 : index
    %118 = vector.load %arg5[%c359, %c0_56] : memref<368x128xf32, #tpu.memory_space<vmem>>, vector<1x128xf32>
    %119 = vector.broadcast %118 : vector<1x128xf32> to vector<32x128xf32>
    %120 = arith.addf %117, %119 : vector<32x128xf32>
    %121 = arith.addf %74, %120 : vector<32x128xf32>
    %c360 = arith.constant 360 : index
    %c0_57 = arith.constant 0 : index
    %122 = vector.load %arg5[%c360, %c0_57] : memref<368x128xf32, #tpu.memory_space<vmem>>, vector<1x128xf32>
    %c361 = arith.constant 361 : index
    %c0_58 = arith.constant 0 : index
    %123 = vector.load %arg5[%c361, %c0_58] : memref<368x128xf32, #tpu.memory_space<vmem>>, vector<1x128xf32>
    %cst_59 = arith.constant dense<0.000000e+00> : vector<32xf32>
    %124 = vector.multi_reduction <add>, %121, %cst_59 [1] : vector<32x128xf32> to vector<32xf32>
    %125 = vector.shape_cast %124 : vector<32xf32> to vector<32x1xf32>
    %cst_60 = arith.constant 1.280000e+02 : f32
    %126 = vector.broadcast %cst_60 : f32 to vector<32x1xf32>
    %127 = arith.divf %125, %126 : vector<32x1xf32>
    %128 = vector.broadcast %127 : vector<32x1xf32> to vector<32x128xf32>
    %129 = arith.subf %121, %128 : vector<32x128xf32>
    %130 = arith.mulf %129, %129 : vector<32x128xf32>
    %cst_61 = arith.constant dense<0.000000e+00> : vector<32xf32>
    %131 = vector.multi_reduction <add>, %130, %cst_61 [1] : vector<32x128xf32> to vector<32xf32>
    %132 = vector.shape_cast %131 : vector<32xf32> to vector<32x1xf32>
    %cst_62 = arith.constant 1.280000e+02 : f32
    %133 = vector.broadcast %cst_62 : f32 to vector<32x1xf32>
    %134 = arith.divf %132, %133 : vector<32x1xf32>
    %135 = vector.broadcast %127 : vector<32x1xf32> to vector<32x128xf32>
    %136 = arith.subf %121, %135 : vector<32x128xf32>
    %cst_63 = arith.constant 9.99999974E-6 : f32
    %137 = vector.broadcast %cst_63 : f32 to vector<32x1xf32>
    %138 = arith.addf %134, %137 : vector<32x1xf32>
    %139 = math.rsqrt %138 : vector<32x1xf32>
    %140 = vector.broadcast %139 : vector<32x1xf32> to vector<32x128xf32>
    %141 = arith.mulf %136, %140 : vector<32x128xf32>
    %142 = vector.broadcast %122 : vector<1x128xf32> to vector<32x128xf32>
    %143 = arith.mulf %141, %142 : vector<32x128xf32>
    %144 = vector.broadcast %123 : vector<1x128xf32> to vector<32x128xf32>
    %145 = arith.addf %143, %144 : vector<32x128xf32>
    %c768 = arith.constant 768 : index
    %c0_64 = arith.constant 0 : index
    %146 = vector.load %arg3[%c768, %c0_64] : memref<1536x128xbf16, #tpu.memory_space<vmem>>, vector<128x128xbf16>
    %147 = arith.truncf %145 : vector<32x128xf32> to vector<32x128xbf16>
    %cst_65 = arith.constant dense<0.000000e+00> : vector<32x128xf32>
    %148 = tpu.matmul %147, %146, %cst_65 {dimension_numbers = #tpu.dot_dimension_numbers<[1], [0], [0], [1], [0, 0, 1, 1], [], []>} : vector<32x128xbf16>, vector<128x128xbf16>, vector<32x128xf32> -> vector<32x128xf32>
    %c362 = arith.constant 362 : index
    %c0_66 = arith.constant 0 : index
    %149 = vector.load %arg5[%c362, %c0_66] : memref<368x128xf32, #tpu.memory_space<vmem>>, vector<1x128xf32>
    %150 = vector.broadcast %149 : vector<1x128xf32> to vector<32x128xf32>
    %151 = arith.addf %148, %150 : vector<32x128xf32>
    %cst_67 = arith.constant 0.000000e+00 : f32
    %152 = vector.broadcast %cst_67 : f32 to vector<32x128xf32>
    %153 = arith.maximumf %151, %152 : vector<32x128xf32>
    %c896 = arith.constant 896 : index
    %c0_68 = arith.constant 0 : index
    %154 = vector.load %arg3[%c896, %c0_68] : memref<1536x128xbf16, #tpu.memory_space<vmem>>, vector<128x128xbf16>
    %155 = arith.truncf %153 : vector<32x128xf32> to vector<32x128xbf16>
    %cst_69 = arith.constant dense<0.000000e+00> : vector<32x128xf32>
    %156 = tpu.matmul %155, %154, %cst_69 {dimension_numbers = #tpu.dot_dimension_numbers<[1], [0], [0], [1], [0, 0, 1, 1], [], []>} : vector<32x128xbf16>, vector<128x128xbf16>, vector<32x128xf32> -> vector<32x128xf32>
    %c363 = arith.constant 363 : index
    %c0_70 = arith.constant 0 : index
    %157 = vector.load %arg5[%c363, %c0_70] : memref<368x128xf32, #tpu.memory_space<vmem>>, vector<1x128xf32>
    %158 = vector.broadcast %157 : vector<1x128xf32> to vector<32x128xf32>
    %159 = arith.addf %156, %158 : vector<32x128xf32>
    %160 = arith.addf %145, %159 : vector<32x128xf32>
    %c364 = arith.constant 364 : index
    %c0_71 = arith.constant 0 : index
    %161 = vector.load %arg5[%c364, %c0_71] : memref<368x128xf32, #tpu.memory_space<vmem>>, vector<1x128xf32>
    %c365 = arith.constant 365 : index
    %c0_72 = arith.constant 0 : index
    %162 = vector.load %arg5[%c365, %c0_72] : memref<368x128xf32, #tpu.memory_space<vmem>>, vector<1x128xf32>
    %cst_73 = arith.constant dense<0.000000e+00> : vector<32xf32>
    %163 = vector.multi_reduction <add>, %160, %cst_73 [1] : vector<32x128xf32> to vector<32xf32>
    %164 = vector.shape_cast %163 : vector<32xf32> to vector<32x1xf32>
    %cst_74 = arith.constant 1.280000e+02 : f32
    %165 = vector.broadcast %cst_74 : f32 to vector<32x1xf32>
    %166 = arith.divf %164, %165 : vector<32x1xf32>
    %167 = vector.broadcast %166 : vector<32x1xf32> to vector<32x128xf32>
    %168 = arith.subf %160, %167 : vector<32x128xf32>
    %169 = arith.mulf %168, %168 : vector<32x128xf32>
    %cst_75 = arith.constant dense<0.000000e+00> : vector<32xf32>
    %170 = vector.multi_reduction <add>, %169, %cst_75 [1] : vector<32x128xf32> to vector<32xf32>
    %171 = vector.shape_cast %170 : vector<32xf32> to vector<32x1xf32>
    %cst_76 = arith.constant 1.280000e+02 : f32
    %172 = vector.broadcast %cst_76 : f32 to vector<32x1xf32>
    %173 = arith.divf %171, %172 : vector<32x1xf32>
    %174 = vector.broadcast %166 : vector<32x1xf32> to vector<32x128xf32>
    %175 = arith.subf %160, %174 : vector<32x128xf32>
    %cst_77 = arith.constant 9.99999974E-6 : f32
    %176 = vector.broadcast %cst_77 : f32 to vector<32x1xf32>
    %177 = arith.addf %173, %176 : vector<32x1xf32>
    %178 = math.rsqrt %177 : vector<32x1xf32>
    %179 = vector.broadcast %178 : vector<32x1xf32> to vector<32x128xf32>
    %180 = arith.mulf %175, %179 : vector<32x128xf32>
    %181 = vector.broadcast %161 : vector<1x128xf32> to vector<32x128xf32>
    %182 = arith.mulf %180, %181 : vector<32x128xf32>
    %183 = vector.broadcast %162 : vector<1x128xf32> to vector<32x128xf32>
    %184 = arith.addf %182, %183 : vector<32x128xf32>
    %185 = arith.truncf %184 : vector<32x128xf32> to vector<32x128xbf16>
    %c0_78 = arith.constant 0 : index
    %c0_79 = arith.constant 0 : index
    %186 = vector.load %arg6[%c0_78, %c0_79] : memref<32x128xbf16, #tpu.memory_space<vmem>>, vector<32x128xbf16>
    tpu.vector_store %arg6[%c0_78, %c0_79], %185 {strides = array<i32>} : memref<32x128xbf16, #tpu.memory_space<vmem>>, vector<32x128xbf16>,
    return
  }
  func.func @transform_0(%arg0: i32) -> (i32, i32) {
    %c0_i32 = arith.constant 0 : i32
    %c0_i32_0 = arith.constant 0 : i32
    return %arg0, %c0_i32 : i32, i32
  }
  func.func @transform_1(%arg0: i32) -> (i32, i32) {
    %c0_i32 = arith.constant 0 : i32
    %c0_i32_0 = arith.constant 0 : i32
    return %arg0, %c0_i32 : i32, i32
  }
  func.func @transform_2(%arg0: i32) -> (i32, i32) {
    %c0_i32 = arith.constant 0 : i32
    %c0_i32_0 = arith.constant 0 : i32
    %c0_i32_1 = arith.constant 0 : i32
    return %c0_i32, %c0_i32_0 : i32, i32
  }
  func.func @transform_3(%arg0: i32) -> (i32, i32) {
    %c0_i32 = arith.constant 0 : i32
    %c0_i32_0 = arith.constant 0 : i32
    %c0_i32_1 = arith.constant 0 : i32
    return %c0_i32, %c0_i32_0 : i32, i32
  }
  func.func @transform_4(%arg0: i32) -> (i32, i32) {
    %c0_i32 = arith.constant 0 : i32
    %c0_i32_0 = arith.constant 0 : i32
    %c0_i32_1 = arith.constant 0 : i32
    return %c0_i32, %c0_i32_0 : i32, i32
  }
  func.func @transform_5(%arg0: i32) -> (i32, i32) {
    %c0_i32 = arith.constant 0 : i32
    %c0_i32_0 = arith.constant 0 : i32
    return %arg0, %c0_i32 : i32, i32
  }
}

module attributes {stable_mosaic.version = 11 : i64} {
  func.func @head_kernel(%arg0: memref<2x4096xbf16, #tpu.memory_space<vmem>>, %arg1: memref<4480x128xbf16, #tpu.memory_space<vmem>>, %arg2: memref<8x128xf32, #tpu.memory_space<vmem>>, %arg3: memref<2x128xf32, #tpu.memory_space<vmem>>, %arg4: memref<2x128xf32, #tpu.memory_space<vmem>>, %arg5: memref<2x128xf32, #tpu.memory_space<vmem>>) attributes {dimension_semantics = [], scalar_prefetch = 0 : i64, scratch_operands = 0 : i64, tpu.core_type = #tpu.core_type<tc>} {
    %c0 = arith.constant 0 : index
    %c0_0 = arith.constant 0 : index
    %0 = vector.load %arg0[%c0, %c0_0] : memref<2x4096xbf16, #tpu.memory_space<vmem>>, vector<2x4096xbf16>
    %c0_1 = arith.constant 0 : index
    %c0_2 = arith.constant 0 : index
    %1 = vector.load %arg1[%c0_1, %c0_2] : memref<4480x128xbf16, #tpu.memory_space<vmem>>, vector<4096x128xbf16>
    %cst = arith.constant dense<0.000000e+00> : vector<2x128xf32>
    %2 = tpu.matmul %0, %1, %cst {dimension_numbers = #tpu.dot_dimension_numbers<[1], [0], [0], [1], [0, 0, 1, 1], [], []>} : vector<2x4096xbf16>, vector<4096x128xbf16>, vector<2x128xf32> -> vector<2x128xf32>
    %c0_3 = arith.constant 0 : index
    %c0_4 = arith.constant 0 : index
    %3 = vector.load %arg2[%c0_3, %c0_4] : memref<8x128xf32, #tpu.memory_space<vmem>>, vector<1x128xf32>
    %4 = vector.broadcast %3 : vector<1x128xf32> to vector<2x128xf32>
    %5 = arith.addf %2, %4 : vector<2x128xf32>
    %c4096 = arith.constant 4096 : index
    %c0_5 = arith.constant 0 : index
    %6 = vector.load %arg1[%c4096, %c0_5] : memref<4480x128xbf16, #tpu.memory_space<vmem>>, vector<128x128xbf16>
    %7 = arith.truncf %5 : vector<2x128xf32> to vector<2x128xbf16>
    %cst_6 = arith.constant dense<0.000000e+00> : vector<2x128xf32>
    %8 = tpu.matmul %7, %6, %cst_6 {dimension_numbers = #tpu.dot_dimension_numbers<[1], [0], [0], [1], [0, 0, 1, 1], [], []>} : vector<2x128xbf16>, vector<128x128xbf16>, vector<2x128xf32> -> vector<2x128xf32>
    %c1 = arith.constant 1 : index
    %c0_7 = arith.constant 0 : index
    %9 = vector.load %arg2[%c1, %c0_7] : memref<8x128xf32, #tpu.memory_space<vmem>>, vector<1x128xf32>
    %10 = vector.broadcast %9 : vector<1x128xf32> to vector<2x128xf32>
    %11 = arith.addf %8, %10 : vector<2x128xf32>
    %c2 = arith.constant 2 : index
    %c0_8 = arith.constant 0 : index
    %12 = vector.load %arg2[%c2, %c0_8] : memref<8x128xf32, #tpu.memory_space<vmem>>, vector<1x128xf32>
    %c3 = arith.constant 3 : index
    %c0_9 = arith.constant 0 : index
    %13 = vector.load %arg2[%c3, %c0_9] : memref<8x128xf32, #tpu.memory_space<vmem>>, vector<1x128xf32>
    %cst_10 = arith.constant dense<0.000000e+00> : vector<128xf32>
    %14 = vector.multi_reduction <add>, %11, %cst_10 [0] : vector<2x128xf32> to vector<128xf32>
    %15 = vector.shape_cast %14 : vector<128xf32> to vector<1x128xf32>
    %cst_11 = arith.constant 2.000000e+00 : f32
    %16 = vector.broadcast %cst_11 : f32 to vector<1x128xf32>
    %17 = arith.divf %15, %16 : vector<1x128xf32>
    %18 = vector.broadcast %17 : vector<1x128xf32> to vector<2x128xf32>
    %19 = arith.subf %11, %18 : vector<2x128xf32>
    %20 = arith.mulf %19, %19 : vector<2x128xf32>
    %cst_12 = arith.constant dense<0.000000e+00> : vector<128xf32>
    %21 = vector.multi_reduction <add>, %20, %cst_12 [0] : vector<2x128xf32> to vector<128xf32>
    %22 = vector.shape_cast %21 : vector<128xf32> to vector<1x128xf32>
    %cst_13 = arith.constant 2.000000e+00 : f32
    %23 = vector.broadcast %cst_13 : f32 to vector<1x128xf32>
    %24 = arith.divf %22, %23 : vector<1x128xf32>
    %25 = vector.broadcast %17 : vector<1x128xf32> to vector<2x128xf32>
    %26 = arith.subf %11, %25 : vector<2x128xf32>
    %cst_14 = arith.constant 9.99999974E-6 : f32
    %27 = vector.broadcast %cst_14 : f32 to vector<1x128xf32>
    %28 = arith.addf %24, %27 : vector<1x128xf32>
    %29 = math.rsqrt %28 : vector<1x128xf32>
    %30 = vector.broadcast %29 : vector<1x128xf32> to vector<2x128xf32>
    %31 = arith.mulf %26, %30 : vector<2x128xf32>
    %32 = vector.broadcast %12 : vector<1x128xf32> to vector<2x128xf32>
    %33 = arith.mulf %31, %32 : vector<2x128xf32>
    %34 = vector.broadcast %13 : vector<1x128xf32> to vector<2x128xf32>
    %35 = arith.addf %33, %34 : vector<2x128xf32>
    %cst_15 = arith.constant 0.000000e+00 : f32
    %36 = vector.broadcast %cst_15 : f32 to vector<2x128xf32>
    %37 = arith.maximumf %35, %36 : vector<2x128xf32>
    %c4224 = arith.constant 4224 : index
    %c0_16 = arith.constant 0 : index
    %38 = vector.load %arg1[%c4224, %c0_16] : memref<4480x128xbf16, #tpu.memory_space<vmem>>, vector<128x128xbf16>
    %39 = arith.truncf %37 : vector<2x128xf32> to vector<2x128xbf16>
    %cst_17 = arith.constant dense<0.000000e+00> : vector<2x128xf32>
    %40 = tpu.matmul %39, %38, %cst_17 {dimension_numbers = #tpu.dot_dimension_numbers<[1], [0], [0], [1], [0, 0, 1, 1], [], []>} : vector<2x128xbf16>, vector<128x128xbf16>, vector<2x128xf32> -> vector<2x128xf32>
    %c4 = arith.constant 4 : index
    %c0_18 = arith.constant 0 : index
    %41 = vector.load %arg2[%c4, %c0_18] : memref<8x128xf32, #tpu.memory_space<vmem>>, vector<1x128xf32>
    %42 = vector.broadcast %41 : vector<1x128xf32> to vector<2x128xf32>
    %43 = arith.addf %40, %42 : vector<2x128xf32>
    %c5 = arith.constant 5 : index
    %c0_19 = arith.constant 0 : index
    %44 = vector.load %arg2[%c5, %c0_19] : memref<8x128xf32, #tpu.memory_space<vmem>>, vector<1x128xf32>
    %c6 = arith.constant 6 : index
    %c0_20 = arith.constant 0 : index
    %45 = vector.load %arg2[%c6, %c0_20] : memref<8x128xf32, #tpu.memory_space<vmem>>, vector<1x128xf32>
    %cst_21 = arith.constant dense<0.000000e+00> : vector<128xf32>
    %46 = vector.multi_reduction <add>, %43, %cst_21 [0] : vector<2x128xf32> to vector<128xf32>
    %47 = vector.shape_cast %46 : vector<128xf32> to vector<1x128xf32>
    %cst_22 = arith.constant 2.000000e+00 : f32
    %48 = vector.broadcast %cst_22 : f32 to vector<1x128xf32>
    %49 = arith.divf %47, %48 : vector<1x128xf32>
    %50 = vector.broadcast %49 : vector<1x128xf32> to vector<2x128xf32>
    %51 = arith.subf %43, %50 : vector<2x128xf32>
    %52 = arith.mulf %51, %51 : vector<2x128xf32>
    %cst_23 = arith.constant dense<0.000000e+00> : vector<128xf32>
    %53 = vector.multi_reduction <add>, %52, %cst_23 [0] : vector<2x128xf32> to vector<128xf32>
    %54 = vector.shape_cast %53 : vector<128xf32> to vector<1x128xf32>
    %cst_24 = arith.constant 2.000000e+00 : f32
    %55 = vector.broadcast %cst_24 : f32 to vector<1x128xf32>
    %56 = arith.divf %54, %55 : vector<1x128xf32>
    %57 = vector.broadcast %49 : vector<1x128xf32> to vector<2x128xf32>
    %58 = arith.subf %43, %57 : vector<2x128xf32>
    %cst_25 = arith.constant 9.99999974E-6 : f32
    %59 = vector.broadcast %cst_25 : f32 to vector<1x128xf32>
    %60 = arith.addf %56, %59 : vector<1x128xf32>
    %61 = math.rsqrt %60 : vector<1x128xf32>
    %62 = vector.broadcast %61 : vector<1x128xf32> to vector<2x128xf32>
    %63 = arith.mulf %58, %62 : vector<2x128xf32>
    %64 = vector.broadcast %44 : vector<1x128xf32> to vector<2x128xf32>
    %65 = arith.mulf %63, %64 : vector<2x128xf32>
    %66 = vector.broadcast %45 : vector<1x128xf32> to vector<2x128xf32>
    %67 = arith.addf %65, %66 : vector<2x128xf32>
    %cst_26 = arith.constant 0.000000e+00 : f32
    %68 = vector.broadcast %cst_26 : f32 to vector<2x128xf32>
    %69 = arith.maximumf %67, %68 : vector<2x128xf32>
    %c4352 = arith.constant 4352 : index
    %c0_27 = arith.constant 0 : index
    %70 = vector.load %arg1[%c4352, %c0_27] : memref<4480x128xbf16, #tpu.memory_space<vmem>>, vector<128x128xbf16>
    %71 = arith.truncf %69 : vector<2x128xf32> to vector<2x128xbf16>
    %cst_28 = arith.constant dense<0.000000e+00> : vector<2x128xf32>
    %72 = tpu.matmul %71, %70, %cst_28 {dimension_numbers = #tpu.dot_dimension_numbers<[1], [0], [0], [1], [0, 0, 1, 1], [], []>} : vector<2x128xbf16>, vector<128x128xbf16>, vector<2x128xf32> -> vector<2x128xf32>
    %c7 = arith.constant 7 : index
    %c0_29 = arith.constant 0 : index
    %73 = vector.load %arg2[%c7, %c0_29] : memref<8x128xf32, #tpu.memory_space<vmem>>, vector<1x128xf32>
    %74 = vector.broadcast %73 : vector<1x128xf32> to vector<2x128xf32>
    %75 = arith.addf %72, %74 : vector<2x128xf32>
    %c0_30 = arith.constant 0 : index
    %c0_31 = arith.constant 0 : index
    %76 = vector.load %arg3[%c0_30, %c0_31] : memref<2x128xf32, #tpu.memory_space<vmem>>, vector<2x128xf32>
    tpu.vector_store %arg3[%c0_30, %c0_31], %75 {strides = array<i32>} : memref<2x128xf32, #tpu.memory_space<vmem>>, vector<2x128xf32>,
    %c0_32 = arith.constant 0 : index
    %c0_33 = arith.constant 0 : index
    %77 = vector.load %arg4[%c0_32, %c0_33] : memref<2x128xf32, #tpu.memory_space<vmem>>, vector<2x128xf32>
    tpu.vector_store %arg4[%c0_32, %c0_33], %37 {strides = array<i32>} : memref<2x128xf32, #tpu.memory_space<vmem>>, vector<2x128xf32>,
    %c0_34 = arith.constant 0 : index
    %c0_35 = arith.constant 0 : index
    %78 = vector.load %arg5[%c0_34, %c0_35] : memref<2x128xf32, #tpu.memory_space<vmem>>, vector<2x128xf32>
    tpu.vector_store %arg5[%c0_34, %c0_35], %5 {strides = array<i32>} : memref<2x128xf32, #tpu.memory_space<vmem>>, vector<2x128xf32>,
    return
  }
}

</mosaic_0001>

<llo_original>
// kernel: ppo_actor_forward.2
$region0: #{ppo_actor_forward.2}
  #allocation0 [shape = 'u32[]', space=smem, size = 0x4, offset = 0x4, fixed_abs, tag = 'smem constant byte address 0x4 - core index']
  #allocation1 [shape = 'u32[144,128]{1,0:T(1,128)}', space=vmem, size = 0x12000, scoped, tag = 'internal scratch']
  #allocation2 [shape = 'f32[32,128]{1,0:T(8,128)}', space=vmem, size = 0x4000, scoped, tag = 'scratch operand']
  %s0 = inlined_call_operand.vmem [shape: bf16[128,256], index: 0, kind: input, shape index: {}]
  %s1 = inlined_call_operand.vmem [shape: bf16[128,128], index: 1, kind: input, shape index: {}]
  %s2 = inlined_call_operand.vmem [shape: bf16[1536,128], index: 2, kind: input, shape index: {}]
  %s3 = inlined_call_operand.vmem [shape: bf16[128,384], index: 3, kind: input, shape index: {}]
  %s4 = inlined_call_operand.vmem [shape: f32[368,128], index: 4, kind: input, shape index: {}]
  %s5 = inlined_call_operand.vmem [shape: bf16[64,128], index: 5, kind: output, shape index: {}]
  %s6 = sld [smem:[#allocation0]]
  $region53: #{ppo_actor_forward.2} parent=0
    _
  %s8 = ssub.s32 1, %s6
  %s9 = scalar_select 0, %s8, %s6
  loop: start=0, step=1, limit=4
  $region2: #{ppo_actor_forward.2} parent=0 // loop_pre_header
    _
  $region3: #{ppo_actor_forward.2} parent=0 // loop_header
    %s11 = sphi 0, %s15
    %p12 = scmp.ge.s32.totalorder %s11, 4
    %s21 = sphi 0, %s23
    %s24 = sphi 0, %s21
    %s25 = sphi 0, %s24
    %s41 = sphi 0, %s25
    %s47 = sphi 0, %s49
    %s50 = sphi 0, %s47
    %s51 = sphi 0, %s50
    %s67 = sphi 0, %s51
    %s71 = sphi 0, %s71
    %s73 = sphi 0, %s71
    %s74 = sphi 0, %s73
    %s88 = sphi 0, %s74
    %s92 = sphi 0, %s92
    %s94 = sphi 0, %s92
    %s95 = sphi 0, %s94
    %s109 = sphi 0, %s95
    %s113 = sphi 0, %s113
    %s115 = sphi 0, %s113
    %s116 = sphi 0, %s115
    %s130 = sphi 0, %s116
    %s136 = sphi 0, %s138
    %s139 = sphi 0, %s136
    %s140 = sphi 0, %s139
    %s156 = sphi 0, %s140
  $region4: #{ppo_actor_forward.2} parent=0 // loop_header_branch
    %14 = sbr.rel (%p12) target = $region8
  $region5: #{ppo_actor_forward.2} parent=0 // loop_body
    %s16 = ssub.s32 %s11, 1
    %s17 = ssub.s32 %s11, 2
    %s18 = sadd.s32 %s11, 1
    %s19 = ssub.s32 %s11, %s18
    %p20 = scmp.eq.s32.totalorder %s19, 0
    %s22 = sadd.s32 %s21, 1
    %s23 = scalar_select %p20, %s21, %s22
    %p26 = pneg %p20
    %p27 = scmp.eq.s32.totalorder %s11, 1
    %p28 = por %p26, %p27
    %p29 = scmp.ne.s32.totalorder %s21, %s24
    %p30 = scmp.eq.s32.totalorder %s11, 0
    %p31 = por %p29, %p30
    %p32 = scmp.ne.s32.totalorder %s21, %s24
    %p33 = scmp.eq.s32.totalorder %s16, 1
    %p34 = por %p32, %p33
    %p35 = scmp.ne.s32.totalorder %s24, %s25
    %p36 = scmp.eq.s32.totalorder %s16, 0
    %p37 = por %p35, %p36
    %p38 = scmp.ne.s32.totalorder %s24, %s25
    %p39 = scmp.eq.s32.totalorder %s17, 1
    %p40 = por %p38, %p39
    %p42 = scmp.ne.s32.totalorder %s25, %s41
    %p43 = scmp.eq.s32.totalorder %s17, 0
    %p44 = por %p42, %p43
    %s45 = ssub.s32 %s11, %s18
    %p46 = scmp.eq.s32.totalorder %s45, 0
    %s48 = sadd.s32 %s47, 1
    %s49 = scalar_select %p46, %s47, %s48
    %p52 = pneg %p46
    %p53 = scmp.eq.s32.totalorder %s11, 1
    %p54 = por %p52, %p53
    %p55 = scmp.ne.s32.totalorder %s47, %s50
    %p56 = scmp.eq.s32.totalorder %s11, 0
    %p57 = por %p55, %p56
    %p58 = scmp.ne.s32.totalorder %s47, %s50
    %p59 = scmp.eq.s32.totalorder %s16, 1
    %p60 = por %p58, %p59
    %p61 = scmp.ne.s32.totalorder %s50, %s51
    %p62 = scmp.eq.s32.totalorder %s16, 0
    %p63 = por %p61, %p62
    %p64 = scmp.ne.s32.totalorder %s50, %s51
    %p65 = scmp.eq.s32.totalorder %s17, 1
    %p66 = por %p64, %p65
    %p68 = scmp.ne.s32.totalorder %s51, %s67
    %p69 = scmp.eq.s32.totalorder %s17, 0
    %p70 = por %p68, %p69
    %s72 = sadd.s32 %s71, 1
    %p75 = scmp.eq.s32.totalorder %s11, 1
    %p76 = scmp.ne.s32.totalorder %s71, %s73
    %p77 = scmp.eq.s32.totalorder %s11, 0
    %p78 = por %p76, %p77
    %p79 = scmp.ne.s32.totalorder %s71, %s73
    %p80 = scmp.eq.s32.totalorder %s16, 1
    %p81 = por %p79, %p80
    %p82 = scmp.ne.s32.totalorder %s73, %s74
    %p83 = scmp.eq.s32.totalorder %s16, 0
    %p84 = por %p82, %p83
    %p85 = scmp.ne.s32.totalorder %s73, %s74
    %p86 = scmp.eq.s32.totalorder %s17, 1
    %p87 = por %p85, %p86
    %p89 = scmp.ne.s32.totalorder %s74, %s88
    %p90 = scmp.eq.s32.totalorder %s17, 0
    %p91 = por %p89, %p90
    %s93 = sadd.s32 %s92, 1
    %p96 = scmp.eq.s32.totalorder %s11, 1
    %p97 = scmp.ne.s32.totalorder %s92, %s94
    %p98 = scmp.eq.s32.totalorder %s11, 0
    %p99 = por %p97, %p98
    %p100 = scmp.ne.s32.totalorder %s92, %s94
    %p101 = scmp.eq.s32.totalorder %s16, 1
    %p102 = por %p100, %p101
    %p103 = scmp.ne.s32.totalorder %s94, %s95
    %p104 = scmp.eq.s32.totalorder %s16, 0
    %p105 = por %p103, %p104
    %p106 = scmp.ne.s32.totalorder %s94, %s95
    %p107 = scmp.eq.s32.totalorder %s17, 1
    %p108 = por %p106, %p107
    %p110 = scmp.ne.s32.totalorder %s95, %s109
    %p111 = scmp.eq.s32.totalorder %s17, 0
    %p112 = por %p110, %p111
    %s114 = sadd.s32 %s113, 1
    %p117 = scmp.eq.s32.totalorder %s11, 1
    %p118 = scmp.ne.s32.totalorder %s113, %s115
    %p119 = scmp.eq.s32.totalorder %s11, 0
    %p120 = por %p118, %p119
    %p121 = scmp.ne.s32.totalorder %s113, %s115
    %p122 = scmp.eq.s32.totalorder %s16, 1
    %p123 = por %p121, %p122
    %p124 = scmp.ne.s32.totalorder %s115, %s116
    %p125 = scmp.eq.s32.totalorder %s16, 0
    %p126 = por %p124, %p125
    %p127 = scmp.ne.s32.totalorder %s115, %s116
    %p128 = scmp.eq.s32.totalorder %s17, 1
    %p129 = por %p127, %p128
    %p131 = scmp.ne.s32.totalorder %s116, %s130
    %p132 = scmp.eq.s32.totalorder %s17, 0
    %p133 = por %p131, %p132
    %s134 = ssub.s32 %s11, %s18
    %p135 = scmp.eq.s32.totalorder %s134, 0
    %s137 = sadd.s32 %s136, 1
    %s138 = scalar_select %p135, %s136, %s137
    %p141 = pneg %p135
    %p142 = scmp.eq.s32.totalorder %s11, 1
    %p143 = por %p141, %p142
    %p144 = scmp.ne.s32.totalorder %s136, %s139
    %p145 = scmp.eq.s32.totalorder %s11, 0
    %p146 = por %p144, %p145
    %p147 = scmp.ne.s32.totalorder %s136, %s139
    %p148 = scmp.eq.s32.totalorder %s16, 1
    %p149 = por %p147, %p148
    %p150 = scmp.ne.s32.totalorder %s139, %s140
    %p151 = scmp.eq.s32.totalorder %s16, 0
    %p152 = por %p150, %p151
    %p153 = scmp.ne.s32.totalorder %s139, %s140
    %p154 = scmp.eq.s32.totalorder %s17, 1
    %p155 = por %p153, %p154
    %p157 = scmp.ne.s32.totalorder %s140, %s156
    %p158 = scmp.eq.s32.totalorder %s17, 0
    %p159 = por %p157, %p158
    %p160 = scmp.le.s32.totalorder 1, %s11
    %p161 = scmp.lt.s32.totalorder %s11, 3
    %p162 = pnand %p160, %p161
    %p163 = pneg %p162
    // Predicated region
    $region9: #{ppo_actor_forward.2} parent=5 // pred_check
      _
    $region10: #{ppo_actor_forward.2} parent=5 // pred_check_branch
      %165 = sbr.rel (%p162) target = $region12
    $region11: #{ppo_actor_forward.2} parent=5 // pred_region
      %s166 = ssub.s32 %s11, 1
      // Predicated region
      $region13: #{ppo_actor_forward.2} parent=11 // pred_check
        %p167 = pneg %p84
      $region14: #{ppo_actor_forward.2} parent=11 // pred_check_branch
        %169 = sbr.rel (%p167) target = $region16
      $region15: #{ppo_actor_forward.2} parent=11 // pred_region
        _
      $region16: #{ppo_actor_forward.2} parent=11 // pred_fallthru
        _
      // Predicated region
      $region17: #{ppo_actor_forward.2} parent=11 // pred_check
        %p170 = pneg %p105
      $region18: #{ppo_actor_forward.2} parent=11 // pred_check_branch
        %172 = sbr.rel (%p170) target = $region20
      $region19: #{ppo_actor_forward.2} parent=11 // pred_region
        _
      $region20: #{ppo_actor_forward.2} parent=11 // pred_fallthru
        _
      // Predicated region
      $region21: #{ppo_actor_forward.2} parent=11 // pred_check
        %p173 = pneg %p126
      $region22: #{ppo_actor_forward.2} parent=11 // pred_check_branch
        %175 = sbr.rel (%p173) target = $region24
      $region23: #{ppo_actor_forward.2} parent=11 // pred_region
        _
      $region24: #{ppo_actor_forward.2} parent=11 // pred_fallthru
        _
    $region12: #{ppo_actor_forward.2} parent=5 // pred_fallthru
      _
    %p176 = scmp.lt.s32.totalorder %s11, 2
    // Predicated region
    $region25: #{ppo_actor_forward.2} parent=5 // pred_check
      %p177 = pneg %p176
    $region26: #{ppo_actor_forward.2} parent=5 // pred_check_branch
      %179 = sbr.rel (%p177) target = $region28
    $region27: #{ppo_actor_forward.2} parent=5 // pred_region
      // Predicated region
      $region29: #{ppo_actor_forward.2} parent=27 // pred_check
        %p180 = pneg %p31
      $region30: #{ppo_actor_forward.2} parent=27 // pred_check_branch
        %182 = sbr.rel (%p180) target = $region32
      $region31: #{ppo_actor_forward.2} parent=27 // pred_region
        %s183 = smul.u32 8, %s11
        %p184 = scmp.lt.s32.totalorder %s183, 15
        %s185 = scalar_select %p184, %s183, 15
        %s186 = smul.addr %s185, 2
        %s187 = smul.addr %s186, 4
        %s188 = scalar_lea.vmem %s0, %s187
        %s189 = smul.u32 8, %s11
      $region32: #{ppo_actor_forward.2} parent=27 // pred_fallthru
        _
      // Predicated region
      $region33: #{ppo_actor_forward.2} parent=27 // pred_check
        %p190 = pneg %p57
      $region34: #{ppo_actor_forward.2} parent=27 // pred_check_branch
        %192 = sbr.rel (%p190) target = $region36
      $region35: #{ppo_actor_forward.2} parent=27 // pred_region
        %s193 = smul.u32 8, %s11
        %p194 = scmp.lt.s32.totalorder %s193, 15
        %s195 = scalar_select %p194, %s193, 15
        %s196 = smul.addr %s195, 4
        %s197 = scalar_lea.vmem %s1, %s196
        %s198 = smul.u32 8, %s11
      $region36: #{ppo_actor_forward.2} parent=27 // pred_fallthru
        _
    $region28: #{ppo_actor_forward.2} parent=5 // pred_fallthru
      _
    %p199 = scmp.le.s32.totalorder 1, %s11
    %p200 = scmp.lt.s32.totalorder %s11, 3
    %p201 = pnand %p199, %p200
    %p202 = pneg %p201
    // Predicated region
    $region37: #{ppo_actor_forward.2} parent=5 // pred_check
      _
    $region38: #{ppo_actor_forward.2} parent=5 // pred_check_branch
      %204 = sbr.rel (%p201) target = $region40
    $region39: #{ppo_actor_forward.2} parent=5 // pred_region
      %s205 = ssub.s32 %s11, 1
      %s206 = smul.u32 8, %s16
      %p207 = scmp.lt.s32.totalorder %s206, 15
      %s208 = scalar_select %p207, %s206, 15
      %s209 = smul.addr %s208, 2
      %s210 = smul.addr %s209, 4
      %s211 = scalar_lea.vmem %s0, %s210
      %p212 = pneg %p37
      %p213 = pneg %p34
      %s214 = smul.u32 8, %s16
      %p215 = scmp.lt.s32.totalorder %s214, 15
      %s216 = scalar_select %p215, %s214, 15
      %s217 = smul.addr %s216, 4
      %s218 = scalar_lea.vmem %s1, %s217
      %p219 = pneg %p63
      %p220 = pneg %p60
      %p221 = pneg %p84
      %p222 = pneg %p81
      %p223 = pneg %p105
      %p224 = pneg %p102
      %p225 = pneg %p126
      %p226 = pneg %p123
      %p227 = pneg %p152
      %p228 = pneg %p149
      %s229 = smul.u32 4, %s16
      %p230 = scmp.lt.s32.totalorder %s229, 7
      %s231 = scalar_select %p230, %s229, 7
      %s232 = smul.addr %s231, 4
      %s233 = scalar_lea.vmem %s5, %s232
      %s234 = smul.u32 8, %s16
      %p235 = scmp.lt.s32.totalorder %s234, 15
      %s236 = scalar_select %p235, %s234, 15
      %s237 = smul.addr %s236, 2
      %s238 = smul.addr %s237, 4
      %s239 = scalar_lea.vmem %s0, %s238
      %s240 = smul.u32 8, %s16
      %s241 = smul.u32 8, %s16
      %p242 = scmp.lt.s32.totalorder %s241, 15
      %s243 = scalar_select %p242, %s241, 15
      %s244 = smul.addr %s243, 4
      %s245 = scalar_lea.vmem %s1, %s244
      %s246 = smul.u32 8, %s16
      %s247 = smul.u32 4, %s16
      %p248 = scmp.lt.s32.totalorder %s247, 7
      %s249 = scalar_select %p248, %s247, 7
      %s250 = smul.addr %s249, 4
      %s251 = scalar_lea.vmem %s5, %s250
      %s252 = smul.u32 4, %s16
      %v254 = vld [vmem:[%s4] sm:$0xff]
      %v255 = vld [vmem:[%s4 + $0x8] sm:$0xff]
      %v256 = vld [vmem:[%s4 + $0x10] sm:$0xff]
      %v257 = vld [vmem:[%s4 + $0x18] sm:$0xff]
      %v258 = vld [vmem:[%s239] sm:$0xff]
      %v259 = vld [vmem:[%s239 + $0x8] sm:$0xff]
      %v260 = vld [vmem:[%s239 + $0x10] sm:$0xff]
      %v261 = vld [vmem:[%s239 + $0x18] sm:$0xff]
      %v262 = vld [vmem:[%s239 + $0x20] sm:$0xff]
      %v263 = vld [vmem:[%s239 + $0x28] sm:$0xff]
      %v264 = vld [vmem:[%s239 + $0x30] sm:$0xff]
      %v265 = vld [vmem:[%s239 + $0x38] sm:$0xff]
      %v266 = vld [vmem:[%s2] sm:$0xf]
      %v267 = vld [vmem:[%s2 + $0x4] sm:$0xf]
      %v268 = vld [vmem:[%s2 + $0x8] sm:$0xf]
      %v269 = vld [vmem:[%s2 + $0xc] sm:$0xf]
      %v270 = vld [vmem:[%s2 + $0x10] sm:$0xf]
      %v271 = vld [vmem:[%s2 + $0x14] sm:$0xf]
      %v272 = vld [vmem:[%s2 + $0x18] sm:$0xf]
      %v273 = vld [vmem:[%s2 + $0x1c] sm:$0xf]
      %v274 = vld [vmem:[%s2 + $0x20] sm:$0xf]
      %v275 = vld [vmem:[%s2 + $0x24] sm:$0xf]
      %v276 = vld [vmem:[%s2 + $0x28] sm:$0xf]
      %v277 = vld [vmem:[%s2 + $0x2c] sm:$0xf]
      %v278 = vld [vmem:[%s2 + $0x30] sm:$0xf]
      %v279 = vld [vmem:[%s2 + $0x34] sm:$0xf]
      %v280 = vld [vmem:[%s2 + $0x38] sm:$0xf]
      %v281 = vld [vmem:[%s2 + $0x3c] sm:$0xf]
      %v282 = vld [vmem:[%s2 + $0x40] sm:$0xf]
      %v283 = vld [vmem:[%s2 + $0x44] sm:$0xf]
      %v284 = vld [vmem:[%s2 + $0x48] sm:$0xf]
      %v285 = vld [vmem:[%s2 + $0x4c] sm:$0xf]
      %v286 = vld [vmem:[%s2 + $0x50] sm:$0xf]
      %v287 = vld [vmem:[%s2 + $0x54] sm:$0xf]
      %v288 = vld [vmem:[%s2 + $0x58] sm:$0xf]
      %v289 = vld [vmem:[%s2 + $0x5c] sm:$0xf]
      %v290 = vld [vmem:[%s2 + $0x60] sm:$0xf]
      %v291 = vld [vmem:[%s2 + $0x64] sm:$0xf]
      %v292 = vld [vmem:[%s2 + $0x68] sm:$0xf]
      %v293 = vld [vmem:[%s2 + $0x6c] sm:$0xf]
      %v294 = vld [vmem:[%s2 + $0x70] sm:$0xf]
      %v295 = vld [vmem:[%s2 + $0x74] sm:$0xf]
      %v296 = vld [vmem:[%s2 + $0x78] sm:$0xf]
      %v297 = vld [vmem:[%s2 + $0x7c] sm:$0xf]
      %v298 = vld [vmem:[%s4 + $0x160] sm:$0x1]
      %v299 = vlaneseq
      %v300 = vshrl.u32 %v299, 7
      %v301 = vsub.s32 0, %v300
      %v302 = vrot.slane %v298, %v301
      %v311 = vunpack.c.l.b16 %v258
      %v312 = vunpack.c.h.b16 %v258
      %v313 = vunpack.c.l.b16 %v259
      %v314 = vunpack.c.h.b16 %v259
      %v315 = vunpack.c.l.b16 %v260
      %v316 = vunpack.c.h.b16 %v260
      %v317 = vunpack.c.l.b16 %v261
      %v318 = vunpack.c.h.b16 %v261
      %v319 = vunpack.c.l.b16 %v262
      %v320 = vunpack.c.h.b16 %v262
      %v321 = vunpack.c.l.b16 %v263
      %v322 = vunpack.c.h.b16 %v263
      %v323 = vunpack.c.l.b16 %v264
      %v324 = vunpack.c.h.b16 %v264
      %v325 = vunpack.c.l.b16 %v265
      %v326 = vunpack.c.h.b16 %v265
      %v327 = vpack.c.b16 %v313, %v311
      %v328 = vpack.c.b16 %v314, %v312
      %v329 = vpack.c.b16 %v317, %v315
      %v330 = vpack.c.b16 %v318, %v316
      %v331 = vpack.c.b16 %v321, %v319
      %v332 = vpack.c.b16 %v322, %v320
      %v333 = vpack.c.b16 %v325, %v323
      %v334 = vpack.c.b16 %v326, %v324
      %v375 = vunpack.c.l.b16 %v266
      %v376 = vunpack.c.l.b16 %v267
      %v377 = vunpack.c.l.b16 %v268
      %v378 = vunpack.c.l.b16 %v269
      %v379 = vunpack.c.l.b16 %v270
      %v380 = vunpack.c.l.b16 %v271
      %v381 = vunpack.c.l.b16 %v272
      %v382 = vunpack.c.l.b16 %v273
      %v383 = vunpack.c.l.b16 %v274
      %v384 = vunpack.c.l.b16 %v275
      %v385 = vunpack.c.l.b16 %v276
      %v386 = vunpack.c.l.b16 %v277
      %v387 = vunpack.c.l.b16 %v278
      %v388 = vunpack.c.l.b16 %v279
      %v389 = vunpack.c.l.b16 %v280
      %v390 = vunpack.c.l.b16 %v281
      %v391 = vunpack.c.l.b16 %v282
      %v392 = vunpack.c.l.b16 %v283
      %v393 = vunpack.c.l.b16 %v284
      %v394 = vunpack.c.l.b16 %v285
      %v395 = vunpack.c.l.b16 %v286
      %v396 = vunpack.c.l.b16 %v287
      %v397 = vunpack.c.l.b16 %v288
      %v398 = vunpack.c.l.b16 %v289
      %v399 = vunpack.c.l.b16 %v290
      %v400 = vunpack.c.l.b16 %v291
      %v401 = vunpack.c.l.b16 %v292
      %v402 = vunpack.c.l.b16 %v293
      %v403 = vunpack.c.l.b16 %v294
      %v404 = vunpack.c.l.b16 %v295
      %v405 = vunpack.c.l.b16 %v296
      %v406 = vunpack.c.l.b16 %v297
      %v407 = vpack.c.b16 %v376, %v375
      %v408 = vpack.c.b16 %v378, %v377
      %v409 = vpack.c.b16 %v380, %v379
      %v410 = vpack.c.b16 %v382, %v381
      %v411 = vpack.c.b16 %v384, %v383
      %v412 = vpack.c.b16 %v386, %v385
      %v413 = vpack.c.b16 %v388, %v387
      %v414 = vpack.c.b16 %v390, %v389
      %v415 = vpack.c.b16 %v392, %v391
      %v416 = vpack.c.b16 %v394, %v393
      %v417 = vpack.c.b16 %v396, %v395
      %v418 = vpack.c.b16 %v398, %v397
      %v419 = vpack.c.b16 %v400, %v399
      %v420 = vpack.c.b16 %v402, %v401
      %v421 = vpack.c.b16 %v404, %v403
      %v422 = vpack.c.b16 %v406, %v405
      %439 = vmatprep.subr.bf16.mxu0 0
      %440 = vmatpush1.bf16.msra.mxu0 %v407
      %441 = vmatprep.subr.bf16.mxu0 0
      %442 = vmatpush1.bf16.msra.mxu0 %v408
      %443 = vmatprep.subr.bf16.mxu0 0
      %444 = vmatpush1.bf16.msra.mxu0 %v409
      %445 = vmatprep.subr.bf16.mxu0 0
      %446 = vmatpush1.bf16.msra.mxu0 %v410
      %447 = vmatprep.subr.bf16.mxu0 0
      %448 = vmatpush1.bf16.msra.mxu0 %v411
      %449 = vmatprep.subr.bf16.mxu0 0
      %450 = vmatpush1.bf16.msra.mxu0 %v412
      %451 = vmatprep.subr.bf16.mxu0 0
      %452 = vmatpush1.bf16.msra.mxu0 %v413
      %453 = vmatprep.subr.bf16.mxu0 0
      %454 = vmatpush1.bf16.msra.mxu0 %v414
      %455 = vmatprep.subr.bf16.mxu0 0
      %456 = vmatpush1.bf16.msra.mxu0 %v415
      %457 = vmatprep.subr.bf16.mxu0 0
      %458 = vmatpush1.bf16.msra.mxu0 %v416
      %459 = vmatprep.subr.bf16.mxu0 0
      %460 = vmatpush1.bf16.msra.mxu0 %v417
      %461 = vmatprep.subr.bf16.mxu0 0
      %462 = vmatpush1.bf16.msra.mxu0 %v418
      %463 = vmatprep.subr.bf16.mxu0 0
      %464 = vmatpush1.bf16.msra.mxu0 %v419
      %465 = vmatprep.subr.bf16.mxu0 0
      %466 = vmatpush1.bf16.msra.mxu0 %v420
      %467 = vmatprep.subr.bf16.mxu0 0
      %468 = vmatpush1.bf16.msra.mxu0 %v421
      %469 = vmatprep.subr.bf16.mxu0 0
      %470 = vmatpush1.bf16.msra.mxu0 %v422
      %471 = vmatprep.mubr.bf16.mxu0 %v328
      %472 = vmatmul.mubr.bf16.gmra.mrb[0].mxu0 %v327
      %v473 = vpop.f32.mrb[0].mxu0
      %v474 = vadd.f32 %v302, %v473
      %v475 = vpop.f32.mrb[0].mxu0
      %v476 = vpop.f32.mrb[0].mxu0
      %v477 = vadd.f32 %v302, %v476
      %v478 = vpop.f32.mrb[0].mxu0
      %479 = vmatprep.mubr.bf16.mxu0 %v330
      %480 = vmatmul.mubr.bf16.gmra.mrb[0].mxu0 %v329
      %v481 = vpop.f32.mrb[0].mxu0
      %v482 = vadd.f32 %v302, %v481
      %v483 = vpop.f32.mrb[0].mxu0
      %v484 = vpop.f32.mrb[0].mxu0
      %v485 = vadd.f32 %v302, %v484
      %v486 = vpop.f32.mrb[0].mxu0
      %487 = vmatprep.mubr.bf16.mxu0 %v332
      %488 = vmatmul.mubr.bf16.gmra.mrb[0].mxu0 %v331
      %v489 = vpop.f32.mrb[0].mxu0
      %v490 = vadd.f32 %v302, %v489
      %v491 = vpop.f32.mrb[0].mxu0
      %v492 = vpop.f32.mrb[0].mxu0
      %v493 = vadd.f32 %v302, %v492
      %v494 = vpop.f32.mrb[0].mxu0
      %495 = vmatprep.mubr.bf16.mxu0 %v334
      %496 = vmatmul.mubr.bf16.gmra.mrb[0].mxu0 %v333
      %v497 = vpop.f32.mrb[0].mxu0
      %v498 = vadd.f32 %v302, %v497
      %v499 = vpop.f32.mrb[0].mxu0
      %v500 = vpop.f32.mrb[0].mxu0
      %v501 = vadd.f32 %v302, %v500
      %v502 = vpop.f32.mrb[0].mxu0
      %503 = vdwg.mxu0
      %v504 = vld [vmem:[%s245] sm:$0xf]
      %v505 = vld [vmem:[%s245 + $0x4] sm:$0xf]
      %v506 = vld [vmem:[%s245 + $0x8] sm:$0xf]
      %v507 = vld [vmem:[%s245 + $0xc] sm:$0xf]
      %v508 = vld [vmem:[%s245 + $0x10] sm:$0xf]
      %v509 = vld [vmem:[%s245 + $0x14] sm:$0xf]
      %v510 = vld [vmem:[%s245 + $0x18] sm:$0xf]
      %v511 = vld [vmem:[%s245 + $0x1c] sm:$0xf]
      %v512 = vunpack.c.l.bf16 %v504
      %v513 = vunpack.c.l.bf16 %v505
      %v514 = vunpack.c.l.bf16 %v506
      %v515 = vunpack.c.l.bf16 %v507
      %v516 = vunpack.c.l.bf16 %v508
      %v517 = vunpack.c.l.bf16 %v509
      %v518 = vunpack.c.l.bf16 %v510
      %v519 = vunpack.c.l.bf16 %v511
      %v520 = vadd.f32 %v474, %v512
      %v521 = vadd.f32 %v477, %v513
      %v522 = vadd.f32 %v482, %v514
      %v523 = vadd.f32 %v485, %v515
      %v524 = vadd.f32 %v490, %v516
      %v525 = vadd.f32 %v493, %v517
      %v526 = vadd.f32 %v498, %v518
      %v527 = vadd.f32 %v501, %v519
      %v528 = vld [vmem:[%s2 + $0x80] sm:$0xf]
      %v529 = vld [vmem:[%s2 + $0x84] sm:$0xf]
      %v530 = vld [vmem:[%s2 + $0x88] sm:$0xf]
      %v531 = vld [vmem:[%s2 + $0x8c] sm:$0xf]
      %v532 = vld [vmem:[%s2 + $0x90] sm:$0xf]
      %v533 = vld [vmem:[%s2 + $0x94] sm:$0xf]
      %v534 = vld [vmem:[%s2 + $0x98] sm:$0xf]
      %v535 = vld [vmem:[%s2 + $0x9c] sm:$0xf]
      %v536 = vld [vmem:[%s2 + $0xa0] sm:$0xf]
      %v537 = vld [vmem:[%s2 + $0xa4] sm:$0xf]
      %v538 = vld [vmem:[%s2 + $0xa8] sm:$0xf]
      %v539 = vld [vmem:[%s2 + $0xac] sm:$0xf]
      %v540 = vld [vmem:[%s2 + $0xb0] sm:$0xf]
      %v541 = vld [vmem:[%s2 + $0xb4] sm:$0xf]
      %v542 = vld [vmem:[%s2 + $0xb8] sm:$0xf]
      %v543 = vld [vmem:[%s2 + $0xbc] sm:$0xf]
      %v544 = vpack.c.bf16 %v521, %v520
      %v545 = vpack.c.bf16 %v523, %v522
      %v546 = vpack.c.bf16 %v525, %v524
      %v547 = vpack.c.bf16 %v527, %v526
      %v548 = vld [vmem:[%s4 + $0x161] sm:$0x1]
      %v549 = vlaneseq
      %v550 = vshrl.u32 %v549, 7
      %v551 = vsub.s32 0, %v550
      %v552 = vrot.slane %v548, %v551
      %v569 = vunpack.c.l.b16 %v528
      %v570 = vunpack.c.l.b16 %v529
      %v571 = vunpack.c.l.b16 %v530
      %v572 = vunpack.c.l.b16 %v531
      %v573 = vunpack.c.l.b16 %v532
      %v574 = vunpack.c.l.b16 %v533
      %v575 = vunpack.c.l.b16 %v534
      %v576 = vunpack.c.l.b16 %v535
      %v577 = vunpack.c.l.b16 %v536
      %v578 = vunpack.c.l.b16 %v537
      %v579 = vunpack.c.l.b16 %v538
      %v580 = vunpack.c.l.b16 %v539
      %v581 = vunpack.c.l.b16 %v540
      %v582 = vunpack.c.l.b16 %v541
      %v583 = vunpack.c.l.b16 %v542
      %v584 = vunpack.c.l.b16 %v543
      %v585 = vpack.c.b16 %v570, %v569
      %v586 = vpack.c.b16 %v572, %v571
      %v587 = vpack.c.b16 %v574, %v573
      %v588 = vpack.c.b16 %v576, %v575
      %v589 = vpack.c.b16 %v578, %v577
      %v590 = vpack.c.b16 %v580, %v579
      %v591 = vpack.c.b16 %v582, %v581
      %v592 = vpack.c.b16 %v584, %v583
      %601 = vmatprep.subr.bf16.mxu0 0
      %602 = vmatpush1.bf16.msra.mxu0 %v585
      %603 = vmatprep.subr.bf16.mxu0 0
      %604 = vmatpush1.bf16.msra.mxu0 %v586
      %605 = vmatprep.subr.bf16.mxu0 0
      %606 = vmatpush1.bf16.msra.mxu0 %v587
      %607 = vmatprep.subr.bf16.mxu0 0
      %608 = vmatpush1.bf16.msra.mxu0 %v588
      %609 = vmatprep.subr.bf16.mxu0 0
      %610 = vmatpush1.bf16.msra.mxu0 %v589
      %611 = vmatprep.subr.bf16.mxu0 0
      %612 = vmatpush1.bf16.msra.mxu0 %v590
      %613 = vmatprep.subr.bf16.mxu0 0
      %614 = vmatpush1.bf16.msra.mxu0 %v591
      %615 = vmatprep.subr.bf16.mxu0 0
      %616 = vmatpush1.bf16.msra.mxu0 %v592
      %617 = vmatprep.subr.bf16.mxu0 0
      %618 = vmatpush1.bf16.msra.mxu0 0
      %619 = vmatprep.subr.bf16.mxu0 0
      %620 = vmatpush1.bf16.msra.mxu0 0
      %621 = vmatprep.subr.bf16.mxu0 0
      %622 = vmatpush1.bf16.msra.mxu0 0
      %623 = vmatprep.subr.bf16.mxu0 0
      %624 = vmatpush1.bf16.msra.mxu0 0
      %625 = vmatprep.subr.bf16.mxu0 0
      %626 = vmatpush1.bf16.msra.mxu0 0
      %627 = vmatprep.subr.bf16.mxu0 0
      %628 = vmatpush1.bf16.msra.mxu0 0
      %629 = vmatprep.subr.bf16.mxu0 0
      %630 = vmatpush1.bf16.msra.mxu0 0
      %631 = vmatprep.subr.bf16.mxu0 0
      %632 = vmatpush1.bf16.msra.mxu0 0
      %633 = vmatprep.mubr.bf16.mxu0 0
      %634 = vmatmul.mubr.bf16.gmra.mrb[0].mxu0 %v544
      %v635 = vpop.f32.mrb[0].mxu0
      %v636 = vadd.f32 %v552, %v635
      %v637 = vpop.f32.mrb[0].mxu0
      %v638 = vpop.f32.mrb[0].mxu0
      %v639 = vadd.f32 %v552, %v638
      %v640 = vpop.f32.mrb[0].mxu0
      %641 = vmatprep.mubr.bf16.mxu0 0
      %642 = vmatmul.mubr.bf16.gmra.mrb[0].mxu0 %v545
      %v643 = vpop.f32.mrb[0].mxu0
      %v644 = vadd.f32 %v552, %v643
      %v645 = vpop.f32.mrb[0].mxu0
      %v646 = vpop.f32.mrb[0].mxu0
      %v647 = vadd.f32 %v552, %v646
      %v648 = vpop.f32.mrb[0].mxu0
      %649 = vmatprep.mubr.bf16.mxu0 0
      %650 = vmatmul.mubr.bf16.gmra.mrb[0].mxu0 %v546
      %v651 = vpop.f32.mrb[0].mxu0
      %v652 = vadd.f32 %v552, %v651
      %v653 = vpop.f32.mrb[0].mxu0
      %v654 = vpop.f32.mrb[0].mxu0
      %v655 = vadd.f32 %v552, %v654
      %v656 = vpop.f32.mrb[0].mxu0
      %657 = vmatprep.mubr.bf16.mxu0 0
      %658 = vmatmul.mubr.bf16.gmra.mrb[0].mxu0 %v547
      %v659 = vpop.f32.mrb[0].mxu0
      %v660 = vadd.f32 %v552, %v659
      %v661 = vpop.f32.mrb[0].mxu0
      %v662 = vpop.f32.mrb[0].mxu0
      %v663 = vadd.f32 %v552, %v662
      %v664 = vpop.f32.mrb[0].mxu0
      %665 = vdwg.mxu0
      %v666 = vld [vmem:[%s2 + $0xc0] sm:$0xf]
      %v667 = vld [vmem:[%s2 + $0xc4] sm:$0xf]
      %v668 = vld [vmem:[%s2 + $0xc8] sm:$0xf]
      %v669 = vld [vmem:[%s2 + $0xcc] sm:$0xf]
      %v670 = vld [vmem:[%s2 + $0xd0] sm:$0xf]
      %v671 = vld [vmem:[%s2 + $0xd4] sm:$0xf]
      %v672 = vld [vmem:[%s2 + $0xd8] sm:$0xf]
      %v673 = vld [vmem:[%s2 + $0xdc] sm:$0xf]
      %v674 = vld [vmem:[%s2 + $0xe0] sm:$0xf]
      %v675 = vld [vmem:[%s2 + $0xe4] sm:$0xf]
      %v676 = vld [vmem:[%s2 + $0xe8] sm:$0xf]
      %v677 = vld [vmem:[%s2 + $0xec] sm:$0xf]
      %v678 = vld [vmem:[%s2 + $0xf0] sm:$0xf]
      %v679 = vld [vmem:[%s2 + $0xf4] sm:$0xf]
      %v680 = vld [vmem:[%s2 + $0xf8] sm:$0xf]
      %v681 = vld [vmem:[%s2 + $0xfc] sm:$0xf]
      %v682 = vpack.c.bf16 %v477, %v474
      %v683 = vpack.c.bf16 %v485, %v482
      %v684 = vpack.c.bf16 %v493, %v490
      %v685 = vpack.c.bf16 %v501, %v498
      %v686 = vld [vmem:[%s4 + $0x162] sm:$0x1]
      %v687 = vlaneseq
      %v688 = vshrl.u32 %v687, 7
      %v689 = vsub.s32 0, %v688
      %v690 = vrot.slane %v686, %v689
      %v707 = vunpack.c.l.b16 %v666
      %v708 = vunpack.c.l.b16 %v667
      %v709 = vunpack.c.l.b16 %v668
      %v710 = vunpack.c.l.b16 %v669
      %v711 = vunpack.c.l.b16 %v670
      %v712 = vunpack.c.l.b16 %v671
      %v713 = vunpack.c.l.b16 %v672
      %v714 = vunpack.c.l.b16 %v673
      %v715 = vunpack.c.l.b16 %v674
      %v716 = vunpack.c.l.b16 %v675
      %v717 = vunpack.c.l.b16 %v676
      %v718 = vunpack.c.l.b16 %v677
      %v719 = vunpack.c.l.b16 %v678
      %v720 = vunpack.c.l.b16 %v679
      %v721 = vunpack.c.l.b16 %v680
      %v722 = vunpack.c.l.b16 %v681
      %v723 = vpack.c.b16 %v708, %v707
      %v724 = vpack.c.b16 %v710, %v709
      %v725 = vpack.c.b16 %v712, %v711
      %v726 = vpack.c.b16 %v714, %v713
      %v727 = vpack.c.b16 %v716, %v715
      %v728 = vpack.c.b16 %v718, %v717
      %v729 = vpack.c.b16 %v720, %v719
      %v730 = vpack.c.b16 %v722, %v721
      %739 = vmatprep.subr.bf16.mxu0 0
      %740 = vmatpush1.bf16.msra.mxu0 %v723
      %741 = vmatprep.subr.bf16.mxu0 0
      %742 = vmatpush1.bf16.msra.mxu0 %v724
      %743 = vmatprep.subr.bf16.mxu0 0
      %744 = vmatpush1.bf16.msra.mxu0 %v725
      %745 = vmatprep.subr.bf16.mxu0 0
      %746 = vmatpush1.bf16.msra.mxu0 %v726
      %747 = vmatprep.subr.bf16.mxu0 0
      %748 = vmatpush1.bf16.msra.mxu0 %v727
      %749 = vmatprep.subr.bf16.mxu0 0
      %750 = vmatpush1.bf16.msra.mxu0 %v728
      %751 = vmatprep.subr.bf16.mxu0 0
      %752 = vmatpush1.bf16.msra.mxu0 %v729
      %753 = vmatprep.subr.bf16.mxu0 0
      %754 = vmatpush1.bf16.msra.mxu0 %v730
      %755 = vmatprep.subr.bf16.mxu0 0
      %756 = vmatpush1.bf16.msra.mxu0 0
      %757 = vmatprep.subr.bf16.mxu0 0
      %758 = vmatpush1.bf16.msra.mxu0 0
      %759 = vmatprep.subr.bf16.mxu0 0
      %760 = vmatpush1.bf16.msra.mxu0 0
      %761 = vmatprep.subr.bf16.mxu0 0
      %762 = vmatpush1.bf16.msra.mxu0 0
      %763 = vmatprep.subr.bf16.mxu0 0
      %764 = vmatpush1.bf16.msra.mxu0 0
      %765 = vmatprep.subr.bf16.mxu0 0
      %766 = vmatpush1.bf16.msra.mxu0 0
      %767 = vmatprep.subr.bf16.mxu0 0
      %768 = vmatpush1.bf16.msra.mxu0 0
      %769 = vmatprep.subr.bf16.mxu0 0
      %770 = vmatpush1.bf16.msra.mxu0 0
      %771 = vmatprep.mubr.bf16.mxu0 0
      %772 = vmatmul.mubr.bf16.gmra.mrb[0].mxu0 %v682
      %v773 = vpop.f32.mrb[0].mxu0
      %v774 = vadd.f32 %v690, %v773
      %v775 = vpop.f32.mrb[0].mxu0
      %v776 = vpop.f32.mrb[0].mxu0
      %v777 = vadd.f32 %v690, %v776
      %v778 = vpop.f32.mrb[0].mxu0
      %779 = vmatprep.mubr.bf16.mxu0 0
      %780 = vmatmul.mubr.bf16.gmra.mrb[0].mxu0 %v683
      %v781 = vpop.f32.mrb[0].mxu0
      %v782 = vadd.f32 %v690, %v781
      %v783 = vpop.f32.mrb[0].mxu0
      %v784 = vpop.f32.mrb[0].mxu0
      %v785 = vadd.f32 %v690, %v784
      %v786 = vpop.f32.mrb[0].mxu0
      %787 = vmatprep.mubr.bf16.mxu0 0
      %788 = vmatmul.mubr.bf16.gmra.mrb[0].mxu0 %v684
      %v789 = vpop.f32.mrb[0].mxu0
      %v790 = vadd.f32 %v690, %v789
      %v791 = vpop.f32.mrb[0].mxu0
      %v792 = vpop.f32.mrb[0].mxu0
      %v793 = vadd.f32 %v690, %v792
      %v794 = vpop.f32.mrb[0].mxu0
      %795 = vmatprep.mubr.bf16.mxu0 0
      %796 = vmatmul.mubr.bf16.gmra.mrb[0].mxu0 %v685
      %v797 = vpop.f32.mrb[0].mxu0
      %v798 = vadd.f32 %v690, %v797
      %v799 = vpop.f32.mrb[0].mxu0
      %v800 = vpop.f32.mrb[0].mxu0
      %v801 = vadd.f32 %v690, %v800
      %v802 = vpop.f32.mrb[0].mxu0
      %803 = vdwg.mxu0
      %v804 = vld [vmem:[%s2 + $0x200] sm:$0xf]
      %v805 = vld [vmem:[%s2 + $0x204] sm:$0xf]
      %v806 = vld [vmem:[%s2 + $0x208] sm:$0xf]
      %v807 = vld [vmem:[%s2 + $0x20c] sm:$0xf]
      %v808 = vld [vmem:[%s2 + $0x210] sm:$0xf]
      %v809 = vld [vmem:[%s2 + $0x214] sm:$0xf]
      %v810 = vld [vmem:[%s2 + $0x218] sm:$0xf]
      %v811 = vld [vmem:[%s2 + $0x21c] sm:$0xf]
      %v812 = vld [vmem:[%s2 + $0x220] sm:$0xf]
      %v813 = vld [vmem:[%s2 + $0x224] sm:$0xf]
      %v814 = vld [vmem:[%s2 + $0x228] sm:$0xf]
      %v815 = vld [vmem:[%s2 + $0x22c] sm:$0xf]
      %v816 = vld [vmem:[%s2 + $0x230] sm:$0xf]
      %v817 = vld [vmem:[%s2 + $0x234] sm:$0xf]
      %v818 = vld [vmem:[%s2 + $0x238] sm:$0xf]
      %v819 = vld [vmem:[%s2 + $0x23c] sm:$0xf]
      %v820 = vld [vmem:[%s2 + $0x240] sm:$0xf]
      %v821 = vld [vmem:[%s2 + $0x244] sm:$0xf]
      %v822 = vld [vmem:[%s2 + $0x248] sm:$0xf]
      %v823 = vld [vmem:[%s2 + $0x24c] sm:$0xf]
      %v824 = vld [vmem:[%s2 + $0x250] sm:$0xf]
      %v825 = vld [vmem:[%s2 + $0x254] sm:$0xf]
      %v826 = vld [vmem:[%s2 + $0x258] sm:$0xf]
      %v827 = vld [vmem:[%s2 + $0x25c] sm:$0xf]
      %v828 = vld [vmem:[%s2 + $0x260] sm:$0xf]
      %v829 = vld [vmem:[%s2 + $0x264] sm:$0xf]
      %v830 = vld [vmem:[%s2 + $0x268] sm:$0xf]
      %v831 = vld [vmem:[%s2 + $0x26c] sm:$0xf]
      %v832 = vld [vmem:[%s2 + $0x270] sm:$0xf]
      %v833 = vld [vmem:[%s2 + $0x274] sm:$0xf]
      %v834 = vld [vmem:[%s2 + $0x278] sm:$0xf]
      %v835 = vld [vmem:[%s2 + $0x27c] sm:$0xf]
      %v836 = vpack.c.bf16 %v639, %v636
      %v837 = vpack.c.bf16 %v647, %v644
      %v838 = vpack.c.bf16 %v655, %v652
      %v839 = vpack.c.bf16 %v663, %v660
      %v872 = vunpack.c.l.b16 %v804
      %v873 = vunpack.c.l.b16 %v805
      %v874 = vunpack.c.l.b16 %v806
      %v875 = vunpack.c.l.b16 %v807
      %v876 = vunpack.c.l.b16 %v808
      %v877 = vunpack.c.l.b16 %v809
      %v878 = vunpack.c.l.b16 %v810
      %v879 = vunpack.c.l.b16 %v811
      %v880 = vunpack.c.l.b16 %v812
      %v881 = vunpack.c.l.b16 %v813
      %v882 = vunpack.c.l.b16 %v814
      %v883 = vunpack.c.l.b16 %v815
      %v884 = vunpack.c.l.b16 %v816
      %v885 = vunpack.c.l.b16 %v817
      %v886 = vunpack.c.l.b16 %v818
      %v887 = vunpack.c.l.b16 %v819
      %v888 = vunpack.c.l.b16 %v820
      %v889 = vunpack.c.l.b16 %v821
      %v890 = vunpack.c.l.b16 %v822
      %v891 = vunpack.c.l.b16 %v823
      %v892 = vunpack.c.l.b16 %v824
      %v893 = vunpack.c.l.b16 %v825
      %v894 = vunpack.c.l.b16 %v826
      %v895 = vunpack.c.l.b16 %v827
      %v896 = vunpack.c.l.b16 %v828
      %v897 = vunpack.c.l.b16 %v829
      %v898 = vunpack.c.l.b16 %v830
      %v899 = vunpack.c.l.b16 %v831
      %v900 = vunpack.c.l.b16 %v832
      %v901 = vunpack.c.l.b16 %v833
      %v902 = vunpack.c.l.b16 %v834
      %v903 = vunpack.c.l.b16 %v835
      %v904 = vpack.c.b16 %v873, %v872
      %v905 = vpack.c.b16 %v875, %v874
      %v906 = vpack.c.b16 %v877, %v876
      %v907 = vpack.c.b16 %v879, %v878
      %v908 = vpack.c.b16 %v881, %v880
      %v909 = vpack.c.b16 %v883, %v882
      %v910 = vpack.c.b16 %v885, %v884
      %v911 = vpack.c.b16 %v887, %v886
      %v912 = vpack.c.b16 %v889, %v888
      %v913 = vpack.c.b16 %v891, %v890
      %v914 = vpack.c.b16 %v893, %v892
      %v915 = vpack.c.b16 %v895, %v894
      %v916 = vpack.c.b16 %v897, %v896
      %v917 = vpack.c.b16 %v899, %v898
      %v918 = vpack.c.b16 %v901, %v900
      %v919 = vpack.c.b16 %v903, %v902
      %936 = vmatprep.subr.bf16.mxu0 0
      %937 = vmatpush1.bf16.xpose.msra.mxu0 %v836
      %938 = vmatprep.subr.bf16.mxu0 0
      %939 = vmatpush1.bf16.xpose.msra.mxu0 %v837
      %940 = vmatprep.subr.bf16.mxu0 0
      %941 = vmatpush1.bf16.xpose.msra.mxu0 %v838
      %942 = vmatprep.subr.bf16.mxu0 0
      %943 = vmatpush1.bf16.xpose.msra.mxu0 %v839
      %944 = vmatprep.subr.bf16.mxu0 0
      %945 = vmatpush1.bf16.xpose.msra.mxu0 0
      %946 = vmatprep.subr.bf16.mxu0 0
      %947 = vmatpush1.bf16.xpose.msra.mxu0 0
      %948 = vmatprep.subr.bf16.mxu0 0
      %949 = vmatpush1.bf16.xpose.msra.mxu0 0
      %950 = vmatprep.subr.bf16.mxu0 0
      %951 = vmatpush1.bf16.xpose.msra.mxu0 0
      %952 = vmatprep.subr.bf16.mxu0 0
      %953 = vmatpush1.bf16.xpose.msra.mxu0 0
      %954 = vmatprep.subr.bf16.mxu0 0
      %955 = vmatpush1.bf16.xpose.msra.mxu0 0
      %956 = vmatprep.subr.bf16.mxu0 0
      %957 = vmatpush1.bf16.xpose.msra.mxu0 0
      %958 = vmatprep.subr.bf16.mxu0 0
      %959 = vmatpush1.bf16.xpose.msra.mxu0 0
      %960 = vmatprep.subr.bf16.mxu0 0
      %961 = vmatpush1.bf16.xpose.msra.mxu0 0
      %962 = vmatprep.subr.bf16.mxu0 0
      %963 = vmatpush1.bf16.xpose.msra.mxu0 0
      %964 = vmatprep.subr.bf16.mxu0 0
      %965 = vmatpush1.bf16.xpose.msra.mxu0 0
      %966 = vmatprep.subr.bf16.mxu0 0
      %967 = vmatpush1.bf16.xpose.msra.mxu0 0
      %968 = vmatprep.mubr.bf16.mxu0 0
      %969 = vmatmul.mubr.bf16.gmra.mrb[0].mxu0 %v904
      %v970 = vpop.f32.mrb[0].mxu0
      %v971 = vadd.f32 0.0, %v970
      %v972 = vpop.f32.mrb[0].mxu0
      %v973 = vpop.f32.mrb[0].mxu0
      %v974 = vadd.f32 0.0, %v973
      %v975 = vpop.f32.mrb[0].mxu0
      %976 = vmatprep.mubr.bf16.mxu0 0
      %977 = vmatmul.mubr.bf16.gmra.mrb[0].mxu0 %v905
      %v978 = vpop.f32.mrb[0].mxu0
      %v979 = vadd.f32 0.0, %v978
      %v980 = vpop.f32.mrb[0].mxu0
      %v981 = vpop.f32.mrb[0].mxu0
      %v982 = vadd.f32 0.0, %v981
      %v983 = vpop.f32.mrb[0].mxu0
      %984 = vmatprep.mubr.bf16.mxu0 0
      %985 = vmatmul.mubr.bf16.gmra.mrb[0].mxu0 %v906
      %v986 = vpop.f32.mrb[0].mxu0
      %v987 = vadd.f32 0.0, %v986
      %v988 = vpop.f32.mrb[0].mxu0
      %v989 = vpop.f32.mrb[0].mxu0
      %v990 = vadd.f32 0.0, %v989
      %v991 = vpop.f32.mrb[0].mxu0
      %992 = vmatprep.mubr.bf16.mxu0 0
      %993 = vmatmul.mubr.bf16.gmra.mrb[0].mxu0 %v907
      %v994 = vpop.f32.mrb[0].mxu0
      %v995 = vadd.f32 0.0, %v994
      %v996 = vpop.f32.mrb[0].mxu0
      %v997 = vpop.f32.mrb[0].mxu0
      %v998 = vadd.f32 0.0, %v997
      %v999 = vpop.f32.mrb[0].mxu0
      %1000 = vmatprep.mubr.bf16.mxu0 0
      %1001 = vmatmul.mubr.bf16.gmra.mrb[0].mxu0 %v908
      %v1002 = vpop.f32.mrb[0].mxu0
      %v1003 = vadd.f32 0.0, %v1002
      %v1004 = vpop.f32.mrb[0].mxu0
      %v1005 = vpop.f32.mrb[0].mxu0
      %v1006 = vadd.f32 0.0, %v1005
      %v1007 = vpop.f32.mrb[0].mxu0
      %1008 = vmatprep.mubr.bf16.mxu0 0
      %1009 = vmatmul.mubr.bf16.gmra.mrb[0].mxu0 %v909
      %v1010 = vpop.f32.mrb[0].mxu0
      %v1011 = vadd.f32 0.0, %v1010
      %v1012 = vpop.f32.mrb[0].mxu0
      %v1013 = vpop.f32.mrb[0].mxu0
      %v1014 = vadd.f32 0.0, %v1013
      %v1015 = vpop.f32.mrb[0].mxu0
      %1016 = vmatprep.mubr.bf16.mxu0 0
      %1017 = vmatmul.mubr.bf16.gmra.mrb[0].mxu0 %v910
      %v1018 = vpop.f32.mrb[0].mxu0
      %v1019 = vadd.f32 0.0, %v1018
      %v1020 = vpop.f32.mrb[0].mxu0
      %v1021 = vpop.f32.mrb[0].mxu0
      %v1022 = vadd.f32 0.0, %v1021
      %v1023 = vpop.f32.mrb[0].mxu0
      %1024 = vmatprep.mubr.bf16.mxu0 0
      %1025 = vmatmul.mubr.bf16.gmra.mrb[0].mxu0 %v911
      %v1026 = vpop.f32.mrb[0].mxu0
      %v1027 = vadd.f32 0.0, %v1026
      %v1028 = vpop.f32.mrb[0].mxu0
      %v1029 = vpop.f32.mrb[0].mxu0
      %v1030 = vadd.f32 0.0, %v1029
      %v1031 = vpop.f32.mrb[0].mxu0
      %1032 = vmatprep.mubr.bf16.mxu0 0
      %1033 = vmatmul.mubr.bf16.gmra.mrb[0].mxu0 %v912
      %v1034 = vpop.f32.mrb[0].mxu0
      %v1035 = vadd.f32 0.0, %v1034
      %v1036 = vpop.f32.mrb[0].mxu0
      %v1037 = vpop.f32.mrb[0].mxu0
      %v1038 = vadd.f32 0.0, %v1037
      %v1039 = vpop.f32.mrb[0].mxu0
      %1040 = vmatprep.mubr.bf16.mxu0 0
      %1041 = vmatmul.mubr.bf16.gmra.mrb[0].mxu0 %v913
      %v1042 = vpop.f32.mrb[0].mxu0
      %v1043 = vadd.f32 0.0, %v1042
      %v1044 = vpop.f32.mrb[0].mxu0
      %v1045 = vpop.f32.mrb[0].mxu0
      %v1046 = vadd.f32 0.0, %v1045
      %v1047 = vpop.f32.mrb[0].mxu0
      %1048 = vmatprep.mubr.bf16.mxu0 0
      %1049 = vmatmul.mubr.bf16.gmra.mrb[0].mxu0 %v914
      %v1050 = vpop.f32.mrb[0].mxu0
      %v1051 = vadd.f32 0.0, %v1050
      %v1052 = vpop.f32.mrb[0].mxu0
      %v1053 = vpop.f32.mrb[0].mxu0
      %v1054 = vadd.f32 0.0, %v1053
      %v1055 = vpop.f32.mrb[0].mxu0
      %1056 = vmatprep.mubr.bf16.mxu0 0
      %1057 = vmatmul.mubr.bf16.gmra.mrb[0].mxu0 %v915
      %v1058 = vpop.f32.mrb[0].mxu0
      %v1059 = vadd.f32 0.0, %v1058
      %v1060 = vpop.f32.mrb[0].mxu0
      %v1061 = vpop.f32.mrb[0].mxu0
      %v1062 = vadd.f32 0.0, %v1061
      %v1063 = vpop.f32.mrb[0].mxu0
      %1064 = vmatprep.mubr.bf16.mxu0 0
      %1065 = vmatmul.mubr.bf16.gmra.mrb[0].mxu0 %v916
      %v1066 = vpop.f32.mrb[0].mxu0
      %v1067 = vadd.f32 0.0, %v1066
      %v1068 = vpop.f32.mrb[0].mxu0
      %v1069 = vpop.f32.mrb[0].mxu0
      %v1070 = vadd.f32 0.0, %v1069
      %v1071 = vpop.f32.mrb[0].mxu0
      %1072 = vmatprep.mubr.bf16.mxu0 0
      %1073 = vmatmul.mubr.bf16.gmra.mrb[0].mxu0 %v917
      %v1074 = vpop.f32.mrb[0].mxu0
      %v1075 = vadd.f32 0.0, %v1074
      %v1076 = vpop.f32.mrb[0].mxu0
      %v1077 = vpop.f32.mrb[0].mxu0
      %v1078 = vadd.f32 0.0, %v1077
      %v1079 = vpop.f32.mrb[0].mxu0
      %1080 = vmatprep.mubr.bf16.mxu0 0
      %1081 = vmatmul.mubr.bf16.gmra.mrb[0].mxu0 %v918
      %v1082 = vpop.f32.mrb[0].mxu0
      %v1083 = vadd.f32 0.0, %v1082
      %v1084 = vpop.f32.mrb[0].mxu0
      %v1085 = vpop.f32.mrb[0].mxu0
      %v1086 = vadd.f32 0.0, %v1085
      %v1087 = vpop.f32.mrb[0].mxu0
      %1088 = vmatprep.mubr.bf16.mxu0 0
      %1089 = vmatmul.mubr.bf16.gmra.mrb[0].mxu0 %v919
      %v1090 = vpop.f32.mrb[0].mxu0
      %v1091 = vadd.f32 0.0, %v1090
      %v1092 = vpop.f32.mrb[0].mxu0
      %v1093 = vpop.f32.mrb[0].mxu0
      %v1094 = vadd.f32 0.0, %v1093
      %v1095 = vpop.f32.mrb[0].mxu0
      %1096 = vdwg.mxu0
      %vm1097 = vcmask 523264
      %v1098 = vsel %vm1097, %v971, -inf
      %1099 = vmax.xlane.f32.xlu0 %v1098
      %v1100 = vpop.xlane.xlu0 %1099
      %v1101 = vsel %vm1097, %v974, -inf
      %1102 = vmax.xlane.f32.xlu0 %v1101
      %v1103 = vpop.xlane.xlu0 %1102
      %v1104 = vsel %vm1097, %v979, -inf
      %1105 = vmax.xlane.f32.xlu0 %v1104
      %v1106 = vpop.xlane.xlu0 %1105
      %v1107 = vsel %vm1097, %v982, -inf
      %1108 = vmax.xlane.f32.xlu0 %v1107
      %v1109 = vpop.xlane.xlu0 %1108
      %v1110 = vsel %vm1097, %v987, -inf
      %1111 = vmax.xlane.f32.xlu0 %v1110
      %v1112 = vpop.xlane.xlu0 %1111
      %v1113 = vsel %vm1097, %v990, -inf
      %1114 = vmax.xlane.f32.xlu0 %v1113
      %v1115 = vpop.xlane.xlu0 %1114
      %v1116 = vsel %vm1097, %v995, -inf
      %1117 = vmax.xlane.f32.xlu0 %v1116
      %v1118 = vpop.xlane.xlu0 %1117
      %v1119 = vsel %vm1097, %v998, -inf
      %1120 = vmax.xlane.f32.xlu0 %v1119
      %v1121 = vpop.xlane.xlu0 %1120
      %v1122 = vsel %vm1097, %v1003, -inf
      %1123 = vmax.xlane.f32.xlu0 %v1122
      %v1124 = vpop.xlane.xlu0 %1123
      %v1125 = vsel %vm1097, %v1006, -inf
      %1126 = vmax.xlane.f32.xlu0 %v1125
      %v1127 = vpop.xlane.xlu0 %1126
      %v1128 = vsel %vm1097, %v1011, -inf
      %1129 = vmax.xlane.f32.xlu0 %v1128
      %v1130 = vpop.xlane.xlu0 %1129
      %v1131 = vsel %vm1097, %v1014, -inf
      %1132 = vmax.xlane.f32.xlu0 %v1131
      %v1133 = vpop.xlane.xlu0 %1132
      %v1134 = vsel %vm1097, %v1019, -inf
      %1135 = vmax.xlane.f32.xlu0 %v1134
      %v1136 = vpop.xlane.xlu0 %1135
      %v1137 = vsel %vm1097, %v1022, -inf
      %1138 = vmax.xlane.f32.xlu0 %v1137
      %v1139 = vpop.xlane.xlu0 %1138
      %v1140 = vsel %vm1097, %v1027, -inf
      %1141 = vmax.xlane.f32.xlu0 %v1140
      %v1142 = vpop.xlane.xlu0 %1141
      %v1143 = vsel %vm1097, %v1030, -inf
      %1144 = vmax.xlane.f32.xlu0 %v1143
      %v1145 = vpop.xlane.xlu0 %1144
      %v1146 = vsel %vm1097, %v1035, -inf
      %1147 = vmax.xlane.f32.xlu0 %v1146
      %v1148 = vpop.xlane.xlu0 %1147
      %v1149 = vsel %vm1097, %v1038, -inf
      %1150 = vmax.xlane.f32.xlu0 %v1149
      %v1151 = vpop.xlane.xlu0 %1150
      %v1152 = vsel %vm1097, %v1043, -inf
      %1153 = vmax.xlane.f32.xlu0 %v1152
      %v1154 = vpop.xlane.xlu0 %1153
      %v1155 = vsel %vm1097, %v1046, -inf
      %1156 = vmax.xlane.f32.xlu0 %v1155
      %v1157 = vpop.xlane.xlu0 %1156
      %v1158 = vsel %vm1097, %v1051, -inf
      %1159 = vmax.xlane.f32.xlu0 %v1158
      %v1160 = vpop.xlane.xlu0 %1159
      %v1161 = vsel %vm1097, %v1054, -inf
      %1162 = vmax.xlane.f32.xlu0 %v1161
      %v1163 = vpop.xlane.xlu0 %1162
      %v1164 = vsel %vm1097, %v1059, -inf
      %1165 = vmax.xlane.f32.xlu0 %v1164
      %v1166 = vpop.xlane.xlu0 %1165
      %v1167 = vsel %vm1097, %v1062, -inf
      %1168 = vmax.xlane.f32.xlu0 %v1167
      %v1169 = vpop.xlane.xlu0 %1168
      %v1170 = vsel %vm1097, %v1067, -inf
      %1171 = vmax.xlane.f32.xlu0 %v1170
      %v1172 = vpop.xlane.xlu0 %1171
      %v1173 = vsel %vm1097, %v1070, -inf
      %1174 = vmax.xlane.f32.xlu0 %v1173
      %v1175 = vpop.xlane.xlu0 %1174
      %v1176 = vsel %vm1097, %v1075, -inf
      %1177 = vmax.xlane.f32.xlu0 %v1176
      %v1178 = vpop.xlane.xlu0 %1177
      %v1179 = vsel %vm1097, %v1078, -inf
      %1180 = vmax.xlane.f32.xlu0 %v1179
      %v1181 = vpop.xlane.xlu0 %1180
      %v1182 = vsel %vm1097, %v1083, -inf
      %1183 = vmax.xlane.f32.xlu0 %v1182
      %v1184 = vpop.xlane.xlu0 %1183
      %v1185 = vsel %vm1097, %v1086, -inf
      %1186 = vmax.xlane.f32.xlu0 %v1185
      %v1187 = vpop.xlane.xlu0 %1186
      %v1188 = vsel %vm1097, %v1091, -inf
      %1189 = vmax.xlane.f32.xlu0 %v1188
      %v1190 = vpop.xlane.xlu0 %1189
      %v1191 = vsel %vm1097, %v1094, -inf
      %1192 = vmax.xlane.f32.xlu0 %v1191
      %v1193 = vpop.xlane.xlu0 %1192
      %v1194 = vsub.f32 %v971, %v1100
      %v1195 = vsub.f32 %v974, %v1103
      %v1196 = vsub.f32 %v979, %v1106
      %v1197 = vsub.f32 %v982, %v1109
      %v1198 = vsub.f32 %v987, %v1112
      %v1199 = vsub.f32 %v990, %v1115
      %v1200 = vsub.f32 %v995, %v1118
      %v1201 = vsub.f32 %v998, %v1121
      %v1202 = vsub.f32 %v1003, %v1124
      %v1203 = vsub.f32 %v1006, %v1127
      %v1204 = vsub.f32 %v1011, %v1130
      %v1205 = vsub.f32 %v1014, %v1133
      %v1206 = vsub.f32 %v1019, %v1136
      %v1207 = vsub.f32 %v1022, %v1139
      %v1208 = vsub.f32 %v1027, %v1142
      %v1209 = vsub.f32 %v1030, %v1145
      %v1210 = vsub.f32 %v1035, %v1148
      %v1211 = vsub.f32 %v1038, %v1151
      %v1212 = vsub.f32 %v1043, %v1154
      %v1213 = vsub.f32 %v1046, %v1157
      %v1214 = vsub.f32 %v1051, %v1160
      %v1215 = vsub.f32 %v1054, %v1163
      %v1216 = vsub.f32 %v1059, %v1166
      %v1217 = vsub.f32 %v1062, %v1169
      %v1218 = vsub.f32 %v1067, %v1172
      %v1219 = vsub.f32 %v1070, %v1175
      %v1220 = vsub.f32 %v1075, %v1178
      %v1221 = vsub.f32 %v1078, %v1181
      %v1222 = vsub.f32 %v1083, %v1184
      %v1223 = vsub.f32 %v1086, %v1187
      %v1224 = vsub.f32 %v1091, %v1190
      %v1225 = vsub.f32 %v1094, %v1193
      %v1226 = vmul.f32 %v1194, 1.442695
      %v1227 = vpow.pop %v1226
      %v1228 = vmul.f32 %v1195, 1.442695
      %v1229 = vpow.pop %v1228
      %v1230 = vmul.f32 %v1196, 1.442695
      %v1231 = vpow.pop %v1230
      %v1232 = vmul.f32 %v1197, 1.442695
      %v1233 = vpow.pop %v1232
      %v1234 = vmul.f32 %v1198, 1.442695
      %v1235 = vpow.pop %v1234
      %v1236 = vmul.f32 %v1199, 1.442695
      %v1237 = vpow.pop %v1236
      %v1238 = vmul.f32 %v1200, 1.442695
      %v1239 = vpow.pop %v1238
      %v1240 = vmul.f32 %v1201, 1.442695
      %v1241 = vpow.pop %v1240
      %v1242 = vmul.f32 %v1202, 1.442695
      %v1243 = vpow.pop %v1242
      %v1244 = vmul.f32 %v1203, 1.442695
      %v1245 = vpow.pop %v1244
      %v1246 = vmul.f32 %v1204, 1.442695
      %v1247 = vpow.pop %v1246
      %v1248 = vmul.f32 %v1205, 1.442695
      %v1249 = vpow.pop %v1248
      %v1250 = vmul.f32 %v1206, 1.442695
      %v1251 = vpow.pop %v1250
      %v1252 = vmul.f32 %v1207, 1.442695
      %v1253 = vpow.pop %v1252
      %v1254 = vmul.f32 %v1208, 1.442695
      %v1255 = vpow.pop %v1254
      %v1256 = vmul.f32 %v1209, 1.442695
      %v1257 = vpow.pop %v1256
      %v1258 = vmul.f32 %v1210, 1.442695
      %v1259 = vpow.pop %v1258
      %v1260 = vmul.f32 %v1211, 1.442695
      %v1261 = vpow.pop %v1260
      %v1262 = vmul.f32 %v1212, 1.442695
      %v1263 = vpow.pop %v1262
      %v1264 = vmul.f32 %v1213, 1.442695
      %v1265 = vpow.pop %v1264
      %v1266 = vmul.f32 %v1214, 1.442695
      %v1267 = vpow.pop %v1266
      %v1268 = vmul.f32 %v1215, 1.442695
      %v1269 = vpow.pop %v1268
      %v1270 = vmul.f32 %v1216, 1.442695
      %v1271 = vpow.pop %v1270
      %v1272 = vmul.f32 %v1217, 1.442695
      %v1273 = vpow.pop %v1272
      %v1274 = vmul.f32 %v1218, 1.442695
      %v1275 = vpow.pop %v1274
      %v1276 = vmul.f32 %v1219, 1.442695
      %v1277 = vpow.pop %v1276
      %v1278 = vmul.f32 %v1220, 1.442695
      %v1279 = vpow.pop %v1278
      %v1280 = vmul.f32 %v1221, 1.442695
      %v1281 = vpow.pop %v1280
      %v1282 = vmul.f32 %v1222, 1.442695
      %v1283 = vpow.pop %v1282
      %v1284 = vmul.f32 %v1223, 1.442695
      %v1285 = vpow.pop %v1284
      %v1286 = vmul.f32 %v1224, 1.442695
      %v1287 = vpow.pop %v1286
      %v1288 = vmul.f32 %v1225, 1.442695
      %v1289 = vpow.pop %v1288
      %v1290 = vsel %vm1097, %v1227, 0.0
      %1291 = vadd.xlane.f32.xlu0 %v1290
      %v1292 = vpop.xlane.xlu0 %1291
      %v1293 = vsel %vm1097, %v1229, 0.0
      %1294 = vadd.xlane.f32.xlu0 %v1293
      %v1295 = vpop.xlane.xlu0 %1294
      %v1296 = vsel %vm1097, %v1231, 0.0
      %1297 = vadd.xlane.f32.xlu0 %v1296
      %v1298 = vpop.xlane.xlu0 %1297
      %v1299 = vsel %vm1097, %v1233, 0.0
      %1300 = vadd.xlane.f32.xlu0 %v1299
      %v1301 = vpop.xlane.xlu0 %1300
      %v1302 = vsel %vm1097, %v1235, 0.0
      %1303 = vadd.xlane.f32.xlu0 %v1302
      %v1304 = vpop.xlane.xlu0 %1303
      %v1305 = vsel %vm1097, %v1237, 0.0
      %1306 = vadd.xlane.f32.xlu0 %v1305
      %v1307 = vpop.xlane.xlu0 %1306
      %v1308 = vsel %vm1097, %v1239, 0.0
      %1309 = vadd.xlane.f32.xlu0 %v1308
      %v1310 = vpop.xlane.xlu0 %1309
      %v1311 = vsel %vm1097, %v1241, 0.0
      %1312 = vadd.xlane.f32.xlu0 %v1311
      %v1313 = vpop.xlane.xlu0 %1312
      %v1314 = vsel %vm1097, %v1243, 0.0
      %1315 = vadd.xlane.f32.xlu0 %v1314
      %v1316 = vpop.xlane.xlu0 %1315
      %v1317 = vsel %vm1097, %v1245, 0.0
      %1318 = vadd.xlane.f32.xlu0 %v1317
      %v1319 = vpop.xlane.xlu0 %1318
      %v1320 = vsel %vm1097, %v1247, 0.0
      %1321 = vadd.xlane.f32.xlu0 %v1320
      %v1322 = vpop.xlane.xlu0 %1321
      %v1323 = vsel %vm1097, %v1249, 0.0
      %1324 = vadd.xlane.f32.xlu0 %v1323
      %v1325 = vpop.xlane.xlu0 %1324
      %v1326 = vsel %vm1097, %v1251, 0.0
      %1327 = vadd.xlane.f32.xlu0 %v1326
      %v1328 = vpop.xlane.xlu0 %1327
      %v1329 = vsel %vm1097, %v1253, 0.0
      %1330 = vadd.xlane.f32.xlu0 %v1329
      %v1331 = vpop.xlane.xlu0 %1330
      %v1332 = vsel %vm1097, %v1255, 0.0
      %1333 = vadd.xlane.f32.xlu0 %v1332
      %v1334 = vpop.xlane.xlu0 %1333
      %v1335 = vsel %vm1097, %v1257, 0.0
      %1336 = vadd.xlane.f32.xlu0 %v1335
      %v1337 = vpop.xlane.xlu0 %1336
      %v1338 = vsel %vm1097, %v1259, 0.0
      %1339 = vadd.xlane.f32.xlu0 %v1338
      %v1340 = vpop.xlane.xlu0 %1339
      %v1341 = vsel %vm1097, %v1261, 0.0
      %1342 = vadd.xlane.f32.xlu0 %v1341
      %v1343 = vpop.xlane.xlu0 %1342
      %v1344 = vsel %vm1097, %v1263, 0.0
      %1345 = vadd.xlane.f32.xlu0 %v1344
      %v1346 = vpop.xlane.xlu0 %1345
      %v1347 = vsel %vm1097, %v1265, 0.0
      %1348 = vadd.xlane.f32.xlu0 %v1347
      %v1349 = vpop.xlane.xlu0 %1348
      %v1350 = vsel %vm1097, %v1267, 0.0
      %1351 = vadd.xlane.f32.xlu0 %v1350
      %v1352 = vpop.xlane.xlu0 %1351
      %v1353 = vsel %vm1097, %v1269, 0.0
      %1354 = vadd.xlane.f32.xlu0 %v1353
      %v1355 = vpop.xlane.xlu0 %1354
      %v1356 = vsel %vm1097, %v1271, 0.0
      %1357 = vadd.xlane.f32.xlu0 %v1356
      %v1358 = vpop.xlane.xlu0 %1357
      %v1359 = vsel %vm1097, %v1273, 0.0
      %1360 = vadd.xlane.f32.xlu0 %v1359
      %v1361 = vpop.xlane.xlu0 %1360
      %v1362 = vsel %vm1097, %v1275, 0.0
      %1363 = vadd.xlane.f32.xlu0 %v1362
      %v1364 = vpop.xlane.xlu0 %1363
      %v1365 = vsel %vm1097, %v1277, 0.0
      %1366 = vadd.xlane.f32.xlu0 %v1365
      %v1367 = vpop.xlane.xlu0 %1366
      %v1368 = vsel %vm1097, %v1279, 0.0
      %1369 = vadd.xlane.f32.xlu0 %v1368
      %v1370 = vpop.xlane.xlu0 %1369
      %v1371 = vsel %vm1097, %v1281, 0.0
      %1372 = vadd.xlane.f32.xlu0 %v1371
      %v1373 = vpop.xlane.xlu0 %1372
      %v1374 = vsel %vm1097, %v1283, 0.0
      %1375 = vadd.xlane.f32.xlu0 %v1374
      %v1376 = vpop.xlane.xlu0 %1375
      %v1377 = vsel %vm1097, %v1285, 0.0
      %1378 = vadd.xlane.f32.xlu0 %v1377
      %v1379 = vpop.xlane.xlu0 %1378
      %v1380 = vsel %vm1097, %v1287, 0.0
      %1381 = vadd.xlane.f32.xlu0 %v1380
      %v1382 = vpop.xlane.xlu0 %1381
      %v1383 = vsel %vm1097, %v1289, 0.0
      %1384 = vadd.xlane.f32.xlu0 %v1383
      %v1385 = vpop.xlane.xlu0 %1384
      %v1386 = vrcp.pop %v1292
      %v1387 = vrcp.pop %v1295
      %v1388 = vrcp.pop %v1298
      %v1389 = vrcp.pop %v1301
      %v1390 = vrcp.pop %v1304
      %v1391 = vrcp.pop %v1307
      %v1392 = vrcp.pop %v1310
      %v1393 = vrcp.pop %v1313
      %v1394 = vrcp.pop %v1316
      %v1395 = vrcp.pop %v1319
      %v1396 = vrcp.pop %v1322
      %v1397 = vrcp.pop %v1325
      %v1398 = vrcp.pop %v1328
      %v1399 = vrcp.pop %v1331
      %v1400 = vrcp.pop %v1334
      %v1401 = vrcp.pop %v1337
      %v1402 = vrcp.pop %v1340
      %v1403 = vrcp.pop %v1343
      %v1404 = vrcp.pop %v1346
      %v1405 = vrcp.pop %v1349
      %v1406 = vrcp.pop %v1352
      %v1407 = vrcp.pop %v1355
      %v1408 = vrcp.pop %v1358
      %v1409 = vrcp.pop %v1361
      %v1410 = vrcp.pop %v1364
      %v1411 = vrcp.pop %v1367
      %v1412 = vrcp.pop %v1370
      %v1413 = vrcp.pop %v1373
      %v1414 = vrcp.pop %v1376
      %v1415 = vrcp.pop %v1379
      %v1416 = vrcp.pop %v1382
      %v1417 = vrcp.pop %v1385
      %v1418 = vmul.f32 %v1227, %v1386
      %v1419 = vmul.f32 %v1229, %v1387
      %v1420 = vmul.f32 %v1231, %v1388
      %v1421 = vmul.f32 %v1233, %v1389
      %v1422 = vmul.f32 %v1235, %v1390
      %v1423 = vmul.f32 %v1237, %v1391
      %v1424 = vmul.f32 %v1239, %v1392
      %v1425 = vmul.f32 %v1241, %v1393
      %v1426 = vmul.f32 %v1243, %v1394
      %v1427 = vmul.f32 %v1245, %v1395
      %v1428 = vmul.f32 %v1247, %v1396
      %v1429 = vmul.f32 %v1249, %v1397
      %v1430 = vmul.f32 %v1251, %v1398
      %v1431 = vmul.f32 %v1253, %v1399
      %v1432 = vmul.f32 %v1255, %v1400
      %v1433 = vmul.f32 %v1257, %v1401
      %v1434 = vmul.f32 %v1259, %v1402
      %v1435 = vmul.f32 %v1261, %v1403
      %v1436 = vmul.f32 %v1263, %v1404
      %v1437 = vmul.f32 %v1265, %v1405
      %v1438 = vmul.f32 %v1267, %v1406
      %v1439 = vmul.f32 %v1269, %v1407
      %v1440 = vmul.f32 %v1271, %v1408
      %v1441 = vmul.f32 %v1273, %v1409
      %v1442 = vmul.f32 %v1275, %v1410
      %v1443 = vmul.f32 %v1277, %v1411
      %v1444 = vmul.f32 %v1279, %v1412
      %v1445 = vmul.f32 %v1281, %v1413
      %v1446 = vmul.f32 %v1283, %v1414
      %v1447 = vmul.f32 %v1285, %v1415
      %v1448 = vmul.f32 %v1287, %v1416
      %v1449 = vmul.f32 %v1289, %v1417
      %v1450 = vpack.c.bf16 %v1419, %v1418
      %v1451 = vpack.c.bf16 %v1421, %v1420
      %v1452 = vpack.c.bf16 %v1423, %v1422
      %v1453 = vpack.c.bf16 %v1425, %v1424
      %v1454 = vpack.c.bf16 %v1427, %v1426
      %v1455 = vpack.c.bf16 %v1429, %v1428
      %v1456 = vpack.c.bf16 %v1431, %v1430
      %v1457 = vpack.c.bf16 %v1433, %v1432
      %v1458 = vpack.c.bf16 %v1435, %v1434
      %v1459 = vpack.c.bf16 %v1437, %v1436
      %v1460 = vpack.c.bf16 %v1439, %v1438
      %v1461 = vpack.c.bf16 %v1441, %v1440
      %v1462 = vpack.c.bf16 %v1443, %v1442
      %v1463 = vpack.c.bf16 %v1445, %v1444
      %v1464 = vpack.c.bf16 %v1447, %v1446
      %v1465 = vpack.c.bf16 %v1449, %v1448
      %v1466 = vpack.c.bf16 %v777, %v774
      %v1467 = vpack.c.bf16 %v785, %v782
      %v1468 = vpack.c.bf16 %v793, %v790
      %v1469 = vpack.c.bf16 %v801, %v798
      %v1471 = vsel %vm1097, %v1450, 0
      %v1474 = vsel %vm1097, %v1451, 0
      %v1477 = vsel %vm1097, %v1452, 0
      %v1480 = vsel %vm1097, %v1453, 0
      %v1483 = vsel %vm1097, %v1454, 0
      %v1486 = vsel %vm1097, %v1455, 0
      %v1489 = vsel %vm1097, %v1456, 0
      %v1492 = vsel %vm1097, %v1457, 0
      %v1495 = vsel %vm1097, %v1458, 0
      %v1498 = vsel %vm1097, %v1459, 0
      %v1501 = vsel %vm1097, %v1460, 0
      %v1504 = vsel %vm1097, %v1461, 0
      %v1507 = vsel %vm1097, %v1462, 0
      %v1510 = vsel %vm1097, %v1463, 0
      %v1513 = vsel %vm1097, %v1464, 0
      %v1516 = vsel %vm1097, %v1465, 0
      %1518 = vmatprep.subr.bf16.mxu0 0
      %1519 = vmatpush1.bf16.msra.mxu0 %v1466
      %1520 = vmatprep.subr.bf16.mxu0 0
      %1521 = vmatpush1.bf16.msra.mxu0 %v1467
      %1522 = vmatprep.subr.bf16.mxu0 0
      %1523 = vmatpush1.bf16.msra.mxu0 %v1468
      %1524 = vmatprep.subr.bf16.mxu0 0
      %1525 = vmatpush1.bf16.msra.mxu0 %v1469
      %1526 = vmatprep.subr.bf16.mxu0 0
      %1527 = vmatpush1.bf16.msra.mxu0 0
      %1528 = vmatprep.subr.bf16.mxu0 0
      %1529 = vmatpush1.bf16.msra.mxu0 0
      %1530 = vmatprep.subr.bf16.mxu0 0
      %1531 = vmatpush1.bf16.msra.mxu0 0
      %1532 = vmatprep.subr.bf16.mxu0 0
      %1533 = vmatpush1.bf16.msra.mxu0 0
      %1534 = vmatprep.subr.bf16.mxu0 0
      %1535 = vmatpush1.bf16.msra.mxu0 0
      %1536 = vmatprep.subr.bf16.mxu0 0
      %1537 = vmatpush1.bf16.msra.mxu0 0
      %1538 = vmatprep.subr.bf16.mxu0 0
      %1539 = vmatpush1.bf16.msra.mxu0 0
      %1540 = vmatprep.subr.bf16.mxu0 0
      %1541 = vmatpush1.bf16.msra.mxu0 0
      %1542 = vmatprep.subr.bf16.mxu0 0
      %1543 = vmatpush1.bf16.msra.mxu0 0
      %1544 = vmatprep.subr.bf16.mxu0 0
      %1545 = vmatpush1.bf16.msra.mxu0 0
      %1546 = vmatprep.subr.bf16.mxu0 0
      %1547 = vmatpush1.bf16.msra.mxu0 0
      %1548 = vmatprep.subr.bf16.mxu0 0
      %1549 = vmatpush1.bf16.msra.mxu0 0
      %1550 = vmatprep.mubr.bf16.mxu0 0
      %1551 = vmatmul.mubr.bf16.gmra.mrb[0].mxu0 %v1471
      %v1552 = vpop.f32.mrb[0].mxu0
      %v1553 = vadd.f32 0.0, %v1552
      %v1554 = vpop.f32.mrb[0].mxu0
      %v1555 = vpop.f32.mrb[0].mxu0
      %v1556 = vadd.f32 0.0, %v1555
      %v1557 = vpop.f32.mrb[0].mxu0
      %1558 = vmatprep.mubr.bf16.mxu0 0
      %1559 = vmatmul.mubr.bf16.gmra.mrb[0].mxu0 %v1474
      %v1560 = vpop.f32.mrb[0].mxu0
      %v1561 = vadd.f32 0.0, %v1560
      %v1562 = vpop.f32.mrb[0].mxu0
      %v1563 = vpop.f32.mrb[0].mxu0
      %v1564 = vadd.f32 0.0, %v1563
      %v1565 = vpop.f32.mrb[0].mxu0
      %1566 = vmatprep.mubr.bf16.mxu0 0
      %1567 = vmatmul.mubr.bf16.gmra.mrb[0].mxu0 %v1477
      %v1568 = vpop.f32.mrb[0].mxu0
      %v1569 = vadd.f32 0.0, %v1568
      %v1570 = vpop.f32.mrb[0].mxu0
      %v1571 = vpop.f32.mrb[0].mxu0
      %v1572 = vadd.f32 0.0, %v1571
      %v1573 = vpop.f32.mrb[0].mxu0
      %1574 = vmatprep.mubr.bf16.mxu0 0
      %1575 = vmatmul.mubr.bf16.gmra.mrb[0].mxu0 %v1480
      %v1576 = vpop.f32.mrb[0].mxu0
      %v1577 = vadd.f32 0.0, %v1576
      %v1578 = vpop.f32.mrb[0].mxu0
      %v1579 = vpop.f32.mrb[0].mxu0
      %v1580 = vadd.f32 0.0, %v1579
      %v1581 = vpop.f32.mrb[0].mxu0
      %1582 = vmatprep.mubr.bf16.mxu0 0
      %1583 = vmatmul.mubr.bf16.gmra.mrb[0].mxu0 %v1483
      %v1584 = vpop.f32.mrb[0].mxu0
      %v1585 = vadd.f32 0.0, %v1584
      %v1586 = vpop.f32.mrb[0].mxu0
      %v1587 = vpop.f32.mrb[0].mxu0
      %v1588 = vadd.f32 0.0, %v1587
      %v1589 = vpop.f32.mrb[0].mxu0
      %1590 = vmatprep.mubr.bf16.mxu0 0
      %1591 = vmatmul.mubr.bf16.gmra.mrb[0].mxu0 %v1486
      %v1592 = vpop.f32.mrb[0].mxu0
      %v1593 = vadd.f32 0.0, %v1592
      %v1594 = vpop.f32.mrb[0].mxu0
      %v1595 = vpop.f32.mrb[0].mxu0
      %v1596 = vadd.f32 0.0, %v1595
      %v1597 = vpop.f32.mrb[0].mxu0
      %1598 = vmatprep.mubr.bf16.mxu0 0
      %1599 = vmatmul.mubr.bf16.gmra.mrb[0].mxu0 %v1489
      %v1600 = vpop.f32.mrb[0].mxu0
      %v1601 = vadd.f32 0.0, %v1600
      %v1602 = vpop.f32.mrb[0].mxu0
      %v1603 = vpop.f32.mrb[0].mxu0
      %v1604 = vadd.f32 0.0, %v1603
      %v1605 = vpop.f32.mrb[0].mxu0
      %1606 = vmatprep.mubr.bf16.mxu0 0
      %1607 = vmatmul.mubr.bf16.gmra.mrb[0].mxu0 %v1492
      %v1608 = vpop.f32.mrb[0].mxu0
      %v1609 = vadd.f32 0.0, %v1608
      %v1610 = vpop.f32.mrb[0].mxu0
      %v1611 = vpop.f32.mrb[0].mxu0
      %v1612 = vadd.f32 0.0, %v1611
      %v1613 = vpop.f32.mrb[0].mxu0
      %1614 = vmatprep.mubr.bf16.mxu0 0
      %1615 = vmatmul.mubr.bf16.gmra.mrb[0].mxu0 %v1495
      %v1616 = vpop.f32.mrb[0].mxu0
      %v1617 = vadd.f32 0.0, %v1616
      %v1618 = vpop.f32.mrb[0].mxu0
      %v1619 = vpop.f32.mrb[0].mxu0
      %v1620 = vadd.f32 0.0, %v1619
      %v1621 = vpop.f32.mrb[0].mxu0
      %1622 = vmatprep.mubr.bf16.mxu0 0
      %1623 = vmatmul.mubr.bf16.gmra.mrb[0].mxu0 %v1498
      %v1624 = vpop.f32.mrb[0].mxu0
      %v1625 = vadd.f32 0.0, %v1624
      %v1626 = vpop.f32.mrb[0].mxu0
      %v1627 = vpop.f32.mrb[0].mxu0
      %v1628 = vadd.f32 0.0, %v1627
      %v1629 = vpop.f32.mrb[0].mxu0
      %1630 = vmatprep.mubr.bf16.mxu0 0
      %1631 = vmatmul.mubr.bf16.gmra.mrb[0].mxu0 %v1501
      %v1632 = vpop.f32.mrb[0].mxu0
      %v1633 = vadd.f32 0.0, %v1632
      %v1634 = vpop.f32.mrb[0].mxu0
      %v1635 = vpop.f32.mrb[0].mxu0
      %v1636 = vadd.f32 0.0, %v1635
      %v1637 = vpop.f32.mrb[0].mxu0
      %1638 = vmatprep.mubr.bf16.mxu0 0
      %1639 = vmatmul.mubr.bf16.gmra.mrb[0].mxu0 %v1504
      %v1640 = vpop.f32.mrb[0].mxu0
      %v1641 = vadd.f32 0.0, %v1640
      %v1642 = vpop.f32.mrb[0].mxu0
      %v1643 = vpop.f32.mrb[0].mxu0
      %v1644 = vadd.f32 0.0, %v1643
      %v1645 = vpop.f32.mrb[0].mxu0
      %1646 = vmatprep.mubr.bf16.mxu0 0
      %1647 = vmatmul.mubr.bf16.gmra.mrb[0].mxu0 %v1507
      %v1648 = vpop.f32.mrb[0].mxu0
      %v1649 = vadd.f32 0.0, %v1648
      %v1650 = vpop.f32.mrb[0].mxu0
      %v1651 = vpop.f32.mrb[0].mxu0
      %v1652 = vadd.f32 0.0, %v1651
      %v1653 = vpop.f32.mrb[0].mxu0
      %1654 = vmatprep.mubr.bf16.mxu0 0
      %1655 = vmatmul.mubr.bf16.gmra.mrb[0].mxu0 %v1510
      %v1656 = vpop.f32.mrb[0].mxu0
      %v1657 = vadd.f32 0.0, %v1656
      %v1658 = vpop.f32.mrb[0].mxu0
      %v1659 = vpop.f32.mrb[0].mxu0
      %v1660 = vadd.f32 0.0, %v1659
      %v1661 = vpop.f32.mrb[0].mxu0
      %1662 = vmatprep.mubr.bf16.mxu0 0
      %1663 = vmatmul.mubr.bf16.gmra.mrb[0].mxu0 %v1513
      %v1664 = vpop.f32.mrb[0].mxu0
      %v1665 = vadd.f32 0.0, %v1664
      %v1666 = vpop.f32.mrb[0].mxu0
      %v1667 = vpop.f32.mrb[0].mxu0
      %v1668 = vadd.f32 0.0, %v1667
      %v1669 = vpop.f32.mrb[0].mxu0
      %1670 = vmatprep.mubr.bf16.mxu0 0
      %1671 = vmatmul.mubr.bf16.gmra.mrb[0].mxu0 %v1516
      %v1672 = vpop.f32.mrb[0].mxu0
      %v1673 = vadd.f32 0.0, %v1672
      %v1674 = vpop.f32.mrb[0].mxu0
      %v1675 = vpop.f32.mrb[0].mxu0
      %v1676 = vadd.f32 0.0, %v1675
      %v1677 = vpop.f32.mrb[0].mxu0
      %1678 = vdwg.mxu0
      %v1679 = vld [vmem:[%s4 + $0x60] sm:$0xff]
      %v1680 = vld [vmem:[%s4 + $0x68] sm:$0xff]
      %v1681 = vld [vmem:[%s4 + $0x70] sm:$0xff]
      %v1682 = vld [vmem:[%s4 + $0x78] sm:$0xff]
      %v1683 = vld [vmem:[%s4 + $0x80] sm:$0xff]
      %v1684 = vld [vmem:[%s4 + $0x88] sm:$0xff]
      %v1685 = vld [vmem:[%s4 + $0x90] sm:$0xff]
      %v1686 = vld [vmem:[%s4 + $0x98] sm:$0xff]
      %v1687 = vld [vmem:[%s4 + $0xa0] sm:$0xff]
      %v1688 = vld [vmem:[%s4 + $0xa8] sm:$0xff]
      %v1689 = vld [vmem:[%s4 + $0xb0] sm:$0xff]
      %v1690 = vld [vmem:[%s4 + $0xb8] sm:$0xff]
      %v1691 = vld [vmem:[%s4 + $0xc0] sm:$0xff]
      %v1692 = vld [vmem:[%s4 + $0xc8] sm:$0xff]
      %v1693 = vld [vmem:[%s4 + $0xd0] sm:$0xff]
      %v1694 = vld [vmem:[%s4 + $0xd8] sm:$0xff]
      %v1695 = vld [vmem:[%s4 + $0xe0] sm:$0xff]
      %v1696 = vld [vmem:[%s4 + $0xe8] sm:$0xff]
      %v1697 = vld [vmem:[%s4 + $0xf0] sm:$0xff]
      %v1698 = vld [vmem:[%s4 + $0xf8] sm:$0xff]
      %v1699 = vld [vmem:[%s4 + $0x100] sm:$0xff]
      %v1700 = vld [vmem:[%s4 + $0x108] sm:$0xff]
      %v1701 = vld [vmem:[%s4 + $0x110] sm:$0xff]
      %v1702 = vld [vmem:[%s4 + $0x118] sm:$0xff]
      %v1703 = vld [vmem:[%s4 + $0x120] sm:$0xff]
      %v1704 = vld [vmem:[%s4 + $0x128] sm:$0xff]
      %v1705 = vld [vmem:[%s4 + $0x130] sm:$0xff]
      %v1706 = vld [vmem:[%s4 + $0x138] sm:$0xff]
      %v1707 = vld [vmem:[%s4 + $0x140] sm:$0xff]
      %v1708 = vld [vmem:[%s4 + $0x148] sm:$0xff]
      %v1709 = vld [vmem:[%s4 + $0x150] sm:$0xff]
      %v1710 = vld [vmem:[%s4 + $0x158] sm:$0xff]
      %v1711 = vmul.f32 %v1553, %v1679
      %v1712 = vmul.f32 %v1556, %v1680
      %v1713 = vmul.f32 %v1561, %v1681
      %v1714 = vmul.f32 %v1564, %v1682
      %v1715 = vmul.f32 %v1569, %v1683
      %v1716 = vmul.f32 %v1572, %v1684
      %v1717 = vmul.f32 %v1577, %v1685
      %v1718 = vmul.f32 %v1580, %v1686
      %v1719 = vmul.f32 %v1585, %v1687
      %v1720 = vmul.f32 %v1588, %v1688
      %v1721 = vmul.f32 %v1593, %v1689
      %v1722 = vmul.f32 %v1596, %v1690
      %v1723 = vmul.f32 %v1601, %v1691
      %v1724 = vmul.f32 %v1604, %v1692
      %v1725 = vmul.f32 %v1609, %v1693
      %v1726 = vmul.f32 %v1612, %v1694
      %v1727 = vmul.f32 %v1617, %v1695
      %v1728 = vmul.f32 %v1620, %v1696
      %v1729 = vmul.f32 %v1625, %v1697
      %v1730 = vmul.f32 %v1628, %v1698
      %v1731 = vmul.f32 %v1633, %v1699
      %v1732 = vmul.f32 %v1636, %v1700
      %v1733 = vmul.f32 %v1641, %v1701
      %v1734 = vmul.f32 %v1644, %v1702
      %v1735 = vmul.f32 %v1649, %v1703
      %v1736 = vmul.f32 %v1652, %v1704
      %v1737 = vmul.f32 %v1657, %v1705
      %v1738 = vmul.f32 %v1660, %v1706
      %v1739 = vmul.f32 %v1665, %v1707
      %v1740 = vmul.f32 %v1668, %v1708
      %v1741 = vmul.f32 %v1673, %v1709
      %v1742 = vmul.f32 %v1676, %v1710
      %v1743 = vadd.f32 %v1711, %v1715
      %v1744 = vadd.f32 %v1743, %v1719
      %v1745 = vadd.f32 %v1744, %v1723
      %v1746 = vadd.f32 %v1745, %v1727
      %v1747 = vadd.f32 %v1746, %v1731
      %v1748 = vadd.f32 %v1747, %v1735
      %v1749 = vadd.f32 %v1748, %v1739
      %v1750 = vadd.f32 %v1712, %v1716
      %v1751 = vadd.f32 %v1750, %v1720
      %v1752 = vadd.f32 %v1751, %v1724
      %v1753 = vadd.f32 %v1752, %v1728
      %v1754 = vadd.f32 %v1753, %v1732
      %v1755 = vadd.f32 %v1754, %v1736
      %v1756 = vadd.f32 %v1755, %v1740
      %v1757 = vadd.f32 %v1713, %v1717
      %v1758 = vadd.f32 %v1757, %v1721
      %v1759 = vadd.f32 %v1758, %v1725
      %v1760 = vadd.f32 %v1759, %v1729
      %v1761 = vadd.f32 %v1760, %v1733
      %v1762 = vadd.f32 %v1761, %v1737
      %v1763 = vadd.f32 %v1762, %v1741
      %v1764 = vadd.f32 %v1714, %v1718
      %v1765 = vadd.f32 %v1764, %v1722
      %v1766 = vadd.f32 %v1765, %v1726
      %v1767 = vadd.f32 %v1766, %v1730
      %v1768 = vadd.f32 %v1767, %v1734
      %v1769 = vadd.f32 %v1768, %v1738
      %v1770 = vadd.f32 %v1769, %v1742
      %1771 = vst [vmem:[#allocation2] sm:$0xff] %v1749
      %1772 = vst [vmem:[#allocation2 + $0x8] sm:$0xff] %v1756
      %1773 = vst [vmem:[#allocation2 + $0x10] sm:$0xff] %v1763
      %1774 = vst [vmem:[#allocation2 + $0x18] sm:$0xff] %v1770
      %v1775 = vld [vmem:[#allocation2] sm:$0xff]
      %v1776 = vld [vmem:[#allocation2 + $0x8] sm:$0xff]
      %v1777 = vld [vmem:[#allocation2 + $0x10] sm:$0xff]
      %v1778 = vld [vmem:[#allocation2 + $0x18] sm:$0xff]
      %v1779 = vld [vmem:[%s2 + $0x100] sm:$0xf]
      %v1780 = vld [vmem:[%s2 + $0x104] sm:$0xf]
      %v1781 = vld [vmem:[%s2 + $0x108] sm:$0xf]
      %v1782 = vld [vmem:[%s2 + $0x10c] sm:$0xf]
      %v1783 = vld [vmem:[%s2 + $0x110] sm:$0xf]
      %v1784 = vld [vmem:[%s2 + $0x114] sm:$0xf]
      %v1785 = vld [vmem:[%s2 + $0x118] sm:$0xf]
      %v1786 = vld [vmem:[%s2 + $0x11c] sm:$0xf]
      %v1787 = vld [vmem:[%s2 + $0x120] sm:$0xf]
      %v1788 = vld [vmem:[%s2 + $0x124] sm:$0xf]
      %v1789 = vld [vmem:[%s2 + $0x128] sm:$0xf]
      %v1790 = vld [vmem:[%s2 + $0x12c] sm:$0xf]
      %v1791 = vld [vmem:[%s2 + $0x130] sm:$0xf]
      %v1792 = vld [vmem:[%s2 + $0x134] sm:$0xf]
      %v1793 = vld [vmem:[%s2 + $0x138] sm:$0xf]
      %v1794 = vld [vmem:[%s2 + $0x13c] sm:$0xf]
      %v1795 = vpack.c.bf16 %v1776, %v1775
      %v1796 = vpack.c.bf16 %v1778, %v1777
      %v1797 = vld [vmem:[%s4 + $0x163] sm:$0x1]
      %v1798 = vlaneseq
      %v1799 = vshrl.u32 %v1798, 7
      %v1800 = vsub.s32 0, %v1799
      %v1801 = vrot.slane %v1797, %v1800
      %v1818 = vunpack.c.l.b16 %v1779
      %v1819 = vunpack.c.l.b16 %v1780
      %v1820 = vunpack.c.l.b16 %v1781
      %v1821 = vunpack.c.l.b16 %v1782
      %v1822 = vunpack.c.l.b16 %v1783
      %v1823 = vunpack.c.l.b16 %v1784
      %v1824 = vunpack.c.l.b16 %v1785
      %v1825 = vunpack.c.l.b16 %v1786
      %v1826 = vunpack.c.l.b16 %v1787
      %v1827 = vunpack.c.l.b16 %v1788
      %v1828 = vunpack.c.l.b16 %v1789
      %v1829 = vunpack.c.l.b16 %v1790
      %v1830 = vunpack.c.l.b16 %v1791
      %v1831 = vunpack.c.l.b16 %v1792
      %v1832 = vunpack.c.l.b16 %v1793
      %v1833 = vunpack.c.l.b16 %v1794
      %v1834 = vpack.c.b16 %v1819, %v1818
      %v1835 = vpack.c.b16 %v1821, %v1820
      %v1836 = vpack.c.b16 %v1823, %v1822
      %v1837 = vpack.c.b16 %v1825, %v1824
      %v1838 = vpack.c.b16 %v1827, %v1826
      %v1839 = vpack.c.b16 %v1829, %v1828
      %v1840 = vpack.c.b16 %v1831, %v1830
      %v1841 = vpack.c.b16 %v1833, %v1832
      %1850 = vmatprep.subr.bf16.mxu0 0
      %1851 = vmatpush1.bf16.msra.mxu0 %v1834
      %1852 = vmatprep.subr.bf16.mxu0 0
      %1853 = vmatpush1.bf16.msra.mxu0 %v1835
      %1854 = vmatprep.subr.bf16.mxu0 0
      %1855 = vmatpush1.bf16.msra.mxu0 %v1836
      %1856 = vmatprep.subr.bf16.mxu0 0
      %1857 = vmatpush1.bf16.msra.mxu0 %v1837
      %1858 = vmatprep.subr.bf16.mxu0 0
      %1859 = vmatpush1.bf16.msra.mxu0 %v1838
      %1860 = vmatprep.subr.bf16.mxu0 0
      %1861 = vmatpush1.bf16.msra.mxu0 %v1839
      %1862 = vmatprep.subr.bf16.mxu0 0
      %1863 = vmatpush1.bf16.msra.mxu0 %v1840
      %1864 = vmatprep.subr.bf16.mxu0 0
      %1865 = vmatpush1.bf16.msra.mxu0 %v1841
      %1866 = vmatprep.subr.bf16.mxu0 0
      %1867 = vmatpush1.bf16.msra.mxu0 0
      %1868 = vmatprep.subr.bf16.mxu0 0
      %1869 = vmatpush1.bf16.msra.mxu0 0
      %1870 = vmatprep.subr.bf16.mxu0 0
      %1871 = vmatpush1.bf16.msra.mxu0 0
      %1872 = vmatprep.subr.bf16.mxu0 0
      %1873 = vmatpush1.bf16.msra.mxu0 0
      %1874 = vmatprep.subr.bf16.mxu0 0
      %1875 = vmatpush1.bf16.msra.mxu0 0
      %1876 = vmatprep.subr.bf16.mxu0 0
      %1877 = vmatpush1.bf16.msra.mxu0 0
      %1878 = vmatprep.subr.bf16.mxu0 0
      %1879 = vmatpush1.bf16.msra.mxu0 0
      %1880 = vmatprep.subr.bf16.mxu0 0
      %1881 = vmatpush1.bf16.msra.mxu0 0
      %1882 = vmatprep.mubr.bf16.mxu0 0
      %1883 = vmatmul.mubr.bf16.gmra.mrb[0].mxu0 %v1795
      %v1884 = vpop.f32.mrb[0].mxu0
      %v1885 = vadd.f32 %v1801, %v1884
      %v1886 = vpop.f32.mrb[0].mxu0
      %v1887 = vpop.f32.mrb[0].mxu0
      %v1888 = vadd.f32 %v1801, %v1887
      %v1889 = vpop.f32.mrb[0].mxu0
      %1890 = vmatprep.mubr.bf16.mxu0 0
      %1891 = vmatmul.mubr.bf16.gmra.mrb[0].mxu0 %v1796
      %v1892 = vpop.f32.mrb[0].mxu0
      %v1893 = vadd.f32 %v1801, %v1892
      %v1894 = vpop.f32.mrb[0].mxu0
      %v1895 = vpop.f32.mrb[0].mxu0
      %v1896 = vadd.f32 %v1801, %v1895
      %v1897 = vpop.f32.mrb[0].mxu0
      %1898 = vdwg.mxu0
      %v1899 = vadd.f32 %v1885, %v254
      %v1900 = vadd.f32 %v1888, %v255
      %v1901 = vadd.f32 %v1893, %v256
      %v1902 = vadd.f32 %v1896, %v257
      %v1903 = vld [vmem:[%s4 + $0x164] sm:$0x1]
      %v1904 = vld [vmem:[%s4 + $0x165] sm:$0x1]
      %1905 = vadd.xlane.f32.xlu0 %v1899
      %v1906 = vpop.xlane.xlu0 %1905
      %1907 = vadd.xlane.f32.xlu0 %v1900
      %v1908 = vpop.xlane.xlu0 %1907
      %1909 = vadd.xlane.f32.xlu0 %v1901
      %v1910 = vpop.xlane.xlu0 %1909
      %1911 = vadd.xlane.f32.xlu0 %v1902
      %v1912 = vpop.xlane.xlu0 %1911
      %v1913 = vrcp.pop 128.0
      %v1914 = vmul.f32 %v1906, %v1913
      %v1915 = vmul.f32 %v1908, %v1913
      %v1916 = vmul.f32 %v1910, %v1913
      %v1917 = vmul.f32 %v1912, %v1913
      %v1918 = vsub.f32 %v1899, %v1914
      %v1919 = vsub.f32 %v1900, %v1915
      %v1920 = vsub.f32 %v1901, %v1916
      %v1921 = vsub.f32 %v1902, %v1917
      %v1922 = vmul.f32 %v1918, %v1918
      %v1923 = vmul.f32 %v1919, %v1919
      %v1924 = vmul.f32 %v1920, %v1920
      %v1925 = vmul.f32 %v1921, %v1921
      %1926 = vadd.xlane.f32.xlu0 %v1922
      %v1927 = vpop.xlane.xlu0 %1926
      %1928 = vadd.xlane.f32.xlu0 %v1923
      %v1929 = vpop.xlane.xlu0 %1928
      %1930 = vadd.xlane.f32.xlu0 %v1924
      %v1931 = vpop.xlane.xlu0 %1930
      %1932 = vadd.xlane.f32.xlu0 %v1925
      %v1933 = vpop.xlane.xlu0 %1932
      %v1934 = vmul.f32 %v1927, %v1913
      %v1935 = vmul.f32 %v1929, %v1913
      %v1936 = vmul.f32 %v1931, %v1913
      %v1937 = vmul.f32 %v1933, %v1913
      %v1938 = vadd.f32 %v1934, 1e-05
      %v1939 = vadd.f32 %v1935, 1e-05
      %v1940 = vadd.f32 %v1936, 1e-05
      %v1941 = vadd.f32 %v1937, 1e-05
      %v1942 = vrsqrt.pop %v1938
      %v1943 = vrsqrt.pop %v1939
      %v1944 = vrsqrt.pop %v1940
      %v1945 = vrsqrt.pop %v1941
      %v1946 = vmul.f32 %v1918, %v1942
      %v1947 = vmul.f32 %v1919, %v1943
      %v1948 = vmul.f32 %v1920, %v1944
      %v1949 = vmul.f32 %v1921, %v1945
      %v1950 = vlaneseq
      %v1951 = vshrl.u32 %v1950, 7
      %v1952 = vsub.s32 0, %v1951
      %v1953 = vrot.slane %v1903, %v1952
      %v1954 = vmul.f32 %v1946, %v1953
      %v1955 = vmul.f32 %v1947, %v1953
      %v1956 = vmul.f32 %v1948, %v1953
      %v1957 = vmul.f32 %v1949, %v1953
      %v1958 = vlaneseq
      %v1959 = vshrl.u32 %v1958, 7
      %v1960 = vsub.s32 0, %v1959
      %v1961 = vrot.slane %v1904, %v1960
      %v1962 = vadd.f32 %v1954, %v1961
      %v1963 = vadd.f32 %v1955, %v1961
      %v1964 = vadd.f32 %v1956, %v1961
      %v1965 = vadd.f32 %v1957, %v1961
      %v1966 = vld [vmem:[%s3] sm:$0xff]
      %v1967 = vld [vmem:[%s3 + $0x8] sm:$0xf]
      %v1968 = vld [vmem:[%s3 + $0xc] sm:$0xff]
      %v1969 = vld [vmem:[%s3 + $0x14] sm:$0xf]
      %v1970 = vld [vmem:[%s3 + $0x18] sm:$0xff]
      %v1971 = vld [vmem:[%s3 + $0x20] sm:$0xf]
      %v1972 = vld [vmem:[%s3 + $0x24] sm:$0xff]
      %v1973 = vld [vmem:[%s3 + $0x2c] sm:$0xf]
      %v1974 = vld [vmem:[%s3 + $0x30] sm:$0xff]
      %v1975 = vld [vmem:[%s3 + $0x38] sm:$0xf]
      %v1976 = vld [vmem:[%s3 + $0x3c] sm:$0xff]
      %v1977 = vld [vmem:[%s3 + $0x44] sm:$0xf]
      %v1978 = vld [vmem:[%s3 + $0x48] sm:$0xff]
      %v1979 = vld [vmem:[%s3 + $0x50] sm:$0xf]
      %v1980 = vld [vmem:[%s3 + $0x54] sm:$0xff]
      %v1981 = vld [vmem:[%s3 + $0x5c] sm:$0xf]
      %v1982 = vld [vmem:[%s3 + $0x60] sm:$0xff]
      %v1983 = vld [vmem:[%s3 + $0x68] sm:$0xf]
      %v1984 = vld [vmem:[%s3 + $0x6c] sm:$0xff]
      %v1985 = vld [vmem:[%s3 + $0x74] sm:$0xf]
      %v1986 = vld [vmem:[%s3 + $0x78] sm:$0xff]
      %v1987 = vld [vmem:[%s3 + $0x80] sm:$0xf]
      %v1988 = vld [vmem:[%s3 + $0x84] sm:$0xff]
      %v1989 = vld [vmem:[%s3 + $0x8c] sm:$0xf]
      %v1990 = vld [vmem:[%s3 + $0x90] sm:$0xff]
      %v1991 = vld [vmem:[%s3 + $0x98] sm:$0xf]
      %v1992 = vld [vmem:[%s3 + $0x9c] sm:$0xff]
      %v1993 = vld [vmem:[%s3 + $0xa4] sm:$0xf]
      %v1994 = vld [vmem:[%s3 + $0xa8] sm:$0xff]
      %v1995 = vld [vmem:[%s3 + $0xb0] sm:$0xf]
      %v1996 = vld [vmem:[%s3 + $0xb4] sm:$0xff]
      %v1997 = vld [vmem:[%s3 + $0xbc] sm:$0xf]
      %v1998 = vpack.c.bf16 %v1963, %v1962
      %v1999 = vpack.c.bf16 %v1965, %v1964
      %v2032 = vunpack.c.l.b16 %v1966
      %v2033 = vunpack.c.h.b16 %v1966
      %v2034 = vunpack.c.l.b16 %v1967
      %v2035 = vunpack.c.l.b16 %v1968
      %v2036 = vunpack.c.h.b16 %v1968
      %v2037 = vunpack.c.l.b16 %v1969
      %v2038 = vunpack.c.l.b16 %v1970
      %v2039 = vunpack.c.h.b16 %v1970
      %v2040 = vunpack.c.l.b16 %v1971
      %v2041 = vunpack.c.l.b16 %v1972
      %v2042 = vunpack.c.h.b16 %v1972
      %v2043 = vunpack.c.l.b16 %v1973
      %v2044 = vunpack.c.l.b16 %v1974
      %v2045 = vunpack.c.h.b16 %v1974
      %v2046 = vunpack.c.l.b16 %v1975
      %v2047 = vunpack.c.l.b16 %v1976
      %v2048 = vunpack.c.h.b16 %v1976
      %v2049 = vunpack.c.l.b16 %v1977
      %v2050 = vunpack.c.l.b16 %v1978
      %v2051 = vunpack.c.h.b16 %v1978
      %v2052 = vunpack.c.l.b16 %v1979
      %v2053 = vunpack.c.l.b16 %v1980
      %v2054 = vunpack.c.h.b16 %v1980
      %v2055 = vunpack.c.l.b16 %v1981
      %v2056 = vunpack.c.l.b16 %v1982
      %v2057 = vunpack.c.h.b16 %v1982
      %v2058 = vunpack.c.l.b16 %v1983
      %v2059 = vunpack.c.l.b16 %v1984
      %v2060 = vunpack.c.h.b16 %v1984
      %v2061 = vunpack.c.l.b16 %v1985
      %v2062 = vunpack.c.l.b16 %v1986
      %v2063 = vunpack.c.h.b16 %v1986
      %v2064 = vunpack.c.l.b16 %v1987
      %v2065 = vunpack.c.l.b16 %v1988
      %v2066 = vunpack.c.h.b16 %v1988
      %v2067 = vunpack.c.l.b16 %v1989
      %v2068 = vunpack.c.l.b16 %v1990
      %v2069 = vunpack.c.h.b16 %v1990
      %v2070 = vunpack.c.l.b16 %v1991
      %v2071 = vunpack.c.l.b16 %v1992
      %v2072 = vunpack.c.h.b16 %v1992
      %v2073 = vunpack.c.l.b16 %v1993
      %v2074 = vunpack.c.l.b16 %v1994
      %v2075 = vunpack.c.h.b16 %v1994
      %v2076 = vunpack.c.l.b16 %v1995
      %v2077 = vunpack.c.l.b16 %v1996
      %v2078 = vunpack.c.h.b16 %v1996
      %v2079 = vunpack.c.l.b16 %v1997
      %v2080 = vpack.c.b16 %v2035, %v2032
      %v2081 = vpack.c.b16 %v2036, %v2033
      %v2082 = vpack.c.b16 %v2037, %v2034
      %v2083 = vpack.c.b16 %v2041, %v2038
      %v2084 = vpack.c.b16 %v2042, %v2039
      %v2085 = vpack.c.b16 %v2043, %v2040
      %v2086 = vpack.c.b16 %v2047, %v2044
      %v2087 = vpack.c.b16 %v2048, %v2045
      %v2088 = vpack.c.b16 %v2049, %v2046
      %v2089 = vpack.c.b16 %v2053, %v2050
      %v2090 = vpack.c.b16 %v2054, %v2051
      %v2091 = vpack.c.b16 %v2055, %v2052
      %v2092 = vpack.c.b16 %v2059, %v2056
      %v2093 = vpack.c.b16 %v2060, %v2057
      %v2094 = vpack.c.b16 %v2061, %v2058
      %v2095 = vpack.c.b16 %v2065, %v2062
      %v2096 = vpack.c.b16 %v2066, %v2063
      %v2097 = vpack.c.b16 %v2067, %v2064
      %v2098 = vpack.c.b16 %v2071, %v2068
      %v2099 = vpack.c.b16 %v2072, %v2069
      %v2100 = vpack.c.b16 %v2073, %v2070
      %v2101 = vpack.c.b16 %v2077, %v2074
      %v2102 = vpack.c.b16 %v2078, %v2075
      %v2103 = vpack.c.b16 %v2079, %v2076
      %2128 = vmatprep.subr.bf16.mxu0 %v2081
      %2129 = vmatpush1.bf16.msra.mxu0 %v2080
      %2130 = vmatprep.subr.bf16.mxu0 %v2084
      %2131 = vmatpush1.bf16.msra.mxu0 %v2083
      %2132 = vmatprep.subr.bf16.mxu0 %v2087
      %2133 = vmatpush1.bf16.msra.mxu0 %v2086
      %2134 = vmatprep.subr.bf16.mxu0 %v2090
      %2135 = vmatpush1.bf16.msra.mxu0 %v2089
      %2136 = vmatprep.subr.bf16.mxu0 %v2093
      %2137 = vmatpush1.bf16.msra.mxu0 %v2092
      %2138 = vmatprep.subr.bf16.mxu0 %v2096
      %2139 = vmatpush1.bf16.msra.mxu0 %v2095
      %2140 = vmatprep.subr.bf16.mxu0 %v2099
      %2141 = vmatpush1.bf16.msra.mxu0 %v2098
      %2142 = vmatprep.subr.bf16.mxu0 %v2102
      %2143 = vmatpush1.bf16.msra.mxu0 %v2101
      %2144 = vmatprep.subr.bf16.mxu0 0
      %2145 = vmatpush1.bf16.msra.mxu0 0
      %2146 = vmatprep.subr.bf16.mxu0 0
      %2147 = vmatpush1.bf16.msra.mxu0 0
      %2148 = vmatprep.subr.bf16.mxu0 0
      %2149 = vmatpush1.bf16.msra.mxu0 0
      %2150 = vmatprep.subr.bf16.mxu0 0
      %2151 = vmatpush1.bf16.msra.mxu0 0
      %2152 = vmatprep.subr.bf16.mxu0 0
      %2153 = vmatpush1.bf16.msra.mxu0 0
      %2154 = vmatprep.subr.bf16.mxu0 0
      %2155 = vmatpush1.bf16.msra.mxu0 0
      %2156 = vmatprep.subr.bf16.mxu0 0
      %2157 = vmatpush1.bf16.msra.mxu0 0
      %2158 = vmatprep.subr.bf16.mxu0 0
      %2159 = vmatpush1.bf16.msra.mxu0 0
      %2160 = vmatprep.mubr.bf16.mxu0 0
      %2161 = vmatmul.mubr.bf16.gmra.mrb[0].mxu0 %v1998
      %v2162 = vpop.f32.mrb[0].mxu0
      %v2163 = vadd.f32 0.0, %v2162
      %v2164 = vpop.f32.mrb[0].mxu0
      %v2165 = vadd.f32 0.0, %v2164
      %v2166 = vpop.f32.mrb[0].mxu0
      %v2167 = vadd.f32 0.0, %v2166
      %v2168 = vpop.f32.mrb[0].mxu0
      %v2169 = vadd.f32 0.0, %v2168
      %2170 = vmatprep.mubr.bf16.mxu0 0
      %2171 = vmatmul.mubr.bf16.gmra.mrb[0].mxu0 %v1999
      %v2172 = vpop.f32.mrb[0].mxu0
      %v2173 = vadd.f32 0.0, %v2172
      %v2174 = vpop.f32.mrb[0].mxu0
      %v2175 = vadd.f32 0.0, %v2174
      %v2176 = vpop.f32.mrb[0].mxu0
      %v2177 = vadd.f32 0.0, %v2176
      %v2178 = vpop.f32.mrb[0].mxu0
      %v2179 = vadd.f32 0.0, %v2178
      %2180 = vdwg.mxu0
      %2181 = vmatprep.subr.bf16.mxu0 0
      %2182 = vmatpush1.bf16.msra.mxu0 %v2082
      %2183 = vmatprep.subr.bf16.mxu0 0
      %2184 = vmatpush1.bf16.msra.mxu0 %v2085
      %2185 = vmatprep.subr.bf16.mxu0 0
      %2186 = vmatpush1.bf16.msra.mxu0 %v2088
      %2187 = vmatprep.subr.bf16.mxu0 0
      %2188 = vmatpush1.bf16.msra.mxu0 %v2091
      %2189 = vmatprep.subr.bf16.mxu0 0
      %2190 = vmatpush1.bf16.msra.mxu0 %v2094
      %2191 = vmatprep.subr.bf16.mxu0 0
      %2192 = vmatpush1.bf16.msra.mxu0 %v2097
      %2193 = vmatprep.subr.bf16.mxu0 0
      %2194 = vmatpush1.bf16.msra.mxu0 %v2100
      %2195 = vmatprep.subr.bf16.mxu0 0
      %2196 = vmatpush1.bf16.msra.mxu0 %v2103
      %2197 = vmatprep.subr.bf16.mxu0 0
      %2198 = vmatpush1.bf16.msra.mxu0 0
      %2199 = vmatprep.subr.bf16.mxu0 0
      %2200 = vmatpush1.bf16.msra.mxu0 0
      %2201 = vmatprep.subr.bf16.mxu0 0
      %2202 = vmatpush1.bf16.msra.mxu0 0
      %2203 = vmatprep.subr.bf16.mxu0 0
      %2204 = vmatpush1.bf16.msra.mxu0 0
      %2205 = vmatprep.subr.bf16.mxu0 0
      %2206 = vmatpush1.bf16.msra.mxu0 0
      %2207 = vmatprep.subr.bf16.mxu0 0
      %2208 = vmatpush1.bf16.msra.mxu0 0
      %2209 = vmatprep.subr.bf16.mxu0 0
      %2210 = vmatpush1.bf16.msra.mxu0 0
      %2211 = vmatprep.subr.bf16.mxu0 0
      %2212 = vmatpush1.bf16.msra.mxu0 0
      %2213 = vmatprep.mubr.bf16.mxu0 0
      %2214 = vmatmul.mubr.bf16.gmra.mrb[0].mxu0 %v1998
      %v2215 = vpop.f32.mrb[0].mxu0
      %v2216 = vadd.f32 0.0, %v2215
      %v2217 = vpop.f32.mrb[0].mxu0
      %v2218 = vpop.f32.mrb[0].mxu0
      %v2219 = vadd.f32 0.0, %v2218
      %v2220 = vpop.f32.mrb[0].mxu0
      %2221 = vmatprep.mubr.bf16.mxu0 0
      %2222 = vmatmul.mubr.bf16.gmra.mrb[0].mxu0 %v1999
      %v2223 = vpop.f32.mrb[0].mxu0
      %v2224 = vadd.f32 0.0, %v2223
      %v2225 = vpop.f32.mrb[0].mxu0
      %v2226 = vpop.f32.mrb[0].mxu0
      %v2227 = vadd.f32 0.0, %v2226
      %v2228 = vpop.f32.mrb[0].mxu0
      %2229 = vdwg.mxu0
      %v2230 = vld [vmem:[%s4 + $0x20] sm:$0xff]
      %v2231 = vld [vmem:[%s4 + $0x28] sm:$0xff]
      %v2232 = vld [vmem:[%s4 + $0x30] sm:$0xff]
      %v2233 = vld [vmem:[%s4 + $0x38] sm:$0xff]
      %v2234 = vld [vmem:[%s4 + $0x40] sm:$0xff]
      %v2235 = vld [vmem:[%s4 + $0x48] sm:$0xff]
      %v2236 = vld [vmem:[%s4 + $0x50] sm:$0xff]
      %v2237 = vld [vmem:[%s4 + $0x58] sm:$0xff]
      %v2238 = vld [vmem:[%s4 + $0x166] sm:$0x1]
      %v2239 = vadd.f32 %v2163, %v2230
      %v2240 = vadd.f32 %v2167, %v2231
      %v2241 = vadd.f32 %v2173, %v2232
      %v2242 = vadd.f32 %v2177, %v2233
      %v2243 = vmul.f32 %v2239, 0.25
      %v2244 = vmul.f32 %v2240, 0.25
      %v2245 = vmul.f32 %v2241, 0.25
      %v2246 = vmul.f32 %v2242, 0.25
      %v2247 = vadd.f32 %v2165, %v2234
      %v2248 = vadd.f32 %v2169, %v2235
      %v2249 = vadd.f32 %v2175, %v2236
      %v2250 = vadd.f32 %v2179, %v2237
      %v2251 = vlaneseq
      %v2252 = vshrl.u32 %v2251, 7
      %v2253 = vsub.s32 0, %v2252
      %v2254 = vrot.slane %v2238, %v2253
      %v2255 = vadd.f32 %v2216, %v2254
      %v2256 = vadd.f32 %v2219, %v2254
      %v2257 = vadd.f32 %v2224, %v2254
      %v2258 = vadd.f32 %v2227, %v2254
      %v2259 = vpack.c.bf16 %v2244, %v2243
      %v2260 = vpack.c.bf16 %v2246, %v2245
      %v2261 = vld [vmem:[%s2 + $0x280] sm:$0xf]
      %v2262 = vld [vmem:[%s2 + $0x284] sm:$0xf]
      %v2263 = vld [vmem:[%s2 + $0x288] sm:$0xf]
      %v2264 = vld [vmem:[%s2 + $0x28c] sm:$0xf]
      %v2265 = vld [vmem:[%s2 + $0x290] sm:$0xf]
      %v2266 = vld [vmem:[%s2 + $0x294] sm:$0xf]
      %v2267 = vld [vmem:[%s2 + $0x298] sm:$0xf]
      %v2268 = vld [vmem:[%s2 + $0x29c] sm:$0xf]
      %v2269 = vld [vmem:[%s2 + $0x2a0] sm:$0xf]
      %v2270 = vld [vmem:[%s2 + $0x2a4] sm:$0xf]
      %v2271 = vld [vmem:[%s2 + $0x2a8] sm:$0xf]
      %v2272 = vld [vmem:[%s2 + $0x2ac] sm:$0xf]
      %v2273 = vld [vmem:[%s2 + $0x2b0] sm:$0xf]
      %v2274 = vld [vmem:[%s2 + $0x2b4] sm:$0xf]
      %v2275 = vld [vmem:[%s2 + $0x2b8] sm:$0xf]
      %v2276 = vld [vmem:[%s2 + $0x2bc] sm:$0xf]
      %v2277 = vld [vmem:[%s2 + $0x2c0] sm:$0xf]
      %v2278 = vld [vmem:[%s2 + $0x2c4] sm:$0xf]
      %v2279 = vld [vmem:[%s2 + $0x2c8] sm:$0xf]
      %v2280 = vld [vmem:[%s2 + $0x2cc] sm:$0xf]
      %v2281 = vld [vmem:[%s2 + $0x2d0] sm:$0xf]
      %v2282 = vld [vmem:[%s2 + $0x2d4] sm:$0xf]
      %v2283 = vld [vmem:[%s2 + $0x2d8] sm:$0xf]
      %v2284 = vld [vmem:[%s2 + $0x2dc] sm:$0xf]
      %v2285 = vld [vmem:[%s2 + $0x2e0] sm:$0xf]
      %v2286 = vld [vmem:[%s2 + $0x2e4] sm:$0xf]
      %v2287 = vld [vmem:[%s2 + $0x2e8] sm:$0xf]
      %v2288 = vld [vmem:[%s2 + $0x2ec] sm:$0xf]
      %v2289 = vld [vmem:[%s2 + $0x2f0] sm:$0xf]
      %v2290 = vld [vmem:[%s2 + $0x2f4] sm:$0xf]
      %v2291 = vld [vmem:[%s2 + $0x2f8] sm:$0xf]
      %v2292 = vld [vmem:[%s2 + $0x2fc] sm:$0xf]
      %v2325 = vunpack.c.l.b16 %v2261
      %v2326 = vunpack.c.l.b16 %v2262
      %v2327 = vunpack.c.l.b16 %v2263
      %v2328 = vunpack.c.l.b16 %v2264
      %v2329 = vunpack.c.l.b16 %v2265
      %v2330 = vunpack.c.l.b16 %v2266
      %v2331 = vunpack.c.l.b16 %v2267
      %v2332 = vunpack.c.l.b16 %v2268
      %v2333 = vunpack.c.l.b16 %v2269
      %v2334 = vunpack.c.l.b16 %v2270
      %v2335 = vunpack.c.l.b16 %v2271
      %v2336 = vunpack.c.l.b16 %v2272
      %v2337 = vunpack.c.l.b16 %v2273
      %v2338 = vunpack.c.l.b16 %v2274
      %v2339 = vunpack.c.l.b16 %v2275
      %v2340 = vunpack.c.l.b16 %v2276
      %v2341 = vunpack.c.l.b16 %v2277
      %v2342 = vunpack.c.l.b16 %v2278
      %v2343 = vunpack.c.l.b16 %v2279
      %v2344 = vunpack.c.l.b16 %v2280
      %v2345 = vunpack.c.l.b16 %v2281
      %v2346 = vunpack.c.l.b16 %v2282
      %v2347 = vunpack.c.l.b16 %v2283
      %v2348 = vunpack.c.l.b16 %v2284
      %v2349 = vunpack.c.l.b16 %v2285
      %v2350 = vunpack.c.l.b16 %v2286
      %v2351 = vunpack.c.l.b16 %v2287
      %v2352 = vunpack.c.l.b16 %v2288
      %v2353 = vunpack.c.l.b16 %v2289
      %v2354 = vunpack.c.l.b16 %v2290
      %v2355 = vunpack.c.l.b16 %v2291
      %v2356 = vunpack.c.l.b16 %v2292
      %v2357 = vpack.c.b16 %v2326, %v2325
      %v2358 = vpack.c.b16 %v2328, %v2327
      %v2359 = vpack.c.b16 %v2330, %v2329
      %v2360 = vpack.c.b16 %v2332, %v2331
      %v2361 = vpack.c.b16 %v2334, %v2333
      %v2362 = vpack.c.b16 %v2336, %v2335
      %v2363 = vpack.c.b16 %v2338, %v2337
      %v2364 = vpack.c.b16 %v2340, %v2339
      %v2365 = vpack.c.b16 %v2342, %v2341
      %v2366 = vpack.c.b16 %v2344, %v2343
      %v2367 = vpack.c.b16 %v2346, %v2345
      %v2368 = vpack.c.b16 %v2348, %v2347
      %v2369 = vpack.c.b16 %v2350, %v2349
      %v2370 = vpack.c.b16 %v2352, %v2351
      %v2371 = vpack.c.b16 %v2354, %v2353
      %v2372 = vpack.c.b16 %v2356, %v2355
      %v2389 = vmul.bf16 %v2259, %v2357
      %v2390 = vmul.bf16 %v2260, %v2358
      %v2391 = vmul.bf16 %v2259, %v2359
      %v2392 = vmul.bf16 %v2260, %v2360
      %v2393 = vmul.bf16 %v2259, %v2361
      %v2394 = vmul.bf16 %v2260, %v2362
      %v2395 = vmul.bf16 %v2259, %v2363
      %v2396 = vmul.bf16 %v2260, %v2364
      %v2397 = vmul.bf16 %v2259, %v2365
      %v2398 = vmul.bf16 %v2260, %v2366
      %v2399 = vmul.bf16 %v2259, %v2367
      %v2400 = vmul.bf16 %v2260, %v2368
      %v2401 = vmul.bf16 %v2259, %v2369
      %v2402 = vmul.bf16 %v2260, %v2370
      %v2403 = vmul.bf16 %v2259, %v2371
      %v2404 = vmul.bf16 %v2260, %v2372
      %v2405 = vpack.c.bf16 %v2248, %v2247
      %v2406 = vpack.c.bf16 %v2250, %v2249
      %2407 = vmatprep.subr.bf16.mxu0 0
      %2408 = vmatpush1.bf16.xpose.msra.mxu0 %v2405
      %2409 = vmatprep.subr.bf16.mxu0 0
      %2410 = vmatpush1.bf16.xpose.msra.mxu0 %v2406
      %2411 = vmatprep.subr.bf16.mxu0 0
      %2412 = vmatpush1.bf16.xpose.msra.mxu0 0
      %2413 = vmatprep.subr.bf16.mxu0 0
      %2414 = vmatpush1.bf16.xpose.msra.mxu0 0
      %2415 = vmatprep.subr.bf16.mxu0 0
      %2416 = vmatpush1.bf16.xpose.msra.mxu0 0
      %2417 = vmatprep.subr.bf16.mxu0 0
      %2418 = vmatpush1.bf16.xpose.msra.mxu0 0
      %2419 = vmatprep.subr.bf16.mxu0 0
      %2420 = vmatpush1.bf16.xpose.msra.mxu0 0
      %2421 = vmatprep.subr.bf16.mxu0 0
      %2422 = vmatpush1.bf16.xpose.msra.mxu0 0
      %2423 = vmatprep.subr.bf16.mxu0 0
      %2424 = vmatpush1.bf16.xpose.msra.mxu0 0
      %2425 = vmatprep.subr.bf16.mxu0 0
      %2426 = vmatpush1.bf16.xpose.msra.mxu0 0
      %2427 = vmatprep.subr.bf16.mxu0 0
      %2428 = vmatpush1.bf16.xpose.msra.mxu0 0
      %2429 = vmatprep.subr.bf16.mxu0 0
      %2430 = vmatpush1.bf16.xpose.msra.mxu0 0
      %2431 = vmatprep.subr.bf16.mxu0 0
      %2432 = vmatpush1.bf16.xpose.msra.mxu0 0
      %2433 = vmatprep.subr.bf16.mxu0 0
      %2434 = vmatpush1.bf16.xpose.msra.mxu0 0
      %2435 = vmatprep.subr.bf16.mxu0 0
      %2436 = vmatpush1.bf16.xpose.msra.mxu0 0
      %2437 = vmatprep.subr.bf16.mxu0 0
      %2438 = vmatpush1.bf16.xpose.msra.mxu0 0
      %2439 = vmatprep.mubr.bf16.mxu0 0
      %2440 = vmatmul.mubr.bf16.gmra.mrb[0].mxu0 %v2389
      %v2441 = vpop.f32.mrb[0].mxu0
      %v2442 = vadd.f32 0.0, %v2441
      %v2443 = vpop.f32.mrb[0].mxu0
      %v2444 = vpop.f32.mrb[0].mxu0
      %v2445 = vadd.f32 0.0, %v2444
      %v2446 = vpop.f32.mrb[0].mxu0
      %2447 = vmatprep.mubr.bf16.mxu0 0
      %2448 = vmatmul.mubr.bf16.gmra.mrb[0].mxu0 %v2390
      %v2449 = vpop.f32.mrb[0].mxu0
      %v2450 = vadd.f32 0.0, %v2449
      %v2451 = vpop.f32.mrb[0].mxu0
      %v2452 = vpop.f32.mrb[0].mxu0
      %v2453 = vadd.f32 0.0, %v2452
      %v2454 = vpop.f32.mrb[0].mxu0
      %2455 = vmatprep.mubr.bf16.mxu0 0
      %2456 = vmatmul.mubr.bf16.gmra.mrb[0].mxu0 %v2391
      %v2457 = vpop.f32.mrb[0].mxu0
      %v2458 = vadd.f32 0.0, %v2457
      %v2459 = vpop.f32.mrb[0].mxu0
      %v2460 = vpop.f32.mrb[0].mxu0
      %v2461 = vadd.f32 0.0, %v2460
      %v2462 = vpop.f32.mrb[0].mxu0
      %2463 = vmatprep.mubr.bf16.mxu0 0
      %2464 = vmatmul.mubr.bf16.gmra.mrb[0].mxu0 %v2392
      %v2465 = vpop.f32.mrb[0].mxu0
      %v2466 = vadd.f32 0.0, %v2465
      %v2467 = vpop.f32.mrb[0].mxu0
      %v2468 = vpop.f32.mrb[0].mxu0
      %v2469 = vadd.f32 0.0, %v2468
      %v2470 = vpop.f32.mrb[0].mxu0
      %2471 = vmatprep.mubr.bf16.mxu0 0
      %2472 = vmatmul.mubr.bf16.gmra.mrb[0].mxu0 %v2393
      %v2473 = vpop.f32.mrb[0].mxu0
      %v2474 = vadd.f32 0.0, %v2473
      %v2475 = vpop.f32.mrb[0].mxu0
      %v2476 = vpop.f32.mrb[0].mxu0
      %v2477 = vadd.f32 0.0, %v2476
      %v2478 = vpop.f32.mrb[0].mxu0
      %2479 = vmatprep.mubr.bf16.mxu0 0
      %2480 = vmatmul.mubr.bf16.gmra.mrb[0].mxu0 %v2394
      %v2481 = vpop.f32.mrb[0].mxu0
      %v2482 = vadd.f32 0.0, %v2481
      %v2483 = vpop.f32.mrb[0].mxu0
      %v2484 = vpop.f32.mrb[0].mxu0
      %v2485 = vadd.f32 0.0, %v2484
      %v2486 = vpop.f32.mrb[0].mxu0
      %2487 = vmatprep.mubr.bf16.mxu0 0
      %2488 = vmatmul.mubr.bf16.gmra.mrb[0].mxu0 %v2395
      %v2489 = vpop.f32.mrb[0].mxu0
      %v2490 = vadd.f32 0.0, %v2489
      %v2491 = vpop.f32.mrb[0].mxu0
      %v2492 = vpop.f32.mrb[0].mxu0
      %v2493 = vadd.f32 0.0, %v2492
      %v2494 = vpop.f32.mrb[0].mxu0
      %2495 = vmatprep.mubr.bf16.mxu0 0
      %2496 = vmatmul.mubr.bf16.gmra.mrb[0].mxu0 %v2396
      %v2497 = vpop.f32.mrb[0].mxu0
      %v2498 = vadd.f32 0.0, %v2497
      %v2499 = vpop.f32.mrb[0].mxu0
      %v2500 = vpop.f32.mrb[0].mxu0
      %v2501 = vadd.f32 0.0, %v2500
      %v2502 = vpop.f32.mrb[0].mxu0
      %2503 = vmatprep.mubr.bf16.mxu0 0
      %2504 = vmatmul.mubr.bf16.gmra.mrb[0].mxu0 %v2397
      %v2505 = vpop.f32.mrb[0].mxu0
      %v2506 = vadd.f32 0.0, %v2505
      %v2507 = vpop.f32.mrb[0].mxu0
      %v2508 = vpop.f32.mrb[0].mxu0
      %v2509 = vadd.f32 0.0, %v2508
      %v2510 = vpop.f32.mrb[0].mxu0
      %2511 = vmatprep.mubr.bf16.mxu0 0
      %2512 = vmatmul.mubr.bf16.gmra.mrb[0].mxu0 %v2398
      %v2513 = vpop.f32.mrb[0].mxu0
      %v2514 = vadd.f32 0.0, %v2513
      %v2515 = vpop.f32.mrb[0].mxu0
      %v2516 = vpop.f32.mrb[0].mxu0
      %v2517 = vadd.f32 0.0, %v2516
      %v2518 = vpop.f32.mrb[0].mxu0
      %2519 = vmatprep.mubr.bf16.mxu0 0
      %2520 = vmatmul.mubr.bf16.gmra.mrb[0].mxu0 %v2399
      %v2521 = vpop.f32.mrb[0].mxu0
      %v2522 = vadd.f32 0.0, %v2521
      %v2523 = vpop.f32.mrb[0].mxu0
      %v2524 = vpop.f32.mrb[0].mxu0
      %v2525 = vadd.f32 0.0, %v2524
      %v2526 = vpop.f32.mrb[0].mxu0
      %2527 = vmatprep.mubr.bf16.mxu0 0
      %2528 = vmatmul.mubr.bf16.gmra.mrb[0].mxu0 %v2400
      %v2529 = vpop.f32.mrb[0].mxu0
      %v2530 = vadd.f32 0.0, %v2529
      %v2531 = vpop.f32.mrb[0].mxu0
      %v2532 = vpop.f32.mrb[0].mxu0
      %v2533 = vadd.f32 0.0, %v2532
      %v2534 = vpop.f32.mrb[0].mxu0
      %2535 = vmatprep.mubr.bf16.mxu0 0
      %2536 = vmatmul.mubr.bf16.gmra.mrb[0].mxu0 %v2401
      %v2537 = vpop.f32.mrb[0].mxu0
      %v2538 = vadd.f32 0.0, %v2537
      %v2539 = vpop.f32.mrb[0].mxu0
      %v2540 = vpop.f32.mrb[0].mxu0
      %v2541 = vadd.f32 0.0, %v2540
      %v2542 = vpop.f32.mrb[0].mxu0
      %2543 = vmatprep.mubr.bf16.mxu0 0
      %2544 = vmatmul.mubr.bf16.gmra.mrb[0].mxu0 %v2402
      %v2545 = vpop.f32.mrb[0].mxu0
      %v2546 = vadd.f32 0.0, %v2545
      %v2547 = vpop.f32.mrb[0].mxu0
      %v2548 = vpop.f32.mrb[0].mxu0
      %v2549 = vadd.f32 0.0, %v2548
      %v2550 = vpop.f32.mrb[0].mxu0
      %2551 = vmatprep.mubr.bf16.mxu0 0
      %2552 = vmatmul.mubr.bf16.gmra.mrb[0].mxu0 %v2403
      %v2553 = vpop.f32.mrb[0].mxu0
      %v2554 = vadd.f32 0.0, %v2553
      %v2555 = vpop.f32.mrb[0].mxu0
      %v2556 = vpop.f32.mrb[0].mxu0
      %v2557 = vadd.f32 0.0, %v2556
      %v2558 = vpop.f32.mrb[0].mxu0
      %2559 = vmatprep.mubr.bf16.mxu0 0
      %2560 = vmatmul.mubr.bf16.gmra.mrb[0].mxu0 %v2404
      %v2561 = vpop.f32.mrb[0].mxu0
      %v2562 = vadd.f32 0.0, %v2561
      %v2563 = vpop.f32.mrb[0].mxu0
      %v2564 = vpop.f32.mrb[0].mxu0
      %v2565 = vadd.f32 0.0, %v2564
      %v2566 = vpop.f32.mrb[0].mxu0
      %2567 = vdwg.mxu0
      %vm2568 = vcmask 261120
      %v2569 = vsel %vm2568, %v2442, -inf
      %2570 = vmax.xlane.f32.xlu0 %v2569
      %v2571 = vpop.xlane.xlu0 %2570
      %v2572 = vsel %vm2568, %v2445, -inf
      %2573 = vmax.xlane.f32.xlu0 %v2572
      %v2574 = vpop.xlane.xlu0 %2573
      %v2575 = vsel %vm2568, %v2450, -inf
      %2576 = vmax.xlane.f32.xlu0 %v2575
      %v2577 = vpop.xlane.xlu0 %2576
      %v2578 = vsel %vm2568, %v2453, -inf
      %2579 = vmax.xlane.f32.xlu0 %v2578
      %v2580 = vpop.xlane.xlu0 %2579
      %v2581 = vsel %vm2568, %v2458, -inf
      %2582 = vmax.xlane.f32.xlu0 %v2581
      %v2583 = vpop.xlane.xlu0 %2582
      %v2584 = vsel %vm2568, %v2461, -inf
      %2585 = vmax.xlane.f32.xlu0 %v2584
      %v2586 = vpop.xlane.xlu0 %2585
      %v2587 = vsel %vm2568, %v2466, -inf
      %2588 = vmax.xlane.f32.xlu0 %v2587
      %v2589 = vpop.xlane.xlu0 %2588
      %v2590 = vsel %vm2568, %v2469, -inf
      %2591 = vmax.xlane.f32.xlu0 %v2590
      %v2592 = vpop.xlane.xlu0 %2591
      %v2593 = vsel %vm2568, %v2474, -inf
      %2594 = vmax.xlane.f32.xlu0 %v2593
      %v2595 = vpop.xlane.xlu0 %2594
      %v2596 = vsel %vm2568, %v2477, -inf
      %2597 = vmax.xlane.f32.xlu0 %v2596
      %v2598 = vpop.xlane.xlu0 %2597
      %v2599 = vsel %vm2568, %v2482, -inf
      %2600 = vmax.xlane.f32.xlu0 %v2599
      %v2601 = vpop.xlane.xlu0 %2600
      %v2602 = vsel %vm2568, %v2485, -inf
      %2603 = vmax.xlane.f32.xlu0 %v2602
      %v2604 = vpop.xlane.xlu0 %2603
      %v2605 = vsel %vm2568, %v2490, -inf
      %2606 = vmax.xlane.f32.xlu0 %v2605
      %v2607 = vpop.xlane.xlu0 %2606
      %v2608 = vsel %vm2568, %v2493, -inf
      %2609 = vmax.xlane.f32.xlu0 %v2608
      %v2610 = vpop.xlane.xlu0 %2609
      %v2611 = vsel %vm2568, %v2498, -inf
      %2612 = vmax.xlane.f32.xlu0 %v2611
      %v2613 = vpop.xlane.xlu0 %2612
      %v2614 = vsel %vm2568, %v2501, -inf
      %2615 = vmax.xlane.f32.xlu0 %v2614
      %v2616 = vpop.xlane.xlu0 %2615
      %v2617 = vsel %vm2568, %v2506, -inf
      %2618 = vmax.xlane.f32.xlu0 %v2617
      %v2619 = vpop.xlane.xlu0 %2618
      %v2620 = vsel %vm2568, %v2509, -inf
      %2621 = vmax.xlane.f32.xlu0 %v2620
      %v2622 = vpop.xlane.xlu0 %2621
      %v2623 = vsel %vm2568, %v2514, -inf
      %2624 = vmax.xlane.f32.xlu0 %v2623
      %v2625 = vpop.xlane.xlu0 %2624
      %v2626 = vsel %vm2568, %v2517, -inf
      %2627 = vmax.xlane.f32.xlu0 %v2626
      %v2628 = vpop.xlane.xlu0 %2627
      %v2629 = vsel %vm2568, %v2522, -inf
      %2630 = vmax.xlane.f32.xlu0 %v2629
      %v2631 = vpop.xlane.xlu0 %2630
      %v2632 = vsel %vm2568, %v2525, -inf
      %2633 = vmax.xlane.f32.xlu0 %v2632
      %v2634 = vpop.xlane.xlu0 %2633
      %v2635 = vsel %vm2568, %v2530, -inf
      %2636 = vmax.xlane.f32.xlu0 %v2635
      %v2637 = vpop.xlane.xlu0 %2636
      %v2638 = vsel %vm2568, %v2533, -inf
      %2639 = vmax.xlane.f32.xlu0 %v2638
      %v2640 = vpop.xlane.xlu0 %2639
      %v2641 = vsel %vm2568, %v2538, -inf
      %2642 = vmax.xlane.f32.xlu0 %v2641
      %v2643 = vpop.xlane.xlu0 %2642
      %v2644 = vsel %vm2568, %v2541, -inf
      %2645 = vmax.xlane.f32.xlu0 %v2644
      %v2646 = vpop.xlane.xlu0 %2645
      %v2647 = vsel %vm2568, %v2546, -inf
      %2648 = vmax.xlane.f32.xlu0 %v2647
      %v2649 = vpop.xlane.xlu0 %2648
      %v2650 = vsel %vm2568, %v2549, -inf
      %2651 = vmax.xlane.f32.xlu0 %v2650
      %v2652 = vpop.xlane.xlu0 %2651
      %v2653 = vsel %vm2568, %v2554, -inf
      %2654 = vmax.xlane.f32.xlu0 %v2653
      %v2655 = vpop.xlane.xlu0 %2654
      %v2656 = vsel %vm2568, %v2557, -inf
      %2657 = vmax.xlane.f32.xlu0 %v2656
      %v2658 = vpop.xlane.xlu0 %2657
      %v2659 = vsel %vm2568, %v2562, -inf
      %2660 = vmax.xlane.f32.xlu0 %v2659
      %v2661 = vpop.xlane.xlu0 %2660
      %v2662 = vsel %vm2568, %v2565, -inf
      %2663 = vmax.xlane.f32.xlu0 %v2662
      %v2664 = vpop.xlane.xlu0 %2663
      %v2665 = vsub.f32 %v2442, %v2571
      %v2666 = vsub.f32 %v2445, %v2574
      %v2667 = vsub.f32 %v2450, %v2577
      %v2668 = vsub.f32 %v2453, %v2580
      %v2669 = vsub.f32 %v2458, %v2583
      %v2670 = vsub.f32 %v2461, %v2586
      %v2671 = vsub.f32 %v2466, %v2589
      %v2672 = vsub.f32 %v2469, %v2592
      %v2673 = vsub.f32 %v2474, %v2595
      %v2674 = vsub.f32 %v2477, %v2598
      %v2675 = vsub.f32 %v2482, %v2601
      %v2676 = vsub.f32 %v2485, %v2604
      %v2677 = vsub.f32 %v2490, %v2607
      %v2678 = vsub.f32 %v2493, %v2610
      %v2679 = vsub.f32 %v2498, %v2613
      %v2680 = vsub.f32 %v2501, %v2616
      %v2681 = vsub.f32 %v2506, %v2619
      %v2682 = vsub.f32 %v2509, %v2622
      %v2683 = vsub.f32 %v2514, %v2625
      %v2684 = vsub.f32 %v2517, %v2628
      %v2685 = vsub.f32 %v2522, %v2631
      %v2686 = vsub.f32 %v2525, %v2634
      %v2687 = vsub.f32 %v2530, %v2637
      %v2688 = vsub.f32 %v2533, %v2640
      %v2689 = vsub.f32 %v2538, %v2643
      %v2690 = vsub.f32 %v2541, %v2646
      %v2691 = vsub.f32 %v2546, %v2649
      %v2692 = vsub.f32 %v2549, %v2652
      %v2693 = vsub.f32 %v2554, %v2655
      %v2694 = vsub.f32 %v2557, %v2658
      %v2695 = vsub.f32 %v2562, %v2661
      %v2696 = vsub.f32 %v2565, %v2664
      %v2697 = vmul.f32 %v2665, 1.442695
      %v2698 = vpow.pop %v2697
      %v2699 = vmul.f32 %v2666, 1.442695
      %v2700 = vpow.pop %v2699
      %v2701 = vmul.f32 %v2667, 1.442695
      %v2702 = vpow.pop %v2701
      %v2703 = vmul.f32 %v2668, 1.442695
      %v2704 = vpow.pop %v2703
      %v2705 = vmul.f32 %v2669, 1.442695
      %v2706 = vpow.pop %v2705
      %v2707 = vmul.f32 %v2670, 1.442695
      %v2708 = vpow.pop %v2707
      %v2709 = vmul.f32 %v2671, 1.442695
      %v2710 = vpow.pop %v2709
      %v2711 = vmul.f32 %v2672, 1.442695
      %v2712 = vpow.pop %v2711
      %v2713 = vmul.f32 %v2673, 1.442695
      %v2714 = vpow.pop %v2713
      %v2715 = vmul.f32 %v2674, 1.442695
      %v2716 = vpow.pop %v2715
      %v2717 = vmul.f32 %v2675, 1.442695
      %v2718 = vpow.pop %v2717
      %v2719 = vmul.f32 %v2676, 1.442695
      %v2720 = vpow.pop %v2719
      %v2721 = vmul.f32 %v2677, 1.442695
      %v2722 = vpow.pop %v2721
      %v2723 = vmul.f32 %v2678, 1.442695
      %v2724 = vpow.pop %v2723
      %v2725 = vmul.f32 %v2679, 1.442695
      %v2726 = vpow.pop %v2725
      %v2727 = vmul.f32 %v2680, 1.442695
      %v2728 = vpow.pop %v2727
      %v2729 = vmul.f32 %v2681, 1.442695
      %v2730 = vpow.pop %v2729
      %v2731 = vmul.f32 %v2682, 1.442695
      %v2732 = vpow.pop %v2731
      %v2733 = vmul.f32 %v2683, 1.442695
      %v2734 = vpow.pop %v2733
      %v2735 = vmul.f32 %v2684, 1.442695
      %v2736 = vpow.pop %v2735
      %v2737 = vmul.f32 %v2685, 1.442695
      %v2738 = vpow.pop %v2737
      %v2739 = vmul.f32 %v2686, 1.442695
      %v2740 = vpow.pop %v2739
      %v2741 = vmul.f32 %v2687, 1.442695
      %v2742 = vpow.pop %v2741
      %v2743 = vmul.f32 %v2688, 1.442695
      %v2744 = vpow.pop %v2743
      %v2745 = vmul.f32 %v2689, 1.442695
      %v2746 = vpow.pop %v2745
      %v2747 = vmul.f32 %v2690, 1.442695
      %v2748 = vpow.pop %v2747
      %v2749 = vmul.f32 %v2691, 1.442695
      %v2750 = vpow.pop %v2749
      %v2751 = vmul.f32 %v2692, 1.442695
      %v2752 = vpow.pop %v2751
      %v2753 = vmul.f32 %v2693, 1.442695
      %v2754 = vpow.pop %v2753
      %v2755 = vmul.f32 %v2694, 1.442695
      %v2756 = vpow.pop %v2755
      %v2757 = vmul.f32 %v2695, 1.442695
      %v2758 = vpow.pop %v2757
      %v2759 = vmul.f32 %v2696, 1.442695
      %v2760 = vpow.pop %v2759
      %v2761 = vsel %vm2568, %v2698, 0.0
      %2762 = vadd.xlane.f32.xlu0 %v2761
      %v2763 = vpop.xlane.xlu0 %2762
      %v2764 = vsel %vm2568, %v2700, 0.0
      %2765 = vadd.xlane.f32.xlu0 %v2764
      %v2766 = vpop.xlane.xlu0 %2765
      %v2767 = vsel %vm2568, %v2702, 0.0
      %2768 = vadd.xlane.f32.xlu0 %v2767
      %v2769 = vpop.xlane.xlu0 %2768
      %v2770 = vsel %vm2568, %v2704, 0.0
      %2771 = vadd.xlane.f32.xlu0 %v2770
      %v2772 = vpop.xlane.xlu0 %2771
      %v2773 = vsel %vm2568, %v2706, 0.0
      %2774 = vadd.xlane.f32.xlu0 %v2773
      %v2775 = vpop.xlane.xlu0 %2774
      %v2776 = vsel %vm2568, %v2708, 0.0
      %2777 = vadd.xlane.f32.xlu0 %v2776
      %v2778 = vpop.xlane.xlu0 %2777
      %v2779 = vsel %vm2568, %v2710, 0.0
      %2780 = vadd.xlane.f32.xlu0 %v2779
      %v2781 = vpop.xlane.xlu0 %2780
      %v2782 = vsel %vm2568, %v2712, 0.0
      %2783 = vadd.xlane.f32.xlu0 %v2782
      %v2784 = vpop.xlane.xlu0 %2783
      %v2785 = vsel %vm2568, %v2714, 0.0
      %2786 = vadd.xlane.f32.xlu0 %v2785
      %v2787 = vpop.xlane.xlu0 %2786
      %v2788 = vsel %vm2568, %v2716, 0.0
      %2789 = vadd.xlane.f32.xlu0 %v2788
      %v2790 = vpop.xlane.xlu0 %2789
      %v2791 = vsel %vm2568, %v2718, 0.0
      %2792 = vadd.xlane.f32.xlu0 %v2791
      %v2793 = vpop.xlane.xlu0 %2792
      %v2794 = vsel %vm2568, %v2720, 0.0
      %2795 = vadd.xlane.f32.xlu0 %v2794
      %v2796 = vpop.xlane.xlu0 %2795
      %v2797 = vsel %vm2568, %v2722, 0.0
      %2798 = vadd.xlane.f32.xlu0 %v2797
      %v2799 = vpop.xlane.xlu0 %2798
      %v2800 = vsel %vm2568, %v2724, 0.0
      %2801 = vadd.xlane.f32.xlu0 %v2800
      %v2802 = vpop.xlane.xlu0 %2801
      %v2803 = vsel %vm2568, %v2726, 0.0
      %2804 = vadd.xlane.f32.xlu0 %v2803
      %v2805 = vpop.xlane.xlu0 %2804
      %v2806 = vsel %vm2568, %v2728, 0.0
      %2807 = vadd.xlane.f32.xlu0 %v2806
      %v2808 = vpop.xlane.xlu0 %2807
      %v2809 = vsel %vm2568, %v2730, 0.0
      %2810 = vadd.xlane.f32.xlu0 %v2809
      %v2811 = vpop.xlane.xlu0 %2810
      %v2812 = vsel %vm2568, %v2732, 0.0
      %2813 = vadd.xlane.f32.xlu0 %v2812
      %v2814 = vpop.xlane.xlu0 %2813
      %v2815 = vsel %vm2568, %v2734, 0.0
      %2816 = vadd.xlane.f32.xlu0 %v2815
      %v2817 = vpop.xlane.xlu0 %2816
      %v2818 = vsel %vm2568, %v2736, 0.0
      %2819 = vadd.xlane.f32.xlu0 %v2818
      %v2820 = vpop.xlane.xlu0 %2819
      %v2821 = vsel %vm2568, %v2738, 0.0
      %2822 = vadd.xlane.f32.xlu0 %v2821
      %v2823 = vpop.xlane.xlu0 %2822
      %v2824 = vsel %vm2568, %v2740, 0.0
      %2825 = vadd.xlane.f32.xlu0 %v2824
      %v2826 = vpop.xlane.xlu0 %2825
      %v2827 = vsel %vm2568, %v2742, 0.0
      %2828 = vadd.xlane.f32.xlu0 %v2827
      %v2829 = vpop.xlane.xlu0 %2828
      %v2830 = vsel %vm2568, %v2744, 0.0
      %2831 = vadd.xlane.f32.xlu0 %v2830
      %v2832 = vpop.xlane.xlu0 %2831
      %v2833 = vsel %vm2568, %v2746, 0.0
      %2834 = vadd.xlane.f32.xlu0 %v2833
      %v2835 = vpop.xlane.xlu0 %2834
      %v2836 = vsel %vm2568, %v2748, 0.0
      %2837 = vadd.xlane.f32.xlu0 %v2836
      %v2838 = vpop.xlane.xlu0 %2837
      %v2839 = vsel %vm2568, %v2750, 0.0
      %2840 = vadd.xlane.f32.xlu0 %v2839
      %v2841 = vpop.xlane.xlu0 %2840
      %v2842 = vsel %vm2568, %v2752, 0.0
      %2843 = vadd.xlane.f32.xlu0 %v2842
      %v2844 = vpop.xlane.xlu0 %2843
      %v2845 = vsel %vm2568, %v2754, 0.0
      %2846 = vadd.xlane.f32.xlu0 %v2845
      %v2847 = vpop.xlane.xlu0 %2846
      %v2848 = vsel %vm2568, %v2756, 0.0
      %2849 = vadd.xlane.f32.xlu0 %v2848
      %v2850 = vpop.xlane.xlu0 %2849
      %v2851 = vsel %vm2568, %v2758, 0.0
      %2852 = vadd.xlane.f32.xlu0 %v2851
      %v2853 = vpop.xlane.xlu0 %2852
      %v2854 = vsel %vm2568, %v2760, 0.0
      %2855 = vadd.xlane.f32.xlu0 %v2854
      %v2856 = vpop.xlane.xlu0 %2855
      %v2857 = vrcp.pop %v2763
      %v2858 = vrcp.pop %v2766
      %v2859 = vrcp.pop %v2769
      %v2860 = vrcp.pop %v2772
      %v2861 = vrcp.pop %v2775
      %v2862 = vrcp.pop %v2778
      %v2863 = vrcp.pop %v2781
      %v2864 = vrcp.pop %v2784
      %v2865 = vrcp.pop %v2787
      %v2866 = vrcp.pop %v2790
      %v2867 = vrcp.pop %v2793
      %v2868 = vrcp.pop %v2796
      %v2869 = vrcp.pop %v2799
      %v2870 = vrcp.pop %v2802
      %v2871 = vrcp.pop %v2805
      %v2872 = vrcp.pop %v2808
      %v2873 = vrcp.pop %v2811
      %v2874 = vrcp.pop %v2814
      %v2875 = vrcp.pop %v2817
      %v2876 = vrcp.pop %v2820
      %v2877 = vrcp.pop %v2823
      %v2878 = vrcp.pop %v2826
      %v2879 = vrcp.pop %v2829
      %v2880 = vrcp.pop %v2832
      %v2881 = vrcp.pop %v2835
      %v2882 = vrcp.pop %v2838
      %v2883 = vrcp.pop %v2841
      %v2884 = vrcp.pop %v2844
      %v2885 = vrcp.pop %v2847
      %v2886 = vrcp.pop %v2850
      %v2887 = vrcp.pop %v2853
      %v2888 = vrcp.pop %v2856
      %v2889 = vmul.f32 %v2698, %v2857
      %v2890 = vmul.f32 %v2700, %v2858
      %v2891 = vmul.f32 %v2702, %v2859
      %v2892 = vmul.f32 %v2704, %v2860
      %v2893 = vmul.f32 %v2706, %v2861
      %v2894 = vmul.f32 %v2708, %v2862
      %v2895 = vmul.f32 %v2710, %v2863
      %v2896 = vmul.f32 %v2712, %v2864
      %v2897 = vmul.f32 %v2714, %v2865
      %v2898 = vmul.f32 %v2716, %v2866
      %v2899 = vmul.f32 %v2718, %v2867
      %v2900 = vmul.f32 %v2720, %v2868
      %v2901 = vmul.f32 %v2722, %v2869
      %v2902 = vmul.f32 %v2724, %v2870
      %v2903 = vmul.f32 %v2726, %v2871
      %v2904 = vmul.f32 %v2728, %v2872
      %v2905 = vmul.f32 %v2730, %v2873
      %v2906 = vmul.f32 %v2732, %v2874
      %v2907 = vmul.f32 %v2734, %v2875
      %v2908 = vmul.f32 %v2736, %v2876
      %v2909 = vmul.f32 %v2738, %v2877
      %v2910 = vmul.f32 %v2740, %v2878
      %v2911 = vmul.f32 %v2742, %v2879
      %v2912 = vmul.f32 %v2744, %v2880
      %v2913 = vmul.f32 %v2746, %v2881
      %v2914 = vmul.f32 %v2748, %v2882
      %v2915 = vmul.f32 %v2750, %v2883
      %v2916 = vmul.f32 %v2752, %v2884
      %v2917 = vmul.f32 %v2754, %v2885
      %v2918 = vmul.f32 %v2756, %v2886
      %v2919 = vmul.f32 %v2758, %v2887
      %v2920 = vmul.f32 %v2760, %v2888
      %v2921 = vpack.c.bf16 %v2890, %v2889
      %v2922 = vpack.c.bf16 %v2892, %v2891
      %v2923 = vpack.c.bf16 %v2894, %v2893
      %v2924 = vpack.c.bf16 %v2896, %v2895
      %v2925 = vpack.c.bf16 %v2898, %v2897
      %v2926 = vpack.c.bf16 %v2900, %v2899
      %v2927 = vpack.c.bf16 %v2902, %v2901
      %v2928 = vpack.c.bf16 %v2904, %v2903
      %v2929 = vpack.c.bf16 %v2906, %v2905
      %v2930 = vpack.c.bf16 %v2908, %v2907
      %v2931 = vpack.c.bf16 %v2910, %v2909
      %v2932 = vpack.c.bf16 %v2912, %v2911
      %v2933 = vpack.c.bf16 %v2914, %v2913
      %v2934 = vpack.c.bf16 %v2916, %v2915
      %v2935 = vpack.c.bf16 %v2918, %v2917
      %v2936 = vpack.c.bf16 %v2920, %v2919
      %v2937 = vpack.c.bf16 %v2256, %v2255
      %v2938 = vpack.c.bf16 %v2258, %v2257
      %v2940 = vsel %vm2568, %v2921, 0
      %v2943 = vsel %vm2568, %v2922, 0
      %v2946 = vsel %vm2568, %v2923, 0
      %v2949 = vsel %vm2568, %v2924, 0
      %v2952 = vsel %vm2568, %v2925, 0
      %v2955 = vsel %vm2568, %v2926, 0
      %v2958 = vsel %vm2568, %v2927, 0
      %v2961 = vsel %vm2568, %v2928, 0
      %v2964 = vsel %vm2568, %v2929, 0
      %v2967 = vsel %vm2568, %v2930, 0
      %v2970 = vsel %vm2568, %v2931, 0
      %v2973 = vsel %vm2568, %v2932, 0
      %v2976 = vsel %vm2568, %v2933, 0
      %v2979 = vsel %vm2568, %v2934, 0
      %v2982 = vsel %vm2568, %v2935, 0
      %v2985 = vsel %vm2568, %v2936, 0
      %2987 = vmatprep.subr.bf16.mxu0 0
      %2988 = vmatpush1.bf16.msra.mxu0 %v2937
      %2989 = vmatprep.subr.bf16.mxu0 0
      %2990 = vmatpush1.bf16.msra.mxu0 %v2938
      %2991 = vmatprep.subr.bf16.mxu0 0
      %2992 = vmatpush1.bf16.msra.mxu0 0
      %2993 = vmatprep.subr.bf16.mxu0 0
      %2994 = vmatpush1.bf16.msra.mxu0 0
      %2995 = vmatprep.subr.bf16.mxu0 0
      %2996 = vmatpush1.bf16.msra.mxu0 0
      %2997 = vmatprep.subr.bf16.mxu0 0
      %2998 = vmatpush1.bf16.msra.mxu0 0
      %2999 = vmatprep.subr.bf16.mxu0 0
      %3000 = vmatpush1.bf16.msra.mxu0 0
      %3001 = vmatprep.subr.bf16.mxu0 0
      %3002 = vmatpush1.bf16.msra.mxu0 0
      %3003 = vmatprep.subr.bf16.mxu0 0
      %3004 = vmatpush1.bf16.msra.mxu0 0
      %3005 = vmatprep.subr.bf16.mxu0 0
      %3006 = vmatpush1.bf16.msra.mxu0 0
      %3007 = vmatprep.subr.bf16.mxu0 0
      %3008 = vmatpush1.bf16.msra.mxu0 0
      %3009 = vmatprep.subr.bf16.mxu0 0
      %3010 = vmatpush1.bf16.msra.mxu0 0
      %3011 = vmatprep.subr.bf16.mxu0 0
      %3012 = vmatpush1.bf16.msra.mxu0 0
      %3013 = vmatprep.subr.bf16.mxu0 0
      %3014 = vmatpush1.bf16.msra.mxu0 0
      %3015 = vmatprep.subr.bf16.mxu0 0
      %3016 = vmatpush1.bf16.msra.mxu0 0
      %3017 = vmatprep.subr.bf16.mxu0 0
      %3018 = vmatpush1.bf16.msra.mxu0 0
      %3019 = vmatprep.mubr.bf16.mxu0 0
      %3020 = vmatmul.mubr.bf16.gmra.mrb[0].mxu0 %v2940
      %v3021 = vpop.f32.mrb[0].mxu0
      %v3022 = vadd.f32 0.0, %v3021
      %v3023 = vpop.f32.mrb[0].mxu0
      %v3024 = vpop.f32.mrb[0].mxu0
      %v3025 = vadd.f32 0.0, %v3024
      %v3026 = vpop.f32.mrb[0].mxu0
      %3027 = vmatprep.mubr.bf16.mxu0 0
      %3028 = vmatmul.mubr.bf16.gmra.mrb[0].mxu0 %v2943
      %v3029 = vpop.f32.mrb[0].mxu0
      %v3030 = vadd.f32 0.0, %v3029
      %v3031 = vpop.f32.mrb[0].mxu0
      %v3032 = vpop.f32.mrb[0].mxu0
      %v3033 = vadd.f32 0.0, %v3032
      %v3034 = vpop.f32.mrb[0].mxu0
      %3035 = vmatprep.mubr.bf16.mxu0 0
      %3036 = vmatmul.mubr.bf16.gmra.mrb[0].mxu0 %v2946
      %v3037 = vpop.f32.mrb[0].mxu0
      %v3038 = vadd.f32 0.0, %v3037
      %v3039 = vpop.f32.mrb[0].mxu0
      %v3040 = vpop.f32.mrb[0].mxu0
      %v3041 = vadd.f32 0.0, %v3040
      %v3042 = vpop.f32.mrb[0].mxu0
      %3043 = vmatprep.mubr.bf16.mxu0 0
      %3044 = vmatmul.mubr.bf16.gmra.mrb[0].mxu0 %v2949
      %v3045 = vpop.f32.mrb[0].mxu0
      %v3046 = vadd.f32 0.0, %v3045
      %v3047 = vpop.f32.mrb[0].mxu0
      %v3048 = vpop.f32.mrb[0].mxu0
      %v3049 = vadd.f32 0.0, %v3048
      %v3050 = vpop.f32.mrb[0].mxu0
      %3051 = vmatprep.mubr.bf16.mxu0 0
      %3052 = vmatmul.mubr.bf16.gmra.mrb[0].mxu0 %v2952
      %v3053 = vpop.f32.mrb[0].mxu0
      %v3054 = vadd.f32 0.0, %v3053
      %v3055 = vpop.f32.mrb[0].mxu0
      %v3056 = vpop.f32.mrb[0].mxu0
      %v3057 = vadd.f32 0.0, %v3056
      %v3058 = vpop.f32.mrb[0].mxu0
      %3059 = vmatprep.mubr.bf16.mxu0 0
      %3060 = vmatmul.mubr.bf16.gmra.mrb[0].mxu0 %v2955
      %v3061 = vpop.f32.mrb[0].mxu0
      %v3062 = vadd.f32 0.0, %v3061
      %v3063 = vpop.f32.mrb[0].mxu0
      %v3064 = vpop.f32.mrb[0].mxu0
      %v3065 = vadd.f32 0.0, %v3064
      %v3066 = vpop.f32.mrb[0].mxu0
      %3067 = vmatprep.mubr.bf16.mxu0 0
      %3068 = vmatmul.mubr.bf16.gmra.mrb[0].mxu0 %v2958
      %v3069 = vpop.f32.mrb[0].mxu0
      %v3070 = vadd.f32 0.0, %v3069
      %v3071 = vpop.f32.mrb[0].mxu0
      %v3072 = vpop.f32.mrb[0].mxu0
      %v3073 = vadd.f32 0.0, %v3072
      %v3074 = vpop.f32.mrb[0].mxu0
      %3075 = vmatprep.mubr.bf16.mxu0 0
      %3076 = vmatmul.mubr.bf16.gmra.mrb[0].mxu0 %v2961
      %v3077 = vpop.f32.mrb[0].mxu0
      %v3078 = vadd.f32 0.0, %v3077
      %v3079 = vpop.f32.mrb[0].mxu0
      %v3080 = vpop.f32.mrb[0].mxu0
      %v3081 = vadd.f32 0.0, %v3080
      %v3082 = vpop.f32.mrb[0].mxu0
      %3083 = vmatprep.mubr.bf16.mxu0 0
      %3084 = vmatmul.mubr.bf16.gmra.mrb[0].mxu0 %v2964
      %v3085 = vpop.f32.mrb[0].mxu0
      %v3086 = vadd.f32 0.0, %v3085
      %v3087 = vpop.f32.mrb[0].mxu0
      %v3088 = vpop.f32.mrb[0].mxu0
      %v3089 = vadd.f32 0.0, %v3088
      %v3090 = vpop.f32.mrb[0].mxu0
      %3091 = vmatprep.mubr.bf16.mxu0 0
      %3092 = vmatmul.mubr.bf16.gmra.mrb[0].mxu0 %v2967
      %v3093 = vpop.f32.mrb[0].mxu0
      %v3094 = vadd.f32 0.0, %v3093
      %v3095 = vpop.f32.mrb[0].mxu0
      %v3096 = vpop.f32.mrb[0].mxu0
      %v3097 = vadd.f32 0.0, %v3096
      %v3098 = vpop.f32.mrb[0].mxu0
      %3099 = vmatprep.mubr.bf16.mxu0 0
      %3100 = vmatmul.mubr.bf16.gmra.mrb[0].mxu0 %v2970
      %v3101 = vpop.f32.mrb[0].mxu0
      %v3102 = vadd.f32 0.0, %v3101
      %v3103 = vpop.f32.mrb[0].mxu0
      %v3104 = vpop.f32.mrb[0].mxu0
      %v3105 = vadd.f32 0.0, %v3104
      %v3106 = vpop.f32.mrb[0].mxu0
      %3107 = vmatprep.mubr.bf16.mxu0 0
      %3108 = vmatmul.mubr.bf16.gmra.mrb[0].mxu0 %v2973
      %v3109 = vpop.f32.mrb[0].mxu0
      %v3110 = vadd.f32 0.0, %v3109
      %v3111 = vpop.f32.mrb[0].mxu0
      %v3112 = vpop.f32.mrb[0].mxu0
      %v3113 = vadd.f32 0.0, %v3112
      %v3114 = vpop.f32.mrb[0].mxu0
      %3115 = vmatprep.mubr.bf16.mxu0 0
      %3116 = vmatmul.mubr.bf16.gmra.mrb[0].mxu0 %v2976
      %v3117 = vpop.f32.mrb[0].mxu0
      %v3118 = vadd.f32 0.0, %v3117
      %v3119 = vpop.f32.mrb[0].mxu0
      %v3120 = vpop.f32.mrb[0].mxu0
      %v3121 = vadd.f32 0.0, %v3120
      %v3122 = vpop.f32.mrb[0].mxu0
      %3123 = vmatprep.mubr.bf16.mxu0 0
      %3124 = vmatmul.mubr.bf16.gmra.mrb[0].mxu0 %v2979
      %v3125 = vpop.f32.mrb[0].mxu0
      %v3126 = vadd.f32 0.0, %v3125
      %v3127 = vpop.f32.mrb[0].mxu0
      %v3128 = vpop.f32.mrb[0].mxu0
      %v3129 = vadd.f32 0.0, %v3128
      %v3130 = vpop.f32.mrb[0].mxu0
      %3131 = vmatprep.mubr.bf16.mxu0 0
      %3132 = vmatmul.mubr.bf16.gmra.mrb[0].mxu0 %v2982
      %v3133 = vpop.f32.mrb[0].mxu0
      %v3134 = vadd.f32 0.0, %v3133
      %v3135 = vpop.f32.mrb[0].mxu0
      %v3136 = vpop.f32.mrb[0].mxu0
      %v3137 = vadd.f32 0.0, %v3136
      %v3138 = vpop.f32.mrb[0].mxu0
      %3139 = vmatprep.mubr.bf16.mxu0 0
      %3140 = vmatmul.mubr.bf16.gmra.mrb[0].mxu0 %v2985
      %v3141 = vpop.f32.mrb[0].mxu0
      %v3142 = vadd.f32 0.0, %v3141
      %v3143 = vpop.f32.mrb[0].mxu0
      %v3144 = vpop.f32.mrb[0].mxu0
      %v3145 = vadd.f32 0.0, %v3144
      %v3146 = vpop.f32.mrb[0].mxu0
      %3147 = vdwg.mxu0
      %v3148 = vld [vmem:[%s4 + $0x60] sm:$0xff]
      %v3149 = vld [vmem:[%s4 + $0x68] sm:$0xff]
      %v3150 = vld [vmem:[%s4 + $0x70] sm:$0xff]
      %v3151 = vld [vmem:[%s4 + $0x78] sm:$0xff]
      %v3152 = vld [vmem:[%s4 + $0x80] sm:$0xff]
      %v3153 = vld [vmem:[%s4 + $0x88] sm:$0xff]
      %v3154 = vld [vmem:[%s4 + $0x90] sm:$0xff]
      %v3155 = vld [vmem:[%s4 + $0x98] sm:$0xff]
      %v3156 = vld [vmem:[%s4 + $0xa0] sm:$0xff]
      %v3157 = vld [vmem:[%s4 + $0xa8] sm:$0xff]
      %v3158 = vld [vmem:[%s4 + $0xb0] sm:$0xff]
      %v3159 = vld [vmem:[%s4 + $0xb8] sm:$0xff]
      %v3160 = vld [vmem:[%s4 + $0xc0] sm:$0xff]
      %v3161 = vld [vmem:[%s4 + $0xc8] sm:$0xff]
      %v3162 = vld [vmem:[%s4 + $0xd0] sm:$0xff]
      %v3163 = vld [vmem:[%s4 + $0xd8] sm:$0xff]
      %v3164 = vld [vmem:[%s4 + $0xe0] sm:$0xff]
      %v3165 = vld [vmem:[%s4 + $0xe8] sm:$0xff]
      %v3166 = vld [vmem:[%s4 + $0xf0] sm:$0xff]
      %v3167 = vld [vmem:[%s4 + $0xf8] sm:$0xff]
      %v3168 = vld [vmem:[%s4 + $0x100] sm:$0xff]
      %v3169 = vld [vmem:[%s4 + $0x108] sm:$0xff]
      %v3170 = vld [vmem:[%s4 + $0x110] sm:$0xff]
      %v3171 = vld [vmem:[%s4 + $0x118] sm:$0xff]
      %v3172 = vld [vmem:[%s4 + $0x120] sm:$0xff]
      %v3173 = vld [vmem:[%s4 + $0x128] sm:$0xff]
      %v3174 = vld [vmem:[%s4 + $0x130] sm:$0xff]
      %v3175 = vld [vmem:[%s4 + $0x138] sm:$0xff]
      %v3176 = vld [vmem:[%s4 + $0x140] sm:$0xff]
      %v3177 = vld [vmem:[%s4 + $0x148] sm:$0xff]
      %v3178 = vld [vmem:[%s4 + $0x150] sm:$0xff]
      %v3179 = vld [vmem:[%s4 + $0x158] sm:$0xff]
      %v3180 = vmul.f32 %v3022, %v3148
      %v3181 = vmul.f32 %v3025, %v3149
      %v3182 = vmul.f32 %v3030, %v3150
      %v3183 = vmul.f32 %v3033, %v3151
      %v3184 = vmul.f32 %v3038, %v3152
      %v3185 = vmul.f32 %v3041, %v3153
      %v3186 = vmul.f32 %v3046, %v3154
      %v3187 = vmul.f32 %v3049, %v3155
      %v3188 = vmul.f32 %v3054, %v3156
      %v3189 = vmul.f32 %v3057, %v3157
      %v3190 = vmul.f32 %v3062, %v3158
      %v3191 = vmul.f32 %v3065, %v3159
      %v3192 = vmul.f32 %v3070, %v3160
      %v3193 = vmul.f32 %v3073, %v3161
      %v3194 = vmul.f32 %v3078, %v3162
      %v3195 = vmul.f32 %v3081, %v3163
      %v3196 = vmul.f32 %v3086, %v3164
      %v3197 = vmul.f32 %v3089, %v3165
      %v3198 = vmul.f32 %v3094, %v3166
      %v3199 = vmul.f32 %v3097, %v3167
      %v3200 = vmul.f32 %v3102, %v3168
      %v3201 = vmul.f32 %v3105, %v3169
      %v3202 = vmul.f32 %v3110, %v3170
      %v3203 = vmul.f32 %v3113, %v3171
      %v3204 = vmul.f32 %v3118, %v3172
      %v3205 = vmul.f32 %v3121, %v3173
      %v3206 = vmul.f32 %v3126, %v3174
      %v3207 = vmul.f32 %v3129, %v3175
      %v3208 = vmul.f32 %v3134, %v3176
      %v3209 = vmul.f32 %v3137, %v3177
      %v3210 = vmul.f32 %v3142, %v3178
      %v3211 = vmul.f32 %v3145, %v3179
      %v3212 = vadd.f32 %v3180, %v3184
      %v3213 = vadd.f32 %v3212, %v3188
      %v3214 = vadd.f32 %v3213, %v3192
      %v3215 = vadd.f32 %v3214, %v3196
      %v3216 = vadd.f32 %v3215, %v3200
      %v3217 = vadd.f32 %v3216, %v3204
      %v3218 = vadd.f32 %v3217, %v3208
      %v3219 = vadd.f32 %v3181, %v3185
      %v3220 = vadd.f32 %v3219, %v3189
      %v3221 = vadd.f32 %v3220, %v3193
      %v3222 = vadd.f32 %v3221, %v3197
      %v3223 = vadd.f32 %v3222, %v3201
      %v3224 = vadd.f32 %v3223, %v3205
      %v3225 = vadd.f32 %v3224, %v3209
      %v3226 = vadd.f32 %v3182, %v3186
      %v3227 = vadd.f32 %v3226, %v3190
      %v3228 = vadd.f32 %v3227, %v3194
      %v3229 = vadd.f32 %v3228, %v3198
      %v3230 = vadd.f32 %v3229, %v3202
      %v3231 = vadd.f32 %v3230, %v3206
      %v3232 = vadd.f32 %v3231, %v3210
      %v3233 = vadd.f32 %v3183, %v3187
      %v3234 = vadd.f32 %v3233, %v3191
      %v3235 = vadd.f32 %v3234, %v3195
      %v3236 = vadd.f32 %v3235, %v3199
      %v3237 = vadd.f32 %v3236, %v3203
      %v3238 = vadd.f32 %v3237, %v3207
      %v3239 = vadd.f32 %v3238, %v3211
      %3240 = vst [vmem:[#allocation2] sm:$0xff] %v3218
      %3241 = vst [vmem:[#allocation2 + $0x8] sm:$0xff] %v3225
      %3242 = vst [vmem:[#allocation2 + $0x10] sm:$0xff] %v3232
      %3243 = vst [vmem:[#allocation2 + $0x18] sm:$0xff] %v3239
      %v3244 = vld [vmem:[#allocation2] sm:$0xff]
      %v3245 = vld [vmem:[#allocation2 + $0x8] sm:$0xff]
      %v3246 = vld [vmem:[#allocation2 + $0x10] sm:$0xff]
      %v3247 = vld [vmem:[#allocation2 + $0x18] sm:$0xff]
      %v3248 = vld [vmem:[%s2 + $0x140] sm:$0xf]
      %v3249 = vld [vmem:[%s2 + $0x144] sm:$0xf]
      %v3250 = vld [vmem:[%s2 + $0x148] sm:$0xf]
      %v3251 = vld [vmem:[%s2 + $0x14c] sm:$0xf]
      %v3252 = vld [vmem:[%s2 + $0x150] sm:$0xf]
      %v3253 = vld [vmem:[%s2 + $0x154] sm:$0xf]
      %v3254 = vld [vmem:[%s2 + $0x158] sm:$0xf]
      %v3255 = vld [vmem:[%s2 + $0x15c] sm:$0xf]
      %v3256 = vld [vmem:[%s2 + $0x160] sm:$0xf]
      %v3257 = vld [vmem:[%s2 + $0x164] sm:$0xf]
      %v3258 = vld [vmem:[%s2 + $0x168] sm:$0xf]
      %v3259 = vld [vmem:[%s2 + $0x16c] sm:$0xf]
      %v3260 = vld [vmem:[%s2 + $0x170] sm:$0xf]
      %v3261 = vld [vmem:[%s2 + $0x174] sm:$0xf]
      %v3262 = vld [vmem:[%s2 + $0x178] sm:$0xf]
      %v3263 = vld [vmem:[%s2 + $0x17c] sm:$0xf]
      %v3264 = vpack.c.bf16 %v3245, %v3244
      %v3265 = vpack.c.bf16 %v3247, %v3246
      %v3266 = vld [vmem:[%s4 + $0x167] sm:$0x1]
      %v3267 = vlaneseq
      %v3268 = vshrl.u32 %v3267, 7
      %v3269 = vsub.s32 0, %v3268
      %v3270 = vrot.slane %v3266, %v3269
      %v3287 = vunpack.c.l.b16 %v3248
      %v3288 = vunpack.c.l.b16 %v3249
      %v3289 = vunpack.c.l.b16 %v3250
      %v3290 = vunpack.c.l.b16 %v3251
      %v3291 = vunpack.c.l.b16 %v3252
      %v3292 = vunpack.c.l.b16 %v3253
      %v3293 = vunpack.c.l.b16 %v3254
      %v3294 = vunpack.c.l.b16 %v3255
      %v3295 = vunpack.c.l.b16 %v3256
      %v3296 = vunpack.c.l.b16 %v3257
      %v3297 = vunpack.c.l.b16 %v3258
      %v3298 = vunpack.c.l.b16 %v3259
      %v3299 = vunpack.c.l.b16 %v3260
      %v3300 = vunpack.c.l.b16 %v3261
      %v3301 = vunpack.c.l.b16 %v3262
      %v3302 = vunpack.c.l.b16 %v3263
      %v3303 = vpack.c.b16 %v3288, %v3287
      %v3304 = vpack.c.b16 %v3290, %v3289
      %v3305 = vpack.c.b16 %v3292, %v3291
      %v3306 = vpack.c.b16 %v3294, %v3293
      %v3307 = vpack.c.b16 %v3296, %v3295
      %v3308 = vpack.c.b16 %v3298, %v3297
      %v3309 = vpack.c.b16 %v3300, %v3299
      %v3310 = vpack.c.b16 %v3302, %v3301
      %3319 = vmatprep.subr.bf16.mxu0 0
      %3320 = vmatpush1.bf16.msra.mxu0 %v3303
      %3321 = vmatprep.subr.bf16.mxu0 0
      %3322 = vmatpush1.bf16.msra.mxu0 %v3304
      %3323 = vmatprep.subr.bf16.mxu0 0
      %3324 = vmatpush1.bf16.msra.mxu0 %v3305
      %3325 = vmatprep.subr.bf16.mxu0 0
      %3326 = vmatpush1.bf16.msra.mxu0 %v3306
      %3327 = vmatprep.subr.bf16.mxu0 0
      %3328 = vmatpush1.bf16.msra.mxu0 %v3307
      %3329 = vmatprep.subr.bf16.mxu0 0
      %3330 = vmatpush1.bf16.msra.mxu0 %v3308
      %3331 = vmatprep.subr.bf16.mxu0 0
      %3332 = vmatpush1.bf16.msra.mxu0 %v3309
      %3333 = vmatprep.subr.bf16.mxu0 0
      %3334 = vmatpush1.bf16.msra.mxu0 %v3310
      %3335 = vmatprep.subr.bf16.mxu0 0
      %3336 = vmatpush1.bf16.msra.mxu0 0
      %3337 = vmatprep.subr.bf16.mxu0 0
      %3338 = vmatpush1.bf16.msra.mxu0 0
      %3339 = vmatprep.subr.bf16.mxu0 0
      %3340 = vmatpush1.bf16.msra.mxu0 0
      %3341 = vmatprep.subr.bf16.mxu0 0
      %3342 = vmatpush1.bf16.msra.mxu0 0
      %3343 = vmatprep.subr.bf16.mxu0 0
      %3344 = vmatpush1.bf16.msra.mxu0 0
      %3345 = vmatprep.subr.bf16.mxu0 0
      %3346 = vmatpush1.bf16.msra.mxu0 0
      %3347 = vmatprep.subr.bf16.mxu0 0
      %3348 = vmatpush1.bf16.msra.mxu0 0
      %3349 = vmatprep.subr.bf16.mxu0 0
      %3350 = vmatpush1.bf16.msra.mxu0 0
      %3351 = vmatprep.mubr.bf16.mxu0 0
      %3352 = vmatmul.mubr.bf16.gmra.mrb[0].mxu0 %v3264
      %v3353 = vpop.f32.mrb[0].mxu0
      %v3354 = vadd.f32 %v3270, %v3353
      %v3355 = vpop.f32.mrb[0].mxu0
      %v3356 = vpop.f32.mrb[0].mxu0
      %v3357 = vadd.f32 %v3270, %v3356
      %v3358 = vpop.f32.mrb[0].mxu0
      %3359 = vmatprep.mubr.bf16.mxu0 0
      %3360 = vmatmul.mubr.bf16.gmra.mrb[0].mxu0 %v3265
      %v3361 = vpop.f32.mrb[0].mxu0
      %v3362 = vadd.f32 %v3270, %v3361
      %v3363 = vpop.f32.mrb[0].mxu0
      %v3364 = vpop.f32.mrb[0].mxu0
      %v3365 = vadd.f32 %v3270, %v3364
      %v3366 = vpop.f32.mrb[0].mxu0
      %3367 = vdwg.mxu0
      %v3368 = vadd.f32 %v1962, %v3354
      %v3369 = vadd.f32 %v1963, %v3357
      %v3370 = vadd.f32 %v1964, %v3362
      %v3371 = vadd.f32 %v1965, %v3365
      %v3372 = vld [vmem:[%s4 + $0x168] sm:$0x1]
      %v3373 = vld [vmem:[%s4 + $0x169] sm:$0x1]
      %3374 = vadd.xlane.f32.xlu0 %v3368
      %v3375 = vpop.xlane.xlu0 %3374
      %3376 = vadd.xlane.f32.xlu0 %v3369
      %v3377 = vpop.xlane.xlu0 %3376
      %3378 = vadd.xlane.f32.xlu0 %v3370
      %v3379 = vpop.xlane.xlu0 %3378
      %3380 = vadd.xlane.f32.xlu0 %v3371
      %v3381 = vpop.xlane.xlu0 %3380
      %v3382 = vmul.f32 %v3375, %v1913
      %v3383 = vmul.f32 %v3377, %v1913
      %v3384 = vmul.f32 %v3379, %v1913
      %v3385 = vmul.f32 %v3381, %v1913
      %v3386 = vsub.f32 %v3368, %v3382
      %v3387 = vsub.f32 %v3369, %v3383
      %v3388 = vsub.f32 %v3370, %v3384
      %v3389 = vsub.f32 %v3371, %v3385
      %v3390 = vmul.f32 %v3386, %v3386
      %v3391 = vmul.f32 %v3387, %v3387
      %v3392 = vmul.f32 %v3388, %v3388
      %v3393 = vmul.f32 %v3389, %v3389
      %3394 = vadd.xlane.f32.xlu0 %v3390
      %v3395 = vpop.xlane.xlu0 %3394
      %3396 = vadd.xlane.f32.xlu0 %v3391
      %v3397 = vpop.xlane.xlu0 %3396
      %3398 = vadd.xlane.f32.xlu0 %v3392
      %v3399 = vpop.xlane.xlu0 %3398
      %3400 = vadd.xlane.f32.xlu0 %v3393
      %v3401 = vpop.xlane.xlu0 %3400
      %v3402 = vmul.f32 %v3395, %v1913
      %v3403 = vmul.f32 %v3397, %v1913
      %v3404 = vmul.f32 %v3399, %v1913
      %v3405 = vmul.f32 %v3401, %v1913
      %v3406 = vadd.f32 %v3402, 1e-05
      %v3407 = vadd.f32 %v3403, 1e-05
      %v3408 = vadd.f32 %v3404, 1e-05
      %v3409 = vadd.f32 %v3405, 1e-05
      %v3410 = vrsqrt.pop %v3406
      %v3411 = vrsqrt.pop %v3407
      %v3412 = vrsqrt.pop %v3408
      %v3413 = vrsqrt.pop %v3409
      %v3414 = vmul.f32 %v3386, %v3410
      %v3415 = vmul.f32 %v3387, %v3411
      %v3416 = vmul.f32 %v3388, %v3412
      %v3417 = vmul.f32 %v3389, %v3413
      %v3418 = vlaneseq
      %v3419 = vshrl.u32 %v3418, 7
      %v3420 = vsub.s32 0, %v3419
      %v3421 = vrot.slane %v3372, %v3420
      %v3422 = vmul.f32 %v3414, %v3421
      %v3423 = vmul.f32 %v3415, %v3421
      %v3424 = vmul.f32 %v3416, %v3421
      %v3425 = vmul.f32 %v3417, %v3421
      %v3426 = vlaneseq
      %v3427 = vshrl.u32 %v3426, 7
      %v3428 = vsub.s32 0, %v3427
      %v3429 = vrot.slane %v3373, %v3428
      %v3430 = vadd.f32 %v3422, %v3429
      %v3431 = vadd.f32 %v3423, %v3429
      %v3432 = vadd.f32 %v3424, %v3429
      %v3433 = vadd.f32 %v3425, %v3429
      %v3434 = vld [vmem:[%s2 + $0x180] sm:$0xf]
      %v3435 = vld [vmem:[%s2 + $0x184] sm:$0xf]
      %v3436 = vld [vmem:[%s2 + $0x188] sm:$0xf]
      %v3437 = vld [vmem:[%s2 + $0x18c] sm:$0xf]
      %v3438 = vld [vmem:[%s2 + $0x190] sm:$0xf]
      %v3439 = vld [vmem:[%s2 + $0x194] sm:$0xf]
      %v3440 = vld [vmem:[%s2 + $0x198] sm:$0xf]
      %v3441 = vld [vmem:[%s2 + $0x19c] sm:$0xf]
      %v3442 = vld [vmem:[%s2 + $0x1a0] sm:$0xf]
      %v3443 = vld [vmem:[%s2 + $0x1a4] sm:$0xf]
      %v3444 = vld [vmem:[%s2 + $0x1a8] sm:$0xf]
      %v3445 = vld [vmem:[%s2 + $0x1ac] sm:$0xf]
      %v3446 = vld [vmem:[%s2 + $0x1b0] sm:$0xf]
      %v3447 = vld [vmem:[%s2 + $0x1b4] sm:$0xf]
      %v3448 = vld [vmem:[%s2 + $0x1b8] sm:$0xf]
      %v3449 = vld [vmem:[%s2 + $0x1bc] sm:$0xf]
      %v3450 = vpack.c.bf16 %v3431, %v3430
      %v3451 = vpack.c.bf16 %v3433, %v3432
      %v3452 = vld [vmem:[%s4 + $0x16a] sm:$0x1]
      %v3453 = vlaneseq
      %v3454 = vshrl.u32 %v3453, 7
      %v3455 = vsub.s32 0, %v3454
      %v3456 = vrot.slane %v3452, %v3455
      %v3473 = vunpack.c.l.b16 %v3434
      %v3474 = vunpack.c.l.b16 %v3435
      %v3475 = vunpack.c.l.b16 %v3436
      %v3476 = vunpack.c.l.b16 %v3437
      %v3477 = vunpack.c.l.b16 %v3438
      %v3478 = vunpack.c.l.b16 %v3439
      %v3479 = vunpack.c.l.b16 %v3440
      %v3480 = vunpack.c.l.b16 %v3441
      %v3481 = vunpack.c.l.b16 %v3442
      %v3482 = vunpack.c.l.b16 %v3443
      %v3483 = vunpack.c.l.b16 %v3444
      %v3484 = vunpack.c.l.b16 %v3445
      %v3485 = vunpack.c.l.b16 %v3446
      %v3486 = vunpack.c.l.b16 %v3447
      %v3487 = vunpack.c.l.b16 %v3448
      %v3488 = vunpack.c.l.b16 %v3449
      %v3489 = vpack.c.b16 %v3474, %v3473
      %v3490 = vpack.c.b16 %v3476, %v3475
      %v3491 = vpack.c.b16 %v3478, %v3477
      %v3492 = vpack.c.b16 %v3480, %v3479
      %v3493 = vpack.c.b16 %v3482, %v3481
      %v3494 = vpack.c.b16 %v3484, %v3483
      %v3495 = vpack.c.b16 %v3486, %v3485
      %v3496 = vpack.c.b16 %v3488, %v3487
      %3505 = vmatprep.subr.bf16.mxu0 0
      %3506 = vmatpush1.bf16.msra.mxu0 %v3489
      %3507 = vmatprep.subr.bf16.mxu0 0
      %3508 = vmatpush1.bf16.msra.mxu0 %v3490
      %3509 = vmatprep.subr.bf16.mxu0 0
      %3510 = vmatpush1.bf16.msra.mxu0 %v3491
      %3511 = vmatprep.subr.bf16.mxu0 0
      %3512 = vmatpush1.bf16.msra.mxu0 %v3492
      %3513 = vmatprep.subr.bf16.mxu0 0
      %3514 = vmatpush1.bf16.msra.mxu0 %v3493
      %3515 = vmatprep.subr.bf16.mxu0 0
      %3516 = vmatpush1.bf16.msra.mxu0 %v3494
      %3517 = vmatprep.subr.bf16.mxu0 0
      %3518 = vmatpush1.bf16.msra.mxu0 %v3495
      %3519 = vmatprep.subr.bf16.mxu0 0
      %3520 = vmatpush1.bf16.msra.mxu0 %v3496
      %3521 = vmatprep.subr.bf16.mxu0 0
      %3522 = vmatpush1.bf16.msra.mxu0 0
      %3523 = vmatprep.subr.bf16.mxu0 0
      %3524 = vmatpush1.bf16.msra.mxu0 0
      %3525 = vmatprep.subr.bf16.mxu0 0
      %3526 = vmatpush1.bf16.msra.mxu0 0
      %3527 = vmatprep.subr.bf16.mxu0 0
      %3528 = vmatpush1.bf16.msra.mxu0 0
      %3529 = vmatprep.subr.bf16.mxu0 0
      %3530 = vmatpush1.bf16.msra.mxu0 0
      %3531 = vmatprep.subr.bf16.mxu0 0
      %3532 = vmatpush1.bf16.msra.mxu0 0
      %3533 = vmatprep.subr.bf16.mxu0 0
      %3534 = vmatpush1.bf16.msra.mxu0 0
      %3535 = vmatprep.subr.bf16.mxu0 0
      %3536 = vmatpush1.bf16.msra.mxu0 0
      %3537 = vmatprep.mubr.bf16.mxu0 0
      %3538 = vmatmul.mubr.bf16.gmra.mrb[0].mxu0 %v3450
      %v3539 = vpop.f32.mrb[0].mxu0
      %v3540 = vadd.f32 %v3456, %v3539
      %v3541 = vpop.f32.mrb[0].mxu0
      %v3542 = vpop.f32.mrb[0].mxu0
      %v3543 = vadd.f32 %v3456, %v3542
      %v3544 = vpop.f32.mrb[0].mxu0
      %3545 = vmatprep.mubr.bf16.mxu0 0
      %3546 = vmatmul.mubr.bf16.gmra.mrb[0].mxu0 %v3451
      %v3547 = vpop.f32.mrb[0].mxu0
      %v3548 = vadd.f32 %v3456, %v3547
      %v3549 = vpop.f32.mrb[0].mxu0
      %v3550 = vpop.f32.mrb[0].mxu0
      %v3551 = vadd.f32 %v3456, %v3550
      %v3552 = vpop.f32.mrb[0].mxu0
      %3553 = vdwg.mxu0
      %v3554 = vmax.f32 %v3540, 0.0
      %v3555 = vmax.f32 %v3543, 0.0
      %v3556 = vmax.f32 %v3548, 0.0
      %v3557 = vmax.f32 %v3551, 0.0
      %v3558 = vld [vmem:[%s2 + $0x1c0] sm:$0xf]
      %v3559 = vld [vmem:[%s2 + $0x1c4] sm:$0xf]
      %v3560 = vld [vmem:[%s2 + $0x1c8] sm:$0xf]
      %v3561 = vld [vmem:[%s2 + $0x1cc] sm:$0xf]
      %v3562 = vld [vmem:[%s2 + $0x1d0] sm:$0xf]
      %v3563 = vld [vmem:[%s2 + $0x1d4] sm:$0xf]
      %v3564 = vld [vmem:[%s2 + $0x1d8] sm:$0xf]
      %v3565 = vld [vmem:[%s2 + $0x1dc] sm:$0xf]
      %v3566 = vld [vmem:[%s2 + $0x1e0] sm:$0xf]
      %v3567 = vld [vmem:[%s2 + $0x1e4] sm:$0xf]
      %v3568 = vld [vmem:[%s2 + $0x1e8] sm:$0xf]
      %v3569 = vld [vmem:[%s2 + $0x1ec] sm:$0xf]
      %v3570 = vld [vmem:[%s2 + $0x1f0] sm:$0xf]
      %v3571 = vld [vmem:[%s2 + $0x1f4] sm:$0xf]
      %v3572 = vld [vmem:[%s2 + $0x1f8] sm:$0xf]
      %v3573 = vld [vmem:[%s2 + $0x1fc] sm:$0xf]
      %v3574 = vpack.c.bf16 %v3555, %v3554
      %v3575 = vpack.c.bf16 %v3557, %v3556
      %v3576 = vld [vmem:[%s4 + $0x16b] sm:$0x1]
      %v3577 = vlaneseq
      %v3578 = vshrl.u32 %v3577, 7
      %v3579 = vsub.s32 0, %v3578
      %v3580 = vrot.slane %v3576, %v3579
      %v3597 = vunpack.c.l.b16 %v3558
      %v3598 = vunpack.c.l.b16 %v3559
      %v3599 = vunpack.c.l.b16 %v3560
      %v3600 = vunpack.c.l.b16 %v3561
      %v3601 = vunpack.c.l.b16 %v3562
      %v3602 = vunpack.c.l.b16 %v3563
      %v3603 = vunpack.c.l.b16 %v3564
      %v3604 = vunpack.c.l.b16 %v3565
      %v3605 = vunpack.c.l.b16 %v3566
      %v3606 = vunpack.c.l.b16 %v3567
      %v3607 = vunpack.c.l.b16 %v3568
      %v3608 = vunpack.c.l.b16 %v3569
      %v3609 = vunpack.c.l.b16 %v3570
      %v3610 = vunpack.c.l.b16 %v3571
      %v3611 = vunpack.c.l.b16 %v3572
      %v3612 = vunpack.c.l.b16 %v3573
      %v3613 = vpack.c.b16 %v3598, %v3597
      %v3614 = vpack.c.b16 %v3600, %v3599
      %v3615 = vpack.c.b16 %v3602, %v3601
      %v3616 = vpack.c.b16 %v3604, %v3603
      %v3617 = vpack.c.b16 %v3606, %v3605
      %v3618 = vpack.c.b16 %v3608, %v3607
      %v3619 = vpack.c.b16 %v3610, %v3609
      %v3620 = vpack.c.b16 %v3612, %v3611
      %3629 = vmatprep.subr.bf16.mxu0 0
      %3630 = vmatpush1.bf16.msra.mxu0 %v3613
      %3631 = vmatprep.subr.bf16.mxu0 0
      %3632 = vmatpush1.bf16.msra.mxu0 %v3614
      %3633 = vmatprep.subr.bf16.mxu0 0
      %3634 = vmatpush1.bf16.msra.mxu0 %v3615
      %3635 = vmatprep.subr.bf16.mxu0 0
      %3636 = vmatpush1.bf16.msra.mxu0 %v3616
      %3637 = vmatprep.subr.bf16.mxu0 0
      %3638 = vmatpush1.bf16.msra.mxu0 %v3617
      %3639 = vmatprep.subr.bf16.mxu0 0
      %3640 = vmatpush1.bf16.msra.mxu0 %v3618
      %3641 = vmatprep.subr.bf16.mxu0 0
      %3642 = vmatpush1.bf16.msra.mxu0 %v3619
      %3643 = vmatprep.subr.bf16.mxu0 0
      %3644 = vmatpush1.bf16.msra.mxu0 %v3620
      %3645 = vmatprep.subr.bf16.mxu0 0
      %3646 = vmatpush1.bf16.msra.mxu0 0
      %3647 = vmatprep.subr.bf16.mxu0 0
      %3648 = vmatpush1.bf16.msra.mxu0 0
      %3649 = vmatprep.subr.bf16.mxu0 0
      %3650 = vmatpush1.bf16.msra.mxu0 0
      %3651 = vmatprep.subr.bf16.mxu0 0
      %3652 = vmatpush1.bf16.msra.mxu0 0
      %3653 = vmatprep.subr.bf16.mxu0 0
      %3654 = vmatpush1.bf16.msra.mxu0 0
      %3655 = vmatprep.subr.bf16.mxu0 0
      %3656 = vmatpush1.bf16.msra.mxu0 0
      %3657 = vmatprep.subr.bf16.mxu0 0
      %3658 = vmatpush1.bf16.msra.mxu0 0
      %3659 = vmatprep.subr.bf16.mxu0 0
      %3660 = vmatpush1.bf16.msra.mxu0 0
      %3661 = vmatprep.mubr.bf16.mxu0 0
      %3662 = vmatmul.mubr.bf16.gmra.mrb[0].mxu0 %v3574
      %v3663 = vpop.f32.mrb[0].mxu0
      %v3664 = vadd.f32 %v3580, %v3663
      %v3665 = vpop.f32.mrb[0].mxu0
      %v3666 = vpop.f32.mrb[0].mxu0
      %v3667 = vadd.f32 %v3580, %v3666
      %v3668 = vpop.f32.mrb[0].mxu0
      %3669 = vmatprep.mubr.bf16.mxu0 0
      %3670 = vmatmul.mubr.bf16.gmra.mrb[0].mxu0 %v3575
      %v3671 = vpop.f32.mrb[0].mxu0
      %v3672 = vadd.f32 %v3580, %v3671
      %v3673 = vpop.f32.mrb[0].mxu0
      %v3674 = vpop.f32.mrb[0].mxu0
      %v3675 = vadd.f32 %v3580, %v3674
      %v3676 = vpop.f32.mrb[0].mxu0
      %3677 = vdwg.mxu0
      %v3678 = vadd.f32 %v3430, %v3664
      %v3679 = vadd.f32 %v3431, %v3667
      %v3680 = vadd.f32 %v3432, %v3672
      %v3681 = vadd.f32 %v3433, %v3675
      %v3682 = vld [vmem:[%s4 + $0x16c] sm:$0x1]
      %v3683 = vld [vmem:[%s4 + $0x16d] sm:$0x1]
      %3684 = vadd.xlane.f32.xlu0 %v3678
      %v3685 = vpop.xlane.xlu0 %3684
      %3686 = vadd.xlane.f32.xlu0 %v3679
      %v3687 = vpop.xlane.xlu0 %3686
      %3688 = vadd.xlane.f32.xlu0 %v3680
      %v3689 = vpop.xlane.xlu0 %3688
      %3690 = vadd.xlane.f32.xlu0 %v3681
      %v3691 = vpop.xlane.xlu0 %3690
      %v3692 = vmul.f32 %v3685, %v1913
      %v3693 = vmul.f32 %v3687, %v1913
      %v3694 = vmul.f32 %v3689, %v1913
      %v3695 = vmul.f32 %v3691, %v1913
      %v3696 = vsub.f32 %v3678, %v3692
      %v3697 = vsub.f32 %v3679, %v3693
      %v3698 = vsub.f32 %v3680, %v3694
      %v3699 = vsub.f32 %v3681, %v3695
      %v3700 = vmul.f32 %v3696, %v3696
      %v3701 = vmul.f32 %v3697, %v3697
      %v3702 = vmul.f32 %v3698, %v3698
      %v3703 = vmul.f32 %v3699, %v3699
      %3704 = vadd.xlane.f32.xlu0 %v3700
      %v3705 = vpop.xlane.xlu0 %3704
      %3706 = vadd.xlane.f32.xlu0 %v3701
      %v3707 = vpop.xlane.xlu0 %3706
      %3708 = vadd.xlane.f32.xlu0 %v3702
      %v3709 = vpop.xlane.xlu0 %3708
      %3710 = vadd.xlane.f32.xlu0 %v3703
      %v3711 = vpop.xlane.xlu0 %3710
      %v3712 = vmul.f32 %v3705, %v1913
      %v3713 = vmul.f32 %v3707, %v1913
      %v3714 = vmul.f32 %v3709, %v1913
      %v3715 = vmul.f32 %v3711, %v1913
      %v3716 = vadd.f32 %v3712, 1e-05
      %v3717 = vadd.f32 %v3713, 1e-05
      %v3718 = vadd.f32 %v3714, 1e-05
      %v3719 = vadd.f32 %v3715, 1e-05
      %v3720 = vrsqrt.pop %v3716
      %v3721 = vrsqrt.pop %v3717
      %v3722 = vrsqrt.pop %v3718
      %v3723 = vrsqrt.pop %v3719
      %v3724 = vmul.f32 %v3696, %v3720
      %v3725 = vmul.f32 %v3697, %v3721
      %v3726 = vmul.f32 %v3698, %v3722
      %v3727 = vmul.f32 %v3699, %v3723
      %v3728 = vlaneseq
      %v3729 = vshrl.u32 %v3728, 7
      %v3730 = vsub.s32 0, %v3729
      %v3731 = vrot.slane %v3682, %v3730
      %v3732 = vmul.f32 %v3724, %v3731
      %v3733 = vmul.f32 %v3725, %v3731
      %v3734 = vmul.f32 %v3726, %v3731
      %v3735 = vmul.f32 %v3727, %v3731
      %v3736 = vlaneseq
      %v3737 = vshrl.u32 %v3736, 7
      %v3738 = vsub.s32 0, %v3737
      %v3739 = vrot.slane %v3683, %v3738
      %v3740 = vadd.f32 %v3732, %v3739
      %v3741 = vadd.f32 %v3733, %v3739
      %v3742 = vadd.f32 %v3734, %v3739
      %v3743 = vadd.f32 %v3735, %v3739
      %v3744 = vpack.c.bf16 %v3741, %v3740
      %v3745 = vpack.c.bf16 %v3743, %v3742
      %v3748 = vunpack.c.l.b16 %v3744
      %v3749 = vunpack.c.h.b16 %v3744
      %v3750 = vunpack.c.l.b16 %v3745
      %v3751 = vunpack.c.h.b16 %v3745
      %v3752 = vpack.c.b16 %v3748, %v3748
      %v3753 = vpack.c.b16 %v3749, %v3749
      %v3754 = vpack.c.b16 %v3750, %v3750
      %v3755 = vpack.c.b16 %v3751, %v3751
      %3760 = vst [vmem:[%s251] sm:$0xf] %v3752
      %3761 = vst [vmem:[%s251 + $0x4] sm:$0xf] %v3753
      %3762 = vst [vmem:[%s251 + $0x8] sm:$0xf] %v3754
      %3763 = vst [vmem:[%s251 + $0xc] sm:$0xf] %v3755
      %s3764 = smul.u32 4, %s16
      %p3765 = scmp.lt.s32.totalorder %s3764, 7
      %s3766 = scalar_select %p3765, %s3764, 7
      %s3767 = smul.addr %s3766, 4
      %s3768 = scalar_lea.vmem %s5, %s3767
      // Predicated region
      $region41: #{ppo_actor_forward.2} parent=39 // pred_check
        %p3769 = pneg %p149
      $region42: #{ppo_actor_forward.2} parent=39 // pred_check_branch
        %3771 = sbr.rel (%p3769) target = $region44
      $region43: #{ppo_actor_forward.2} parent=39 // pred_region
        %s3772 = smul.u32 4, %s16
      $region44: #{ppo_actor_forward.2} parent=39 // pred_fallthru
        _
    $region40: #{ppo_actor_forward.2} parent=5 // pred_fallthru
      _
    %p3773 = scmp.le.s32.totalorder 2, %s11
    // Predicated region
    $region45: #{ppo_actor_forward.2} parent=5 // pred_check
      %p3774 = pneg %p3773
    $region46: #{ppo_actor_forward.2} parent=5 // pred_check_branch
      %3776 = sbr.rel (%p3774) target = $region48
    $region47: #{ppo_actor_forward.2} parent=5 // pred_region
      %s3777 = ssub.s32 %s11, 2
      // Predicated region
      $region49: #{ppo_actor_forward.2} parent=47 // pred_check
        %p3778 = pneg %p155
      $region50: #{ppo_actor_forward.2} parent=47 // pred_check_branch
        %3780 = sbr.rel (%p3778) target = $region52
      $region51: #{ppo_actor_forward.2} parent=47 // pred_region
        %s3781 = smul.u32 4, %s17
        %p3782 = scmp.lt.s32.totalorder %s3781, 7
        %s3783 = scalar_select %p3782, %s3781, 7
        %s3784 = smul.addr %s3783, 4
        %s3785 = scalar_lea.vmem %s5, %s3784
      $region52: #{ppo_actor_forward.2} parent=47 // pred_fallthru
        _
    $region48: #{ppo_actor_forward.2} parent=5 // pred_fallthru
      _
  $region6: #{ppo_actor_forward.2} parent=0 // loop_footer
    %s15 = sadd.s32 1, %s11
  $region7: #{ppo_actor_forward.2} parent=0 // loop_footer_branch
    %10 = sbr.rel target = $region3
  $region8: #{ppo_actor_forward.2} parent=0 // loop_exit
    _

// kernel: ppo_actor_forward.3
$region0: #{ppo_actor_forward.3}
  #allocation0 [shape = 'u32[]', space=smem, size = 0x4, offset = 0x4, fixed_abs, tag = 'smem constant byte address 0x4 - core index']
  #allocation1 [shape = 'u32[144,128]{1,0:T(1,128)}', space=vmem, size = 0x12000, scoped, tag = 'internal scratch']
  %s0 = inlined_call_operand.vmem [shape: bf16[2,4096], index: 0, kind: input, shape index: {}]
  %s1 = inlined_call_operand.vmem [shape: bf16[4480,128], index: 1, kind: input, shape index: {}]
  %s2 = inlined_call_operand.vmem [shape: f32[8,128], index: 2, kind: input, shape index: {}]
  %s3 = inlined_call_operand.vmem [shape: f32[2,128], index: 3, kind: output, shape index: {0}]
  %s4 = inlined_call_operand.hbm [shape: f32[2,128], index: 4, kind: output, shape index: {1}]
  %s5 = inlined_call_operand.hbm [shape: f32[2,128], index: 5, kind: output, shape index: {2}]
  %6 = xla_tuple %s3, %s4, %s5
  %s7 = sld [smem:[#allocation0]]
  $region38: #{ppo_actor_forward.3} parent=0
    _
  %s9 = ssub.s32 1, %s7
  %s10 = scalar_select 0, %s9, %s7
  $region1: #{ppo_actor_forward.3} parent=0
    #allocation2 [shape = 'u8[1024]{0}', space=vmem, size = 0x400, scoped, tag = 'output window, operand 1, single buffered']
    #allocation3 [shape = 's32[1]{0}', space=sflag, size = 0x4, scoped, tag = 'scoped memory for ppo_actor_forward.3']
    #allocation4 [shape = 'u8[1024]{0}', space=vmem, size = 0x400, scoped, tag = 'output window, operand 2, single buffered']
    #allocation5 [shape = 's32[1]{0}', space=sflag, size = 0x4, scoped, tag = 'scoped memory for ppo_actor_forward.3']
    %11 = vsyncpa [#allocation3], 0
    %12 = vsyncpa [#allocation5], 0
    // Predicated region
    $region2: #{ppo_actor_forward.3} parent=1 // pred_check
      _
    $region3: #{ppo_actor_forward.3} parent=1 // pred_check_branch
      %14 = sbr.rel (0) target = $region5
    $region4: #{ppo_actor_forward.3} parent=1 // pred_region
      _
    $region5: #{ppo_actor_forward.3} parent=1 // pred_fallthru
      _
    // Predicated region
    $region6: #{ppo_actor_forward.3} parent=1 // pred_check
      _
    $region7: #{ppo_actor_forward.3} parent=1 // pred_check_branch
      %16 = sbr.rel (0) target = $region9
    $region8: #{ppo_actor_forward.3} parent=1 // pred_region
      _
    $region9: #{ppo_actor_forward.3} parent=1 // pred_fallthru
      _
    // Predicated region
    $region10: #{ppo_actor_forward.3} parent=1 // pred_check
      _
    $region11: #{ppo_actor_forward.3} parent=1 // pred_check_branch
      %18 = sbr.rel (0) target = $region13
    $region12: #{ppo_actor_forward.3} parent=1 // pred_region
      _
    $region13: #{ppo_actor_forward.3} parent=1 // pred_fallthru
      _
    %v20 = vld [vmem:[%s0] sm:$0xff]
    %v21 = vld [vmem:[%s0 + $0x8] sm:$0xff]
    %v22 = vld [vmem:[%s0 + $0x10] sm:$0xff]
    %v23 = vld [vmem:[%s0 + $0x18] sm:$0xff]
    %v24 = vld [vmem:[%s1] sm:$0xf]
    %v25 = vld [vmem:[%s1 + $0x4] sm:$0xf]
    %v26 = vld [vmem:[%s1 + $0x8] sm:$0xf]
    %v27 = vld [vmem:[%s1 + $0xc] sm:$0xf]
    %v28 = vld [vmem:[%s1 + $0x10] sm:$0xf]
    %v29 = vld [vmem:[%s1 + $0x14] sm:$0xf]
    %v30 = vld [vmem:[%s1 + $0x18] sm:$0xf]
    %v31 = vld [vmem:[%s1 + $0x1c] sm:$0xf]
    %v32 = vld [vmem:[%s1 + $0x20] sm:$0xf]
    %v33 = vld [vmem:[%s1 + $0x24] sm:$0xf]
    %v34 = vld [vmem:[%s1 + $0x28] sm:$0xf]
    %v35 = vld [vmem:[%s1 + $0x2c] sm:$0xf]
    %v36 = vld [vmem:[%s1 + $0x30] sm:$0xf]
    %v37 = vld [vmem:[%s1 + $0x34] sm:$0xf]
    %v38 = vld [vmem:[%s1 + $0x38] sm:$0xf]
    %v39 = vld [vmem:[%s1 + $0x3c] sm:$0xf]
    %v40 = vld [vmem:[%s1 + $0x40] sm:$0xf]
    %v41 = vld [vmem:[%s1 + $0x44] sm:$0xf]
    %v42 = vld [vmem:[%s1 + $0x48] sm:$0xf]
    %v43 = vld [vmem:[%s1 + $0x4c] sm:$0xf]
    %v44 = vld [vmem:[%s1 + $0x50] sm:$0xf]
    %v45 = vld [vmem:[%s1 + $0x54] sm:$0xf]
    %v46 = vld [vmem:[%s1 + $0x58] sm:$0xf]
    %v47 = vld [vmem:[%s1 + $0x5c] sm:$0xf]
    %v48 = vld [vmem:[%s1 + $0x60] sm:$0xf]
    %v49 = vld [vmem:[%s1 + $0x64] sm:$0xf]
    %v50 = vld [vmem:[%s1 + $0x68] sm:$0xf]
    %v51 = vld [vmem:[%s1 + $0x6c] sm:$0xf]
    %v52 = vld [vmem:[%s1 + $0x70] sm:$0xf]
    %v53 = vld [vmem:[%s1 + $0x74] sm:$0xf]
    %v54 = vld [vmem:[%s1 + $0x78] sm:$0xf]
    %v55 = vld [vmem:[%s1 + $0x7c] sm:$0xf]
    %v56 = vld [vmem:[%s1 + $0x80] sm:$0xf]
    %v57 = vld [vmem:[%s1 + $0x84] sm:$0xf]
    %v58 = vld [vmem:[%s1 + $0x88] sm:$0xf]
    %v59 = vld [vmem:[%s1 + $0x8c] sm:$0xf]
    %v60 = vld [vmem:[%s1 + $0x90] sm:$0xf]
    %v61 = vld [vmem:[%s1 + $0x94] sm:$0xf]
    %v62 = vld [vmem:[%s1 + $0x98] sm:$0xf]
    %v63 = vld [vmem:[%s1 + $0x9c] sm:$0xf]
    %v64 = vld [vmem:[%s1 + $0xa0] sm:$0xf]
    %v65 = vld [vmem:[%s1 + $0xa4] sm:$0xf]
    %v66 = vld [vmem:[%s1 + $0xa8] sm:$0xf]
    %v67 = vld [vmem:[%s1 + $0xac] sm:$0xf]
    %v68 = vld [vmem:[%s1 + $0xb0] sm:$0xf]
    %v69 = vld [vmem:[%s1 + $0xb4] sm:$0xf]
    %v70 = vld [vmem:[%s1 + $0xb8] sm:$0xf]
    %v71 = vld [vmem:[%s1 + $0xbc] sm:$0xf]
    %v72 = vld [vmem:[%s1 + $0xc0] sm:$0xf]
    %v73 = vld [vmem:[%s1 + $0xc4] sm:$0xf]
    %v74 = vld [vmem:[%s1 + $0xc8] sm:$0xf]
    %v75 = vld [vmem:[%s1 + $0xcc] sm:$0xf]
    %v76 = vld [vmem:[%s1 + $0xd0] sm:$0xf]
    %v77 = vld [vmem:[%s1 + $0xd4] sm:$0xf]
    %v78 = vld [vmem:[%s1 + $0xd8] sm:$0xf]
    %v79 = vld [vmem:[%s1 + $0xdc] sm:$0xf]
    %v80 = vld [vmem:[%s1 + $0xe0] sm:$0xf]
    %v81 = vld [vmem:[%s1 + $0xe4] sm:$0xf]
    %v82 = vld [vmem:[%s1 + $0xe8] sm:$0xf]
    %v83 = vld [vmem:[%s1 + $0xec] sm:$0xf]
    %v84 = vld [vmem:[%s1 + $0xf0] sm:$0xf]
    %v85 = vld [vmem:[%s1 + $0xf4] sm:$0xf]
    %v86 = vld [vmem:[%s1 + $0xf8] sm:$0xf]
    %v87 = vld [vmem:[%s1 + $0xfc] sm:$0xf]
    %v88 = vld [vmem:[%s1 + $0x100] sm:$0xf]
    %v89 = vld [vmem:[%s1 + $0x104] sm:$0xf]
    %v90 = vld [vmem:[%s1 + $0x108] sm:$0xf]
    %v91 = vld [vmem:[%s1 + $0x10c] sm:$0xf]
    %v92 = vld [vmem:[%s1 + $0x110] sm:$0xf]
    %v93 = vld [vmem:[%s1 + $0x114] sm:$0xf]
    %v94 = vld [vmem:[%s1 + $0x118] sm:$0xf]
    %v95 = vld [vmem:[%s1 + $0x11c] sm:$0xf]
    %v96 = vld [vmem:[%s1 + $0x120] sm:$0xf]
    %v97 = vld [vmem:[%s1 + $0x124] sm:$0xf]
    %v98 = vld [vmem:[%s1 + $0x128] sm:$0xf]
    %v99 = vld [vmem:[%s1 + $0x12c] sm:$0xf]
    %v100 = vld [vmem:[%s1 + $0x130] sm:$0xf]
    %v101 = vld [vmem:[%s1 + $0x134] sm:$0xf]
    %v102 = vld [vmem:[%s1 + $0x138] sm:$0xf]
    %v103 = vld [vmem:[%s1 + $0x13c] sm:$0xf]
    %v104 = vld [vmem:[%s1 + $0x140] sm:$0xf]
    %v105 = vld [vmem:[%s1 + $0x144] sm:$0xf]
    %v106 = vld [vmem:[%s1 + $0x148] sm:$0xf]
    %v107 = vld [vmem:[%s1 + $0x14c] sm:$0xf]
    %v108 = vld [vmem:[%s1 + $0x150] sm:$0xf]
    %v109 = vld [vmem:[%s1 + $0x154] sm:$0xf]
    %v110 = vld [vmem:[%s1 + $0x158] sm:$0xf]
    %v111 = vld [vmem:[%s1 + $0x15c] sm:$0xf]
    %v112 = vld [vmem:[%s1 + $0x160] sm:$0xf]
    %v113 = vld [vmem:[%s1 + $0x164] sm:$0xf]
    %v114 = vld [vmem:[%s1 + $0x168] sm:$0xf]
    %v115 = vld [vmem:[%s1 + $0x16c] sm:$0xf]
    %v116 = vld [vmem:[%s1 + $0x170] sm:$0xf]
    %v117 = vld [vmem:[%s1 + $0x174] sm:$0xf]
    %v118 = vld [vmem:[%s1 + $0x178] sm:$0xf]
    %v119 = vld [vmem:[%s1 + $0x17c] sm:$0xf]
    %v120 = vld [vmem:[%s1 + $0x180] sm:$0xf]
    %v121 = vld [vmem:[%s1 + $0x184] sm:$0xf]
    %v122 = vld [vmem:[%s1 + $0x188] sm:$0xf]
    %v123 = vld [vmem:[%s1 + $0x18c] sm:$0xf]
    %v124 = vld [vmem:[%s1 + $0x190] sm:$0xf]
    %v125 = vld [vmem:[%s1 + $0x194] sm:$0xf]
    %v126 = vld [vmem:[%s1 + $0x198] sm:$0xf]
    %v127 = vld [vmem:[%s1 + $0x19c] sm:$0xf]
    %v128 = vld [vmem:[%s1 + $0x1a0] sm:$0xf]
    %v129 = vld [vmem:[%s1 + $0x1a4] sm:$0xf]
    %v130 = vld [vmem:[%s1 + $0x1a8] sm:$0xf]
    %v131 = vld [vmem:[%s1 + $0x1ac] sm:$0xf]
    %v132 = vld [vmem:[%s1 + $0x1b0] sm:$0xf]
    %v133 = vld [vmem:[%s1 + $0x1b4] sm:$0xf]
    %v134 = vld [vmem:[%s1 + $0x1b8] sm:$0xf]
    %v135 = vld [vmem:[%s1 + $0x1bc] sm:$0xf]
    %v136 = vld [vmem:[%s1 + $0x1c0] sm:$0xf]
    %v137 = vld [vmem:[%s1 + $0x1c4] sm:$0xf]
    %v138 = vld [vmem:[%s1 + $0x1c8] sm:$0xf]
    %v139 = vld [vmem:[%s1 + $0x1cc] sm:$0xf]
    %v140 = vld [vmem:[%s1 + $0x1d0] sm:$0xf]
    %v141 = vld [vmem:[%s1 + $0x1d4] sm:$0xf]
    %v142 = vld [vmem:[%s1 + $0x1d8] sm:$0xf]
    %v143 = vld [vmem:[%s1 + $0x1dc] sm:$0xf]
    %v144 = vld [vmem:[%s1 + $0x1e0] sm:$0xf]
    %v145 = vld [vmem:[%s1 + $0x1e4] sm:$0xf]
    %v146 = vld [vmem:[%s1 + $0x1e8] sm:$0xf]
    %v147 = vld [vmem:[%s1 + $0x1ec] sm:$0xf]
    %v148 = vld [vmem:[%s1 + $0x1f0] sm:$0xf]
    %v149 = vld [vmem:[%s1 + $0x1f4] sm:$0xf]
    %v150 = vld [vmem:[%s1 + $0x1f8] sm:$0xf]
    %v151 = vld [vmem:[%s1 + $0x1fc] sm:$0xf]
    %v152 = vld [vmem:[%s1 + $0x200] sm:$0xf]
    %v153 = vld [vmem:[%s1 + $0x204] sm:$0xf]
    %v154 = vld [vmem:[%s1 + $0x208] sm:$0xf]
    %v155 = vld [vmem:[%s1 + $0x20c] sm:$0xf]
    %v156 = vld [vmem:[%s1 + $0x210] sm:$0xf]
    %v157 = vld [vmem:[%s1 + $0x214] sm:$0xf]
    %v158 = vld [vmem:[%s1 + $0x218] sm:$0xf]
    %v159 = vld [vmem:[%s1 + $0x21c] sm:$0xf]
    %v160 = vld [vmem:[%s1 + $0x220] sm:$0xf]
    %v161 = vld [vmem:[%s1 + $0x224] sm:$0xf]
    %v162 = vld [vmem:[%s1 + $0x228] sm:$0xf]
    %v163 = vld [vmem:[%s1 + $0x22c] sm:$0xf]
    %v164 = vld [vmem:[%s1 + $0x230] sm:$0xf]
    %v165 = vld [vmem:[%s1 + $0x234] sm:$0xf]
    %v166 = vld [vmem:[%s1 + $0x238] sm:$0xf]
    %v167 = vld [vmem:[%s1 + $0x23c] sm:$0xf]
    %v168 = vld [vmem:[%s1 + $0x240] sm:$0xf]
    %v169 = vld [vmem:[%s1 + $0x244] sm:$0xf]
    %v170 = vld [vmem:[%s1 + $0x248] sm:$0xf]
    %v171 = vld [vmem:[%s1 + $0x24c] sm:$0xf]
    %v172 = vld [vmem:[%s1 + $0x250] sm:$0xf]
    %v173 = vld [vmem:[%s1 + $0x254] sm:$0xf]
    %v174 = vld [vmem:[%s1 + $0x258] sm:$0xf]
    %v175 = vld [vmem:[%s1 + $0x25c] sm:$0xf]
    %v176 = vld [vmem:[%s1 + $0x260] sm:$0xf]
    %v177 = vld [vmem:[%s1 + $0x264] sm:$0xf]
    %v178 = vld [vmem:[%s1 + $0x268] sm:$0xf]
    %v179 = vld [vmem:[%s1 + $0x26c] sm:$0xf]
    %v180 = vld [vmem:[%s1 + $0x270] sm:$0xf]
    %v181 = vld [vmem:[%s1 + $0x274] sm:$0xf]
    %v182 = vld [vmem:[%s1 + $0x278] sm:$0xf]
    %v183 = vld [vmem:[%s1 + $0x27c] sm:$0xf]
    %v184 = vld [vmem:[%s1 + $0x280] sm:$0xf]
    %v185 = vld [vmem:[%s1 + $0x284] sm:$0xf]
    %v186 = vld [vmem:[%s1 + $0x288] sm:$0xf]
    %v187 = vld [vmem:[%s1 + $0x28c] sm:$0xf]
    %v188 = vld [vmem:[%s1 + $0x290] sm:$0xf]
    %v189 = vld [vmem:[%s1 + $0x294] sm:$0xf]
    %v190 = vld [vmem:[%s1 + $0x298] sm:$0xf]
    %v191 = vld [vmem:[%s1 + $0x29c] sm:$0xf]
    %v192 = vld [vmem:[%s1 + $0x2a0] sm:$0xf]
    %v193 = vld [vmem:[%s1 + $0x2a4] sm:$0xf]
    %v194 = vld [vmem:[%s1 + $0x2a8] sm:$0xf]
    %v195 = vld [vmem:[%s1 + $0x2ac] sm:$0xf]
    %v196 = vld [vmem:[%s1 + $0x2b0] sm:$0xf]
    %v197 = vld [vmem:[%s1 + $0x2b4] sm:$0xf]
    %v198 = vld [vmem:[%s1 + $0x2b8] sm:$0xf]
    %v199 = vld [vmem:[%s1 + $0x2bc] sm:$0xf]
    %v200 = vld [vmem:[%s1 + $0x2c0] sm:$0xf]
    %v201 = vld [vmem:[%s1 + $0x2c4] sm:$0xf]
    %v202 = vld [vmem:[%s1 + $0x2c8] sm:$0xf]
    %v203 = vld [vmem:[%s1 + $0x2cc] sm:$0xf]
    %v204 = vld [vmem:[%s1 + $0x2d0] sm:$0xf]
    %v205 = vld [vmem:[%s1 + $0x2d4] sm:$0xf]
    %v206 = vld [vmem:[%s1 + $0x2d8] sm:$0xf]
    %v207 = vld [vmem:[%s1 + $0x2dc] sm:$0xf]
    %v208 = vld [vmem:[%s1 + $0x2e0] sm:$0xf]
    %v209 = vld [vmem:[%s1 + $0x2e4] sm:$0xf]
    %v210 = vld [vmem:[%s1 + $0x2e8] sm:$0xf]
    %v211 = vld [vmem:[%s1 + $0x2ec] sm:$0xf]
    %v212 = vld [vmem:[%s1 + $0x2f0] sm:$0xf]
    %v213 = vld [vmem:[%s1 + $0x2f4] sm:$0xf]
    %v214 = vld [vmem:[%s1 + $0x2f8] sm:$0xf]
    %v215 = vld [vmem:[%s1 + $0x2fc] sm:$0xf]
    %v216 = vld [vmem:[%s1 + $0x300] sm:$0xf]
    %v217 = vld [vmem:[%s1 + $0x304] sm:$0xf]
    %v218 = vld [vmem:[%s1 + $0x308] sm:$0xf]
    %v219 = vld [vmem:[%s1 + $0x30c] sm:$0xf]
    %v220 = vld [vmem:[%s1 + $0x310] sm:$0xf]
    %v221 = vld [vmem:[%s1 + $0x314] sm:$0xf]
    %v222 = vld [vmem:[%s1 + $0x318] sm:$0xf]
    %v223 = vld [vmem:[%s1 + $0x31c] sm:$0xf]
    %v224 = vld [vmem:[%s1 + $0x320] sm:$0xf]
    %v225 = vld [vmem:[%s1 + $0x324] sm:$0xf]
    %v226 = vld [vmem:[%s1 + $0x328] sm:$0xf]
    %v227 = vld [vmem:[%s1 + $0x32c] sm:$0xf]
    %v228 = vld [vmem:[%s1 + $0x330] sm:$0xf]
    %v229 = vld [vmem:[%s1 + $0x334] sm:$0xf]
    %v230 = vld [vmem:[%s1 + $0x338] sm:$0xf]
    %v231 = vld [vmem:[%s1 + $0x33c] sm:$0xf]
    %v232 = vld [vmem:[%s1 + $0x340] sm:$0xf]
    %v233 = vld [vmem:[%s1 + $0x344] sm:$0xf]
    %v234 = vld [vmem:[%s1 + $0x348] sm:$0xf]
    %v235 = vld [vmem:[%s1 + $0x34c] sm:$0xf]
    %v236 = vld [vmem:[%s1 + $0x350] sm:$0xf]
    %v237 = vld [vmem:[%s1 + $0x354] sm:$0xf]
    %v238 = vld [vmem:[%s1 + $0x358] sm:$0xf]
    %v239 = vld [vmem:[%s1 + $0x35c] sm:$0xf]
    %v240 = vld [vmem:[%s1 + $0x360] sm:$0xf]
    %v241 = vld [vmem:[%s1 + $0x364] sm:$0xf]
    %v242 = vld [vmem:[%s1 + $0x368] sm:$0xf]
    %v243 = vld [vmem:[%s1 + $0x36c] sm:$0xf]
    %v244 = vld [vmem:[%s1 + $0x370] sm:$0xf]
    %v245 = vld [vmem:[%s1 + $0x374] sm:$0xf]
    %v246 = vld [vmem:[%s1 + $0x378] sm:$0xf]
    %v247 = vld [vmem:[%s1 + $0x37c] sm:$0xf]
    %v248 = vld [vmem:[%s1 + $0x380] sm:$0xf]
    %v249 = vld [vmem:[%s1 + $0x384] sm:$0xf]
    %v250 = vld [vmem:[%s1 + $0x388] sm:$0xf]
    %v251 = vld [vmem:[%s1 + $0x38c] sm:$0xf]
    %v252 = vld [vmem:[%s1 + $0x390] sm:$0xf]
    %v253 = vld [vmem:[%s1 + $0x394] sm:$0xf]
    %v254 = vld [vmem:[%s1 + $0x398] sm:$0xf]
    %v255 = vld [vmem:[%s1 + $0x39c] sm:$0xf]
    %v256 = vld [vmem:[%s1 + $0x3a0] sm:$0xf]
    %v257 = vld [vmem:[%s1 + $0x3a4] sm:$0xf]
    %v258 = vld [vmem:[%s1 + $0x3a8] sm:$0xf]
    %v259 = vld [vmem:[%s1 + $0x3ac] sm:$0xf]
    %v260 = vld [vmem:[%s1 + $0x3b0] sm:$0xf]
    %v261 = vld [vmem:[%s1 + $0x3b4] sm:$0xf]
    %v262 = vld [vmem:[%s1 + $0x3b8] sm:$0xf]
    %v263 = vld [vmem:[%s1 + $0x3bc] sm:$0xf]
    %v264 = vld [vmem:[%s1 + $0x3c0] sm:$0xf]
    %v265 = vld [vmem:[%s1 + $0x3c4] sm:$0xf]
    %v266 = vld [vmem:[%s1 + $0x3c8] sm:$0xf]
    %v267 = vld [vmem:[%s1 + $0x3cc] sm:$0xf]
    %v268 = vld [vmem:[%s1 + $0x3d0] sm:$0xf]
    %v269 = vld [vmem:[%s1 + $0x3d4] sm:$0xf]
    %v270 = vld [vmem:[%s1 + $0x3d8] sm:$0xf]
    %v271 = vld [vmem:[%s1 + $0x3dc] sm:$0xf]
    %v272 = vld [vmem:[%s1 + $0x3e0] sm:$0xf]
    %v273 = vld [vmem:[%s1 + $0x3e4] sm:$0xf]
    %v274 = vld [vmem:[%s1 + $0x3e8] sm:$0xf]
    %v275 = vld [vmem:[%s1 + $0x3ec] sm:$0xf]
    %v276 = vld [vmem:[%s1 + $0x3f0] sm:$0xf]
    %v277 = vld [vmem:[%s1 + $0x3f4] sm:$0xf]
    %v278 = vld [vmem:[%s1 + $0x3f8] sm:$0xf]
    %v279 = vld [vmem:[%s1 + $0x3fc] sm:$0xf]
    %v280 = vld [vmem:[%s1 + $0x400] sm:$0xf]
    %v281 = vld [vmem:[%s1 + $0x404] sm:$0xf]
    %v282 = vld [vmem:[%s1 + $0x408] sm:$0xf]
    %v283 = vld [vmem:[%s1 + $0x40c] sm:$0xf]
    %v284 = vld [vmem:[%s1 + $0x410] sm:$0xf]
    %v285 = vld [vmem:[%s1 + $0x414] sm:$0xf]
    %v286 = vld [vmem:[%s1 + $0x418] sm:$0xf]
    %v287 = vld [vmem:[%s1 + $0x41c] sm:$0xf]
    %v288 = vld [vmem:[%s1 + $0x420] sm:$0xf]
    %v289 = vld [vmem:[%s1 + $0x424] sm:$0xf]
    %v290 = vld [vmem:[%s1 + $0x428] sm:$0xf]
    %v291 = vld [vmem:[%s1 + $0x42c] sm:$0xf]
    %v292 = vld [vmem:[%s1 + $0x430] sm:$0xf]
    %v293 = vld [vmem:[%s1 + $0x434] sm:$0xf]
    %v294 = vld [vmem:[%s1 + $0x438] sm:$0xf]
    %v295 = vld [vmem:[%s1 + $0x43c] sm:$0xf]
    %v296 = vld [vmem:[%s1 + $0x440] sm:$0xf]
    %v297 = vld [vmem:[%s1 + $0x444] sm:$0xf]
    %v298 = vld [vmem:[%s1 + $0x448] sm:$0xf]
    %v299 = vld [vmem:[%s1 + $0x44c] sm:$0xf]
    %v300 = vld [vmem:[%s1 + $0x450] sm:$0xf]
    %v301 = vld [vmem:[%s1 + $0x454] sm:$0xf]
    %v302 = vld [vmem:[%s1 + $0x458] sm:$0xf]
    %v303 = vld [vmem:[%s1 + $0x45c] sm:$0xf]
    %v304 = vld [vmem:[%s1 + $0x460] sm:$0xf]
    %v305 = vld [vmem:[%s1 + $0x464] sm:$0xf]
    %v306 = vld [vmem:[%s1 + $0x468] sm:$0xf]
    %v307 = vld [vmem:[%s1 + $0x46c] sm:$0xf]
    %v308 = vld [vmem:[%s1 + $0x470] sm:$0xf]
    %v309 = vld [vmem:[%s1 + $0x474] sm:$0xf]
    %v310 = vld [vmem:[%s1 + $0x478] sm:$0xf]
    %v311 = vld [vmem:[%s1 + $0x47c] sm:$0xf]
    %v312 = vld [vmem:[%s1 + $0x480] sm:$0xf]
    %v313 = vld [vmem:[%s1 + $0x484] sm:$0xf]
    %v314 = vld [vmem:[%s1 + $0x488] sm:$0xf]
    %v315 = vld [vmem:[%s1 + $0x48c] sm:$0xf]
    %v316 = vld [vmem:[%s1 + $0x490] sm:$0xf]
    %v317 = vld [vmem:[%s1 + $0x494] sm:$0xf]
    %v318 = vld [vmem:[%s1 + $0x498] sm:$0xf]
    %v319 = vld [vmem:[%s1 + $0x49c] sm:$0xf]
    %v320 = vld [vmem:[%s1 + $0x4a0] sm:$0xf]
    %v321 = vld [vmem:[%s1 + $0x4a4] sm:$0xf]
    %v322 = vld [vmem:[%s1 + $0x4a8] sm:$0xf]
    %v323 = vld [vmem:[%s1 + $0x4ac] sm:$0xf]
    %v324 = vld [vmem:[%s1 + $0x4b0] sm:$0xf]
    %v325 = vld [vmem:[%s1 + $0x4b4] sm:$0xf]
    %v326 = vld [vmem:[%s1 + $0x4b8] sm:$0xf]
    %v327 = vld [vmem:[%s1 + $0x4bc] sm:$0xf]
    %v328 = vld [vmem:[%s1 + $0x4c0] sm:$0xf]
    %v329 = vld [vmem:[%s1 + $0x4c4] sm:$0xf]
    %v330 = vld [vmem:[%s1 + $0x4c8] sm:$0xf]
    %v331 = vld [vmem:[%s1 + $0x4cc] sm:$0xf]
    %v332 = vld [vmem:[%s1 + $0x4d0] sm:$0xf]
    %v333 = vld [vmem:[%s1 + $0x4d4] sm:$0xf]
    %v334 = vld [vmem:[%s1 + $0x4d8] sm:$0xf]
    %v335 = vld [vmem:[%s1 + $0x4dc] sm:$0xf]
    %v336 = vld [vmem:[%s1 + $0x4e0] sm:$0xf]
    %v337 = vld [vmem:[%s1 + $0x4e4] sm:$0xf]
    %v338 = vld [vmem:[%s1 + $0x4e8] sm:$0xf]
    %v339 = vld [vmem:[%s1 + $0x4ec] sm:$0xf]
    %v340 = vld [vmem:[%s1 + $0x4f0] sm:$0xf]
    %v341 = vld [vmem:[%s1 + $0x4f4] sm:$0xf]
    %v342 = vld [vmem:[%s1 + $0x4f8] sm:$0xf]
    %v343 = vld [vmem:[%s1 + $0x4fc] sm:$0xf]
    %v344 = vld [vmem:[%s1 + $0x500] sm:$0xf]
    %v345 = vld [vmem:[%s1 + $0x504] sm:$0xf]
    %v346 = vld [vmem:[%s1 + $0x508] sm:$0xf]
    %v347 = vld [vmem:[%s1 + $0x50c] sm:$0xf]
    %v348 = vld [vmem:[%s1 + $0x510] sm:$0xf]
    %v349 = vld [vmem:[%s1 + $0x514] sm:$0xf]
    %v350 = vld [vmem:[%s1 + $0x518] sm:$0xf]
    %v351 = vld [vmem:[%s1 + $0x51c] sm:$0xf]
    %v352 = vld [vmem:[%s1 + $0x520] sm:$0xf]
    %v353 = vld [vmem:[%s1 + $0x524] sm:$0xf]
    %v354 = vld [vmem:[%s1 + $0x528] sm:$0xf]
    %v355 = vld [vmem:[%s1 + $0x52c] sm:$0xf]
    %v356 = vld [vmem:[%s1 + $0x530] sm:$0xf]
    %v357 = vld [vmem:[%s1 + $0x534] sm:$0xf]
    %v358 = vld [vmem:[%s1 + $0x538] sm:$0xf]
    %v359 = vld [vmem:[%s1 + $0x53c] sm:$0xf]
    %v360 = vld [vmem:[%s1 + $0x540] sm:$0xf]
    %v361 = vld [vmem:[%s1 + $0x544] sm:$0xf]
    %v362 = vld [vmem:[%s1 + $0x548] sm:$0xf]
    %v363 = vld [vmem:[%s1 + $0x54c] sm:$0xf]
    %v364 = vld [vmem:[%s1 + $0x550] sm:$0xf]
    %v365 = vld [vmem:[%s1 + $0x554] sm:$0xf]
    %v366 = vld [vmem:[%s1 + $0x558] sm:$0xf]
    %v367 = vld [vmem:[%s1 + $0x55c] sm:$0xf]
    %v368 = vld [vmem:[%s1 + $0x560] sm:$0xf]
    %v369 = vld [vmem:[%s1 + $0x564] sm:$0xf]
    %v370 = vld [vmem:[%s1 + $0x568] sm:$0xf]
    %v371 = vld [vmem:[%s1 + $0x56c] sm:$0xf]
    %v372 = vld [vmem:[%s1 + $0x570] sm:$0xf]
    %v373 = vld [vmem:[%s1 + $0x574] sm:$0xf]
    %v374 = vld [vmem:[%s1 + $0x578] sm:$0xf]
    %v375 = vld [vmem:[%s1 + $0x57c] sm:$0xf]
    %v376 = vld [vmem:[%s1 + $0x580] sm:$0xf]
    %v377 = vld [vmem:[%s1 + $0x584] sm:$0xf]
    %v378 = vld [vmem:[%s1 + $0x588] sm:$0xf]
    %v379 = vld [vmem:[%s1 + $0x58c] sm:$0xf]
    %v380 = vld [vmem:[%s1 + $0x590] sm:$0xf]
    %v381 = vld [vmem:[%s1 + $0x594] sm:$0xf]
    %v382 = vld [vmem:[%s1 + $0x598] sm:$0xf]
    %v383 = vld [vmem:[%s1 + $0x59c] sm:$0xf]
    %v384 = vld [vmem:[%s1 + $0x5a0] sm:$0xf]
    %v385 = vld [vmem:[%s1 + $0x5a4] sm:$0xf]
    %v386 = vld [vmem:[%s1 + $0x5a8] sm:$0xf]
    %v387 = vld [vmem:[%s1 + $0x5ac] sm:$0xf]
    %v388 = vld [vmem:[%s1 + $0x5b0] sm:$0xf]
    %v389 = vld [vmem:[%s1 + $0x5b4] sm:$0xf]
    %v390 = vld [vmem:[%s1 + $0x5b8] sm:$0xf]
    %v391 = vld [vmem:[%s1 + $0x5bc] sm:$0xf]
    %v392 = vld [vmem:[%s1 + $0x5c0] sm:$0xf]
    %v393 = vld [vmem:[%s1 + $0x5c4] sm:$0xf]
    %v394 = vld [vmem:[%s1 + $0x5c8] sm:$0xf]
    %v395 = vld [vmem:[%s1 + $0x5cc] sm:$0xf]
    %v396 = vld [vmem:[%s1 + $0x5d0] sm:$0xf]
    %v397 = vld [vmem:[%s1 + $0x5d4] sm:$0xf]
    %v398 = vld [vmem:[%s1 + $0x5d8] sm:$0xf]
    %v399 = vld [vmem:[%s1 + $0x5dc] sm:$0xf]
    %v400 = vld [vmem:[%s1 + $0x5e0] sm:$0xf]
    %v401 = vld [vmem:[%s1 + $0x5e4] sm:$0xf]
    %v402 = vld [vmem:[%s1 + $0x5e8] sm:$0xf]
    %v403 = vld [vmem:[%s1 + $0x5ec] sm:$0xf]
    %v404 = vld [vmem:[%s1 + $0x5f0] sm:$0xf]
    %v405 = vld [vmem:[%s1 + $0x5f4] sm:$0xf]
    %v406 = vld [vmem:[%s1 + $0x5f8] sm:$0xf]
    %v407 = vld [vmem:[%s1 + $0x5fc] sm:$0xf]
    %v408 = vld [vmem:[%s1 + $0x600] sm:$0xf]
    %v409 = vld [vmem:[%s1 + $0x604] sm:$0xf]
    %v410 = vld [vmem:[%s1 + $0x608] sm:$0xf]
    %v411 = vld [vmem:[%s1 + $0x60c] sm:$0xf]
    %v412 = vld [vmem:[%s1 + $0x610] sm:$0xf]
    %v413 = vld [vmem:[%s1 + $0x614] sm:$0xf]
    %v414 = vld [vmem:[%s1 + $0x618] sm:$0xf]
    %v415 = vld [vmem:[%s1 + $0x61c] sm:$0xf]
    %v416 = vld [vmem:[%s1 + $0x620] sm:$0xf]
    %v417 = vld [vmem:[%s1 + $0x624] sm:$0xf]
    %v418 = vld [vmem:[%s1 + $0x628] sm:$0xf]
    %v419 = vld [vmem:[%s1 + $0x62c] sm:$0xf]
    %v420 = vld [vmem:[%s1 + $0x630] sm:$0xf]
    %v421 = vld [vmem:[%s1 + $0x634] sm:$0xf]
    %v422 = vld [vmem:[%s1 + $0x638] sm:$0xf]
    %v423 = vld [vmem:[%s1 + $0x63c] sm:$0xf]
    %v424 = vld [vmem:[%s1 + $0x640] sm:$0xf]
    %v425 = vld [vmem:[%s1 + $0x644] sm:$0xf]
    %v426 = vld [vmem:[%s1 + $0x648] sm:$0xf]
    %v427 = vld [vmem:[%s1 + $0x64c] sm:$0xf]
    %v428 = vld [vmem:[%s1 + $0x650] sm:$0xf]
    %v429 = vld [vmem:[%s1 + $0x654] sm:$0xf]
    %v430 = vld [vmem:[%s1 + $0x658] sm:$0xf]
    %v431 = vld [vmem:[%s1 + $0x65c] sm:$0xf]
    %v432 = vld [vmem:[%s1 + $0x660] sm:$0xf]
    %v433 = vld [vmem:[%s1 + $0x664] sm:$0xf]
    %v434 = vld [vmem:[%s1 + $0x668] sm:$0xf]
    %v435 = vld [vmem:[%s1 + $0x66c] sm:$0xf]
    %v436 = vld [vmem:[%s1 + $0x670] sm:$0xf]
    %v437 = vld [vmem:[%s1 + $0x674] sm:$0xf]
    %v438 = vld [vmem:[%s1 + $0x678] sm:$0xf]
    %v439 = vld [vmem:[%s1 + $0x67c] sm:$0xf]
    %v440 = vld [vmem:[%s1 + $0x680] sm:$0xf]
    %v441 = vld [vmem:[%s1 + $0x684] sm:$0xf]
    %v442 = vld [vmem:[%s1 + $0x688] sm:$0xf]
    %v443 = vld [vmem:[%s1 + $0x68c] sm:$0xf]
    %v444 = vld [vmem:[%s1 + $0x690] sm:$0xf]
    %v445 = vld [vmem:[%s1 + $0x694] sm:$0xf]
    %v446 = vld [vmem:[%s1 + $0x698] sm:$0xf]
    %v447 = vld [vmem:[%s1 + $0x69c] sm:$0xf]
    %v448 = vld [vmem:[%s1 + $0x6a0] sm:$0xf]
    %v449 = vld [vmem:[%s1 + $0x6a4] sm:$0xf]
    %v450 = vld [vmem:[%s1 + $0x6a8] sm:$0xf]
    %v451 = vld [vmem:[%s1 + $0x6ac] sm:$0xf]
    %v452 = vld [vmem:[%s1 + $0x6b0] sm:$0xf]
    %v453 = vld [vmem:[%s1 + $0x6b4] sm:$0xf]
    %v454 = vld [vmem:[%s1 + $0x6b8] sm:$0xf]
    %v455 = vld [vmem:[%s1 + $0x6bc] sm:$0xf]
    %v456 = vld [vmem:[%s1 + $0x6c0] sm:$0xf]
    %v457 = vld [vmem:[%s1 + $0x6c4] sm:$0xf]
    %v458 = vld [vmem:[%s1 + $0x6c8] sm:$0xf]
    %v459 = vld [vmem:[%s1 + $0x6cc] sm:$0xf]
    %v460 = vld [vmem:[%s1 + $0x6d0] sm:$0xf]
    %v461 = vld [vmem:[%s1 + $0x6d4] sm:$0xf]
    %v462 = vld [vmem:[%s1 + $0x6d8] sm:$0xf]
    %v463 = vld [vmem:[%s1 + $0x6dc] sm:$0xf]
    %v464 = vld [vmem:[%s1 + $0x6e0] sm:$0xf]
    %v465 = vld [vmem:[%s1 + $0x6e4] sm:$0xf]
    %v466 = vld [vmem:[%s1 + $0x6e8] sm:$0xf]
    %v467 = vld [vmem:[%s1 + $0x6ec] sm:$0xf]
    %v468 = vld [vmem:[%s1 + $0x6f0] sm:$0xf]
    %v469 = vld [vmem:[%s1 + $0x6f4] sm:$0xf]
    %v470 = vld [vmem:[%s1 + $0x6f8] sm:$0xf]
    %v471 = vld [vmem:[%s1 + $0x6fc] sm:$0xf]
    %v472 = vld [vmem:[%s1 + $0x700] sm:$0xf]
    %v473 = vld [vmem:[%s1 + $0x704] sm:$0xf]
    %v474 = vld [vmem:[%s1 + $0x708] sm:$0xf]
    %v475 = vld [vmem:[%s1 + $0x70c] sm:$0xf]
    %v476 = vld [vmem:[%s1 + $0x710] sm:$0xf]
    %v477 = vld [vmem:[%s1 + $0x714] sm:$0xf]
    %v478 = vld [vmem:[%s1 + $0x718] sm:$0xf]
    %v479 = vld [vmem:[%s1 + $0x71c] sm:$0xf]
    %v480 = vld [vmem:[%s1 + $0x720] sm:$0xf]
    %v481 = vld [vmem:[%s1 + $0x724] sm:$0xf]
    %v482 = vld [vmem:[%s1 + $0x728] sm:$0xf]
    %v483 = vld [vmem:[%s1 + $0x72c] sm:$0xf]
    %v484 = vld [vmem:[%s1 + $0x730] sm:$0xf]
    %v485 = vld [vmem:[%s1 + $0x734] sm:$0xf]
    %v486 = vld [vmem:[%s1 + $0x738] sm:$0xf]
    %v487 = vld [vmem:[%s1 + $0x73c] sm:$0xf]
    %v488 = vld [vmem:[%s1 + $0x740] sm:$0xf]
    %v489 = vld [vmem:[%s1 + $0x744] sm:$0xf]
    %v490 = vld [vmem:[%s1 + $0x748] sm:$0xf]
    %v491 = vld [vmem:[%s1 + $0x74c] sm:$0xf]
    %v492 = vld [vmem:[%s1 + $0x750] sm:$0xf]
    %v493 = vld [vmem:[%s1 + $0x754] sm:$0xf]
    %v494 = vld [vmem:[%s1 + $0x758] sm:$0xf]
    %v495 = vld [vmem:[%s1 + $0x75c] sm:$0xf]
    %v496 = vld [vmem:[%s1 + $0x760] sm:$0xf]
    %v497 = vld [vmem:[%s1 + $0x764] sm:$0xf]
    %v498 = vld [vmem:[%s1 + $0x768] sm:$0xf]
    %v499 = vld [vmem:[%s1 + $0x76c] sm:$0xf]
    %v500 = vld [vmem:[%s1 + $0x770] sm:$0xf]
    %v501 = vld [vmem:[%s1 + $0x774] sm:$0xf]
    %v502 = vld [vmem:[%s1 + $0x778] sm:$0xf]
    %v503 = vld [vmem:[%s1 + $0x77c] sm:$0xf]
    %v504 = vld [vmem:[%s1 + $0x780] sm:$0xf]
    %v505 = vld [vmem:[%s1 + $0x784] sm:$0xf]
    %v506 = vld [vmem:[%s1 + $0x788] sm:$0xf]
    %v507 = vld [vmem:[%s1 + $0x78c] sm:$0xf]
    %v508 = vld [vmem:[%s1 + $0x790] sm:$0xf]
    %v509 = vld [vmem:[%s1 + $0x794] sm:$0xf]
    %v510 = vld [vmem:[%s1 + $0x798] sm:$0xf]
    %v511 = vld [vmem:[%s1 + $0x79c] sm:$0xf]
    %v512 = vld [vmem:[%s1 + $0x7a0] sm:$0xf]
    %v513 = vld [vmem:[%s1 + $0x7a4] sm:$0xf]
    %v514 = vld [vmem:[%s1 + $0x7a8] sm:$0xf]
    %v515 = vld [vmem:[%s1 + $0x7ac] sm:$0xf]
    %v516 = vld [vmem:[%s1 + $0x7b0] sm:$0xf]
    %v517 = vld [vmem:[%s1 + $0x7b4] sm:$0xf]
    %v518 = vld [vmem:[%s1 + $0x7b8] sm:$0xf]
    %v519 = vld [vmem:[%s1 + $0x7bc] sm:$0xf]
    %v520 = vld [vmem:[%s1 + $0x7c0] sm:$0xf]
    %v521 = vld [vmem:[%s1 + $0x7c4] sm:$0xf]
    %v522 = vld [vmem:[%s1 + $0x7c8] sm:$0xf]
    %v523 = vld [vmem:[%s1 + $0x7cc] sm:$0xf]
    %v524 = vld [vmem:[%s1 + $0x7d0] sm:$0xf]
    %v525 = vld [vmem:[%s1 + $0x7d4] sm:$0xf]
    %v526 = vld [vmem:[%s1 + $0x7d8] sm:$0xf]
    %v527 = vld [vmem:[%s1 + $0x7dc] sm:$0xf]
    %v528 = vld [vmem:[%s1 + $0x7e0] sm:$0xf]
    %v529 = vld [vmem:[%s1 + $0x7e4] sm:$0xf]
    %v530 = vld [vmem:[%s1 + $0x7e8] sm:$0xf]
    %v531 = vld [vmem:[%s1 + $0x7ec] sm:$0xf]
    %v532 = vld [vmem:[%s1 + $0x7f0] sm:$0xf]
    %v533 = vld [vmem:[%s1 + $0x7f4] sm:$0xf]
    %v534 = vld [vmem:[%s1 + $0x7f8] sm:$0xf]
    %v535 = vld [vmem:[%s1 + $0x7fc] sm:$0xf]
    %v536 = vld [vmem:[%s2] sm:$0x1]
    %v537 = vlaneseq
    %v538 = vshrl.u32 %v537, 7
    %v539 = vsub.s32 0, %v538
    %v540 = vrot.slane %v536, %v539
    %v545 = vcombine.high %v20, %v20
    %v547 = vunpack.c.l.s4 1966171168
    %v548 = vunpack.c.0.s8 %v547
    %v549 = vlaneseq
    %v550 = vshrl.u32 %v549, 7
    %v551 = vsub.s32 %v548, %v550
    %v552 = vrot.slane %v20, %v551
    %v554 = vunpack.c.l.s4 1966171168
    %v555 = vunpack.c.0.s8 %v554
    %v556 = vlaneseq
    %v557 = vshrl.u32 %v556, 7
    %v558 = vsub.s32 %v555, %v557
    %v559 = vrot.slane %v545, %v558
    %v560 = vcombine.high %v552, %v552
    %v561 = vcombine.high %v559, %v559
    %v563 = vunpack.c.l.s4 1966171168
    %v564 = vunpack.c.0.s8 %v563
    %v565 = vlaneseq
    %v566 = vshrl.u32 %v565, 7
    %v567 = vsub.s32 %v564, %v566
    %v568 = vrot.slane %v552, %v567
    %v570 = vunpack.c.l.s4 1966171168
    %v571 = vunpack.c.0.s8 %v570
    %v572 = vlaneseq
    %v573 = vshrl.u32 %v572, 7
    %v574 = vsub.s32 %v571, %v573
    %v575 = vrot.slane %v559, %v574
    %v577 = vunpack.c.l.s4 1966171168
    %v578 = vunpack.c.0.s8 %v577
    %v579 = vlaneseq
    %v580 = vshrl.u32 %v579, 7
    %v581 = vsub.s32 %v578, %v580
    %v582 = vrot.slane %v560, %v581
    %v584 = vunpack.c.l.s4 1966171168
    %v585 = vunpack.c.0.s8 %v584
    %v586 = vlaneseq
    %v587 = vshrl.u32 %v586, 7
    %v588 = vsub.s32 %v585, %v587
    %v589 = vrot.slane %v561, %v588
    %v590 = vcombine.high %v568, %v568
    %v591 = vcombine.high %v575, %v575
    %v592 = vcombine.high %v582, %v582
    %v593 = vcombine.high %v589, %v589
    %v594 = vcombine.high %v21, %v21
    %v596 = vunpack.c.l.s4 1966171168
    %v597 = vunpack.c.0.s8 %v596
    %v598 = vlaneseq
    %v599 = vshrl.u32 %v598, 7
    %v600 = vsub.s32 %v597, %v599
    %v601 = vrot.slane %v21, %v600
    %v603 = vunpack.c.l.s4 1966171168
    %v604 = vunpack.c.0.s8 %v603
    %v605 = vlaneseq
    %v606 = vshrl.u32 %v605, 7
    %v607 = vsub.s32 %v604, %v606
    %v608 = vrot.slane %v594, %v607
    %v609 = vcombine.high %v601, %v601
    %v610 = vcombine.high %v608, %v608
    %v612 = vunpack.c.l.s4 1966171168
    %v613 = vunpack.c.0.s8 %v612
    %v614 = vlaneseq
    %v615 = vshrl.u32 %v614, 7
    %v616 = vsub.s32 %v613, %v615
    %v617 = vrot.slane %v601, %v616
    %v619 = vunpack.c.l.s4 1966171168
    %v620 = vunpack.c.0.s8 %v619
    %v621 = vlaneseq
    %v622 = vshrl.u32 %v621, 7
    %v623 = vsub.s32 %v620, %v622
    %v624 = vrot.slane %v608, %v623
    %v626 = vunpack.c.l.s4 1966171168
    %v627 = vunpack.c.0.s8 %v626
    %v628 = vlaneseq
    %v629 = vshrl.u32 %v628, 7
    %v630 = vsub.s32 %v627, %v629
    %v631 = vrot.slane %v609, %v630
    %v633 = vunpack.c.l.s4 1966171168
    %v634 = vunpack.c.0.s8 %v633
    %v635 = vlaneseq
    %v636 = vshrl.u32 %v635, 7
    %v637 = vsub.s32 %v634, %v636
    %v638 = vrot.slane %v610, %v637
    %v639 = vcombine.high %v617, %v617
    %v640 = vcombine.high %v624, %v624
    %v641 = vcombine.high %v631, %v631
    %v642 = vcombine.high %v638, %v638
    %v643 = vcombine.high %v22, %v22
    %v645 = vunpack.c.l.s4 1966171168
    %v646 = vunpack.c.0.s8 %v645
    %v647 = vlaneseq
    %v648 = vshrl.u32 %v647, 7
    %v649 = vsub.s32 %v646, %v648
    %v650 = vrot.slane %v22, %v649
    %v652 = vunpack.c.l.s4 1966171168
    %v653 = vunpack.c.0.s8 %v652
    %v654 = vlaneseq
    %v655 = vshrl.u32 %v654, 7
    %v656 = vsub.s32 %v653, %v655
    %v657 = vrot.slane %v643, %v656
    %v658 = vcombine.high %v650, %v650
    %v659 = vcombine.high %v657, %v657
    %v661 = vunpack.c.l.s4 1966171168
    %v662 = vunpack.c.0.s8 %v661
    %v663 = vlaneseq
    %v664 = vshrl.u32 %v663, 7
    %v665 = vsub.s32 %v662, %v664
    %v666 = vrot.slane %v650, %v665
    %v668 = vunpack.c.l.s4 1966171168
    %v669 = vunpack.c.0.s8 %v668
    %v670 = vlaneseq
    %v671 = vshrl.u32 %v670, 7
    %v672 = vsub.s32 %v669, %v671
    %v673 = vrot.slane %v657, %v672
    %v675 = vunpack.c.l.s4 1966171168
    %v676 = vunpack.c.0.s8 %v675
    %v677 = vlaneseq
    %v678 = vshrl.u32 %v677, 7
    %v679 = vsub.s32 %v676, %v678
    %v680 = vrot.slane %v658, %v679
    %v682 = vunpack.c.l.s4 1966171168
    %v683 = vunpack.c.0.s8 %v682
    %v684 = vlaneseq
    %v685 = vshrl.u32 %v684, 7
    %v686 = vsub.s32 %v683, %v685
    %v687 = vrot.slane %v659, %v686
    %v688 = vcombine.high %v666, %v666
    %v689 = vcombine.high %v673, %v673
    %v690 = vcombine.high %v680, %v680
    %v691 = vcombine.high %v687, %v687
    %v692 = vcombine.high %v23, %v23
    %v694 = vunpack.c.l.s4 1966171168
    %v695 = vunpack.c.0.s8 %v694
    %v696 = vlaneseq
    %v697 = vshrl.u32 %v696, 7
    %v698 = vsub.s32 %v695, %v697
    %v699 = vrot.slane %v23, %v698
    %v701 = vunpack.c.l.s4 1966171168
    %v702 = vunpack.c.0.s8 %v701
    %v703 = vlaneseq
    %v704 = vshrl.u32 %v703, 7
    %v705 = vsub.s32 %v702, %v704
    %v706 = vrot.slane %v692, %v705
    %v707 = vcombine.high %v699, %v699
    %v708 = vcombine.high %v706, %v706
    %v710 = vunpack.c.l.s4 1966171168
    %v711 = vunpack.c.0.s8 %v710
    %v712 = vlaneseq
    %v713 = vshrl.u32 %v712, 7
    %v714 = vsub.s32 %v711, %v713
    %v715 = vrot.slane %v699, %v714
    %v717 = vunpack.c.l.s4 1966171168
    %v718 = vunpack.c.0.s8 %v717
    %v719 = vlaneseq
    %v720 = vshrl.u32 %v719, 7
    %v721 = vsub.s32 %v718, %v720
    %v722 = vrot.slane %v706, %v721
    %v724 = vunpack.c.l.s4 1966171168
    %v725 = vunpack.c.0.s8 %v724
    %v726 = vlaneseq
    %v727 = vshrl.u32 %v726, 7
    %v728 = vsub.s32 %v725, %v727
    %v729 = vrot.slane %v707, %v728
    %v731 = vunpack.c.l.s4 1966171168
    %v732 = vunpack.c.0.s8 %v731
    %v733 = vlaneseq
    %v734 = vshrl.u32 %v733, 7
    %v735 = vsub.s32 %v732, %v734
    %v736 = vrot.slane %v708, %v735
    %v737 = vcombine.high %v715, %v715
    %v738 = vcombine.high %v722, %v722
    %v739 = vcombine.high %v729, %v729
    %v740 = vcombine.high %v736, %v736
    %v1285 = vunpack.c.l.b16 %v24
    %v1286 = vunpack.c.l.b16 %v25
    %v1287 = vunpack.c.l.b16 %v26
    %v1288 = vunpack.c.l.b16 %v27
    %v1289 = vunpack.c.l.b16 %v28
    %v1290 = vunpack.c.l.b16 %v29
    %v1291 = vunpack.c.l.b16 %v30
    %v1292 = vunpack.c.l.b16 %v31
    %v1293 = vunpack.c.l.b16 %v32
    %v1294 = vunpack.c.l.b16 %v33
    %v1295 = vunpack.c.l.b16 %v34
    %v1296 = vunpack.c.l.b16 %v35
    %v1297 = vunpack.c.l.b16 %v36
    %v1298 = vunpack.c.l.b16 %v37
    %v1299 = vunpack.c.l.b16 %v38
    %v1300 = vunpack.c.l.b16 %v39
    %v1301 = vunpack.c.l.b16 %v40
    %v1302 = vunpack.c.l.b16 %v41
    %v1303 = vunpack.c.l.b16 %v42
    %v1304 = vunpack.c.l.b16 %v43
    %v1305 = vunpack.c.l.b16 %v44
    %v1306 = vunpack.c.l.b16 %v45
    %v1307 = vunpack.c.l.b16 %v46
    %v1308 = vunpack.c.l.b16 %v47
    %v1309 = vunpack.c.l.b16 %v48
    %v1310 = vunpack.c.l.b16 %v49
    %v1311 = vunpack.c.l.b16 %v50
    %v1312 = vunpack.c.l.b16 %v51
    %v1313 = vunpack.c.l.b16 %v52
    %v1314 = vunpack.c.l.b16 %v53
    %v1315 = vunpack.c.l.b16 %v54
    %v1316 = vunpack.c.l.b16 %v55
    %v1317 = vunpack.c.l.b16 %v56
    %v1318 = vunpack.c.l.b16 %v57
    %v1319 = vunpack.c.l.b16 %v58
    %v1320 = vunpack.c.l.b16 %v59
    %v1321 = vunpack.c.l.b16 %v60
    %v1322 = vunpack.c.l.b16 %v61
    %v1323 = vunpack.c.l.b16 %v62
    %v1324 = vunpack.c.l.b16 %v63
    %v1325 = vunpack.c.l.b16 %v64
    %v1326 = vunpack.c.l.b16 %v65
    %v1327 = vunpack.c.l.b16 %v66
    %v1328 = vunpack.c.l.b16 %v67
    %v1329 = vunpack.c.l.b16 %v68
    %v1330 = vunpack.c.l.b16 %v69
    %v1331 = vunpack.c.l.b16 %v70
    %v1332 = vunpack.c.l.b16 %v71
    %v1333 = vunpack.c.l.b16 %v72
    %v1334 = vunpack.c.l.b16 %v73
    %v1335 = vunpack.c.l.b16 %v74
    %v1336 = vunpack.c.l.b16 %v75
    %v1337 = vunpack.c.l.b16 %v76
    %v1338 = vunpack.c.l.b16 %v77
    %v1339 = vunpack.c.l.b16 %v78
    %v1340 = vunpack.c.l.b16 %v79
    %v1341 = vunpack.c.l.b16 %v80
    %v1342 = vunpack.c.l.b16 %v81
    %v1343 = vunpack.c.l.b16 %v82
    %v1344 = vunpack.c.l.b16 %v83
    %v1345 = vunpack.c.l.b16 %v84
    %v1346 = vunpack.c.l.b16 %v85
    %v1347 = vunpack.c.l.b16 %v86
    %v1348 = vunpack.c.l.b16 %v87
    %v1349 = vunpack.c.l.b16 %v88
    %v1350 = vunpack.c.l.b16 %v89
    %v1351 = vunpack.c.l.b16 %v90
    %v1352 = vunpack.c.l.b16 %v91
    %v1353 = vunpack.c.l.b16 %v92
    %v1354 = vunpack.c.l.b16 %v93
    %v1355 = vunpack.c.l.b16 %v94
    %v1356 = vunpack.c.l.b16 %v95
    %v1357 = vunpack.c.l.b16 %v96
    %v1358 = vunpack.c.l.b16 %v97
    %v1359 = vunpack.c.l.b16 %v98
    %v1360 = vunpack.c.l.b16 %v99
    %v1361 = vunpack.c.l.b16 %v100
    %v1362 = vunpack.c.l.b16 %v101
    %v1363 = vunpack.c.l.b16 %v102
    %v1364 = vunpack.c.l.b16 %v103
    %v1365 = vunpack.c.l.b16 %v104
    %v1366 = vunpack.c.l.b16 %v105
    %v1367 = vunpack.c.l.b16 %v106
    %v1368 = vunpack.c.l.b16 %v107
    %v1369 = vunpack.c.l.b16 %v108
    %v1370 = vunpack.c.l.b16 %v109
    %v1371 = vunpack.c.l.b16 %v110
    %v1372 = vunpack.c.l.b16 %v111
    %v1373 = vunpack.c.l.b16 %v112
    %v1374 = vunpack.c.l.b16 %v113
    %v1375 = vunpack.c.l.b16 %v114
    %v1376 = vunpack.c.l.b16 %v115
    %v1377 = vunpack.c.l.b16 %v116
    %v1378 = vunpack.c.l.b16 %v117
    %v1379 = vunpack.c.l.b16 %v118
    %v1380 = vunpack.c.l.b16 %v119
    %v1381 = vunpack.c.l.b16 %v120
    %v1382 = vunpack.c.l.b16 %v121
    %v1383 = vunpack.c.l.b16 %v122
    %v1384 = vunpack.c.l.b16 %v123
    %v1385 = vunpack.c.l.b16 %v124
    %v1386 = vunpack.c.l.b16 %v125
    %v1387 = vunpack.c.l.b16 %v126
    %v1388 = vunpack.c.l.b16 %v127
    %v1389 = vunpack.c.l.b16 %v128
    %v1390 = vunpack.c.l.b16 %v129
    %v1391 = vunpack.c.l.b16 %v130
    %v1392 = vunpack.c.l.b16 %v131
    %v1393 = vunpack.c.l.b16 %v132
    %v1394 = vunpack.c.l.b16 %v133
    %v1395 = vunpack.c.l.b16 %v134
    %v1396 = vunpack.c.l.b16 %v135
    %v1397 = vunpack.c.l.b16 %v136
    %v1398 = vunpack.c.l.b16 %v137
    %v1399 = vunpack.c.l.b16 %v138
    %v1400 = vunpack.c.l.b16 %v139
    %v1401 = vunpack.c.l.b16 %v140
    %v1402 = vunpack.c.l.b16 %v141
    %v1403 = vunpack.c.l.b16 %v142
    %v1404 = vunpack.c.l.b16 %v143
    %v1405 = vunpack.c.l.b16 %v144
    %v1406 = vunpack.c.l.b16 %v145
    %v1407 = vunpack.c.l.b16 %v146
    %v1408 = vunpack.c.l.b16 %v147
    %v1409 = vunpack.c.l.b16 %v148
    %v1410 = vunpack.c.l.b16 %v149
    %v1411 = vunpack.c.l.b16 %v150
    %v1412 = vunpack.c.l.b16 %v151
    %v1413 = vunpack.c.l.b16 %v152
    %v1414 = vunpack.c.l.b16 %v153
    %v1415 = vunpack.c.l.b16 %v154
    %v1416 = vunpack.c.l.b16 %v155
    %v1417 = vunpack.c.l.b16 %v156
    %v1418 = vunpack.c.l.b16 %v157
    %v1419 = vunpack.c.l.b16 %v158
    %v1420 = vunpack.c.l.b16 %v159
    %v1421 = vunpack.c.l.b16 %v160
    %v1422 = vunpack.c.l.b16 %v161
    %v1423 = vunpack.c.l.b16 %v162
    %v1424 = vunpack.c.l.b16 %v163
    %v1425 = vunpack.c.l.b16 %v164
    %v1426 = vunpack.c.l.b16 %v165
    %v1427 = vunpack.c.l.b16 %v166
    %v1428 = vunpack.c.l.b16 %v167
    %v1429 = vunpack.c.l.b16 %v168
    %v1430 = vunpack.c.l.b16 %v169
    %v1431 = vunpack.c.l.b16 %v170
    %v1432 = vunpack.c.l.b16 %v171
    %v1433 = vunpack.c.l.b16 %v172
    %v1434 = vunpack.c.l.b16 %v173
    %v1435 = vunpack.c.l.b16 %v174
    %v1436 = vunpack.c.l.b16 %v175
    %v1437 = vunpack.c.l.b16 %v176
    %v1438 = vunpack.c.l.b16 %v177
    %v1439 = vunpack.c.l.b16 %v178
    %v1440 = vunpack.c.l.b16 %v179
    %v1441 = vunpack.c.l.b16 %v180
    %v1442 = vunpack.c.l.b16 %v181
    %v1443 = vunpack.c.l.b16 %v182
    %v1444 = vunpack.c.l.b16 %v183
    %v1445 = vunpack.c.l.b16 %v184
    %v1446 = vunpack.c.l.b16 %v185
    %v1447 = vunpack.c.l.b16 %v186
    %v1448 = vunpack.c.l.b16 %v187
    %v1449 = vunpack.c.l.b16 %v188
    %v1450 = vunpack.c.l.b16 %v189
    %v1451 = vunpack.c.l.b16 %v190
    %v1452 = vunpack.c.l.b16 %v191
    %v1453 = vunpack.c.l.b16 %v192
    %v1454 = vunpack.c.l.b16 %v193
    %v1455 = vunpack.c.l.b16 %v194
    %v1456 = vunpack.c.l.b16 %v195
    %v1457 = vunpack.c.l.b16 %v196
    %v1458 = vunpack.c.l.b16 %v197
    %v1459 = vunpack.c.l.b16 %v198
    %v1460 = vunpack.c.l.b16 %v199
    %v1461 = vunpack.c.l.b16 %v200
    %v1462 = vunpack.c.l.b16 %v201
    %v1463 = vunpack.c.l.b16 %v202
    %v1464 = vunpack.c.l.b16 %v203
    %v1465 = vunpack.c.l.b16 %v204
    %v1466 = vunpack.c.l.b16 %v205
    %v1467 = vunpack.c.l.b16 %v206
    %v1468 = vunpack.c.l.b16 %v207
    %v1469 = vunpack.c.l.b16 %v208
    %v1470 = vunpack.c.l.b16 %v209
    %v1471 = vunpack.c.l.b16 %v210
    %v1472 = vunpack.c.l.b16 %v211
    %v1473 = vunpack.c.l.b16 %v212
    %v1474 = vunpack.c.l.b16 %v213
    %v1475 = vunpack.c.l.b16 %v214
    %v1476 = vunpack.c.l.b16 %v215
    %v1477 = vunpack.c.l.b16 %v216
    %v1478 = vunpack.c.l.b16 %v217
    %v1479 = vunpack.c.l.b16 %v218
    %v1480 = vunpack.c.l.b16 %v219
    %v1481 = vunpack.c.l.b16 %v220
    %v1482 = vunpack.c.l.b16 %v221
    %v1483 = vunpack.c.l.b16 %v222
    %v1484 = vunpack.c.l.b16 %v223
    %v1485 = vunpack.c.l.b16 %v224
    %v1486 = vunpack.c.l.b16 %v225
    %v1487 = vunpack.c.l.b16 %v226
    %v1488 = vunpack.c.l.b16 %v227
    %v1489 = vunpack.c.l.b16 %v228
    %v1490 = vunpack.c.l.b16 %v229
    %v1491 = vunpack.c.l.b16 %v230
    %v1492 = vunpack.c.l.b16 %v231
    %v1493 = vunpack.c.l.b16 %v232
    %v1494 = vunpack.c.l.b16 %v233
    %v1495 = vunpack.c.l.b16 %v234
    %v1496 = vunpack.c.l.b16 %v235
    %v1497 = vunpack.c.l.b16 %v236
    %v1498 = vunpack.c.l.b16 %v237
    %v1499 = vunpack.c.l.b16 %v238
    %v1500 = vunpack.c.l.b16 %v239
    %v1501 = vunpack.c.l.b16 %v240
    %v1502 = vunpack.c.l.b16 %v241
    %v1503 = vunpack.c.l.b16 %v242
    %v1504 = vunpack.c.l.b16 %v243
    %v1505 = vunpack.c.l.b16 %v244
    %v1506 = vunpack.c.l.b16 %v245
    %v1507 = vunpack.c.l.b16 %v246
    %v1508 = vunpack.c.l.b16 %v247
    %v1509 = vunpack.c.l.b16 %v248
    %v1510 = vunpack.c.l.b16 %v249
    %v1511 = vunpack.c.l.b16 %v250
    %v1512 = vunpack.c.l.b16 %v251
    %v1513 = vunpack.c.l.b16 %v252
    %v1514 = vunpack.c.l.b16 %v253
    %v1515 = vunpack.c.l.b16 %v254
    %v1516 = vunpack.c.l.b16 %v255
    %v1517 = vunpack.c.l.b16 %v256
    %v1518 = vunpack.c.l.b16 %v257
    %v1519 = vunpack.c.l.b16 %v258
    %v1520 = vunpack.c.l.b16 %v259
    %v1521 = vunpack.c.l.b16 %v260
    %v1522 = vunpack.c.l.b16 %v261
    %v1523 = vunpack.c.l.b16 %v262
    %v1524 = vunpack.c.l.b16 %v263
    %v1525 = vunpack.c.l.b16 %v264
    %v1526 = vunpack.c.l.b16 %v265
    %v1527 = vunpack.c.l.b16 %v266
    %v1528 = vunpack.c.l.b16 %v267
    %v1529 = vunpack.c.l.b16 %v268
    %v1530 = vunpack.c.l.b16 %v269
    %v1531 = vunpack.c.l.b16 %v270
    %v1532 = vunpack.c.l.b16 %v271
    %v1533 = vunpack.c.l.b16 %v272
    %v1534 = vunpack.c.l.b16 %v273
    %v1535 = vunpack.c.l.b16 %v274
    %v1536 = vunpack.c.l.b16 %v275
    %v1537 = vunpack.c.l.b16 %v276
    %v1538 = vunpack.c.l.b16 %v277
    %v1539 = vunpack.c.l.b16 %v278
    %v1540 = vunpack.c.l.b16 %v279
    %v1541 = vunpack.c.l.b16 %v280
    %v1542 = vunpack.c.l.b16 %v281
    %v1543 = vunpack.c.l.b16 %v282
    %v1544 = vunpack.c.l.b16 %v283
    %v1545 = vunpack.c.l.b16 %v284
    %v1546 = vunpack.c.l.b16 %v285
    %v1547 = vunpack.c.l.b16 %v286
    %v1548 = vunpack.c.l.b16 %v287
    %v1549 = vunpack.c.l.b16 %v288
    %v1550 = vunpack.c.l.b16 %v289
    %v1551 = vunpack.c.l.b16 %v290
    %v1552 = vunpack.c.l.b16 %v291
    %v1553 = vunpack.c.l.b16 %v292
    %v1554 = vunpack.c.l.b16 %v293
    %v1555 = vunpack.c.l.b16 %v294
    %v1556 = vunpack.c.l.b16 %v295
    %v1557 = vunpack.c.l.b16 %v296
    %v1558 = vunpack.c.l.b16 %v297
    %v1559 = vunpack.c.l.b16 %v298
    %v1560 = vunpack.c.l.b16 %v299
    %v1561 = vunpack.c.l.b16 %v300
    %v1562 = vunpack.c.l.b16 %v301
    %v1563 = vunpack.c.l.b16 %v302
    %v1564 = vunpack.c.l.b16 %v303
    %v1565 = vunpack.c.l.b16 %v304
    %v1566 = vunpack.c.l.b16 %v305
    %v1567 = vunpack.c.l.b16 %v306
    %v1568 = vunpack.c.l.b16 %v307
    %v1569 = vunpack.c.l.b16 %v308
    %v1570 = vunpack.c.l.b16 %v309
    %v1571 = vunpack.c.l.b16 %v310
    %v1572 = vunpack.c.l.b16 %v311
    %v1573 = vunpack.c.l.b16 %v312
    %v1574 = vunpack.c.l.b16 %v313
    %v1575 = vunpack.c.l.b16 %v314
    %v1576 = vunpack.c.l.b16 %v315
    %v1577 = vunpack.c.l.b16 %v316
    %v1578 = vunpack.c.l.b16 %v317
    %v1579 = vunpack.c.l.b16 %v318
    %v1580 = vunpack.c.l.b16 %v319
    %v1581 = vunpack.c.l.b16 %v320
    %v1582 = vunpack.c.l.b16 %v321
    %v1583 = vunpack.c.l.b16 %v322
    %v1584 = vunpack.c.l.b16 %v323
    %v1585 = vunpack.c.l.b16 %v324
    %v1586 = vunpack.c.l.b16 %v325
    %v1587 = vunpack.c.l.b16 %v326
    %v1588 = vunpack.c.l.b16 %v327
    %v1589 = vunpack.c.l.b16 %v328
    %v1590 = vunpack.c.l.b16 %v329
    %v1591 = vunpack.c.l.b16 %v330
    %v1592 = vunpack.c.l.b16 %v331
    %v1593 = vunpack.c.l.b16 %v332
    %v1594 = vunpack.c.l.b16 %v333
    %v1595 = vunpack.c.l.b16 %v334
    %v1596 = vunpack.c.l.b16 %v335
    %v1597 = vunpack.c.l.b16 %v336
    %v1598 = vunpack.c.l.b16 %v337
    %v1599 = vunpack.c.l.b16 %v338
    %v1600 = vunpack.c.l.b16 %v339
    %v1601 = vunpack.c.l.b16 %v340
    %v1602 = vunpack.c.l.b16 %v341
    %v1603 = vunpack.c.l.b16 %v342
    %v1604 = vunpack.c.l.b16 %v343
    %v1605 = vunpack.c.l.b16 %v344
    %v1606 = vunpack.c.l.b16 %v345
    %v1607 = vunpack.c.l.b16 %v346
    %v1608 = vunpack.c.l.b16 %v347
    %v1609 = vunpack.c.l.b16 %v348
    %v1610 = vunpack.c.l.b16 %v349
    %v1611 = vunpack.c.l.b16 %v350
    %v1612 = vunpack.c.l.b16 %v351
    %v1613 = vunpack.c.l.b16 %v352
    %v1614 = vunpack.c.l.b16 %v353
    %v1615 = vunpack.c.l.b16 %v354
    %v1616 = vunpack.c.l.b16 %v355
    %v1617 = vunpack.c.l.b16 %v356
    %v1618 = vunpack.c.l.b16 %v357
    %v1619 = vunpack.c.l.b16 %v358
    %v1620 = vunpack.c.l.b16 %v359
    %v1621 = vunpack.c.l.b16 %v360
    %v1622 = vunpack.c.l.b16 %v361
    %v1623 = vunpack.c.l.b16 %v362
    %v1624 = vunpack.c.l.b16 %v363
    %v1625 = vunpack.c.l.b16 %v364
    %v1626 = vunpack.c.l.b16 %v365
    %v1627 = vunpack.c.l.b16 %v366
    %v1628 = vunpack.c.l.b16 %v367
    %v1629 = vunpack.c.l.b16 %v368
    %v1630 = vunpack.c.l.b16 %v369
    %v1631 = vunpack.c.l.b16 %v370
    %v1632 = vunpack.c.l.b16 %v371
    %v1633 = vunpack.c.l.b16 %v372
    %v1634 = vunpack.c.l.b16 %v373
    %v1635 = vunpack.c.l.b16 %v374
    %v1636 = vunpack.c.l.b16 %v375
    %v1637 = vunpack.c.l.b16 %v376
    %v1638 = vunpack.c.l.b16 %v377
    %v1639 = vunpack.c.l.b16 %v378
    %v1640 = vunpack.c.l.b16 %v379
    %v1641 = vunpack.c.l.b16 %v380
    %v1642 = vunpack.c.l.b16 %v381
    %v1643 = vunpack.c.l.b16 %v382
    %v1644 = vunpack.c.l.b16 %v383
    %v1645 = vunpack.c.l.b16 %v384
    %v1646 = vunpack.c.l.b16 %v385
    %v1647 = vunpack.c.l.b16 %v386
    %v1648 = vunpack.c.l.b16 %v387
    %v1649 = vunpack.c.l.b16 %v388
    %v1650 = vunpack.c.l.b16 %v389
    %v1651 = vunpack.c.l.b16 %v390
    %v1652 = vunpack.c.l.b16 %v391
    %v1653 = vunpack.c.l.b16 %v392
    %v1654 = vunpack.c.l.b16 %v393
    %v1655 = vunpack.c.l.b16 %v394
    %v1656 = vunpack.c.l.b16 %v395
    %v1657 = vunpack.c.l.b16 %v396
    %v1658 = vunpack.c.l.b16 %v397
    %v1659 = vunpack.c.l.b16 %v398
    %v1660 = vunpack.c.l.b16 %v399
    %v1661 = vunpack.c.l.b16 %v400
    %v1662 = vunpack.c.l.b16 %v401
    %v1663 = vunpack.c.l.b16 %v402
    %v1664 = vunpack.c.l.b16 %v403
    %v1665 = vunpack.c.l.b16 %v404
    %v1666 = vunpack.c.l.b16 %v405
    %v1667 = vunpack.c.l.b16 %v406
    %v1668 = vunpack.c.l.b16 %v407
    %v1669 = vunpack.c.l.b16 %v408
    %v1670 = vunpack.c.l.b16 %v409
    %v1671 = vunpack.c.l.b16 %v410
    %v1672 = vunpack.c.l.b16 %v411
    %v1673 = vunpack.c.l.b16 %v412
    %v1674 = vunpack.c.l.b16 %v413
    %v1675 = vunpack.c.l.b16 %v414
    %v1676 = vunpack.c.l.b16 %v415
    %v1677 = vunpack.c.l.b16 %v416
    %v1678 = vunpack.c.l.b16 %v417
    %v1679 = vunpack.c.l.b16 %v418
    %v1680 = vunpack.c.l.b16 %v419
    %v1681 = vunpack.c.l.b16 %v420
    %v1682 = vunpack.c.l.b16 %v421
    %v1683 = vunpack.c.l.b16 %v422
    %v1684 = vunpack.c.l.b16 %v423
    %v1685 = vunpack.c.l.b16 %v424
    %v1686 = vunpack.c.l.b16 %v425
    %v1687 = vunpack.c.l.b16 %v426
    %v1688 = vunpack.c.l.b16 %v427
    %v1689 = vunpack.c.l.b16 %v428
    %v1690 = vunpack.c.l.b16 %v429
    %v1691 = vunpack.c.l.b16 %v430
    %v1692 = vunpack.c.l.b16 %v431
    %v1693 = vunpack.c.l.b16 %v432
    %v1694 = vunpack.c.l.b16 %v433
    %v1695 = vunpack.c.l.b16 %v434
    %v1696 = vunpack.c.l.b16 %v435
    %v1697 = vunpack.c.l.b16 %v436
    %v1698 = vunpack.c.l.b16 %v437
    %v1699 = vunpack.c.l.b16 %v438
    %v1700 = vunpack.c.l.b16 %v439
    %v1701 = vunpack.c.l.b16 %v440
    %v1702 = vunpack.c.l.b16 %v441
    %v1703 = vunpack.c.l.b16 %v442
    %v1704 = vunpack.c.l.b16 %v443
    %v1705 = vunpack.c.l.b16 %v444
    %v1706 = vunpack.c.l.b16 %v445
    %v1707 = vunpack.c.l.b16 %v446
    %v1708 = vunpack.c.l.b16 %v447
    %v1709 = vunpack.c.l.b16 %v448
    %v1710 = vunpack.c.l.b16 %v449
    %v1711 = vunpack.c.l.b16 %v450
    %v1712 = vunpack.c.l.b16 %v451
    %v1713 = vunpack.c.l.b16 %v452
    %v1714 = vunpack.c.l.b16 %v453
    %v1715 = vunpack.c.l.b16 %v454
    %v1716 = vunpack.c.l.b16 %v455
    %v1717 = vunpack.c.l.b16 %v456
    %v1718 = vunpack.c.l.b16 %v457
    %v1719 = vunpack.c.l.b16 %v458
    %v1720 = vunpack.c.l.b16 %v459
    %v1721 = vunpack.c.l.b16 %v460
    %v1722 = vunpack.c.l.b16 %v461
    %v1723 = vunpack.c.l.b16 %v462
    %v1724 = vunpack.c.l.b16 %v463
    %v1725 = vunpack.c.l.b16 %v464
    %v1726 = vunpack.c.l.b16 %v465
    %v1727 = vunpack.c.l.b16 %v466
    %v1728 = vunpack.c.l.b16 %v467
    %v1729 = vunpack.c.l.b16 %v468
    %v1730 = vunpack.c.l.b16 %v469
    %v1731 = vunpack.c.l.b16 %v470
    %v1732 = vunpack.c.l.b16 %v471
    %v1733 = vunpack.c.l.b16 %v472
    %v1734 = vunpack.c.l.b16 %v473
    %v1735 = vunpack.c.l.b16 %v474
    %v1736 = vunpack.c.l.b16 %v475
    %v1737 = vunpack.c.l.b16 %v476
    %v1738 = vunpack.c.l.b16 %v477
    %v1739 = vunpack.c.l.b16 %v478
    %v1740 = vunpack.c.l.b16 %v479
    %v1741 = vunpack.c.l.b16 %v480
    %v1742 = vunpack.c.l.b16 %v481
    %v1743 = vunpack.c.l.b16 %v482
    %v1744 = vunpack.c.l.b16 %v483
    %v1745 = vunpack.c.l.b16 %v484
    %v1746 = vunpack.c.l.b16 %v485
    %v1747 = vunpack.c.l.b16 %v486
    %v1748 = vunpack.c.l.b16 %v487
    %v1749 = vunpack.c.l.b16 %v488
    %v1750 = vunpack.c.l.b16 %v489
    %v1751 = vunpack.c.l.b16 %v490
    %v1752 = vunpack.c.l.b16 %v491
    %v1753 = vunpack.c.l.b16 %v492
    %v1754 = vunpack.c.l.b16 %v493
    %v1755 = vunpack.c.l.b16 %v494
    %v1756 = vunpack.c.l.b16 %v495
    %v1757 = vunpack.c.l.b16 %v496
    %v1758 = vunpack.c.l.b16 %v497
    %v1759 = vunpack.c.l.b16 %v498
    %v1760 = vunpack.c.l.b16 %v499
    %v1761 = vunpack.c.l.b16 %v500
    %v1762 = vunpack.c.l.b16 %v501
    %v1763 = vunpack.c.l.b16 %v502
    %v1764 = vunpack.c.l.b16 %v503
    %v1765 = vunpack.c.l.b16 %v504
    %v1766 = vunpack.c.l.b16 %v505
    %v1767 = vunpack.c.l.b16 %v506
    %v1768 = vunpack.c.l.b16 %v507
    %v1769 = vunpack.c.l.b16 %v508
    %v1770 = vunpack.c.l.b16 %v509
    %v1771 = vunpack.c.l.b16 %v510
    %v1772 = vunpack.c.l.b16 %v511
    %v1773 = vunpack.c.l.b16 %v512
    %v1774 = vunpack.c.l.b16 %v513
    %v1775 = vunpack.c.l.b16 %v514
    %v1776 = vunpack.c.l.b16 %v515
    %v1777 = vunpack.c.l.b16 %v516
    %v1778 = vunpack.c.l.b16 %v517
    %v1779 = vunpack.c.l.b16 %v518
    %v1780 = vunpack.c.l.b16 %v519
    %v1781 = vunpack.c.l.b16 %v520
    %v1782 = vunpack.c.l.b16 %v521
    %v1783 = vunpack.c.l.b16 %v522
    %v1784 = vunpack.c.l.b16 %v523
    %v1785 = vunpack.c.l.b16 %v524
    %v1786 = vunpack.c.l.b16 %v525
    %v1787 = vunpack.c.l.b16 %v526
    %v1788 = vunpack.c.l.b16 %v527
    %v1789 = vunpack.c.l.b16 %v528
    %v1790 = vunpack.c.l.b16 %v529
    %v1791 = vunpack.c.l.b16 %v530
    %v1792 = vunpack.c.l.b16 %v531
    %v1793 = vunpack.c.l.b16 %v532
    %v1794 = vunpack.c.l.b16 %v533
    %v1795 = vunpack.c.l.b16 %v534
    %v1796 = vunpack.c.l.b16 %v535
    %v1797 = vpack.c.b16 %v1286, %v1285
    %v1798 = vpack.c.b16 %v1288, %v1287
    %v1799 = vpack.c.b16 %v1290, %v1289
    %v1800 = vpack.c.b16 %v1292, %v1291
    %v1801 = vpack.c.b16 %v1294, %v1293
    %v1802 = vpack.c.b16 %v1296, %v1295
    %v1803 = vpack.c.b16 %v1298, %v1297
    %v1804 = vpack.c.b16 %v1300, %v1299
    %v1805 = vpack.c.b16 %v1302, %v1301
    %v1806 = vpack.c.b16 %v1304, %v1303
    %v1807 = vpack.c.b16 %v1306, %v1305
    %v1808 = vpack.c.b16 %v1308, %v1307
    %v1809 = vpack.c.b16 %v1310, %v1309
    %v1810 = vpack.c.b16 %v1312, %v1311
    %v1811 = vpack.c.b16 %v1314, %v1313
    %v1812 = vpack.c.b16 %v1316, %v1315
    %v1813 = vpack.c.b16 %v1318, %v1317
    %v1814 = vpack.c.b16 %v1320, %v1319
    %v1815 = vpack.c.b16 %v1322, %v1321
    %v1816 = vpack.c.b16 %v1324, %v1323
    %v1817 = vpack.c.b16 %v1326, %v1325
    %v1818 = vpack.c.b16 %v1328, %v1327
    %v1819 = vpack.c.b16 %v1330, %v1329
    %v1820 = vpack.c.b16 %v1332, %v1331
    %v1821 = vpack.c.b16 %v1334, %v1333
    %v1822 = vpack.c.b16 %v1336, %v1335
    %v1823 = vpack.c.b16 %v1338, %v1337
    %v1824 = vpack.c.b16 %v1340, %v1339
    %v1825 = vpack.c.b16 %v1342, %v1341
    %v1826 = vpack.c.b16 %v1344, %v1343
    %v1827 = vpack.c.b16 %v1346, %v1345
    %v1828 = vpack.c.b16 %v1348, %v1347
    %v1829 = vpack.c.b16 %v1350, %v1349
    %v1830 = vpack.c.b16 %v1352, %v1351
    %v1831 = vpack.c.b16 %v1354, %v1353
    %v1832 = vpack.c.b16 %v1356, %v1355
    %v1833 = vpack.c.b16 %v1358, %v1357
    %v1834 = vpack.c.b16 %v1360, %v1359
    %v1835 = vpack.c.b16 %v1362, %v1361
    %v1836 = vpack.c.b16 %v1364, %v1363
    %v1837 = vpack.c.b16 %v1366, %v1365
    %v1838 = vpack.c.b16 %v1368, %v1367
    %v1839 = vpack.c.b16 %v1370, %v1369
    %v1840 = vpack.c.b16 %v1372, %v1371
    %v1841 = vpack.c.b16 %v1374, %v1373
    %v1842 = vpack.c.b16 %v1376, %v1375
    %v1843 = vpack.c.b16 %v1378, %v1377
    %v1844 = vpack.c.b16 %v1380, %v1379
    %v1845 = vpack.c.b16 %v1382, %v1381
    %v1846 = vpack.c.b16 %v1384, %v1383
    %v1847 = vpack.c.b16 %v1386, %v1385
    %v1848 = vpack.c.b16 %v1388, %v1387
    %v1849 = vpack.c.b16 %v1390, %v1389
    %v1850 = vpack.c.b16 %v1392, %v1391
    %v1851 = vpack.c.b16 %v1394, %v1393
    %v1852 = vpack.c.b16 %v1396, %v1395
    %v1853 = vpack.c.b16 %v1398, %v1397
    %v1854 = vpack.c.b16 %v1400, %v1399
    %v1855 = vpack.c.b16 %v1402, %v1401
    %v1856 = vpack.c.b16 %v1404, %v1403
    %v1857 = vpack.c.b16 %v1406, %v1405
    %v1858 = vpack.c.b16 %v1408, %v1407
    %v1859 = vpack.c.b16 %v1410, %v1409
    %v1860 = vpack.c.b16 %v1412, %v1411
    %v1861 = vpack.c.b16 %v1414, %v1413
    %v1862 = vpack.c.b16 %v1416, %v1415
    %v1863 = vpack.c.b16 %v1418, %v1417
    %v1864 = vpack.c.b16 %v1420, %v1419
    %v1865 = vpack.c.b16 %v1422, %v1421
    %v1866 = vpack.c.b16 %v1424, %v1423
    %v1867 = vpack.c.b16 %v1426, %v1425
    %v1868 = vpack.c.b16 %v1428, %v1427
    %v1869 = vpack.c.b16 %v1430, %v1429
    %v1870 = vpack.c.b16 %v1432, %v1431
    %v1871 = vpack.c.b16 %v1434, %v1433
    %v1872 = vpack.c.b16 %v1436, %v1435
    %v1873 = vpack.c.b16 %v1438, %v1437
    %v1874 = vpack.c.b16 %v1440, %v1439
    %v1875 = vpack.c.b16 %v1442, %v1441
    %v1876 = vpack.c.b16 %v1444, %v1443
    %v1877 = vpack.c.b16 %v1446, %v1445
    %v1878 = vpack.c.b16 %v1448, %v1447
    %v1879 = vpack.c.b16 %v1450, %v1449
    %v1880 = vpack.c.b16 %v1452, %v1451
    %v1881 = vpack.c.b16 %v1454, %v1453
    %v1882 = vpack.c.b16 %v1456, %v1455
    %v1883 = vpack.c.b16 %v1458, %v1457
    %v1884 = vpack.c.b16 %v1460, %v1459
    %v1885 = vpack.c.b16 %v1462, %v1461
    %v1886 = vpack.c.b16 %v1464, %v1463
    %v1887 = vpack.c.b16 %v1466, %v1465
    %v1888 = vpack.c.b16 %v1468, %v1467
    %v1889 = vpack.c.b16 %v1470, %v1469
    %v1890 = vpack.c.b16 %v1472, %v1471
    %v1891 = vpack.c.b16 %v1474, %v1473
    %v1892 = vpack.c.b16 %v1476, %v1475
    %v1893 = vpack.c.b16 %v1478, %v1477
    %v1894 = vpack.c.b16 %v1480, %v1479
    %v1895 = vpack.c.b16 %v1482, %v1481
    %v1896 = vpack.c.b16 %v1484, %v1483
    %v1897 = vpack.c.b16 %v1486, %v1485
    %v1898 = vpack.c.b16 %v1488, %v1487
    %v1899 = vpack.c.b16 %v1490, %v1489
    %v1900 = vpack.c.b16 %v1492, %v1491
    %v1901 = vpack.c.b16 %v1494, %v1493
    %v1902 = vpack.c.b16 %v1496, %v1495
    %v1903 = vpack.c.b16 %v1498, %v1497
    %v1904 = vpack.c.b16 %v1500, %v1499
    %v1905 = vpack.c.b16 %v1502, %v1501
    %v1906 = vpack.c.b16 %v1504, %v1503
    %v1907 = vpack.c.b16 %v1506, %v1505
    %v1908 = vpack.c.b16 %v1508, %v1507
    %v1909 = vpack.c.b16 %v1510, %v1509
    %v1910 = vpack.c.b16 %v1512, %v1511
    %v1911 = vpack.c.b16 %v1514, %v1513
    %v1912 = vpack.c.b16 %v1516, %v1515
    %v1913 = vpack.c.b16 %v1518, %v1517
    %v1914 = vpack.c.b16 %v1520, %v1519
    %v1915 = vpack.c.b16 %v1522, %v1521
    %v1916 = vpack.c.b16 %v1524, %v1523
    %v1917 = vpack.c.b16 %v1526, %v1525
    %v1918 = vpack.c.b16 %v1528, %v1527
    %v1919 = vpack.c.b16 %v1530, %v1529
    %v1920 = vpack.c.b16 %v1532, %v1531
    %v1921 = vpack.c.b16 %v1534, %v1533
    %v1922 = vpack.c.b16 %v1536, %v1535
    %v1923 = vpack.c.b16 %v1538, %v1537
    %v1924 = vpack.c.b16 %v1540, %v1539
    %v1925 = vpack.c.b16 %v1542, %v1541
    %v1926 = vpack.c.b16 %v1544, %v1543
    %v1927 = vpack.c.b16 %v1546, %v1545
    %v1928 = vpack.c.b16 %v1548, %v1547
    %v1929 = vpack.c.b16 %v1550, %v1549
    %v1930 = vpack.c.b16 %v1552, %v1551
    %v1931 = vpack.c.b16 %v1554, %v1553
    %v1932 = vpack.c.b16 %v1556, %v1555
    %v1933 = vpack.c.b16 %v1558, %v1557
    %v1934 = vpack.c.b16 %v1560, %v1559
    %v1935 = vpack.c.b16 %v1562, %v1561
    %v1936 = vpack.c.b16 %v1564, %v1563
    %v1937 = vpack.c.b16 %v1566, %v1565
    %v1938 = vpack.c.b16 %v1568, %v1567
    %v1939 = vpack.c.b16 %v1570, %v1569
    %v1940 = vpack.c.b16 %v1572, %v1571
    %v1941 = vpack.c.b16 %v1574, %v1573
    %v1942 = vpack.c.b16 %v1576, %v1575
    %v1943 = vpack.c.b16 %v1578, %v1577
    %v1944 = vpack.c.b16 %v1580, %v1579
    %v1945 = vpack.c.b16 %v1582, %v1581
    %v1946 = vpack.c.b16 %v1584, %v1583
    %v1947 = vpack.c.b16 %v1586, %v1585
    %v1948 = vpack.c.b16 %v1588, %v1587
    %v1949 = vpack.c.b16 %v1590, %v1589
    %v1950 = vpack.c.b16 %v1592, %v1591
    %v1951 = vpack.c.b16 %v1594, %v1593
    %v1952 = vpack.c.b16 %v1596, %v1595
    %v1953 = vpack.c.b16 %v1598, %v1597
    %v1954 = vpack.c.b16 %v1600, %v1599
    %v1955 = vpack.c.b16 %v1602, %v1601
    %v1956 = vpack.c.b16 %v1604, %v1603
    %v1957 = vpack.c.b16 %v1606, %v1605
    %v1958 = vpack.c.b16 %v1608, %v1607
    %v1959 = vpack.c.b16 %v1610, %v1609
    %v1960 = vpack.c.b16 %v1612, %v1611
    %v1961 = vpack.c.b16 %v1614, %v1613
    %v1962 = vpack.c.b16 %v1616, %v1615
    %v1963 = vpack.c.b16 %v1618, %v1617
    %v1964 = vpack.c.b16 %v1620, %v1619
    %v1965 = vpack.c.b16 %v1622, %v1621
    %v1966 = vpack.c.b16 %v1624, %v1623
    %v1967 = vpack.c.b16 %v1626, %v1625
    %v1968 = vpack.c.b16 %v1628, %v1627
    %v1969 = vpack.c.b16 %v1630, %v1629
    %v1970 = vpack.c.b16 %v1632, %v1631
    %v1971 = vpack.c.b16 %v1634, %v1633
    %v1972 = vpack.c.b16 %v1636, %v1635
    %v1973 = vpack.c.b16 %v1638, %v1637
    %v1974 = vpack.c.b16 %v1640, %v1639
    %v1975 = vpack.c.b16 %v1642, %v1641
    %v1976 = vpack.c.b16 %v1644, %v1643
    %v1977 = vpack.c.b16 %v1646, %v1645
    %v1978 = vpack.c.b16 %v1648, %v1647
    %v1979 = vpack.c.b16 %v1650, %v1649
    %v1980 = vpack.c.b16 %v1652, %v1651
    %v1981 = vpack.c.b16 %v1654, %v1653
    %v1982 = vpack.c.b16 %v1656, %v1655
    %v1983 = vpack.c.b16 %v1658, %v1657
    %v1984 = vpack.c.b16 %v1660, %v1659
    %v1985 = vpack.c.b16 %v1662, %v1661
    %v1986 = vpack.c.b16 %v1664, %v1663
    %v1987 = vpack.c.b16 %v1666, %v1665
    %v1988 = vpack.c.b16 %v1668, %v1667
    %v1989 = vpack.c.b16 %v1670, %v1669
    %v1990 = vpack.c.b16 %v1672, %v1671
    %v1991 = vpack.c.b16 %v1674, %v1673
    %v1992 = vpack.c.b16 %v1676, %v1675
    %v1993 = vpack.c.b16 %v1678, %v1677
    %v1994 = vpack.c.b16 %v1680, %v1679
    %v1995 = vpack.c.b16 %v1682, %v1681
    %v1996 = vpack.c.b16 %v1684, %v1683
    %v1997 = vpack.c.b16 %v1686, %v1685
    %v1998 = vpack.c.b16 %v1688, %v1687
    %v1999 = vpack.c.b16 %v1690, %v1689
    %v2000 = vpack.c.b16 %v1692, %v1691
    %v2001 = vpack.c.b16 %v1694, %v1693
    %v2002 = vpack.c.b16 %v1696, %v1695
    %v2003 = vpack.c.b16 %v1698, %v1697
    %v2004 = vpack.c.b16 %v1700, %v1699
    %v2005 = vpack.c.b16 %v1702, %v1701
    %v2006 = vpack.c.b16 %v1704, %v1703
    %v2007 = vpack.c.b16 %v1706, %v1705
    %v2008 = vpack.c.b16 %v1708, %v1707
    %v2009 = vpack.c.b16 %v1710, %v1709
    %v2010 = vpack.c.b16 %v1712, %v1711
    %v2011 = vpack.c.b16 %v1714, %v1713
    %v2012 = vpack.c.b16 %v1716, %v1715
    %v2013 = vpack.c.b16 %v1718, %v1717
    %v2014 = vpack.c.b16 %v1720, %v1719
    %v2015 = vpack.c.b16 %v1722, %v1721
    %v2016 = vpack.c.b16 %v1724, %v1723
    %v2017 = vpack.c.b16 %v1726, %v1725
    %v2018 = vpack.c.b16 %v1728, %v1727
    %v2019 = vpack.c.b16 %v1730, %v1729
    %v2020 = vpack.c.b16 %v1732, %v1731
    %v2021 = vpack.c.b16 %v1734, %v1733
    %v2022 = vpack.c.b16 %v1736, %v1735
    %v2023 = vpack.c.b16 %v1738, %v1737
    %v2024 = vpack.c.b16 %v1740, %v1739
    %v2025 = vpack.c.b16 %v1742, %v1741
    %v2026 = vpack.c.b16 %v1744, %v1743
    %v2027 = vpack.c.b16 %v1746, %v1745
    %v2028 = vpack.c.b16 %v1748, %v1747
    %v2029 = vpack.c.b16 %v1750, %v1749
    %v2030 = vpack.c.b16 %v1752, %v1751
    %v2031 = vpack.c.b16 %v1754, %v1753
    %v2032 = vpack.c.b16 %v1756, %v1755
    %v2033 = vpack.c.b16 %v1758, %v1757
    %v2034 = vpack.c.b16 %v1760, %v1759
    %v2035 = vpack.c.b16 %v1762, %v1761
    %v2036 = vpack.c.b16 %v1764, %v1763
    %v2037 = vpack.c.b16 %v1766, %v1765
    %v2038 = vpack.c.b16 %v1768, %v1767
    %v2039 = vpack.c.b16 %v1770, %v1769
    %v2040 = vpack.c.b16 %v1772, %v1771
    %v2041 = vpack.c.b16 %v1774, %v1773
    %v2042 = vpack.c.b16 %v1776, %v1775
    %v2043 = vpack.c.b16 %v1778, %v1777
    %v2044 = vpack.c.b16 %v1780, %v1779
    %v2045 = vpack.c.b16 %v1782, %v1781
    %v2046 = vpack.c.b16 %v1784, %v1783
    %v2047 = vpack.c.b16 %v1786, %v1785
    %v2048 = vpack.c.b16 %v1788, %v1787
    %v2049 = vpack.c.b16 %v1790, %v1789
    %v2050 = vpack.c.b16 %v1792, %v1791
    %v2051 = vpack.c.b16 %v1794, %v1793
    %v2052 = vpack.c.b16 %v1796, %v1795
    %2309 = vmatprep.subr.bf16.mxu0 0
    %2310 = vmatpush1.bf16.msra.mxu0 %v1797
    %2311 = vmatprep.subr.bf16.mxu0 0
    %2312 = vmatpush1.bf16.msra.mxu0 %v1798
    %2313 = vmatprep.subr.bf16.mxu0 0
    %2314 = vmatpush1.bf16.msra.mxu0 %v1799
    %2315 = vmatprep.subr.bf16.mxu0 0
    %2316 = vmatpush1.bf16.msra.mxu0 %v1800
    %2317 = vmatprep.subr.bf16.mxu0 0
    %2318 = vmatpush1.bf16.msra.mxu0 %v1801
    %2319 = vmatprep.subr.bf16.mxu0 0
    %2320 = vmatpush1.bf16.msra.mxu0 %v1802
    %2321 = vmatprep.subr.bf16.mxu0 0
    %2322 = vmatpush1.bf16.msra.mxu0 %v1803
    %2323 = vmatprep.subr.bf16.mxu0 0
    %2324 = vmatpush1.bf16.msra.mxu0 %v1804
    %2325 = vmatprep.subr.bf16.mxu0 0
    %2326 = vmatpush1.bf16.msra.mxu0 %v1805
    %2327 = vmatprep.subr.bf16.mxu0 0
    %2328 = vmatpush1.bf16.msra.mxu0 %v1806
    %2329 = vmatprep.subr.bf16.mxu0 0
    %2330 = vmatpush1.bf16.msra.mxu0 %v1807
    %2331 = vmatprep.subr.bf16.mxu0 0
    %2332 = vmatpush1.bf16.msra.mxu0 %v1808
    %2333 = vmatprep.subr.bf16.mxu0 0
    %2334 = vmatpush1.bf16.msra.mxu0 %v1809
    %2335 = vmatprep.subr.bf16.mxu0 0
    %2336 = vmatpush1.bf16.msra.mxu0 %v1810
    %2337 = vmatprep.subr.bf16.mxu0 0
    %2338 = vmatpush1.bf16.msra.mxu0 %v1811
    %2339 = vmatprep.subr.bf16.mxu0 0
    %2340 = vmatpush1.bf16.msra.mxu0 %v1812
    %2341 = vmatprep.mubr.bf16.mxu0 %v582
    %2342 = vmatmul.mubr.bf16.gmra.mrb[0].mxu0 %v568
    %v2343 = vpop.f32.mrb[0].mxu0
    %v2344 = vadd.f32 %v540, %v2343
    %v2345 = vpop.f32.mrb[0].mxu0
    %v2346 = vpop.f32.mrb[0].mxu0
    %v2347 = vpop.f32.mrb[0].mxu0
    %2348 = vdwg.mxu0
    %2349 = vmatprep.subr.bf16.mxu0 0
    %2350 = vmatpush1.bf16.msra.mxu0 %v1813
    %2351 = vmatprep.subr.bf16.mxu0 0
    %2352 = vmatpush1.bf16.msra.mxu0 %v1814
    %2353 = vmatprep.subr.bf16.mxu0 0
    %2354 = vmatpush1.bf16.msra.mxu0 %v1815
    %2355 = vmatprep.subr.bf16.mxu0 0
    %2356 = vmatpush1.bf16.msra.mxu0 %v1816
    %2357 = vmatprep.subr.bf16.mxu0 0
    %2358 = vmatpush1.bf16.msra.mxu0 %v1817
    %2359 = vmatprep.subr.bf16.mxu0 0
    %2360 = vmatpush1.bf16.msra.mxu0 %v1818
    %2361 = vmatprep.subr.bf16.mxu0 0
    %2362 = vmatpush1.bf16.msra.mxu0 %v1819
    %2363 = vmatprep.subr.bf16.mxu0 0
    %2364 = vmatpush1.bf16.msra.mxu0 %v1820
    %2365 = vmatprep.subr.bf16.mxu0 0
    %2366 = vmatpush1.bf16.msra.mxu0 %v1821
    %2367 = vmatprep.subr.bf16.mxu0 0
    %2368 = vmatpush1.bf16.msra.mxu0 %v1822
    %2369 = vmatprep.subr.bf16.mxu0 0
    %2370 = vmatpush1.bf16.msra.mxu0 %v1823
    %2371 = vmatprep.subr.bf16.mxu0 0
    %2372 = vmatpush1.bf16.msra.mxu0 %v1824
    %2373 = vmatprep.subr.bf16.mxu0 0
    %2374 = vmatpush1.bf16.msra.mxu0 %v1825
    %2375 = vmatprep.subr.bf16.mxu0 0
    %2376 = vmatpush1.bf16.msra.mxu0 %v1826
    %2377 = vmatprep.subr.bf16.mxu0 0
    %2378 = vmatpush1.bf16.msra.mxu0 %v1827
    %2379 = vmatprep.subr.bf16.mxu0 0
    %2380 = vmatpush1.bf16.msra.mxu0 %v1828
    %2381 = vmatprep.mubr.bf16.mxu0 %v592
    %2382 = vmatmul.mubr.bf16.gmra.mrb[0].mxu0 %v590
    %v2383 = vpop.f32.mrb[0].mxu0
    %v2384 = vadd.f32 %v2344, %v2383
    %v2385 = vpop.f32.mrb[0].mxu0
    %v2386 = vpop.f32.mrb[0].mxu0
    %v2387 = vpop.f32.mrb[0].mxu0
    %2388 = vdwg.mxu0
    %2389 = vmatprep.subr.bf16.mxu0 0
    %2390 = vmatpush1.bf16.msra.mxu0 %v1829
    %2391 = vmatprep.subr.bf16.mxu0 0
    %2392 = vmatpush1.bf16.msra.mxu0 %v1830
    %2393 = vmatprep.subr.bf16.mxu0 0
    %2394 = vmatpush1.bf16.msra.mxu0 %v1831
    %2395 = vmatprep.subr.bf16.mxu0 0
    %2396 = vmatpush1.bf16.msra.mxu0 %v1832
    %2397 = vmatprep.subr.bf16.mxu0 0
    %2398 = vmatpush1.bf16.msra.mxu0 %v1833
    %2399 = vmatprep.subr.bf16.mxu0 0
    %2400 = vmatpush1.bf16.msra.mxu0 %v1834
    %2401 = vmatprep.subr.bf16.mxu0 0
    %2402 = vmatpush1.bf16.msra.mxu0 %v1835
    %2403 = vmatprep.subr.bf16.mxu0 0
    %2404 = vmatpush1.bf16.msra.mxu0 %v1836
    %2405 = vmatprep.subr.bf16.mxu0 0
    %2406 = vmatpush1.bf16.msra.mxu0 %v1837
    %2407 = vmatprep.subr.bf16.mxu0 0
    %2408 = vmatpush1.bf16.msra.mxu0 %v1838
    %2409 = vmatprep.subr.bf16.mxu0 0
    %2410 = vmatpush1.bf16.msra.mxu0 %v1839
    %2411 = vmatprep.subr.bf16.mxu0 0
    %2412 = vmatpush1.bf16.msra.mxu0 %v1840
    %2413 = vmatprep.subr.bf16.mxu0 0
    %2414 = vmatpush1.bf16.msra.mxu0 %v1841
    %2415 = vmatprep.subr.bf16.mxu0 0
    %2416 = vmatpush1.bf16.msra.mxu0 %v1842
    %2417 = vmatprep.subr.bf16.mxu0 0
    %2418 = vmatpush1.bf16.msra.mxu0 %v1843
    %2419 = vmatprep.subr.bf16.mxu0 0
    %2420 = vmatpush1.bf16.msra.mxu0 %v1844
    %2421 = vmatprep.mubr.bf16.mxu0 %v589
    %2422 = vmatmul.mubr.bf16.gmra.mrb[0].mxu0 %v575
    %v2423 = vpop.f32.mrb[0].mxu0
    %v2424 = vadd.f32 %v2384, %v2423
    %v2425 = vpop.f32.mrb[0].mxu0
    %v2426 = vpop.f32.mrb[0].mxu0
    %v2427 = vpop.f32.mrb[0].mxu0
    %2428 = vdwg.mxu0
    %2429 = vmatprep.subr.bf16.mxu0 0
    %2430 = vmatpush1.bf16.msra.mxu0 %v1845
    %2431 = vmatprep.subr.bf16.mxu0 0
    %2432 = vmatpush1.bf16.msra.mxu0 %v1846
    %2433 = vmatprep.subr.bf16.mxu0 0
    %2434 = vmatpush1.bf16.msra.mxu0 %v1847
    %2435 = vmatprep.subr.bf16.mxu0 0
    %2436 = vmatpush1.bf16.msra.mxu0 %v1848
    %2437 = vmatprep.subr.bf16.mxu0 0
    %2438 = vmatpush1.bf16.msra.mxu0 %v1849
    %2439 = vmatprep.subr.bf16.mxu0 0
    %2440 = vmatpush1.bf16.msra.mxu0 %v1850
    %2441 = vmatprep.subr.bf16.mxu0 0
    %2442 = vmatpush1.bf16.msra.mxu0 %v1851
    %2443 = vmatprep.subr.bf16.mxu0 0
    %2444 = vmatpush1.bf16.msra.mxu0 %v1852
    %2445 = vmatprep.subr.bf16.mxu0 0
    %2446 = vmatpush1.bf16.msra.mxu0 %v1853
    %2447 = vmatprep.subr.bf16.mxu0 0
    %2448 = vmatpush1.bf16.msra.mxu0 %v1854
    %2449 = vmatprep.subr.bf16.mxu0 0
    %2450 = vmatpush1.bf16.msra.mxu0 %v1855
    %2451 = vmatprep.subr.bf16.mxu0 0
    %2452 = vmatpush1.bf16.msra.mxu0 %v1856
    %2453 = vmatprep.subr.bf16.mxu0 0
    %2454 = vmatpush1.bf16.msra.mxu0 %v1857
    %2455 = vmatprep.subr.bf16.mxu0 0
    %2456 = vmatpush1.bf16.msra.mxu0 %v1858
    %2457 = vmatprep.subr.bf16.mxu0 0
    %2458 = vmatpush1.bf16.msra.mxu0 %v1859
    %2459 = vmatprep.subr.bf16.mxu0 0
    %2460 = vmatpush1.bf16.msra.mxu0 %v1860
    %2461 = vmatprep.mubr.bf16.mxu0 %v593
    %2462 = vmatmul.mubr.bf16.gmra.mrb[0].mxu0 %v591
    %v2463 = vpop.f32.mrb[0].mxu0
    %v2464 = vadd.f32 %v2424, %v2463
    %v2465 = vpop.f32.mrb[0].mxu0
    %v2466 = vpop.f32.mrb[0].mxu0
    %v2467 = vpop.f32.mrb[0].mxu0
    %2468 = vdwg.mxu0
    %2469 = vmatprep.subr.bf16.mxu0 0
    %2470 = vmatpush1.bf16.msra.mxu0 %v1861
    %2471 = vmatprep.subr.bf16.mxu0 0
    %2472 = vmatpush1.bf16.msra.mxu0 %v1862
    %2473 = vmatprep.subr.bf16.mxu0 0
    %2474 = vmatpush1.bf16.msra.mxu0 %v1863
    %2475 = vmatprep.subr.bf16.mxu0 0
    %2476 = vmatpush1.bf16.msra.mxu0 %v1864
    %2477 = vmatprep.subr.bf16.mxu0 0
    %2478 = vmatpush1.bf16.msra.mxu0 %v1865
    %2479 = vmatprep.subr.bf16.mxu0 0
    %2480 = vmatpush1.bf16.msra.mxu0 %v1866
    %2481 = vmatprep.subr.bf16.mxu0 0
    %2482 = vmatpush1.bf16.msra.mxu0 %v1867
    %2483 = vmatprep.subr.bf16.mxu0 0
    %2484 = vmatpush1.bf16.msra.mxu0 %v1868
    %2485 = vmatprep.subr.bf16.mxu0 0
    %2486 = vmatpush1.bf16.msra.mxu0 %v1869
    %2487 = vmatprep.subr.bf16.mxu0 0
    %2488 = vmatpush1.bf16.msra.mxu0 %v1870
    %2489 = vmatprep.subr.bf16.mxu0 0
    %2490 = vmatpush1.bf16.msra.mxu0 %v1871
    %2491 = vmatprep.subr.bf16.mxu0 0
    %2492 = vmatpush1.bf16.msra.mxu0 %v1872
    %2493 = vmatprep.subr.bf16.mxu0 0
    %2494 = vmatpush1.bf16.msra.mxu0 %v1873
    %2495 = vmatprep.subr.bf16.mxu0 0
    %2496 = vmatpush1.bf16.msra.mxu0 %v1874
    %2497 = vmatprep.subr.bf16.mxu0 0
    %2498 = vmatpush1.bf16.msra.mxu0 %v1875
    %2499 = vmatprep.subr.bf16.mxu0 0
    %2500 = vmatpush1.bf16.msra.mxu0 %v1876
    %2501 = vmatprep.mubr.bf16.mxu0 %v631
    %2502 = vmatmul.mubr.bf16.gmra.mrb[0].mxu0 %v617
    %v2503 = vpop.f32.mrb[0].mxu0
    %v2504 = vadd.f32 %v2464, %v2503
    %v2505 = vpop.f32.mrb[0].mxu0
    %v2506 = vpop.f32.mrb[0].mxu0
    %v2507 = vpop.f32.mrb[0].mxu0
    %2508 = vdwg.mxu0
    %2509 = vmatprep.subr.bf16.mxu0 0
    %2510 = vmatpush1.bf16.msra.mxu0 %v1877
    %2511 = vmatprep.subr.bf16.mxu0 0
    %2512 = vmatpush1.bf16.msra.mxu0 %v1878
    %2513 = vmatprep.subr.bf16.mxu0 0
    %2514 = vmatpush1.bf16.msra.mxu0 %v1879
    %2515 = vmatprep.subr.bf16.mxu0 0
    %2516 = vmatpush1.bf16.msra.mxu0 %v1880
    %2517 = vmatprep.subr.bf16.mxu0 0
    %2518 = vmatpush1.bf16.msra.mxu0 %v1881
    %2519 = vmatprep.subr.bf16.mxu0 0
    %2520 = vmatpush1.bf16.msra.mxu0 %v1882
    %2521 = vmatprep.subr.bf16.mxu0 0
    %2522 = vmatpush1.bf16.msra.mxu0 %v1883
    %2523 = vmatprep.subr.bf16.mxu0 0
    %2524 = vmatpush1.bf16.msra.mxu0 %v1884
    %2525 = vmatprep.subr.bf16.mxu0 0
    %2526 = vmatpush1.bf16.msra.mxu0 %v1885
    %2527 = vmatprep.subr.bf16.mxu0 0
    %2528 = vmatpush1.bf16.msra.mxu0 %v1886
    %2529 = vmatprep.subr.bf16.mxu0 0
    %2530 = vmatpush1.bf16.msra.mxu0 %v1887
    %2531 = vmatprep.subr.bf16.mxu0 0
    %2532 = vmatpush1.bf16.msra.mxu0 %v1888
    %2533 = vmatprep.subr.bf16.mxu0 0
    %2534 = vmatpush1.bf16.msra.mxu0 %v1889
    %2535 = vmatprep.subr.bf16.mxu0 0
    %2536 = vmatpush1.bf16.msra.mxu0 %v1890
    %2537 = vmatprep.subr.bf16.mxu0 0
    %2538 = vmatpush1.bf16.msra.mxu0 %v1891
    %2539 = vmatprep.subr.bf16.mxu0 0
    %2540 = vmatpush1.bf16.msra.mxu0 %v1892
    %2541 = vmatprep.mubr.bf16.mxu0 %v641
    %2542 = vmatmul.mubr.bf16.gmra.mrb[0].mxu0 %v639
    %v2543 = vpop.f32.mrb[0].mxu0
    %v2544 = vadd.f32 %v2504, %v2543
    %v2545 = vpop.f32.mrb[0].mxu0
    %v2546 = vpop.f32.mrb[0].mxu0
    %v2547 = vpop.f32.mrb[0].mxu0
    %2548 = vdwg.mxu0
    %2549 = vmatprep.subr.bf16.mxu0 0
    %2550 = vmatpush1.bf16.msra.mxu0 %v1893
    %2551 = vmatprep.subr.bf16.mxu0 0
    %2552 = vmatpush1.bf16.msra.mxu0 %v1894
    %2553 = vmatprep.subr.bf16.mxu0 0
    %2554 = vmatpush1.bf16.msra.mxu0 %v1895
    %2555 = vmatprep.subr.bf16.mxu0 0
    %2556 = vmatpush1.bf16.msra.mxu0 %v1896
    %2557 = vmatprep.subr.bf16.mxu0 0
    %2558 = vmatpush1.bf16.msra.mxu0 %v1897
    %2559 = vmatprep.subr.bf16.mxu0 0
    %2560 = vmatpush1.bf16.msra.mxu0 %v1898
    %2561 = vmatprep.subr.bf16.mxu0 0
    %2562 = vmatpush1.bf16.msra.mxu0 %v1899
    %2563 = vmatprep.subr.bf16.mxu0 0
    %2564 = vmatpush1.bf16.msra.mxu0 %v1900
    %2565 = vmatprep.subr.bf16.mxu0 0
    %2566 = vmatpush1.bf16.msra.mxu0 %v1901
    %2567 = vmatprep.subr.bf16.mxu0 0
    %2568 = vmatpush1.bf16.msra.mxu0 %v1902
    %2569 = vmatprep.subr.bf16.mxu0 0
    %2570 = vmatpush1.bf16.msra.mxu0 %v1903
    %2571 = vmatprep.subr.bf16.mxu0 0
    %2572 = vmatpush1.bf16.msra.mxu0 %v1904
    %2573 = vmatprep.subr.bf16.mxu0 0
    %2574 = vmatpush1.bf16.msra.mxu0 %v1905
    %2575 = vmatprep.subr.bf16.mxu0 0
    %2576 = vmatpush1.bf16.msra.mxu0 %v1906
    %2577 = vmatprep.subr.bf16.mxu0 0
    %2578 = vmatpush1.bf16.msra.mxu0 %v1907
    %2579 = vmatprep.subr.bf16.mxu0 0
    %2580 = vmatpush1.bf16.msra.mxu0 %v1908
    %2581 = vmatprep.mubr.bf16.mxu0 %v638
    %2582 = vmatmul.mubr.bf16.gmra.mrb[0].mxu0 %v624
    %v2583 = vpop.f32.mrb[0].mxu0
    %v2584 = vadd.f32 %v2544, %v2583
    %v2585 = vpop.f32.mrb[0].mxu0
    %v2586 = vpop.f32.mrb[0].mxu0
    %v2587 = vpop.f32.mrb[0].mxu0
    %2588 = vdwg.mxu0
    %2589 = vmatprep.subr.bf16.mxu0 0
    %2590 = vmatpush1.bf16.msra.mxu0 %v1909
    %2591 = vmatprep.subr.bf16.mxu0 0
    %2592 = vmatpush1.bf16.msra.mxu0 %v1910
    %2593 = vmatprep.subr.bf16.mxu0 0
    %2594 = vmatpush1.bf16.msra.mxu0 %v1911
    %2595 = vmatprep.subr.bf16.mxu0 0
    %2596 = vmatpush1.bf16.msra.mxu0 %v1912
    %2597 = vmatprep.subr.bf16.mxu0 0
    %2598 = vmatpush1.bf16.msra.mxu0 %v1913
    %2599 = vmatprep.subr.bf16.mxu0 0
    %2600 = vmatpush1.bf16.msra.mxu0 %v1914
    %2601 = vmatprep.subr.bf16.mxu0 0
    %2602 = vmatpush1.bf16.msra.mxu0 %v1915
    %2603 = vmatprep.subr.bf16.mxu0 0
    %2604 = vmatpush1.bf16.msra.mxu0 %v1916
    %2605 = vmatprep.subr.bf16.mxu0 0
    %2606 = vmatpush1.bf16.msra.mxu0 %v1917
    %2607 = vmatprep.subr.bf16.mxu0 0
    %2608 = vmatpush1.bf16.msra.mxu0 %v1918
    %2609 = vmatprep.subr.bf16.mxu0 0
    %2610 = vmatpush1.bf16.msra.mxu0 %v1919
    %2611 = vmatprep.subr.bf16.mxu0 0
    %2612 = vmatpush1.bf16.msra.mxu0 %v1920
    %2613 = vmatprep.subr.bf16.mxu0 0
    %2614 = vmatpush1.bf16.msra.mxu0 %v1921
    %2615 = vmatprep.subr.bf16.mxu0 0
    %2616 = vmatpush1.bf16.msra.mxu0 %v1922
    %2617 = vmatprep.subr.bf16.mxu0 0
    %2618 = vmatpush1.bf16.msra.mxu0 %v1923
    %2619 = vmatprep.subr.bf16.mxu0 0
    %2620 = vmatpush1.bf16.msra.mxu0 %v1924
    %2621 = vmatprep.mubr.bf16.mxu0 %v642
    %2622 = vmatmul.mubr.bf16.gmra.mrb[0].mxu0 %v640
    %v2623 = vpop.f32.mrb[0].mxu0
    %v2624 = vadd.f32 %v2584, %v2623
    %v2625 = vpop.f32.mrb[0].mxu0
    %v2626 = vpop.f32.mrb[0].mxu0
    %v2627 = vpop.f32.mrb[0].mxu0
    %2628 = vdwg.mxu0
    %2629 = vmatprep.subr.bf16.mxu0 0
    %2630 = vmatpush1.bf16.msra.mxu0 %v1925
    %2631 = vmatprep.subr.bf16.mxu0 0
    %2632 = vmatpush1.bf16.msra.mxu0 %v1926
    %2633 = vmatprep.subr.bf16.mxu0 0
    %2634 = vmatpush1.bf16.msra.mxu0 %v1927
    %2635 = vmatprep.subr.bf16.mxu0 0
    %2636 = vmatpush1.bf16.msra.mxu0 %v1928
    %2637 = vmatprep.subr.bf16.mxu0 0
    %2638 = vmatpush1.bf16.msra.mxu0 %v1929
    %2639 = vmatprep.subr.bf16.mxu0 0
    %2640 = vmatpush1.bf16.msra.mxu0 %v1930
    %2641 = vmatprep.subr.bf16.mxu0 0
    %2642 = vmatpush1.bf16.msra.mxu0 %v1931
    %2643 = vmatprep.subr.bf16.mxu0 0
    %2644 = vmatpush1.bf16.msra.mxu0 %v1932
    %2645 = vmatprep.subr.bf16.mxu0 0
    %2646 = vmatpush1.bf16.msra.mxu0 %v1933
    %2647 = vmatprep.subr.bf16.mxu0 0
    %2648 = vmatpush1.bf16.msra.mxu0 %v1934
    %2649 = vmatprep.subr.bf16.mxu0 0
    %2650 = vmatpush1.bf16.msra.mxu0 %v1935
    %2651 = vmatprep.subr.bf16.mxu0 0
    %2652 = vmatpush1.bf16.msra.mxu0 %v1936
    %2653 = vmatprep.subr.bf16.mxu0 0
    %2654 = vmatpush1.bf16.msra.mxu0 %v1937
    %2655 = vmatprep.subr.bf16.mxu0 0
    %2656 = vmatpush1.bf16.msra.mxu0 %v1938
    %2657 = vmatprep.subr.bf16.mxu0 0
    %2658 = vmatpush1.bf16.msra.mxu0 %v1939
    %2659 = vmatprep.subr.bf16.mxu0 0
    %2660 = vmatpush1.bf16.msra.mxu0 %v1940
    %2661 = vmatprep.mubr.bf16.mxu0 %v680
    %2662 = vmatmul.mubr.bf16.gmra.mrb[0].mxu0 %v666
    %v2663 = vpop.f32.mrb[0].mxu0
    %v2664 = vadd.f32 %v2624, %v2663
    %v2665 = vpop.f32.mrb[0].mxu0
    %v2666 = vpop.f32.mrb[0].mxu0
    %v2667 = vpop.f32.mrb[0].mxu0
    %2668 = vdwg.mxu0
    %2669 = vmatprep.subr.bf16.mxu0 0
    %2670 = vmatpush1.bf16.msra.mxu0 %v1941
    %2671 = vmatprep.subr.bf16.mxu0 0
    %2672 = vmatpush1.bf16.msra.mxu0 %v1942
    %2673 = vmatprep.subr.bf16.mxu0 0
    %2674 = vmatpush1.bf16.msra.mxu0 %v1943
    %2675 = vmatprep.subr.bf16.mxu0 0
    %2676 = vmatpush1.bf16.msra.mxu0 %v1944
    %2677 = vmatprep.subr.bf16.mxu0 0
    %2678 = vmatpush1.bf16.msra.mxu0 %v1945
    %2679 = vmatprep.subr.bf16.mxu0 0
    %2680 = vmatpush1.bf16.msra.mxu0 %v1946
    %2681 = vmatprep.subr.bf16.mxu0 0
    %2682 = vmatpush1.bf16.msra.mxu0 %v1947
    %2683 = vmatprep.subr.bf16.mxu0 0
    %2684 = vmatpush1.bf16.msra.mxu0 %v1948
    %2685 = vmatprep.subr.bf16.mxu0 0
    %2686 = vmatpush1.bf16.msra.mxu0 %v1949
    %2687 = vmatprep.subr.bf16.mxu0 0
    %2688 = vmatpush1.bf16.msra.mxu0 %v1950
    %2689 = vmatprep.subr.bf16.mxu0 0
    %2690 = vmatpush1.bf16.msra.mxu0 %v1951
    %2691 = vmatprep.subr.bf16.mxu0 0
    %2692 = vmatpush1.bf16.msra.mxu0 %v1952
    %2693 = vmatprep.subr.bf16.mxu0 0
    %2694 = vmatpush1.bf16.msra.mxu0 %v1953
    %2695 = vmatprep.subr.bf16.mxu0 0
    %2696 = vmatpush1.bf16.msra.mxu0 %v1954
    %2697 = vmatprep.subr.bf16.mxu0 0
    %2698 = vmatpush1.bf16.msra.mxu0 %v1955
    %2699 = vmatprep.subr.bf16.mxu0 0
    %2700 = vmatpush1.bf16.msra.mxu0 %v1956
    %2701 = vmatprep.mubr.bf16.mxu0 %v690
    %2702 = vmatmul.mubr.bf16.gmra.mrb[0].mxu0 %v688
    %v2703 = vpop.f32.mrb[0].mxu0
    %v2704 = vadd.f32 %v2664, %v2703
    %v2705 = vpop.f32.mrb[0].mxu0
    %v2706 = vpop.f32.mrb[0].mxu0
    %v2707 = vpop.f32.mrb[0].mxu0
    %2708 = vdwg.mxu0
    %2709 = vmatprep.subr.bf16.mxu0 0
    %2710 = vmatpush1.bf16.msra.mxu0 %v1957
    %2711 = vmatprep.subr.bf16.mxu0 0
    %2712 = vmatpush1.bf16.msra.mxu0 %v1958
    %2713 = vmatprep.subr.bf16.mxu0 0
    %2714 = vmatpush1.bf16.msra.mxu0 %v1959
    %2715 = vmatprep.subr.bf16.mxu0 0
    %2716 = vmatpush1.bf16.msra.mxu0 %v1960
    %2717 = vmatprep.subr.bf16.mxu0 0
    %2718 = vmatpush1.bf16.msra.mxu0 %v1961
    %2719 = vmatprep.subr.bf16.mxu0 0
    %2720 = vmatpush1.bf16.msra.mxu0 %v1962
    %2721 = vmatprep.subr.bf16.mxu0 0
    %2722 = vmatpush1.bf16.msra.mxu0 %v1963
    %2723 = vmatprep.subr.bf16.mxu0 0
    %2724 = vmatpush1.bf16.msra.mxu0 %v1964
    %2725 = vmatprep.subr.bf16.mxu0 0
    %2726 = vmatpush1.bf16.msra.mxu0 %v1965
    %2727 = vmatprep.subr.bf16.mxu0 0
    %2728 = vmatpush1.bf16.msra.mxu0 %v1966
    %2729 = vmatprep.subr.bf16.mxu0 0
    %2730 = vmatpush1.bf16.msra.mxu0 %v1967
    %2731 = vmatprep.subr.bf16.mxu0 0
    %2732 = vmatpush1.bf16.msra.mxu0 %v1968
    %2733 = vmatprep.subr.bf16.mxu0 0
    %2734 = vmatpush1.bf16.msra.mxu0 %v1969
    %2735 = vmatprep.subr.bf16.mxu0 0
    %2736 = vmatpush1.bf16.msra.mxu0 %v1970
    %2737 = vmatprep.subr.bf16.mxu0 0
    %2738 = vmatpush1.bf16.msra.mxu0 %v1971
    %2739 = vmatprep.subr.bf16.mxu0 0
    %2740 = vmatpush1.bf16.msra.mxu0 %v1972
    %2741 = vmatprep.mubr.bf16.mxu0 %v687
    %2742 = vmatmul.mubr.bf16.gmra.mrb[0].mxu0 %v673
    %v2743 = vpop.f32.mrb[0].mxu0
    %v2744 = vadd.f32 %v2704, %v2743
    %v2745 = vpop.f32.mrb[0].mxu0
    %v2746 = vpop.f32.mrb[0].mxu0
    %v2747 = vpop.f32.mrb[0].mxu0
    %2748 = vdwg.mxu0
    %2749 = vmatprep.subr.bf16.mxu0 0
    %2750 = vmatpush1.bf16.msra.mxu0 %v1973
    %2751 = vmatprep.subr.bf16.mxu0 0
    %2752 = vmatpush1.bf16.msra.mxu0 %v1974
    %2753 = vmatprep.subr.bf16.mxu0 0
    %2754 = vmatpush1.bf16.msra.mxu0 %v1975
    %2755 = vmatprep.subr.bf16.mxu0 0
    %2756 = vmatpush1.bf16.msra.mxu0 %v1976
    %2757 = vmatprep.subr.bf16.mxu0 0
    %2758 = vmatpush1.bf16.msra.mxu0 %v1977
    %2759 = vmatprep.subr.bf16.mxu0 0
    %2760 = vmatpush1.bf16.msra.mxu0 %v1978
    %2761 = vmatprep.subr.bf16.mxu0 0
    %2762 = vmatpush1.bf16.msra.mxu0 %v1979
    %2763 = vmatprep.subr.bf16.mxu0 0
    %2764 = vmatpush1.bf16.msra.mxu0 %v1980
    %2765 = vmatprep.subr.bf16.mxu0 0
    %2766 = vmatpush1.bf16.msra.mxu0 %v1981
    %2767 = vmatprep.subr.bf16.mxu0 0
    %2768 = vmatpush1.bf16.msra.mxu0 %v1982
    %2769 = vmatprep.subr.bf16.mxu0 0
    %2770 = vmatpush1.bf16.msra.mxu0 %v1983
    %2771 = vmatprep.subr.bf16.mxu0 0
    %2772 = vmatpush1.bf16.msra.mxu0 %v1984
    %2773 = vmatprep.subr.bf16.mxu0 0
    %2774 = vmatpush1.bf16.msra.mxu0 %v1985
    %2775 = vmatprep.subr.bf16.mxu0 0
    %2776 = vmatpush1.bf16.msra.mxu0 %v1986
    %2777 = vmatprep.subr.bf16.mxu0 0
    %2778 = vmatpush1.bf16.msra.mxu0 %v1987
    %2779 = vmatprep.subr.bf16.mxu0 0
    %2780 = vmatpush1.bf16.msra.mxu0 %v1988
    %2781 = vmatprep.mubr.bf16.mxu0 %v691
    %2782 = vmatmul.mubr.bf16.gmra.mrb[0].mxu0 %v689
    %v2783 = vpop.f32.mrb[0].mxu0
    %v2784 = vadd.f32 %v2744, %v2783
    %v2785 = vpop.f32.mrb[0].mxu0
    %v2786 = vpop.f32.mrb[0].mxu0
    %v2787 = vpop.f32.mrb[0].mxu0
    %2788 = vdwg.mxu0
    %2789 = vmatprep.subr.bf16.mxu0 0
    %2790 = vmatpush1.bf16.msra.mxu0 %v1989
    %2791 = vmatprep.subr.bf16.mxu0 0
    %2792 = vmatpush1.bf16.msra.mxu0 %v1990
    %2793 = vmatprep.subr.bf16.mxu0 0
    %2794 = vmatpush1.bf16.msra.mxu0 %v1991
    %2795 = vmatprep.subr.bf16.mxu0 0
    %2796 = vmatpush1.bf16.msra.mxu0 %v1992
    %2797 = vmatprep.subr.bf16.mxu0 0
    %2798 = vmatpush1.bf16.msra.mxu0 %v1993
    %2799 = vmatprep.subr.bf16.mxu0 0
    %2800 = vmatpush1.bf16.msra.mxu0 %v1994
    %2801 = vmatprep.subr.bf16.mxu0 0
    %2802 = vmatpush1.bf16.msra.mxu0 %v1995
    %2803 = vmatprep.subr.bf16.mxu0 0
    %2804 = vmatpush1.bf16.msra.mxu0 %v1996
    %2805 = vmatprep.subr.bf16.mxu0 0
    %2806 = vmatpush1.bf16.msra.mxu0 %v1997
    %2807 = vmatprep.subr.bf16.mxu0 0
    %2808 = vmatpush1.bf16.msra.mxu0 %v1998
    %2809 = vmatprep.subr.bf16.mxu0 0
    %2810 = vmatpush1.bf16.msra.mxu0 %v1999
    %2811 = vmatprep.subr.bf16.mxu0 0
    %2812 = vmatpush1.bf16.msra.mxu0 %v2000
    %2813 = vmatprep.subr.bf16.mxu0 0
    %2814 = vmatpush1.bf16.msra.mxu0 %v2001
    %2815 = vmatprep.subr.bf16.mxu0 0
    %2816 = vmatpush1.bf16.msra.mxu0 %v2002
    %2817 = vmatprep.subr.bf16.mxu0 0
    %2818 = vmatpush1.bf16.msra.mxu0 %v2003
    %2819 = vmatprep.subr.bf16.mxu0 0
    %2820 = vmatpush1.bf16.msra.mxu0 %v2004
    %2821 = vmatprep.mubr.bf16.mxu0 %v729
    %2822 = vmatmul.mubr.bf16.gmra.mrb[0].mxu0 %v715
    %v2823 = vpop.f32.mrb[0].mxu0
    %v2824 = vadd.f32 %v2784, %v2823
    %v2825 = vpop.f32.mrb[0].mxu0
    %v2826 = vpop.f32.mrb[0].mxu0
    %v2827 = vpop.f32.mrb[0].mxu0
    %2828 = vdwg.mxu0
    %2829 = vmatprep.subr.bf16.mxu0 0
    %2830 = vmatpush1.bf16.msra.mxu0 %v2005
    %2831 = vmatprep.subr.bf16.mxu0 0
    %2832 = vmatpush1.bf16.msra.mxu0 %v2006
    %2833 = vmatprep.subr.bf16.mxu0 0
    %2834 = vmatpush1.bf16.msra.mxu0 %v2007
    %2835 = vmatprep.subr.bf16.mxu0 0
    %2836 = vmatpush1.bf16.msra.mxu0 %v2008
    %2837 = vmatprep.subr.bf16.mxu0 0
    %2838 = vmatpush1.bf16.msra.mxu0 %v2009
    %2839 = vmatprep.subr.bf16.mxu0 0
    %2840 = vmatpush1.bf16.msra.mxu0 %v2010
    %2841 = vmatprep.subr.bf16.mxu0 0
    %2842 = vmatpush1.bf16.msra.mxu0 %v2011
    %2843 = vmatprep.subr.bf16.mxu0 0
    %2844 = vmatpush1.bf16.msra.mxu0 %v2012
    %2845 = vmatprep.subr.bf16.mxu0 0
    %2846 = vmatpush1.bf16.msra.mxu0 %v2013
    %2847 = vmatprep.subr.bf16.mxu0 0
    %2848 = vmatpush1.bf16.msra.mxu0 %v2014
    %2849 = vmatprep.subr.bf16.mxu0 0
    %2850 = vmatpush1.bf16.msra.mxu0 %v2015
    %2851 = vmatprep.subr.bf16.mxu0 0
    %2852 = vmatpush1.bf16.msra.mxu0 %v2016
    %2853 = vmatprep.subr.bf16.mxu0 0
    %2854 = vmatpush1.bf16.msra.mxu0 %v2017
    %2855 = vmatprep.subr.bf16.mxu0 0
    %2856 = vmatpush1.bf16.msra.mxu0 %v2018
    %2857 = vmatprep.subr.bf16.mxu0 0
    %2858 = vmatpush1.bf16.msra.mxu0 %v2019
    %2859 = vmatprep.subr.bf16.mxu0 0
    %2860 = vmatpush1.bf16.msra.mxu0 %v2020
    %2861 = vmatprep.mubr.bf16.mxu0 %v739
    %2862 = vmatmul.mubr.bf16.gmra.mrb[0].mxu0 %v737
    %v2863 = vpop.f32.mrb[0].mxu0
    %v2864 = vadd.f32 %v2824, %v2863
    %v2865 = vpop.f32.mrb[0].mxu0
    %v2866 = vpop.f32.mrb[0].mxu0
    %v2867 = vpop.f32.mrb[0].mxu0
    %2868 = vdwg.mxu0
    %2869 = vmatprep.subr.bf16.mxu0 0
    %2870 = vmatpush1.bf16.msra.mxu0 %v2021
    %2871 = vmatprep.subr.bf16.mxu0 0
    %2872 = vmatpush1.bf16.msra.mxu0 %v2022
    %2873 = vmatprep.subr.bf16.mxu0 0
    %2874 = vmatpush1.bf16.msra.mxu0 %v2023
    %2875 = vmatprep.subr.bf16.mxu0 0
    %2876 = vmatpush1.bf16.msra.mxu0 %v2024
    %2877 = vmatprep.subr.bf16.mxu0 0
    %2878 = vmatpush1.bf16.msra.mxu0 %v2025
    %2879 = vmatprep.subr.bf16.mxu0 0
    %2880 = vmatpush1.bf16.msra.mxu0 %v2026
    %2881 = vmatprep.subr.bf16.mxu0 0
    %2882 = vmatpush1.bf16.msra.mxu0 %v2027
    %2883 = vmatprep.subr.bf16.mxu0 0
    %2884 = vmatpush1.bf16.msra.mxu0 %v2028
    %2885 = vmatprep.subr.bf16.mxu0 0
    %2886 = vmatpush1.bf16.msra.mxu0 %v2029
    %2887 = vmatprep.subr.bf16.mxu0 0
    %2888 = vmatpush1.bf16.msra.mxu0 %v2030
    %2889 = vmatprep.subr.bf16.mxu0 0
    %2890 = vmatpush1.bf16.msra.mxu0 %v2031
    %2891 = vmatprep.subr.bf16.mxu0 0
    %2892 = vmatpush1.bf16.msra.mxu0 %v2032
    %2893 = vmatprep.subr.bf16.mxu0 0
    %2894 = vmatpush1.bf16.msra.mxu0 %v2033
    %2895 = vmatprep.subr.bf16.mxu0 0
    %2896 = vmatpush1.bf16.msra.mxu0 %v2034
    %2897 = vmatprep.subr.bf16.mxu0 0
    %2898 = vmatpush1.bf16.msra.mxu0 %v2035
    %2899 = vmatprep.subr.bf16.mxu0 0
    %2900 = vmatpush1.bf16.msra.mxu0 %v2036
    %2901 = vmatprep.mubr.bf16.mxu0 %v736
    %2902 = vmatmul.mubr.bf16.gmra.mrb[0].mxu0 %v722
    %v2903 = vpop.f32.mrb[0].mxu0
    %v2904 = vadd.f32 %v2864, %v2903
    %v2905 = vpop.f32.mrb[0].mxu0
    %v2906 = vpop.f32.mrb[0].mxu0
    %v2907 = vpop.f32.mrb[0].mxu0
    %2908 = vdwg.mxu0
    %2909 = vmatprep.subr.bf16.mxu0 0
    %2910 = vmatpush1.bf16.msra.mxu0 %v2037
    %2911 = vmatprep.subr.bf16.mxu0 0
    %2912 = vmatpush1.bf16.msra.mxu0 %v2038
    %2913 = vmatprep.subr.bf16.mxu0 0
    %2914 = vmatpush1.bf16.msra.mxu0 %v2039
    %2915 = vmatprep.subr.bf16.mxu0 0
    %2916 = vmatpush1.bf16.msra.mxu0 %v2040
    %2917 = vmatprep.subr.bf16.mxu0 0
    %2918 = vmatpush1.bf16.msra.mxu0 %v2041
    %2919 = vmatprep.subr.bf16.mxu0 0
    %2920 = vmatpush1.bf16.msra.mxu0 %v2042
    %2921 = vmatprep.subr.bf16.mxu0 0
    %2922 = vmatpush1.bf16.msra.mxu0 %v2043
    %2923 = vmatprep.subr.bf16.mxu0 0
    %2924 = vmatpush1.bf16.msra.mxu0 %v2044
    %2925 = vmatprep.subr.bf16.mxu0 0
    %2926 = vmatpush1.bf16.msra.mxu0 %v2045
    %2927 = vmatprep.subr.bf16.mxu0 0
    %2928 = vmatpush1.bf16.msra.mxu0 %v2046
    %2929 = vmatprep.subr.bf16.mxu0 0
    %2930 = vmatpush1.bf16.msra.mxu0 %v2047
    %2931 = vmatprep.subr.bf16.mxu0 0
    %2932 = vmatpush1.bf16.msra.mxu0 %v2048
    %2933 = vmatprep.subr.bf16.mxu0 0
    %2934 = vmatpush1.bf16.msra.mxu0 %v2049
    %2935 = vmatprep.subr.bf16.mxu0 0
    %2936 = vmatpush1.bf16.msra.mxu0 %v2050
    %2937 = vmatprep.subr.bf16.mxu0 0
    %2938 = vmatpush1.bf16.msra.mxu0 %v2051
    %2939 = vmatprep.subr.bf16.mxu0 0
    %2940 = vmatpush1.bf16.msra.mxu0 %v2052
    %2941 = vmatprep.mubr.bf16.mxu0 %v740
    %2942 = vmatmul.mubr.bf16.gmra.mrb[0].mxu0 %v738
    %v2943 = vpop.f32.mrb[0].mxu0
    %v2944 = vadd.f32 %v2904, %v2943
    %v2945 = vpop.f32.mrb[0].mxu0
    %v2946 = vpop.f32.mrb[0].mxu0
    %v2947 = vpop.f32.mrb[0].mxu0
    %2948 = vdwg.mxu0
    %v2949 = vld [vmem:[%s1 + $0x800] sm:$0xf]
    %v2950 = vld [vmem:[%s1 + $0x804] sm:$0xf]
    %v2951 = vld [vmem:[%s1 + $0x808] sm:$0xf]
    %v2952 = vld [vmem:[%s1 + $0x80c] sm:$0xf]
    %v2953 = vld [vmem:[%s1 + $0x810] sm:$0xf]
    %v2954 = vld [vmem:[%s1 + $0x814] sm:$0xf]
    %v2955 = vld [vmem:[%s1 + $0x818] sm:$0xf]
    %v2956 = vld [vmem:[%s1 + $0x81c] sm:$0xf]
    %v2957 = vld [vmem:[%s1 + $0x820] sm:$0xf]
    %v2958 = vld [vmem:[%s1 + $0x824] sm:$0xf]
    %v2959 = vld [vmem:[%s1 + $0x828] sm:$0xf]
    %v2960 = vld [vmem:[%s1 + $0x82c] sm:$0xf]
    %v2961 = vld [vmem:[%s1 + $0x830] sm:$0xf]
    %v2962 = vld [vmem:[%s1 + $0x834] sm:$0xf]
    %v2963 = vld [vmem:[%s1 + $0x838] sm:$0xf]
    %v2964 = vld [vmem:[%s1 + $0x83c] sm:$0xf]
    %v2965 = vpack.c.bf16 %v2944, %v2944
    %v2966 = vld [vmem:[%s2 + $0x1] sm:$0x1]
    %v2967 = vlaneseq
    %v2968 = vshrl.u32 %v2967, 7
    %v2969 = vsub.s32 0, %v2968
    %v2970 = vrot.slane %v2966, %v2969
    %v2987 = vunpack.c.l.b16 %v2949
    %v2988 = vunpack.c.l.b16 %v2950
    %v2989 = vunpack.c.l.b16 %v2951
    %v2990 = vunpack.c.l.b16 %v2952
    %v2991 = vunpack.c.l.b16 %v2953
    %v2992 = vunpack.c.l.b16 %v2954
    %v2993 = vunpack.c.l.b16 %v2955
    %v2994 = vunpack.c.l.b16 %v2956
    %v2995 = vunpack.c.l.b16 %v2957
    %v2996 = vunpack.c.l.b16 %v2958
    %v2997 = vunpack.c.l.b16 %v2959
    %v2998 = vunpack.c.l.b16 %v2960
    %v2999 = vunpack.c.l.b16 %v2961
    %v3000 = vunpack.c.l.b16 %v2962
    %v3001 = vunpack.c.l.b16 %v2963
    %v3002 = vunpack.c.l.b16 %v2964
    %v3003 = vpack.c.b16 %v2988, %v2987
    %v3004 = vpack.c.b16 %v2990, %v2989
    %v3005 = vpack.c.b16 %v2992, %v2991
    %v3006 = vpack.c.b16 %v2994, %v2993
    %v3007 = vpack.c.b16 %v2996, %v2995
    %v3008 = vpack.c.b16 %v2998, %v2997
    %v3009 = vpack.c.b16 %v3000, %v2999
    %v3010 = vpack.c.b16 %v3002, %v3001
    %3019 = vmatprep.subr.bf16.mxu0 0
    %3020 = vmatpush1.bf16.msra.mxu0 %v3003
    %3021 = vmatprep.subr.bf16.mxu0 0
    %3022 = vmatpush1.bf16.msra.mxu0 %v3004
    %3023 = vmatprep.subr.bf16.mxu0 0
    %3024 = vmatpush1.bf16.msra.mxu0 %v3005
    %3025 = vmatprep.subr.bf16.mxu0 0
    %3026 = vmatpush1.bf16.msra.mxu0 %v3006
    %3027 = vmatprep.subr.bf16.mxu0 0
    %3028 = vmatpush1.bf16.msra.mxu0 %v3007
    %3029 = vmatprep.subr.bf16.mxu0 0
    %3030 = vmatpush1.bf16.msra.mxu0 %v3008
    %3031 = vmatprep.subr.bf16.mxu0 0
    %3032 = vmatpush1.bf16.msra.mxu0 %v3009
    %3033 = vmatprep.subr.bf16.mxu0 0
    %3034 = vmatpush1.bf16.msra.mxu0 %v3010
    %3035 = vmatprep.subr.bf16.mxu0 0
    %3036 = vmatpush1.bf16.msra.mxu0 0
    %3037 = vmatprep.subr.bf16.mxu0 0
    %3038 = vmatpush1.bf16.msra.mxu0 0
    %3039 = vmatprep.subr.bf16.mxu0 0
    %3040 = vmatpush1.bf16.msra.mxu0 0
    %3041 = vmatprep.subr.bf16.mxu0 0
    %3042 = vmatpush1.bf16.msra.mxu0 0
    %3043 = vmatprep.subr.bf16.mxu0 0
    %3044 = vmatpush1.bf16.msra.mxu0 0
    %3045 = vmatprep.subr.bf16.mxu0 0
    %3046 = vmatpush1.bf16.msra.mxu0 0
    %3047 = vmatprep.subr.bf16.mxu0 0
    %3048 = vmatpush1.bf16.msra.mxu0 0
    %3049 = vmatprep.subr.bf16.mxu0 0
    %3050 = vmatpush1.bf16.msra.mxu0 0
    %3051 = vmatprep.mubr.bf16.mxu0 0
    %3052 = vmatmul.mubr.bf16.gmra.mrb[0].mxu0 %v2965
    %v3053 = vpop.f32.mrb[0].mxu0
    %v3054 = vadd.f32 %v2970, %v3053
    %v3055 = vpop.f32.mrb[0].mxu0
    %v3056 = vpop.f32.mrb[0].mxu0
    %v3057 = vpop.f32.mrb[0].mxu0
    %3058 = vdwg.mxu0
    %v3059 = vld [vmem:[%s2 + $0x2] sm:$0x1]
    %v3060 = vld [vmem:[%s2 + $0x3] sm:$0x1]
    %vm3061 = vcmask 1041408
    %v3062 = vsel %vm3061, %v3054, 0.0
    %v3063 = vrot.slane %v3062, 4
    %v3064 = vadd.f32 %v3062, %v3063
    %v3065 = vrot.slane %v3064, 2
    %v3066 = vadd.f32 %v3064, %v3065
    %v3067 = vrot.slane %v3066, 1
    %v3068 = vadd.f32 %v3066, %v3067
    %v3069 = vrcp.pop 2.0
    %v3070 = vmul.f32 %v3068, %v3069
    %v3071 = vsub.f32 %v3054, %v3070
    %v3072 = vmul.f32 %v3071, %v3071
    %v3073 = vsel %vm3061, %v3072, 0.0
    %v3074 = vrot.slane %v3073, 4
    %v3075 = vadd.f32 %v3073, %v3074
    %v3076 = vrot.slane %v3075, 2
    %v3077 = vadd.f32 %v3075, %v3076
    %v3078 = vrot.slane %v3077, 1
    %v3079 = vadd.f32 %v3077, %v3078
    %v3080 = vmul.f32 %v3079, %v3069
    %v3081 = vadd.f32 %v3080, 1e-05
    %v3082 = vrsqrt.pop %v3081
    %v3083 = vmul.f32 %v3071, %v3082
    %v3084 = vlaneseq
    %v3085 = vshrl.u32 %v3084, 7
    %v3086 = vsub.s32 0, %v3085
    %v3087 = vrot.slane %v3059, %v3086
    %v3088 = vmul.f32 %v3083, %v3087
    %v3089 = vlaneseq
    %v3090 = vshrl.u32 %v3089, 7
    %v3091 = vsub.s32 0, %v3090
    %v3092 = vrot.slane %v3060, %v3091
    %v3093 = vadd.f32 %v3088, %v3092
    %v3094 = vmax.f32 %v3093, 0.0
    %v3095 = vld [vmem:[%s1 + $0x840] sm:$0xf]
    %v3096 = vld [vmem:[%s1 + $0x844] sm:$0xf]
    %v3097 = vld [vmem:[%s1 + $0x848] sm:$0xf]
    %v3098 = vld [vmem:[%s1 + $0x84c] sm:$0xf]
    %v3099 = vld [vmem:[%s1 + $0x850] sm:$0xf]
    %v3100 = vld [vmem:[%s1 + $0x854] sm:$0xf]
    %v3101 = vld [vmem:[%s1 + $0x858] sm:$0xf]
    %v3102 = vld [vmem:[%s1 + $0x85c] sm:$0xf]
    %v3103 = vld [vmem:[%s1 + $0x860] sm:$0xf]
    %v3104 = vld [vmem:[%s1 + $0x864] sm:$0xf]
    %v3105 = vld [vmem:[%s1 + $0x868] sm:$0xf]
    %v3106 = vld [vmem:[%s1 + $0x86c] sm:$0xf]
    %v3107 = vld [vmem:[%s1 + $0x870] sm:$0xf]
    %v3108 = vld [vmem:[%s1 + $0x874] sm:$0xf]
    %v3109 = vld [vmem:[%s1 + $0x878] sm:$0xf]
    %v3110 = vld [vmem:[%s1 + $0x87c] sm:$0xf]
    %v3111 = vpack.c.bf16 %v3094, %v3094
    %v3112 = vld [vmem:[%s2 + $0x4] sm:$0x1]
    %v3113 = vlaneseq
    %v3114 = vshrl.u32 %v3113, 7
    %v3115 = vsub.s32 0, %v3114
    %v3116 = vrot.slane %v3112, %v3115
    %v3133 = vunpack.c.l.b16 %v3095
    %v3134 = vunpack.c.l.b16 %v3096
    %v3135 = vunpack.c.l.b16 %v3097
    %v3136 = vunpack.c.l.b16 %v3098
    %v3137 = vunpack.c.l.b16 %v3099
    %v3138 = vunpack.c.l.b16 %v3100
    %v3139 = vunpack.c.l.b16 %v3101
    %v3140 = vunpack.c.l.b16 %v3102
    %v3141 = vunpack.c.l.b16 %v3103
    %v3142 = vunpack.c.l.b16 %v3104
    %v3143 = vunpack.c.l.b16 %v3105
    %v3144 = vunpack.c.l.b16 %v3106
    %v3145 = vunpack.c.l.b16 %v3107
    %v3146 = vunpack.c.l.b16 %v3108
    %v3147 = vunpack.c.l.b16 %v3109
    %v3148 = vunpack.c.l.b16 %v3110
    %v3149 = vpack.c.b16 %v3134, %v3133
    %v3150 = vpack.c.b16 %v3136, %v3135
    %v3151 = vpack.c.b16 %v3138, %v3137
    %v3152 = vpack.c.b16 %v3140, %v3139
    %v3153 = vpack.c.b16 %v3142, %v3141
    %v3154 = vpack.c.b16 %v3144, %v3143
    %v3155 = vpack.c.b16 %v3146, %v3145
    %v3156 = vpack.c.b16 %v3148, %v3147
    %3165 = vmatprep.subr.bf16.mxu0 0
    %3166 = vmatpush1.bf16.msra.mxu0 %v3149
    %3167 = vmatprep.subr.bf16.mxu0 0
    %3168 = vmatpush1.bf16.msra.mxu0 %v3150
    %3169 = vmatprep.subr.bf16.mxu0 0
    %3170 = vmatpush1.bf16.msra.mxu0 %v3151
    %3171 = vmatprep.subr.bf16.mxu0 0
    %3172 = vmatpush1.bf16.msra.mxu0 %v3152
    %3173 = vmatprep.subr.bf16.mxu0 0
    %3174 = vmatpush1.bf16.msra.mxu0 %v3153
    %3175 = vmatprep.subr.bf16.mxu0 0
    %3176 = vmatpush1.bf16.msra.mxu0 %v3154
    %3177 = vmatprep.subr.bf16.mxu0 0
    %3178 = vmatpush1.bf16.msra.mxu0 %v3155
    %3179 = vmatprep.subr.bf16.mxu0 0
    %3180 = vmatpush1.bf16.msra.mxu0 %v3156
    %3181 = vmatprep.subr.bf16.mxu0 0
    %3182 = vmatpush1.bf16.msra.mxu0 0
    %3183 = vmatprep.subr.bf16.mxu0 0
    %3184 = vmatpush1.bf16.msra.mxu0 0
    %3185 = vmatprep.subr.bf16.mxu0 0
    %3186 = vmatpush1.bf16.msra.mxu0 0
    %3187 = vmatprep.subr.bf16.mxu0 0
    %3188 = vmatpush1.bf16.msra.mxu0 0
    %3189 = vmatprep.subr.bf16.mxu0 0
    %3190 = vmatpush1.bf16.msra.mxu0 0
    %3191 = vmatprep.subr.bf16.mxu0 0
    %3192 = vmatpush1.bf16.msra.mxu0 0
    %3193 = vmatprep.subr.bf16.mxu0 0
    %3194 = vmatpush1.bf16.msra.mxu0 0
    %3195 = vmatprep.subr.bf16.mxu0 0
    %3196 = vmatpush1.bf16.msra.mxu0 0
    %3197 = vmatprep.mubr.bf16.mxu0 0
    %3198 = vmatmul.mubr.bf16.gmra.mrb[0].mxu0 %v3111
    %v3199 = vpop.f32.mrb[0].mxu0
    %v3200 = vadd.f32 %v3116, %v3199
    %v3201 = vpop.f32.mrb[0].mxu0
    %v3202 = vpop.f32.mrb[0].mxu0
    %v3203 = vpop.f32.mrb[0].mxu0
    %3204 = vdwg.mxu0
    %v3205 = vld [vmem:[%s2 + $0x5] sm:$0x1]
    %v3206 = vld [vmem:[%s2 + $0x6] sm:$0x1]
    %v3207 = vsel %vm3061, %v3200, 0.0
    %v3208 = vrot.slane %v3207, 4
    %v3209 = vadd.f32 %v3207, %v3208
    %v3210 = vrot.slane %v3209, 2
    %v3211 = vadd.f32 %v3209, %v3210
    %v3212 = vrot.slane %v3211, 1
    %v3213 = vadd.f32 %v3211, %v3212
    %v3214 = vmul.f32 %v3213, %v3069
    %v3215 = vsub.f32 %v3200, %v3214
    %v3216 = vmul.f32 %v3215, %v3215
    %v3217 = vsel %vm3061, %v3216, 0.0
    %v3218 = vrot.slane %v3217, 4
    %v3219 = vadd.f32 %v3217, %v3218
    %v3220 = vrot.slane %v3219, 2
    %v3221 = vadd.f32 %v3219, %v3220
    %v3222 = vrot.slane %v3221, 1
    %v3223 = vadd.f32 %v3221, %v3222
    %v3224 = vmul.f32 %v3223, %v3069
    %v3225 = vadd.f32 %v3224, 1e-05
    %v3226 = vrsqrt.pop %v3225
    %v3227 = vmul.f32 %v3215, %v3226
    %v3228 = vlaneseq
    %v3229 = vshrl.u32 %v3228, 7
    %v3230 = vsub.s32 0, %v3229
    %v3231 = vrot.slane %v3205, %v3230
    %v3232 = vmul.f32 %v3227, %v3231
    %v3233 = vlaneseq
    %v3234 = vshrl.u32 %v3233, 7
    %v3235 = vsub.s32 0, %v3234
    %v3236 = vrot.slane %v3206, %v3235
    %v3237 = vadd.f32 %v3232, %v3236
    %v3238 = vmax.f32 %v3237, 0.0
    %v3239 = vld [vmem:[%s1 + $0x880] sm:$0xf]
    %v3240 = vld [vmem:[%s1 + $0x884] sm:$0xf]
    %v3241 = vld [vmem:[%s1 + $0x888] sm:$0xf]
    %v3242 = vld [vmem:[%s1 + $0x88c] sm:$0xf]
    %v3243 = vld [vmem:[%s1 + $0x890] sm:$0xf]
    %v3244 = vld [vmem:[%s1 + $0x894] sm:$0xf]
    %v3245 = vld [vmem:[%s1 + $0x898] sm:$0xf]
    %v3246 = vld [vmem:[%s1 + $0x89c] sm:$0xf]
    %v3247 = vld [vmem:[%s1 + $0x8a0] sm:$0xf]
    %v3248 = vld [vmem:[%s1 + $0x8a4] sm:$0xf]
    %v3249 = vld [vmem:[%s1 + $0x8a8] sm:$0xf]
    %v3250 = vld [vmem:[%s1 + $0x8ac] sm:$0xf]
    %v3251 = vld [vmem:[%s1 + $0x8b0] sm:$0xf]
    %v3252 = vld [vmem:[%s1 + $0x8b4] sm:$0xf]
    %v3253 = vld [vmem:[%s1 + $0x8b8] sm:$0xf]
    %v3254 = vld [vmem:[%s1 + $0x8bc] sm:$0xf]
    %v3255 = vpack.c.bf16 %v3238, %v3238
    %v3256 = vld [vmem:[%s2 + $0x7] sm:$0x1]
    %v3257 = vlaneseq
    %v3258 = vshrl.u32 %v3257, 7
    %v3259 = vsub.s32 0, %v3258
    %v3260 = vrot.slane %v3256, %v3259
    %v3277 = vunpack.c.l.b16 %v3239
    %v3278 = vunpack.c.l.b16 %v3240
    %v3279 = vunpack.c.l.b16 %v3241
    %v3280 = vunpack.c.l.b16 %v3242
    %v3281 = vunpack.c.l.b16 %v3243
    %v3282 = vunpack.c.l.b16 %v3244
    %v3283 = vunpack.c.l.b16 %v3245
    %v3284 = vunpack.c.l.b16 %v3246
    %v3285 = vunpack.c.l.b16 %v3247
    %v3286 = vunpack.c.l.b16 %v3248
    %v3287 = vunpack.c.l.b16 %v3249
    %v3288 = vunpack.c.l.b16 %v3250
    %v3289 = vunpack.c.l.b16 %v3251
    %v3290 = vunpack.c.l.b16 %v3252
    %v3291 = vunpack.c.l.b16 %v3253
    %v3292 = vunpack.c.l.b16 %v3254
    %v3293 = vpack.c.b16 %v3278, %v3277
    %v3294 = vpack.c.b16 %v3280, %v3279
    %v3295 = vpack.c.b16 %v3282, %v3281
    %v3296 = vpack.c.b16 %v3284, %v3283
    %v3297 = vpack.c.b16 %v3286, %v3285
    %v3298 = vpack.c.b16 %v3288, %v3287
    %v3299 = vpack.c.b16 %v3290, %v3289
    %v3300 = vpack.c.b16 %v3292, %v3291
    %3309 = vmatprep.subr.bf16.mxu0 0
    %3310 = vmatpush1.bf16.msra.mxu0 %v3293
    %3311 = vmatprep.subr.bf16.mxu0 0
    %3312 = vmatpush1.bf16.msra.mxu0 %v3294
    %3313 = vmatprep.subr.bf16.mxu0 0
    %3314 = vmatpush1.bf16.msra.mxu0 %v3295
    %3315 = vmatprep.subr.bf16.mxu0 0
    %3316 = vmatpush1.bf16.msra.mxu0 %v3296
    %3317 = vmatprep.subr.bf16.mxu0 0
    %3318 = vmatpush1.bf16.msra.mxu0 %v3297
    %3319 = vmatprep.subr.bf16.mxu0 0
    %3320 = vmatpush1.bf16.msra.mxu0 %v3298
    %3321 = vmatprep.subr.bf16.mxu0 0
    %3322 = vmatpush1.bf16.msra.mxu0 %v3299
    %3323 = vmatprep.subr.bf16.mxu0 0
    %3324 = vmatpush1.bf16.msra.mxu0 %v3300
    %3325 = vmatprep.subr.bf16.mxu0 0
    %3326 = vmatpush1.bf16.msra.mxu0 0
    %3327 = vmatprep.subr.bf16.mxu0 0
    %3328 = vmatpush1.bf16.msra.mxu0 0
    %3329 = vmatprep.subr.bf16.mxu0 0
    %3330 = vmatpush1.bf16.msra.mxu0 0
    %3331 = vmatprep.subr.bf16.mxu0 0
    %3332 = vmatpush1.bf16.msra.mxu0 0
    %3333 = vmatprep.subr.bf16.mxu0 0
    %3334 = vmatpush1.bf16.msra.mxu0 0
    %3335 = vmatprep.subr.bf16.mxu0 0
    %3336 = vmatpush1.bf16.msra.mxu0 0
    %3337 = vmatprep.subr.bf16.mxu0 0
    %3338 = vmatpush1.bf16.msra.mxu0 0
    %3339 = vmatprep.subr.bf16.mxu0 0
    %3340 = vmatpush1.bf16.msra.mxu0 0
    %3341 = vmatprep.mubr.bf16.mxu0 0
    %3342 = vmatmul.mubr.bf16.gmra.mrb[0].mxu0 %v3255
    %v3343 = vpop.f32.mrb[0].mxu0
    %v3344 = vadd.f32 %v3260, %v3343
    %v3345 = vpop.f32.mrb[0].mxu0
    %v3346 = vpop.f32.mrb[0].mxu0
    %v3347 = vpop.f32.mrb[0].mxu0
    %3348 = vdwg.mxu0
    %3349 = vst [vmem:[%s3] sm:$0x3] %v3344
    %3350 = vst [vmem:[#allocation2] sm:$0x3] %v3094
    %3351 = vst [vmem:[#allocation4] sm:$0x3] %v2944
    // Predicated region
    $region14: #{ppo_actor_forward.3} parent=1 // pred_check
      _
    $region15: #{ppo_actor_forward.3} parent=1 // pred_check_branch
      %3353 = sbr.rel (0) target = $region17
    $region16: #{ppo_actor_forward.3} parent=1 // pred_region
      _
    $region17: #{ppo_actor_forward.3} parent=1 // pred_fallthru
      _
    // Predicated region
    $region18: #{ppo_actor_forward.3} parent=1 // pred_check
      _
    $region19: #{ppo_actor_forward.3} parent=1 // pred_check_branch
      %3355 = sbr.rel (0) target = $region21
    $region20: #{ppo_actor_forward.3} parent=1 // pred_region
      %s3357 = ssub.s32 32, 32
      %3358 = vsyncadd [#allocation3], %s3357
      %s3360 = sshll.u32 [#allocation2], 4
      %s3361 = int_to_ptr.vmem [resolvable:$true] %s3360
      %3363 = dma.vmem_to_hbm [thread:$0]  %s3361, 32, %s4, [#allocation3]
    $region21: #{ppo_actor_forward.3} parent=1 // pred_fallthru
      _
    // Predicated region
    $region22: #{ppo_actor_forward.3} parent=1 // pred_check
      _
    $region23: #{ppo_actor_forward.3} parent=1 // pred_check_branch
      %3365 = sbr.rel (0) target = $region25
    $region24: #{ppo_actor_forward.3} parent=1 // pred_region
      %s3367 = ssub.s32 32, 32
      %3368 = vsyncadd [#allocation5], %s3367
      %s3370 = sshll.u32 [#allocation4], 4
      %s3371 = int_to_ptr.vmem [resolvable:$true] %s3370
      %3373 = dma.vmem_to_hbm [thread:$0]  %s3371, 32, %s5, [#allocation5]
    $region25: #{ppo_actor_forward.3} parent=1 // pred_fallthru
      _
    // Predicated region
    $region26: #{ppo_actor_forward.3} parent=1 // pred_check
      _
    $region27: #{ppo_actor_forward.3} parent=1 // pred_check_branch
      %3375 = sbr.rel (0) target = $region29
    $region28: #{ppo_actor_forward.3} parent=1 // pred_region
      _
    $region29: #{ppo_actor_forward.3} parent=1 // pred_fallthru
      _
    // Predicated region
    $region30: #{ppo_actor_forward.3} parent=1 // pred_check
      _
    $region31: #{ppo_actor_forward.3} parent=1 // pred_check_branch
      %3377 = sbr.rel (0) target = $region33
    $region32: #{ppo_actor_forward.3} parent=1 // pred_region
      %3378 = dma.done [#allocation3], 32
    $region33: #{ppo_actor_forward.3} parent=1 // pred_fallthru
      _
    // Predicated region
    $region34: #{ppo_actor_forward.3} parent=1 // pred_check
      _
    $region35: #{ppo_actor_forward.3} parent=1 // pred_check_branch
      %3380 = sbr.rel (0) target = $region37
    $region36: #{ppo_actor_forward.3} parent=1 // pred_region
      %3381 = dma.done [#allocation5], 32
    $region37: #{ppo_actor_forward.3} parent=1 // pred_fallthru
      _
    %3382 = vsyncpa [#allocation3], 1
    %3383 = vsyncpa [#allocation5], 1

</llo_original>
